<compile_context>
chip_gen: v6e
topology: v6e:2x2x1
jax: 0.10.0
libtpu: 0.0.40
codegen_flags: <defaults>
</compile_context>

<pallas_src>
import functools

import jax
import jax.numpy as jnp
from jax.experimental import pallas as pl
from jax.experimental.pallas import tpu as pltpu

LN_EPS = 1e-5
HEAD_OUT = 6
HEAD_PAD = 128   # lane-dense head output; sliced back to HEAD_OUT outside the kernel
FFN_DIM = 2048   # nn.TransformerDecoderLayer default dim_feedforward

LAYER_KEYS = [
    "sa_wq", "sa_wk", "sa_wv", "sa_bq", "sa_bk", "sa_bv", "sa_wo", "sa_bo",
    "ca_wq", "ca_wk", "ca_wv", "ca_bq", "ca_bk", "ca_bv", "ca_wo", "ca_bo",
    "n1_g", "n1_b", "n2_g", "n2_b", "n3_g", "n3_b",
    "w1", "b1", "w2", "b2",
]


# ---------------------------------------------------------------------------
# In-kernel helpers (traced inside the Pallas body)
# ---------------------------------------------------------------------------
def _layernorm(v, g, b):
    mu = jnp.mean(v, axis=-1, keepdims=True)
    d = v - mu
    var = jnp.mean(d * d, axis=-1, keepdims=True)
    return d * jax.lax.rsqrt(var + LN_EPS) * g + b


def _mha(q2d, kv2d, b, lq, lk, wq, wk, wv, bq, bk, bv, wo, bo, num_heads):
    """Batched multi-head attention on row-folded (b*len, E) slabs.

    Weights are pre-transposed so y = x @ W + bias.  Batch is folded into the matmul
    row dimension for the Q/K/V and output projections; the score/softmax/PV step is
    a per-head static loop of batched (3-D) einsums.  The per-head contexts are
    accumulated full-width in their lane positions (head-lane mask on V), so the
    output projection is a single fused (rows, E) @ (E, E) dot.
    """
    e = wq.shape[0]
    dh = e // num_heads
    scale = 1.0 / (dh ** 0.5)

    q = (jnp.dot(q2d, wq, preferred_element_type=jnp.float32) + bq).reshape(b, lq, e)
    k = (jnp.dot(kv2d, wk, preferred_element_type=jnp.float32) + bk).reshape(b, lk, e)
    v = (jnp.dot(kv2d, wv, preferred_element_type=jnp.float32) + bv).reshape(b, lk, e)

    lane = jax.lax.broadcasted_iota(jnp.int32, (1, 1, e), 2)   # hoisted out of the loop
    ctx = jnp.zeros((b, lq, e), jnp.float32)
    for h in range(num_heads):                                 # static unroll over heads
        sl = slice(h * dh, (h + 1) * dh)
        s = jnp.einsum("bqd,bkd->bqk", q[:, :, sl] * scale, k[:, :, sl],
                       preferred_element_type=jnp.float32)
        s = s - jnp.max(s, axis=-1, keepdims=True)
        p = jnp.exp(s)
        # EUP reciprocal instead of a VALU divide.
        p = p * pl.reciprocal(jnp.sum(p, axis=-1, keepdims=True), approx=True)
        head_mask = jnp.logical_and(lane >= h * dh, lane < (h + 1) * dh)
        v_h = jnp.where(head_mask, v, 0.0)                     # head lanes only
        ctx = ctx + jnp.einsum("bqk,bke->bqe", p, v_h,
                               preferred_element_type=jnp.float32)

    # single fused output projection (concat-of-heads is already laid out in ctx)
    ctx2d = ctx.reshape(b * lq, e)
    return jnp.dot(ctx2d, wo, preferred_element_type=jnp.float32) + bo


# ---------------------------------------------------------------------------
# Fused kernel: all decoder layers + final norm + head in one pallas_call
# ---------------------------------------------------------------------------
def fused_decoder_kernel(
        q0_ref, mem_ref,
        sa_wq, sa_wk, sa_wv, sa_bq, sa_bk, sa_bv, sa_wo, sa_bo,
        ca_wq, ca_wk, ca_wv, ca_bq, ca_bk, ca_bv, ca_wo, ca_bo,
        n1_g, n1_b, n2_g, n2_b, n3_g, n3_b,
        w1, b1, w2, b2,
        fn_g, fn_b, head_w, head_b,
        out_ref, x_scr,
        *, num_heads, batch, num_point, seq_len):
    l = pl.program_id(0)
    B, P, S = batch, num_point, seq_len
    E = q0_ref.shape[-1]

    # Initialize the VMEM-resident activation from the query embedding at layer 0;
    # the broadcast over batch happens in-kernel (no extra HBM copies).
    @pl.when(l == 0)
    def _init():
        q0 = q0_ref[...].astype(jnp.float32)                    # (P, E)
        x_scr[...] = jnp.concatenate([q0] * B, axis=0)          # (B*P, E)

    x = x_scr[...]                                              # (B*P, E)
    mem2 = mem_ref[...].astype(jnp.float32).reshape(B * S, E)   # (B*S, E)

    # ---- self-attention + residual + LN1 -----------------------------------
    sa = _mha(x, x, B, P, P,
              sa_wq[0], sa_wk[0], sa_wv[0], sa_bq[0], sa_bk[0], sa_bv[0],
              sa_wo[0], sa_bo[0], num_heads)
    x = _layernorm(x + sa, n1_g[0], n1_b[0])

    # ---- cross-attention + residual + LN2 ----------------------------------
    ca = _mha(x, mem2, B, P, S,
              ca_wq[0], ca_wk[0], ca_wv[0], ca_bq[0], ca_bk[0], ca_bv[0],
              ca_wo[0], ca_bo[0], num_heads)
    x = _layernorm(x + ca, n2_g[0], n2_b[0])

    # ---- feed-forward (relu) + residual + LN3 ------------------------------
    h = jnp.maximum(
        jnp.dot(x, w1[0], preferred_element_type=jnp.float32) + b1[0], 0.0)
    f = jnp.dot(h, w2[0], preferred_element_type=jnp.float32) + b2[0]
    x = _layernorm(x + f, n3_g[0], n3_b[0])

    x_scr[...] = x

    # ---- final LayerNorm + Linear head, fused into the last layer step -----
    @pl.when(l == pl.num_programs(0) - 1)
    def _final():
        xn = _layernorm(x, fn_g[...], fn_b[...])
        y = jnp.dot(xn, head_w[...], preferred_element_type=jnp.float32) + head_b[...]
        out_ref[...] = y.astype(out_ref.dtype)                  # (B*P, HEAD_PAD)


# ---------------------------------------------------------------------------
# Wrapper
# ---------------------------------------------------------------------------
def point_decoder_forward(x, params, *, num_heads, query_pos):
    """x: (B, S, E) memory sequence.  Returns (B, num_point, 6)."""
    B, S, E = x.shape
    q0 = params["query_embed"]
    if query_pos:
        q0 = q0 + params["pos_embed"]
    q0 = q0.astype(jnp.float32)
    P = q0.shape[0]

    stacked = params["layers"]                     # dict of (L, ...) stacked arrays
    L = stacked["sa_wq"].shape[0]
    fin = params["final"]

    # Lane-dense head: pad (E, 6) -> (E, 128); slice back to 6 after the kernel.
    head_w = jnp.zeros((E, HEAD_PAD), jnp.float32).at[:, :HEAD_OUT].set(fin["head_w"])
    head_b = jnp.zeros((1, HEAD_PAD), jnp.float32).at[:, :HEAD_OUT].set(fin["head_b"])

    layer_args = [stacked[k] for k in LAYER_KEYS]

    def _layer_spec(a):        # streamed: one layer slice per grid step
        return pl.BlockSpec((1,) + tuple(a.shape[1:]),
                            lambda l, _n=a.ndim: (l,) + (0,) * (_n - 1))

    def _const_spec(a):        # constant block index -> fetched into VMEM once
        return pl.BlockSpec(tuple(a.shape), lambda l, _n=a.ndim: (0,) * _n)

    in_specs = ([_const_spec(q0), _const_spec(x)]
                + [_layer_spec(a) for a in layer_args]
                + [_const_spec(a) for a in (fin["norm_g"], fin["norm_b"],
                                            head_w, head_b)])

    kernel = functools.partial(fused_decoder_kernel, num_heads=num_heads,
                               batch=B, num_point=P, seq_len=S)

    out = pl.pallas_call(
        kernel,
        out_shape=jax.ShapeDtypeStruct((B * P, HEAD_PAD), jnp.float32),
        grid=(L,),
        in_specs=in_specs,
        out_specs=pl.BlockSpec((B * P, HEAD_PAD), lambda l: (0, 0)),
        scratch_shapes=[pltpu.VMEM((B * P, E), jnp.float32)],
        compiler_params=pltpu.CompilerParams(
            dimension_semantics=("arbitrary",)),   # layer axis carries the activation
    )(q0, x.astype(jnp.float32), *layer_args,
      fin["norm_g"], fin["norm_b"], head_w, head_b)

    return out[:, :HEAD_OUT].reshape(B, P, HEAD_OUT)


# ---------------------------------------------------------------------------
# Parameter construction (deterministic synthetic init)
# ---------------------------------------------------------------------------
def init_params(key, num_heads, num_layers, num_point, embed_dim, ffn_dim=FFN_DIM):
    del num_heads  # head count does not change parameter shapes
    n_rand = 3 + num_layers * 10
    keys = list(jax.random.split(key, n_rand))
    it = iter(keys)

    def nrm(shape, std=0.02):
        return jax.random.normal(next(it), shape, jnp.float32) * std

    params = {
        "query_embed": nrm((num_point, embed_dim)),
        "pos_embed": nrm((num_point, embed_dim)),
        "final": {
            "norm_g": jnp.ones((1, embed_dim), jnp.float32),
            "norm_b": jnp.zeros((1, embed_dim), jnp.float32),
            "head_w": nrm((embed_dim, HEAD_OUT)),
            "head_b": jnp.zeros((1, HEAD_OUT), jnp.float32),
        },
    }

    per_layer = []
    for _ in range(num_layers):
        lp = {}
        for pre in ("sa", "ca"):
            lp[f"{pre}_wq"] = nrm((embed_dim, embed_dim))
            lp[f"{pre}_wk"] = nrm((embed_dim, embed_dim))
            lp[f"{pre}_wv"] = nrm((embed_dim, embed_dim))
            lp[f"{pre}_wo"] = nrm((embed_dim, embed_dim))
            lp[f"{pre}_bq"] = jnp.zeros((1, embed_dim), jnp.float32)
            lp[f"{pre}_bk"] = jnp.zeros((1, embed_dim), jnp.float32)
            lp[f"{pre}_bv"] = jnp.zeros((1, embed_dim), jnp.float32)
            lp[f"{pre}_bo"] = jnp.zeros((1, embed_dim), jnp.float32)
        for n in ("n1", "n2", "n3"):
            lp[f"{n}_g"] = jnp.ones((1, embed_dim), jnp.float32)
            lp[f"{n}_b"] = jnp.zeros((1, embed_dim), jnp.float32)
        lp["w1"] = nrm((embed_dim, ffn_dim))
        lp["b1"] = jnp.zeros((1, ffn_dim), jnp.float32)
        lp["w2"] = nrm((ffn_dim, embed_dim))
        lp["b2"] = jnp.zeros((1, embed_dim), jnp.float32)
        per_layer.append(lp)

    # Stack per-layer params along a leading layer axis so a single fused pallas_call
    # can stream one layer's weights per grid step.
    params["layers"] = {k: jnp.stack([lp[k] for lp in per_layer], axis=0)
                        for k in LAYER_KEYS}
    return params


if __name__ == "__main__":
    # small config consistent with the module
    batch, seq, embed_dim = 2, 8, 32
    num_heads, num_layers, num_point = 4, 2, 8
    query_pos = True

    key = jax.random.PRNGKey(0)
    kx, kp = jax.random.split(key)
    x = jax.random.normal(kx, (batch, seq, embed_dim), jnp.float32)
    params = init_params(kp, num_heads, num_layers, num_point, embed_dim)

    out = point_decoder_forward(x, params, num_heads=num_heads, query_pos=query_pos)
    out = jax.block_until_ready(out)
    assert out.shape == (batch, num_point, HEAD_OUT), out.shape
    assert bool(jnp.all(jnp.isfinite(out)))
    print("KERNEL_OK")
</pallas_src>

<mosaic_0001>
module attributes {stable_mosaic.version = 11 : i64} {
  func.func @fused_decoder_kernel(%arg0: i32, %arg1: memref<8x32xf32, #tpu.memory_space<vmem>>, %arg2: memref<2x8x32xf32, #tpu.memory_space<vmem>>, %arg3: memref<1x32x32xf32, #tpu.memory_space<vmem>>, %arg4: memref<1x32x32xf32, #tpu.memory_space<vmem>>, %arg5: memref<1x32x32xf32, #tpu.memory_space<vmem>>, %arg6: memref<1x1x32xf32, #tpu.memory_space<vmem>>, %arg7: memref<1x1x32xf32, #tpu.memory_space<vmem>>, %arg8: memref<1x1x32xf32, #tpu.memory_space<vmem>>, %arg9: memref<1x32x32xf32, #tpu.memory_space<vmem>>, %arg10: memref<1x1x32xf32, #tpu.memory_space<vmem>>, %arg11: memref<1x32x32xf32, #tpu.memory_space<vmem>>, %arg12: memref<1x32x32xf32, #tpu.memory_space<vmem>>, %arg13: memref<1x32x32xf32, #tpu.memory_space<vmem>>, %arg14: memref<1x1x32xf32, #tpu.memory_space<vmem>>, %arg15: memref<1x1x32xf32, #tpu.memory_space<vmem>>, %arg16: memref<1x1x32xf32, #tpu.memory_space<vmem>>, %arg17: memref<1x32x32xf32, #tpu.memory_space<vmem>>, %arg18: memref<1x1x32xf32, #tpu.memory_space<vmem>>, %arg19: memref<1x1x32xf32, #tpu.memory_space<vmem>>, %arg20: memref<1x1x32xf32, #tpu.memory_space<vmem>>, %arg21: memref<1x1x32xf32, #tpu.memory_space<vmem>>, %arg22: memref<1x1x32xf32, #tpu.memory_space<vmem>>, %arg23: memref<1x1x32xf32, #tpu.memory_space<vmem>>, %arg24: memref<1x1x32xf32, #tpu.memory_space<vmem>>, %arg25: memref<1x32x2048xf32, #tpu.memory_space<vmem>>, %arg26: memref<1x1x2048xf32, #tpu.memory_space<vmem>>, %arg27: memref<1x2048x32xf32, #tpu.memory_space<vmem>>, %arg28: memref<1x1x32xf32, #tpu.memory_space<vmem>>, %arg29: memref<1x32xf32, #tpu.memory_space<vmem>>, %arg30: memref<1x32xf32, #tpu.memory_space<vmem>>, %arg31: memref<32x128xf32, #tpu.memory_space<vmem>>, %arg32: memref<1x128xf32, #tpu.memory_space<vmem>>, %arg33: memref<16x128xf32, #tpu.memory_space<vmem>>, %arg34: memref<16x32xf32, #tpu.memory_space<vmem>>) attributes {dimension_semantics = [#tpu.dimension_semantics<arbitrary>], iteration_bounds = array<i64: 2>, scalar_prefetch = 0 : i64, scratch_operands = 1 : i64, tpu.core_type = #tpu.core_type<tc>, window_params = [{pipeline_mode = #tpu.pipeline_mode<synchronous>, transform_indices = @transform_0, window_bounds = array<i64: 8, 32>}, {pipeline_mode = #tpu.pipeline_mode<synchronous>, transform_indices = @transform_1, window_bounds = array<i64: 2, 8, 32>}, {transform_indices = @transform_2, window_bounds = array<i64: 1, 32, 32>}, {transform_indices = @transform_3, window_bounds = array<i64: 1, 32, 32>}, {transform_indices = @transform_4, window_bounds = array<i64: 1, 32, 32>}, {transform_indices = @transform_5, window_bounds = array<i64: 1, 1, 32>}, {transform_indices = @transform_6, window_bounds = array<i64: 1, 1, 32>}, {transform_indices = @transform_7, window_bounds = array<i64: 1, 1, 32>}, {transform_indices = @transform_8, window_bounds = array<i64: 1, 32, 32>}, {transform_indices = @transform_9, window_bounds = array<i64: 1, 1, 32>}, {transform_indices = @transform_10, window_bounds = array<i64: 1, 32, 32>}, {transform_indices = @transform_11, window_bounds = array<i64: 1, 32, 32>}, {transform_indices = @transform_12, window_bounds = array<i64: 1, 32, 32>}, {transform_indices = @transform_13, window_bounds = array<i64: 1, 1, 32>}, {transform_indices = @transform_14, window_bounds = array<i64: 1, 1, 32>}, {transform_indices = @transform_15, window_bounds = array<i64: 1, 1, 32>}, {transform_indices = @transform_16, window_bounds = array<i64: 1, 32, 32>}, {transform_indices = @transform_17, window_bounds = array<i64: 1, 1, 32>}, {transform_indices = @transform_18, window_bounds = array<i64: 1, 1, 32>}, {transform_indices = @transform_19, window_bounds = array<i64: 1, 1, 32>}, {transform_indices = @transform_20, window_bounds = array<i64: 1, 1, 32>}, {transform_indices = @transform_21, window_bounds = array<i64: 1, 1, 32>}, {transform_indices = @transform_22, window_bounds = array<i64: 1, 1, 32>}, {transform_indices = @transform_23, window_bounds = array<i64: 1, 1, 32>}, {transform_indices = @transform_24, window_bounds = array<i64: 1, 32, 2048>}, {transform_indices = @transform_25, window_bounds = array<i64: 1, 1, 2048>}, {transform_indices = @transform_26, window_bounds = array<i64: 1, 2048, 32>}, {transform_indices = @transform_27, window_bounds = array<i64: 1, 1, 32>}, {pipeline_mode = #tpu.pipeline_mode<synchronous>, transform_indices = @transform_28, window_bounds = array<i64: 1, 32>}, {pipeline_mode = #tpu.pipeline_mode<synchronous>, transform_indices = @transform_29, window_bounds = array<i64: 1, 32>}, {pipeline_mode = #tpu.pipeline_mode<synchronous>, transform_indices = @transform_30, window_bounds = array<i64: 32, 128>}, {pipeline_mode = #tpu.pipeline_mode<synchronous>, transform_indices = @transform_31, window_bounds = array<i64: 1, 128>}, {pipeline_mode = #tpu.pipeline_mode<synchronous>, transform_indices = @transform_32, window_bounds = array<i64: 16, 128>}]} {
    %c0_i32 = arith.constant 0 : i32
    %0 = arith.cmpi eq, %arg0, %c0_i32 : i32
    %1 = arith.extui %0 : i1 to i32
    %c0_i32_0 = arith.constant 0 : i32
    %2 = arith.cmpi ne, %1, %c0_i32_0 : i32
    scf.if %2 {
      %c0_173 = arith.constant 0 : index
      %c0_174 = arith.constant 0 : index
      %377 = vector.load %arg1[%c0_173, %c0_174] : memref<8x32xf32, #tpu.memory_space<vmem>>, vector<8x32xf32>
      %378 = tpu.concatenate %377, %377 in 0 : vector<8x32xf32>, vector<8x32xf32> -> vector<16x32xf32>
      %c0_175 = arith.constant 0 : index
      %c0_176 = arith.constant 0 : index
      %379 = vector.load %arg34[%c0_175, %c0_176] : memref<16x32xf32, #tpu.memory_space<vmem>>, vector<16x32xf32>
      tpu.vector_store %arg34[%c0_175, %c0_176], %378 {strides = array<i32>} : memref<16x32xf32, #tpu.memory_space<vmem>>, vector<16x32xf32>,
    } else {
    }
    %c0 = arith.constant 0 : index
    %c0_1 = arith.constant 0 : index
    %3 = vector.load %arg34[%c0, %c0_1] : memref<16x32xf32, #tpu.memory_space<vmem>>, vector<16x32xf32>
    %c0_2 = arith.constant 0 : index
    %c0_3 = arith.constant 0 : index
    %c0_4 = arith.constant 0 : index
    %4 = vector.load %arg2[%c0_2, %c0_3, %c0_4] : memref<2x8x32xf32, #tpu.memory_space<vmem>>, vector<2x8x32xf32>
    %5 = vector.shape_cast %4 : vector<2x8x32xf32> to vector<16x32xf32>
    %c0_5 = arith.constant 0 : index
    %c0_6 = arith.constant 0 : index
    %c0_7 = arith.constant 0 : index
    %6 = vector.load %arg3[%c0_5, %c0_6, %c0_7] : memref<1x32x32xf32, #tpu.memory_space<vmem>>, vector<1x32x32xf32>
    %7 = vector.shape_cast %6 : vector<1x32x32xf32> to vector<32x32xf32>
    %c0_8 = arith.constant 0 : index
    %c0_9 = arith.constant 0 : index
    %c0_10 = arith.constant 0 : index
    %8 = vector.load %arg4[%c0_8, %c0_9, %c0_10] : memref<1x32x32xf32, #tpu.memory_space<vmem>>, vector<1x32x32xf32>
    %9 = vector.shape_cast %8 : vector<1x32x32xf32> to vector<32x32xf32>
    %c0_11 = arith.constant 0 : index
    %c0_12 = arith.constant 0 : index
    %c0_13 = arith.constant 0 : index
    %10 = vector.load %arg5[%c0_11, %c0_12, %c0_13] : memref<1x32x32xf32, #tpu.memory_space<vmem>>, vector<1x32x32xf32>
    %11 = vector.shape_cast %10 : vector<1x32x32xf32> to vector<32x32xf32>
    %c0_14 = arith.constant 0 : index
    %c0_15 = arith.constant 0 : index
    %c0_16 = arith.constant 0 : index
    %12 = vector.load %arg6[%c0_14, %c0_15, %c0_16] : memref<1x1x32xf32, #tpu.memory_space<vmem>>, vector<1x1x32xf32>
    %13 = vector.shape_cast %12 : vector<1x1x32xf32> to vector<1x32xf32>
    %c0_17 = arith.constant 0 : index
    %c0_18 = arith.constant 0 : index
    %c0_19 = arith.constant 0 : index
    %14 = vector.load %arg7[%c0_17, %c0_18, %c0_19] : memref<1x1x32xf32, #tpu.memory_space<vmem>>, vector<1x1x32xf32>
    %15 = vector.shape_cast %14 : vector<1x1x32xf32> to vector<1x32xf32>
    %c0_20 = arith.constant 0 : index
    %c0_21 = arith.constant 0 : index
    %c0_22 = arith.constant 0 : index
    %16 = vector.load %arg8[%c0_20, %c0_21, %c0_22] : memref<1x1x32xf32, #tpu.memory_space<vmem>>, vector<1x1x32xf32>
    %17 = vector.shape_cast %16 : vector<1x1x32xf32> to vector<1x32xf32>
    %c0_23 = arith.constant 0 : index
    %c0_24 = arith.constant 0 : index
    %c0_25 = arith.constant 0 : index
    %18 = vector.load %arg9[%c0_23, %c0_24, %c0_25] : memref<1x32x32xf32, #tpu.memory_space<vmem>>, vector<1x32x32xf32>
    %19 = vector.shape_cast %18 : vector<1x32x32xf32> to vector<32x32xf32>
    %c0_26 = arith.constant 0 : index
    %c0_27 = arith.constant 0 : index
    %c0_28 = arith.constant 0 : index
    %20 = vector.load %arg10[%c0_26, %c0_27, %c0_28] : memref<1x1x32xf32, #tpu.memory_space<vmem>>, vector<1x1x32xf32>
    %21 = vector.shape_cast %20 : vector<1x1x32xf32> to vector<1x32xf32>
    %cst = arith.constant dense<0.000000e+00> : vector<16x32xf32>
    %22 = tpu.matmul %3, %7, %cst {dimension_numbers = #tpu.dot_dimension_numbers<[1], [0], [0], [1], [0, 0, 1, 1], [], []>} : vector<16x32xf32>, vector<32x32xf32>, vector<16x32xf32> -> vector<16x32xf32>
    %23 = vector.broadcast %13 : vector<1x32xf32> to vector<16x32xf32>
    %24 = arith.addf %22, %23 : vector<16x32xf32>
    %25 = vector.shape_cast %24 : vector<16x32xf32> to vector<2x8x32xf32>
    %cst_29 = arith.constant dense<0.000000e+00> : vector<16x32xf32>
    %26 = tpu.matmul %3, %9, %cst_29 {dimension_numbers = #tpu.dot_dimension_numbers<[1], [0], [0], [1], [0, 0, 1, 1], [], []>} : vector<16x32xf32>, vector<32x32xf32>, vector<16x32xf32> -> vector<16x32xf32>
    %27 = vector.broadcast %15 : vector<1x32xf32> to vector<16x32xf32>
    %28 = arith.addf %26, %27 : vector<16x32xf32>
    %29 = vector.shape_cast %28 : vector<16x32xf32> to vector<2x8x32xf32>
    %cst_30 = arith.constant dense<0.000000e+00> : vector<16x32xf32>
    %30 = tpu.matmul %3, %11, %cst_30 {dimension_numbers = #tpu.dot_dimension_numbers<[1], [0], [0], [1], [0, 0, 1, 1], [], []>} : vector<16x32xf32>, vector<32x32xf32>, vector<16x32xf32> -> vector<16x32xf32>
    %31 = vector.broadcast %17 : vector<1x32xf32> to vector<16x32xf32>
    %32 = arith.addf %30, %31 : vector<16x32xf32>
    %33 = vector.shape_cast %32 : vector<16x32xf32> to vector<2x8x32xf32>
    %34 = tpu.iota {dimensions = array<i32: 2>} : vector<1x1x32xi32>
    %cst_31 = arith.constant 0.000000e+00 : f32
    %35 = vector.broadcast %cst_31 : f32 to vector<2x8x32xf32>
    %36 = vector.extract_strided_slice %25 {offsets = [0, 0, 0], sizes = [2, 8, 8], strides = [1, 1, 1]} : vector<2x8x32xf32> to vector<2x8x8xf32>
    %cst_32 = arith.constant 0.353553385 : f32
    %37 = vector.broadcast %cst_32 : f32 to vector<2x8x8xf32>
    %38 = arith.mulf %36, %37 : vector<2x8x8xf32>
    %39 = vector.extract_strided_slice %29 {offsets = [0, 0, 0], sizes = [2, 8, 8], strides = [1, 1, 1]} : vector<2x8x32xf32> to vector<2x8x8xf32>
    "tpu.trace_start"() <{level = 10 : i32, message = "bqd,bkd->bqk"}> : () -> ()
    %cst_33 = arith.constant dense<0.000000e+00> : vector<2x8x8xf32>
    %40 = tpu.matmul %38, %39, %cst_33 {dimension_numbers = #tpu.dot_dimension_numbers<[2], [2], [1], [1], [0, 0, 0, 1, 1, 1], [0], [0]>} : vector<2x8x8xf32>, vector<2x8x8xf32>, vector<2x8x8xf32> -> vector<2x8x8xf32>
    "tpu.trace_stop"() : () -> ()
    %cst_34 = arith.constant dense<0xFF800000> : vector<2x8xf32>
    %41 = vector.multi_reduction <maximumf>, %40, %cst_34 [2] : vector<2x8x8xf32> to vector<2x8xf32>
    %42 = vector.shape_cast %41 : vector<2x8xf32> to vector<2x8x1xf32>
    %43 = vector.broadcast %42 : vector<2x8x1xf32> to vector<2x8x8xf32>
    %44 = arith.subf %40, %43 : vector<2x8x8xf32>
    %45 = math.exp %44 : vector<2x8x8xf32>
    %cst_35 = arith.constant dense<0.000000e+00> : vector<2x8xf32>
    %46 = vector.multi_reduction <add>, %45, %cst_35 [2] : vector<2x8x8xf32> to vector<2x8xf32>
    %47 = vector.shape_cast %46 : vector<2x8xf32> to vector<2x8x1xf32>
    %48 = tpu.reciprocal %47 {approx = true} : vector<2x8x1xf32> -> vector<2x8x1xf32>
    %49 = vector.broadcast %48 : vector<2x8x1xf32> to vector<2x8x8xf32>
    %50 = arith.mulf %45, %49 : vector<2x8x8xf32>
    %c0_i32_36 = arith.constant 0 : i32
    %51 = vector.broadcast %c0_i32_36 : i32 to vector<1x1x32xi32>
    %52 = arith.cmpi sge, %34, %51 : vector<1x1x32xi32>
    %c8_i32 = arith.constant 8 : i32
    %53 = vector.broadcast %c8_i32 : i32 to vector<1x1x32xi32>
    %54 = arith.cmpi slt, %34, %53 : vector<1x1x32xi32>
    %55 = arith.andi %52, %54 : vector<1x1x32xi1>
    %cst_37 = arith.constant 0.000000e+00 : f32
    %56 = vector.shape_cast %55 : vector<1x1x32xi1> to vector<1x1x32xi1>
    %57 = vector.broadcast %56 : vector<1x1x32xi1> to vector<2x8x32xi1>
    %58 = vector.broadcast %cst_37 : f32 to vector<2x8x32xf32>
    %59 = arith.select %57, %33, %58 : vector<2x8x32xi1>, vector<2x8x32xf32>
    "tpu.trace_start"() <{level = 10 : i32, message = "bqk,bke->bqe"}> : () -> ()
    %cst_38 = arith.constant dense<0.000000e+00> : vector<2x8x32xf32>
    %60 = tpu.matmul %50, %59, %cst_38 {dimension_numbers = #tpu.dot_dimension_numbers<[2], [1], [1], [2], [0, 0, 0, 1, 1, 2], [0], [0]>} : vector<2x8x8xf32>, vector<2x8x32xf32>, vector<2x8x32xf32> -> vector<2x8x32xf32>
    "tpu.trace_stop"() : () -> ()
    %61 = arith.addf %35, %60 : vector<2x8x32xf32>
    %62 = vector.extract_strided_slice %25 {offsets = [0, 0, 8], sizes = [2, 8, 8], strides = [1, 1, 1]} : vector<2x8x32xf32> to vector<2x8x8xf32>
    %cst_39 = arith.constant 0.353553385 : f32
    %63 = vector.broadcast %cst_39 : f32 to vector<2x8x8xf32>
    %64 = arith.mulf %62, %63 : vector<2x8x8xf32>
    %65 = vector.extract_strided_slice %29 {offsets = [0, 0, 8], sizes = [2, 8, 8], strides = [1, 1, 1]} : vector<2x8x32xf32> to vector<2x8x8xf32>
    "tpu.trace_start"() <{level = 10 : i32, message = "bqd,bkd->bqk"}> : () -> ()
    %cst_40 = arith.constant dense<0.000000e+00> : vector<2x8x8xf32>
    %66 = tpu.matmul %64, %65, %cst_40 {dimension_numbers = #tpu.dot_dimension_numbers<[2], [2], [1], [1], [0, 0, 0, 1, 1, 1], [0], [0]>} : vector<2x8x8xf32>, vector<2x8x8xf32>, vector<2x8x8xf32> -> vector<2x8x8xf32>
    "tpu.trace_stop"() : () -> ()
    %cst_41 = arith.constant dense<0xFF800000> : vector<2x8xf32>
    %67 = vector.multi_reduction <maximumf>, %66, %cst_41 [2] : vector<2x8x8xf32> to vector<2x8xf32>
    %68 = vector.shape_cast %67 : vector<2x8xf32> to vector<2x8x1xf32>
    %69 = vector.broadcast %68 : vector<2x8x1xf32> to vector<2x8x8xf32>
    %70 = arith.subf %66, %69 : vector<2x8x8xf32>
    %71 = math.exp %70 : vector<2x8x8xf32>
    %cst_42 = arith.constant dense<0.000000e+00> : vector<2x8xf32>
    %72 = vector.multi_reduction <add>, %71, %cst_42 [2] : vector<2x8x8xf32> to vector<2x8xf32>
    %73 = vector.shape_cast %72 : vector<2x8xf32> to vector<2x8x1xf32>
    %74 = tpu.reciprocal %73 {approx = true} : vector<2x8x1xf32> -> vector<2x8x1xf32>
    %75 = vector.broadcast %74 : vector<2x8x1xf32> to vector<2x8x8xf32>
    %76 = arith.mulf %71, %75 : vector<2x8x8xf32>
    %c8_i32_43 = arith.constant 8 : i32
    %77 = vector.broadcast %c8_i32_43 : i32 to vector<1x1x32xi32>
    %78 = arith.cmpi sge, %34, %77 : vector<1x1x32xi32>
    %c16_i32 = arith.constant 16 : i32
    %79 = vector.broadcast %c16_i32 : i32 to vector<1x1x32xi32>
    %80 = arith.cmpi slt, %34, %79 : vector<1x1x32xi32>
    %81 = arith.andi %78, %80 : vector<1x1x32xi1>
    %cst_44 = arith.constant 0.000000e+00 : f32
    %82 = vector.shape_cast %81 : vector<1x1x32xi1> to vector<1x1x32xi1>
    %83 = vector.broadcast %82 : vector<1x1x32xi1> to vector<2x8x32xi1>
    %84 = vector.broadcast %cst_44 : f32 to vector<2x8x32xf32>
    %85 = arith.select %83, %33, %84 : vector<2x8x32xi1>, vector<2x8x32xf32>
    "tpu.trace_start"() <{level = 10 : i32, message = "bqk,bke->bqe"}> : () -> ()
    %cst_45 = arith.constant dense<0.000000e+00> : vector<2x8x32xf32>
    %86 = tpu.matmul %76, %85, %cst_45 {dimension_numbers = #tpu.dot_dimension_numbers<[2], [1], [1], [2], [0, 0, 0, 1, 1, 2], [0], [0]>} : vector<2x8x8xf32>, vector<2x8x32xf32>, vector<2x8x32xf32> -> vector<2x8x32xf32>
    "tpu.trace_stop"() : () -> ()
    %87 = arith.addf %61, %86 : vector<2x8x32xf32>
    %88 = vector.extract_strided_slice %25 {offsets = [0, 0, 16], sizes = [2, 8, 8], strides = [1, 1, 1]} : vector<2x8x32xf32> to vector<2x8x8xf32>
    %cst_46 = arith.constant 0.353553385 : f32
    %89 = vector.broadcast %cst_46 : f32 to vector<2x8x8xf32>
    %90 = arith.mulf %88, %89 : vector<2x8x8xf32>
    %91 = vector.extract_strided_slice %29 {offsets = [0, 0, 16], sizes = [2, 8, 8], strides = [1, 1, 1]} : vector<2x8x32xf32> to vector<2x8x8xf32>
    "tpu.trace_start"() <{level = 10 : i32, message = "bqd,bkd->bqk"}> : () -> ()
    %cst_47 = arith.constant dense<0.000000e+00> : vector<2x8x8xf32>
    %92 = tpu.matmul %90, %91, %cst_47 {dimension_numbers = #tpu.dot_dimension_numbers<[2], [2], [1], [1], [0, 0, 0, 1, 1, 1], [0], [0]>} : vector<2x8x8xf32>, vector<2x8x8xf32>, vector<2x8x8xf32> -> vector<2x8x8xf32>
    "tpu.trace_stop"() : () -> ()
    %cst_48 = arith.constant dense<0xFF800000> : vector<2x8xf32>
    %93 = vector.multi_reduction <maximumf>, %92, %cst_48 [2] : vector<2x8x8xf32> to vector<2x8xf32>
    %94 = vector.shape_cast %93 : vector<2x8xf32> to vector<2x8x1xf32>
    %95 = vector.broadcast %94 : vector<2x8x1xf32> to vector<2x8x8xf32>
    %96 = arith.subf %92, %95 : vector<2x8x8xf32>
    %97 = math.exp %96 : vector<2x8x8xf32>
    %cst_49 = arith.constant dense<0.000000e+00> : vector<2x8xf32>
    %98 = vector.multi_reduction <add>, %97, %cst_49 [2] : vector<2x8x8xf32> to vector<2x8xf32>
    %99 = vector.shape_cast %98 : vector<2x8xf32> to vector<2x8x1xf32>
    %100 = tpu.reciprocal %99 {approx = true} : vector<2x8x1xf32> -> vector<2x8x1xf32>
    %101 = vector.broadcast %100 : vector<2x8x1xf32> to vector<2x8x8xf32>
    %102 = arith.mulf %97, %101 : vector<2x8x8xf32>
    %c16_i32_50 = arith.constant 16 : i32
    %103 = vector.broadcast %c16_i32_50 : i32 to vector<1x1x32xi32>
    %104 = arith.cmpi sge, %34, %103 : vector<1x1x32xi32>
    %c24_i32 = arith.constant 24 : i32
    %105 = vector.broadcast %c24_i32 : i32 to vector<1x1x32xi32>
    %106 = arith.cmpi slt, %34, %105 : vector<1x1x32xi32>
    %107 = arith.andi %104, %106 : vector<1x1x32xi1>
    %cst_51 = arith.constant 0.000000e+00 : f32
    %108 = vector.shape_cast %107 : vector<1x1x32xi1> to vector<1x1x32xi1>
    %109 = vector.broadcast %108 : vector<1x1x32xi1> to vector<2x8x32xi1>
    %110 = vector.broadcast %cst_51 : f32 to vector<2x8x32xf32>
    %111 = arith.select %109, %33, %110 : vector<2x8x32xi1>, vector<2x8x32xf32>
    "tpu.trace_start"() <{level = 10 : i32, message = "bqk,bke->bqe"}> : () -> ()
    %cst_52 = arith.constant dense<0.000000e+00> : vector<2x8x32xf32>
    %112 = tpu.matmul %102, %111, %cst_52 {dimension_numbers = #tpu.dot_dimension_numbers<[2], [1], [1], [2], [0, 0, 0, 1, 1, 2], [0], [0]>} : vector<2x8x8xf32>, vector<2x8x32xf32>, vector<2x8x32xf32> -> vector<2x8x32xf32>
    "tpu.trace_stop"() : () -> ()
    %113 = arith.addf %87, %112 : vector<2x8x32xf32>
    %114 = vector.extract_strided_slice %25 {offsets = [0, 0, 24], sizes = [2, 8, 8], strides = [1, 1, 1]} : vector<2x8x32xf32> to vector<2x8x8xf32>
    %cst_53 = arith.constant 0.353553385 : f32
    %115 = vector.broadcast %cst_53 : f32 to vector<2x8x8xf32>
    %116 = arith.mulf %114, %115 : vector<2x8x8xf32>
    %117 = vector.extract_strided_slice %29 {offsets = [0, 0, 24], sizes = [2, 8, 8], strides = [1, 1, 1]} : vector<2x8x32xf32> to vector<2x8x8xf32>
    "tpu.trace_start"() <{level = 10 : i32, message = "bqd,bkd->bqk"}> : () -> ()
    %cst_54 = arith.constant dense<0.000000e+00> : vector<2x8x8xf32>
    %118 = tpu.matmul %116, %117, %cst_54 {dimension_numbers = #tpu.dot_dimension_numbers<[2], [2], [1], [1], [0, 0, 0, 1, 1, 1], [0], [0]>} : vector<2x8x8xf32>, vector<2x8x8xf32>, vector<2x8x8xf32> -> vector<2x8x8xf32>
    "tpu.trace_stop"() : () -> ()
    %cst_55 = arith.constant dense<0xFF800000> : vector<2x8xf32>
    %119 = vector.multi_reduction <maximumf>, %118, %cst_55 [2] : vector<2x8x8xf32> to vector<2x8xf32>
    %120 = vector.shape_cast %119 : vector<2x8xf32> to vector<2x8x1xf32>
    %121 = vector.broadcast %120 : vector<2x8x1xf32> to vector<2x8x8xf32>
    %122 = arith.subf %118, %121 : vector<2x8x8xf32>
    %123 = math.exp %122 : vector<2x8x8xf32>
    %cst_56 = arith.constant dense<0.000000e+00> : vector<2x8xf32>
    %124 = vector.multi_reduction <add>, %123, %cst_56 [2] : vector<2x8x8xf32> to vector<2x8xf32>
    %125 = vector.shape_cast %124 : vector<2x8xf32> to vector<2x8x1xf32>
    %126 = tpu.reciprocal %125 {approx = true} : vector<2x8x1xf32> -> vector<2x8x1xf32>
    %127 = vector.broadcast %126 : vector<2x8x1xf32> to vector<2x8x8xf32>
    %128 = arith.mulf %123, %127 : vector<2x8x8xf32>
    %c24_i32_57 = arith.constant 24 : i32
    %129 = vector.broadcast %c24_i32_57 : i32 to vector<1x1x32xi32>
    %130 = arith.cmpi sge, %34, %129 : vector<1x1x32xi32>
    %c32_i32 = arith.constant 32 : i32
    %131 = vector.broadcast %c32_i32 : i32 to vector<1x1x32xi32>
    %132 = arith.cmpi slt, %34, %131 : vector<1x1x32xi32>
    %133 = arith.andi %130, %132 : vector<1x1x32xi1>
    %cst_58 = arith.constant 0.000000e+00 : f32
    %134 = vector.shape_cast %133 : vector<1x1x32xi1> to vector<1x1x32xi1>
    %135 = vector.broadcast %134 : vector<1x1x32xi1> to vector<2x8x32xi1>
    %136 = vector.broadcast %cst_58 : f32 to vector<2x8x32xf32>
    %137 = arith.select %135, %33, %136 : vector<2x8x32xi1>, vector<2x8x32xf32>
    "tpu.trace_start"() <{level = 10 : i32, message = "bqk,bke->bqe"}> : () -> ()
    %cst_59 = arith.constant dense<0.000000e+00> : vector<2x8x32xf32>
    %138 = tpu.matmul %128, %137, %cst_59 {dimension_numbers = #tpu.dot_dimension_numbers<[2], [1], [1], [2], [0, 0, 0, 1, 1, 2], [0], [0]>} : vector<2x8x8xf32>, vector<2x8x32xf32>, vector<2x8x32xf32> -> vector<2x8x32xf32>
    "tpu.trace_stop"() : () -> ()
    %139 = arith.addf %113, %138 : vector<2x8x32xf32>
    %140 = vector.shape_cast %139 : vector<2x8x32xf32> to vector<16x32xf32>
    %cst_60 = arith.constant dense<0.000000e+00> : vector<16x32xf32>
    %141 = tpu.matmul %140, %19, %cst_60 {dimension_numbers = #tpu.dot_dimension_numbers<[1], [0], [0], [1], [0, 0, 1, 1], [], []>} : vector<16x32xf32>, vector<32x32xf32>, vector<16x32xf32> -> vector<16x32xf32>
    %142 = vector.broadcast %21 : vector<1x32xf32> to vector<16x32xf32>
    %143 = arith.addf %141, %142 : vector<16x32xf32>
    %144 = arith.addf %3, %143 : vector<16x32xf32>
    %c0_61 = arith.constant 0 : index
    %c0_62 = arith.constant 0 : index
    %c0_63 = arith.constant 0 : index
    %145 = vector.load %arg19[%c0_61, %c0_62, %c0_63] : memref<1x1x32xf32, #tpu.memory_space<vmem>>, vector<1x1x32xf32>
    %146 = vector.shape_cast %145 : vector<1x1x32xf32> to vector<1x32xf32>
    %c0_64 = arith.constant 0 : index
    %c0_65 = arith.constant 0 : index
    %c0_66 = arith.constant 0 : index
    %147 = vector.load %arg20[%c0_64, %c0_65, %c0_66] : memref<1x1x32xf32, #tpu.memory_space<vmem>>, vector<1x1x32xf32>
    %148 = vector.shape_cast %147 : vector<1x1x32xf32> to vector<1x32xf32>
    %cst_67 = arith.constant dense<0.000000e+00> : vector<16xf32>
    %149 = vector.multi_reduction <add>, %144, %cst_67 [1] : vector<16x32xf32> to vector<16xf32>
    %150 = vector.shape_cast %149 : vector<16xf32> to vector<16x1xf32>
    %cst_68 = arith.constant 3.200000e+01 : f32
    %151 = vector.broadcast %cst_68 : f32 to vector<16x1xf32>
    %152 = arith.divf %150, %151 : vector<16x1xf32>
    %153 = vector.broadcast %152 : vector<16x1xf32> to vector<16x32xf32>
    %154 = arith.subf %144, %153 : vector<16x32xf32>
    %155 = arith.mulf %154, %154 : vector<16x32xf32>
    %cst_69 = arith.constant dense<0.000000e+00> : vector<16xf32>
    %156 = vector.multi_reduction <add>, %155, %cst_69 [1] : vector<16x32xf32> to vector<16xf32>
    %157 = vector.shape_cast %156 : vector<16xf32> to vector<16x1xf32>
    %cst_70 = arith.constant 3.200000e+01 : f32
    %158 = vector.broadcast %cst_70 : f32 to vector<16x1xf32>
    %159 = arith.divf %157, %158 : vector<16x1xf32>
    %cst_71 = arith.constant 9.99999974E-6 : f32
    %160 = vector.broadcast %cst_71 : f32 to vector<16x1xf32>
    %161 = arith.addf %159, %160 : vector<16x1xf32>
    %162 = math.rsqrt %161 : vector<16x1xf32>
    %163 = vector.broadcast %162 : vector<16x1xf32> to vector<16x32xf32>
    %164 = arith.mulf %154, %163 : vector<16x32xf32>
    %165 = vector.broadcast %146 : vector<1x32xf32> to vector<16x32xf32>
    %166 = arith.mulf %164, %165 : vector<16x32xf32>
    %167 = vector.broadcast %148 : vector<1x32xf32> to vector<16x32xf32>
    %168 = arith.addf %166, %167 : vector<16x32xf32>
    %c0_72 = arith.constant 0 : index
    %c0_73 = arith.constant 0 : index
    %c0_74 = arith.constant 0 : index
    %169 = vector.load %arg11[%c0_72, %c0_73, %c0_74] : memref<1x32x32xf32, #tpu.memory_space<vmem>>, vector<1x32x32xf32>
    %170 = vector.shape_cast %169 : vector<1x32x32xf32> to vector<32x32xf32>
    %c0_75 = arith.constant 0 : index
    %c0_76 = arith.constant 0 : index
    %c0_77 = arith.constant 0 : index
    %171 = vector.load %arg12[%c0_75, %c0_76, %c0_77] : memref<1x32x32xf32, #tpu.memory_space<vmem>>, vector<1x32x32xf32>
    %172 = vector.shape_cast %171 : vector<1x32x32xf32> to vector<32x32xf32>
    %c0_78 = arith.constant 0 : index
    %c0_79 = arith.constant 0 : index
    %c0_80 = arith.constant 0 : index
    %173 = vector.load %arg13[%c0_78, %c0_79, %c0_80] : memref<1x32x32xf32, #tpu.memory_space<vmem>>, vector<1x32x32xf32>
    %174 = vector.shape_cast %173 : vector<1x32x32xf32> to vector<32x32xf32>
    %c0_81 = arith.constant 0 : index
    %c0_82 = arith.constant 0 : index
    %c0_83 = arith.constant 0 : index
    %175 = vector.load %arg14[%c0_81, %c0_82, %c0_83] : memref<1x1x32xf32, #tpu.memory_space<vmem>>, vector<1x1x32xf32>
    %176 = vector.shape_cast %175 : vector<1x1x32xf32> to vector<1x32xf32>
    %c0_84 = arith.constant 0 : index
    %c0_85 = arith.constant 0 : index
    %c0_86 = arith.constant 0 : index
    %177 = vector.load %arg15[%c0_84, %c0_85, %c0_86] : memref<1x1x32xf32, #tpu.memory_space<vmem>>, vector<1x1x32xf32>
    %178 = vector.shape_cast %177 : vector<1x1x32xf32> to vector<1x32xf32>
    %c0_87 = arith.constant 0 : index
    %c0_88 = arith.constant 0 : index
    %c0_89 = arith.constant 0 : index
    %179 = vector.load %arg16[%c0_87, %c0_88, %c0_89] : memref<1x1x32xf32, #tpu.memory_space<vmem>>, vector<1x1x32xf32>
    %180 = vector.shape_cast %179 : vector<1x1x32xf32> to vector<1x32xf32>
    %c0_90 = arith.constant 0 : index
    %c0_91 = arith.constant 0 : index
    %c0_92 = arith.constant 0 : index
    %181 = vector.load %arg17[%c0_90, %c0_91, %c0_92] : memref<1x32x32xf32, #tpu.memory_space<vmem>>, vector<1x32x32xf32>
    %182 = vector.shape_cast %181 : vector<1x32x32xf32> to vector<32x32xf32>
    %c0_93 = arith.constant 0 : index
    %c0_94 = arith.constant 0 : index
    %c0_95 = arith.constant 0 : index
    %183 = vector.load %arg18[%c0_93, %c0_94, %c0_95] : memref<1x1x32xf32, #tpu.memory_space<vmem>>, vector<1x1x32xf32>
    %184 = vector.shape_cast %183 : vector<1x1x32xf32> to vector<1x32xf32>
    %cst_96 = arith.constant dense<0.000000e+00> : vector<16x32xf32>
    %185 = tpu.matmul %168, %170, %cst_96 {dimension_numbers = #tpu.dot_dimension_numbers<[1], [0], [0], [1], [0, 0, 1, 1], [], []>} : vector<16x32xf32>, vector<32x32xf32>, vector<16x32xf32> -> vector<16x32xf32>
    %186 = vector.broadcast %176 : vector<1x32xf32> to vector<16x32xf32>
    %187 = arith.addf %185, %186 : vector<16x32xf32>
    %188 = vector.shape_cast %187 : vector<16x32xf32> to vector<2x8x32xf32>
    %cst_97 = arith.constant dense<0.000000e+00> : vector<16x32xf32>
    %189 = tpu.matmul %5, %172, %cst_97 {dimension_numbers = #tpu.dot_dimension_numbers<[1], [0], [0], [1], [0, 0, 1, 1], [], []>} : vector<16x32xf32>, vector<32x32xf32>, vector<16x32xf32> -> vector<16x32xf32>
    %190 = vector.broadcast %178 : vector<1x32xf32> to vector<16x32xf32>
    %191 = arith.addf %189, %190 : vector<16x32xf32>
    %192 = vector.shape_cast %191 : vector<16x32xf32> to vector<2x8x32xf32>
    %cst_98 = arith.constant dense<0.000000e+00> : vector<16x32xf32>
    %193 = tpu.matmul %5, %174, %cst_98 {dimension_numbers = #tpu.dot_dimension_numbers<[1], [0], [0], [1], [0, 0, 1, 1], [], []>} : vector<16x32xf32>, vector<32x32xf32>, vector<16x32xf32> -> vector<16x32xf32>
    %194 = vector.broadcast %180 : vector<1x32xf32> to vector<16x32xf32>
    %195 = arith.addf %193, %194 : vector<16x32xf32>
    %196 = vector.shape_cast %195 : vector<16x32xf32> to vector<2x8x32xf32>
    %197 = tpu.iota {dimensions = array<i32: 2>} : vector<1x1x32xi32>
    %cst_99 = arith.constant 0.000000e+00 : f32
    %198 = vector.broadcast %cst_99 : f32 to vector<2x8x32xf32>
    %199 = vector.extract_strided_slice %188 {offsets = [0, 0, 0], sizes = [2, 8, 8], strides = [1, 1, 1]} : vector<2x8x32xf32> to vector<2x8x8xf32>
    %cst_100 = arith.constant 0.353553385 : f32
    %200 = vector.broadcast %cst_100 : f32 to vector<2x8x8xf32>
    %201 = arith.mulf %199, %200 : vector<2x8x8xf32>
    %202 = vector.extract_strided_slice %192 {offsets = [0, 0, 0], sizes = [2, 8, 8], strides = [1, 1, 1]} : vector<2x8x32xf32> to vector<2x8x8xf32>
    "tpu.trace_start"() <{level = 10 : i32, message = "bqd,bkd->bqk"}> : () -> ()
    %cst_101 = arith.constant dense<0.000000e+00> : vector<2x8x8xf32>
    %203 = tpu.matmul %201, %202, %cst_101 {dimension_numbers = #tpu.dot_dimension_numbers<[2], [2], [1], [1], [0, 0, 0, 1, 1, 1], [0], [0]>} : vector<2x8x8xf32>, vector<2x8x8xf32>, vector<2x8x8xf32> -> vector<2x8x8xf32>
    "tpu.trace_stop"() : () -> ()
    %cst_102 = arith.constant dense<0xFF800000> : vector<2x8xf32>
    %204 = vector.multi_reduction <maximumf>, %203, %cst_102 [2] : vector<2x8x8xf32> to vector<2x8xf32>
    %205 = vector.shape_cast %204 : vector<2x8xf32> to vector<2x8x1xf32>
    %206 = vector.broadcast %205 : vector<2x8x1xf32> to vector<2x8x8xf32>
    %207 = arith.subf %203, %206 : vector<2x8x8xf32>
    %208 = math.exp %207 : vector<2x8x8xf32>
    %cst_103 = arith.constant dense<0.000000e+00> : vector<2x8xf32>
    %209 = vector.multi_reduction <add>, %208, %cst_103 [2] : vector<2x8x8xf32> to vector<2x8xf32>
    %210 = vector.shape_cast %209 : vector<2x8xf32> to vector<2x8x1xf32>
    %211 = tpu.reciprocal %210 {approx = true} : vector<2x8x1xf32> -> vector<2x8x1xf32>
    %212 = vector.broadcast %211 : vector<2x8x1xf32> to vector<2x8x8xf32>
    %213 = arith.mulf %208, %212 : vector<2x8x8xf32>
    %c0_i32_104 = arith.constant 0 : i32
    %214 = vector.broadcast %c0_i32_104 : i32 to vector<1x1x32xi32>
    %215 = arith.cmpi sge, %197, %214 : vector<1x1x32xi32>
    %c8_i32_105 = arith.constant 8 : i32
    %216 = vector.broadcast %c8_i32_105 : i32 to vector<1x1x32xi32>
    %217 = arith.cmpi slt, %197, %216 : vector<1x1x32xi32>
    %218 = arith.andi %215, %217 : vector<1x1x32xi1>
    %cst_106 = arith.constant 0.000000e+00 : f32
    %219 = vector.shape_cast %218 : vector<1x1x32xi1> to vector<1x1x32xi1>
    %220 = vector.broadcast %219 : vector<1x1x32xi1> to vector<2x8x32xi1>
    %221 = vector.broadcast %cst_106 : f32 to vector<2x8x32xf32>
    %222 = arith.select %220, %196, %221 : vector<2x8x32xi1>, vector<2x8x32xf32>
    "tpu.trace_start"() <{level = 10 : i32, message = "bqk,bke->bqe"}> : () -> ()
    %cst_107 = arith.constant dense<0.000000e+00> : vector<2x8x32xf32>
    %223 = tpu.matmul %213, %222, %cst_107 {dimension_numbers = #tpu.dot_dimension_numbers<[2], [1], [1], [2], [0, 0, 0, 1, 1, 2], [0], [0]>} : vector<2x8x8xf32>, vector<2x8x32xf32>, vector<2x8x32xf32> -> vector<2x8x32xf32>
    "tpu.trace_stop"() : () -> ()
    %224 = arith.addf %198, %223 : vector<2x8x32xf32>
    %225 = vector.extract_strided_slice %188 {offsets = [0, 0, 8], sizes = [2, 8, 8], strides = [1, 1, 1]} : vector<2x8x32xf32> to vector<2x8x8xf32>
    %cst_108 = arith.constant 0.353553385 : f32
    %226 = vector.broadcast %cst_108 : f32 to vector<2x8x8xf32>
    %227 = arith.mulf %225, %226 : vector<2x8x8xf32>
    %228 = vector.extract_strided_slice %192 {offsets = [0, 0, 8], sizes = [2, 8, 8], strides = [1, 1, 1]} : vector<2x8x32xf32> to vector<2x8x8xf32>
    "tpu.trace_start"() <{level = 10 : i32, message = "bqd,bkd->bqk"}> : () -> ()
    %cst_109 = arith.constant dense<0.000000e+00> : vector<2x8x8xf32>
    %229 = tpu.matmul %227, %228, %cst_109 {dimension_numbers = #tpu.dot_dimension_numbers<[2], [2], [1], [1], [0, 0, 0, 1, 1, 1], [0], [0]>} : vector<2x8x8xf32>, vector<2x8x8xf32>, vector<2x8x8xf32> -> vector<2x8x8xf32>
    "tpu.trace_stop"() : () -> ()
    %cst_110 = arith.constant dense<0xFF800000> : vector<2x8xf32>
    %230 = vector.multi_reduction <maximumf>, %229, %cst_110 [2] : vector<2x8x8xf32> to vector<2x8xf32>
    %231 = vector.shape_cast %230 : vector<2x8xf32> to vector<2x8x1xf32>
    %232 = vector.broadcast %231 : vector<2x8x1xf32> to vector<2x8x8xf32>
    %233 = arith.subf %229, %232 : vector<2x8x8xf32>
    %234 = math.exp %233 : vector<2x8x8xf32>
    %cst_111 = arith.constant dense<0.000000e+00> : vector<2x8xf32>
    %235 = vector.multi_reduction <add>, %234, %cst_111 [2] : vector<2x8x8xf32> to vector<2x8xf32>
    %236 = vector.shape_cast %235 : vector<2x8xf32> to vector<2x8x1xf32>
    %237 = tpu.reciprocal %236 {approx = true} : vector<2x8x1xf32> -> vector<2x8x1xf32>
    %238 = vector.broadcast %237 : vector<2x8x1xf32> to vector<2x8x8xf32>
    %239 = arith.mulf %234, %238 : vector<2x8x8xf32>
    %c8_i32_112 = arith.constant 8 : i32
    %240 = vector.broadcast %c8_i32_112 : i32 to vector<1x1x32xi32>
    %241 = arith.cmpi sge, %197, %240 : vector<1x1x32xi32>
    %c16_i32_113 = arith.constant 16 : i32
    %242 = vector.broadcast %c16_i32_113 : i32 to vector<1x1x32xi32>
    %243 = arith.cmpi slt, %197, %242 : vector<1x1x32xi32>
    %244 = arith.andi %241, %243 : vector<1x1x32xi1>
    %cst_114 = arith.constant 0.000000e+00 : f32
    %245 = vector.shape_cast %244 : vector<1x1x32xi1> to vector<1x1x32xi1>
    %246 = vector.broadcast %245 : vector<1x1x32xi1> to vector<2x8x32xi1>
    %247 = vector.broadcast %cst_114 : f32 to vector<2x8x32xf32>
    %248 = arith.select %246, %196, %247 : vector<2x8x32xi1>, vector<2x8x32xf32>
    "tpu.trace_start"() <{level = 10 : i32, message = "bqk,bke->bqe"}> : () -> ()
    %cst_115 = arith.constant dense<0.000000e+00> : vector<2x8x32xf32>
    %249 = tpu.matmul %239, %248, %cst_115 {dimension_numbers = #tpu.dot_dimension_numbers<[2], [1], [1], [2], [0, 0, 0, 1, 1, 2], [0], [0]>} : vector<2x8x8xf32>, vector<2x8x32xf32>, vector<2x8x32xf32> -> vector<2x8x32xf32>
    "tpu.trace_stop"() : () -> ()
    %250 = arith.addf %224, %249 : vector<2x8x32xf32>
    %251 = vector.extract_strided_slice %188 {offsets = [0, 0, 16], sizes = [2, 8, 8], strides = [1, 1, 1]} : vector<2x8x32xf32> to vector<2x8x8xf32>
    %cst_116 = arith.constant 0.353553385 : f32
    %252 = vector.broadcast %cst_116 : f32 to vector<2x8x8xf32>
    %253 = arith.mulf %251, %252 : vector<2x8x8xf32>
    %254 = vector.extract_strided_slice %192 {offsets = [0, 0, 16], sizes = [2, 8, 8], strides = [1, 1, 1]} : vector<2x8x32xf32> to vector<2x8x8xf32>
    "tpu.trace_start"() <{level = 10 : i32, message = "bqd,bkd->bqk"}> : () -> ()
    %cst_117 = arith.constant dense<0.000000e+00> : vector<2x8x8xf32>
    %255 = tpu.matmul %253, %254, %cst_117 {dimension_numbers = #tpu.dot_dimension_numbers<[2], [2], [1], [1], [0, 0, 0, 1, 1, 1], [0], [0]>} : vector<2x8x8xf32>, vector<2x8x8xf32>, vector<2x8x8xf32> -> vector<2x8x8xf32>
    "tpu.trace_stop"() : () -> ()
    %cst_118 = arith.constant dense<0xFF800000> : vector<2x8xf32>
    %256 = vector.multi_reduction <maximumf>, %255, %cst_118 [2] : vector<2x8x8xf32> to vector<2x8xf32>
    %257 = vector.shape_cast %256 : vector<2x8xf32> to vector<2x8x1xf32>
    %258 = vector.broadcast %257 : vector<2x8x1xf32> to vector<2x8x8xf32>
    %259 = arith.subf %255, %258 : vector<2x8x8xf32>
    %260 = math.exp %259 : vector<2x8x8xf32>
    %cst_119 = arith.constant dense<0.000000e+00> : vector<2x8xf32>
    %261 = vector.multi_reduction <add>, %260, %cst_119 [2] : vector<2x8x8xf32> to vector<2x8xf32>
    %262 = vector.shape_cast %261 : vector<2x8xf32> to vector<2x8x1xf32>
    %263 = tpu.reciprocal %262 {approx = true} : vector<2x8x1xf32> -> vector<2x8x1xf32>
    %264 = vector.broadcast %263 : vector<2x8x1xf32> to vector<2x8x8xf32>
    %265 = arith.mulf %260, %264 : vector<2x8x8xf32>
    %c16_i32_120 = arith.constant 16 : i32
    %266 = vector.broadcast %c16_i32_120 : i32 to vector<1x1x32xi32>
    %267 = arith.cmpi sge, %197, %266 : vector<1x1x32xi32>
    %c24_i32_121 = arith.constant 24 : i32
    %268 = vector.broadcast %c24_i32_121 : i32 to vector<1x1x32xi32>
    %269 = arith.cmpi slt, %197, %268 : vector<1x1x32xi32>
    %270 = arith.andi %267, %269 : vector<1x1x32xi1>
    %cst_122 = arith.constant 0.000000e+00 : f32
    %271 = vector.shape_cast %270 : vector<1x1x32xi1> to vector<1x1x32xi1>
    %272 = vector.broadcast %271 : vector<1x1x32xi1> to vector<2x8x32xi1>
    %273 = vector.broadcast %cst_122 : f32 to vector<2x8x32xf32>
    %274 = arith.select %272, %196, %273 : vector<2x8x32xi1>, vector<2x8x32xf32>
    "tpu.trace_start"() <{level = 10 : i32, message = "bqk,bke->bqe"}> : () -> ()
    %cst_123 = arith.constant dense<0.000000e+00> : vector<2x8x32xf32>
    %275 = tpu.matmul %265, %274, %cst_123 {dimension_numbers = #tpu.dot_dimension_numbers<[2], [1], [1], [2], [0, 0, 0, 1, 1, 2], [0], [0]>} : vector<2x8x8xf32>, vector<2x8x32xf32>, vector<2x8x32xf32> -> vector<2x8x32xf32>
    "tpu.trace_stop"() : () -> ()
    %276 = arith.addf %250, %275 : vector<2x8x32xf32>
    %277 = vector.extract_strided_slice %188 {offsets = [0, 0, 24], sizes = [2, 8, 8], strides = [1, 1, 1]} : vector<2x8x32xf32> to vector<2x8x8xf32>
    %cst_124 = arith.constant 0.353553385 : f32
    %278 = vector.broadcast %cst_124 : f32 to vector<2x8x8xf32>
    %279 = arith.mulf %277, %278 : vector<2x8x8xf32>
    %280 = vector.extract_strided_slice %192 {offsets = [0, 0, 24], sizes = [2, 8, 8], strides = [1, 1, 1]} : vector<2x8x32xf32> to vector<2x8x8xf32>
    "tpu.trace_start"() <{level = 10 : i32, message = "bqd,bkd->bqk"}> : () -> ()
    %cst_125 = arith.constant dense<0.000000e+00> : vector<2x8x8xf32>
    %281 = tpu.matmul %279, %280, %cst_125 {dimension_numbers = #tpu.dot_dimension_numbers<[2], [2], [1], [1], [0, 0, 0, 1, 1, 1], [0], [0]>} : vector<2x8x8xf32>, vector<2x8x8xf32>, vector<2x8x8xf32> -> vector<2x8x8xf32>
    "tpu.trace_stop"() : () -> ()
    %cst_126 = arith.constant dense<0xFF800000> : vector<2x8xf32>
    %282 = vector.multi_reduction <maximumf>, %281, %cst_126 [2] : vector<2x8x8xf32> to vector<2x8xf32>
    %283 = vector.shape_cast %282 : vector<2x8xf32> to vector<2x8x1xf32>
    %284 = vector.broadcast %283 : vector<2x8x1xf32> to vector<2x8x8xf32>
    %285 = arith.subf %281, %284 : vector<2x8x8xf32>
    %286 = math.exp %285 : vector<2x8x8xf32>
    %cst_127 = arith.constant dense<0.000000e+00> : vector<2x8xf32>
    %287 = vector.multi_reduction <add>, %286, %cst_127 [2] : vector<2x8x8xf32> to vector<2x8xf32>
    %288 = vector.shape_cast %287 : vector<2x8xf32> to vector<2x8x1xf32>
    %289 = tpu.reciprocal %288 {approx = true} : vector<2x8x1xf32> -> vector<2x8x1xf32>
    %290 = vector.broadcast %289 : vector<2x8x1xf32> to vector<2x8x8xf32>
    %291 = arith.mulf %286, %290 : vector<2x8x8xf32>
    %c24_i32_128 = arith.constant 24 : i32
    %292 = vector.broadcast %c24_i32_128 : i32 to vector<1x1x32xi32>
    %293 = arith.cmpi sge, %197, %292 : vector<1x1x32xi32>
    %c32_i32_129 = arith.constant 32 : i32
    %294 = vector.broadcast %c32_i32_129 : i32 to vector<1x1x32xi32>
    %295 = arith.cmpi slt, %197, %294 : vector<1x1x32xi32>
    %296 = arith.andi %293, %295 : vector<1x1x32xi1>
    %cst_130 = arith.constant 0.000000e+00 : f32
    %297 = vector.shape_cast %296 : vector<1x1x32xi1> to vector<1x1x32xi1>
    %298 = vector.broadcast %297 : vector<1x1x32xi1> to vector<2x8x32xi1>
    %299 = vector.broadcast %cst_130 : f32 to vector<2x8x32xf32>
    %300 = arith.select %298, %196, %299 : vector<2x8x32xi1>, vector<2x8x32xf32>
    "tpu.trace_start"() <{level = 10 : i32, message = "bqk,bke->bqe"}> : () -> ()
    %cst_131 = arith.constant dense<0.000000e+00> : vector<2x8x32xf32>
    %301 = tpu.matmul %291, %300, %cst_131 {dimension_numbers = #tpu.dot_dimension_numbers<[2], [1], [1], [2], [0, 0, 0, 1, 1, 2], [0], [0]>} : vector<2x8x8xf32>, vector<2x8x32xf32>, vector<2x8x32xf32> -> vector<2x8x32xf32>
    "tpu.trace_stop"() : () -> ()
    %302 = arith.addf %276, %301 : vector<2x8x32xf32>
    %303 = vector.shape_cast %302 : vector<2x8x32xf32> to vector<16x32xf32>
    %cst_132 = arith.constant dense<0.000000e+00> : vector<16x32xf32>
    %304 = tpu.matmul %303, %182, %cst_132 {dimension_numbers = #tpu.dot_dimension_numbers<[1], [0], [0], [1], [0, 0, 1, 1], [], []>} : vector<16x32xf32>, vector<32x32xf32>, vector<16x32xf32> -> vector<16x32xf32>
    %305 = vector.broadcast %184 : vector<1x32xf32> to vector<16x32xf32>
    %306 = arith.addf %304, %305 : vector<16x32xf32>
    %307 = arith.addf %168, %306 : vector<16x32xf32>
    %c0_133 = arith.constant 0 : index
    %c0_134 = arith.constant 0 : index
    %c0_135 = arith.constant 0 : index
    %308 = vector.load %arg21[%c0_133, %c0_134, %c0_135] : memref<1x1x32xf32, #tpu.memory_space<vmem>>, vector<1x1x32xf32>
    %309 = vector.shape_cast %308 : vector<1x1x32xf32> to vector<1x32xf32>
    %c0_136 = arith.constant 0 : index
    %c0_137 = arith.constant 0 : index
    %c0_138 = arith.constant 0 : index
    %310 = vector.load %arg22[%c0_136, %c0_137, %c0_138] : memref<1x1x32xf32, #tpu.memory_space<vmem>>, vector<1x1x32xf32>
    %311 = vector.shape_cast %310 : vector<1x1x32xf32> to vector<1x32xf32>
    %cst_139 = arith.constant dense<0.000000e+00> : vector<16xf32>
    %312 = vector.multi_reduction <add>, %307, %cst_139 [1] : vector<16x32xf32> to vector<16xf32>
    %313 = vector.shape_cast %312 : vector<16xf32> to vector<16x1xf32>
    %cst_140 = arith.constant 3.200000e+01 : f32
    %314 = vector.broadcast %cst_140 : f32 to vector<16x1xf32>
    %315 = arith.divf %313, %314 : vector<16x1xf32>
    %316 = vector.broadcast %315 : vector<16x1xf32> to vector<16x32xf32>
    %317 = arith.subf %307, %316 : vector<16x32xf32>
    %318 = arith.mulf %317, %317 : vector<16x32xf32>
    %cst_141 = arith.constant dense<0.000000e+00> : vector<16xf32>
    %319 = vector.multi_reduction <add>, %318, %cst_141 [1] : vector<16x32xf32> to vector<16xf32>
    %320 = vector.shape_cast %319 : vector<16xf32> to vector<16x1xf32>
    %cst_142 = arith.constant 3.200000e+01 : f32
    %321 = vector.broadcast %cst_142 : f32 to vector<16x1xf32>
    %322 = arith.divf %320, %321 : vector<16x1xf32>
    %cst_143 = arith.constant 9.99999974E-6 : f32
    %323 = vector.broadcast %cst_143 : f32 to vector<16x1xf32>
    %324 = arith.addf %322, %323 : vector<16x1xf32>
    %325 = math.rsqrt %324 : vector<16x1xf32>
    %326 = vector.broadcast %325 : vector<16x1xf32> to vector<16x32xf32>
    %327 = arith.mulf %317, %326 : vector<16x32xf32>
    %328 = vector.broadcast %309 : vector<1x32xf32> to vector<16x32xf32>
    %329 = arith.mulf %327, %328 : vector<16x32xf32>
    %330 = vector.broadcast %311 : vector<1x32xf32> to vector<16x32xf32>
    %331 = arith.addf %329, %330 : vector<16x32xf32>
    %c0_144 = arith.constant 0 : index
    %c0_145 = arith.constant 0 : index
    %c0_146 = arith.constant 0 : index
    %332 = vector.load %arg25[%c0_144, %c0_145, %c0_146] : memref<1x32x2048xf32, #tpu.memory_space<vmem>>, vector<1x32x2048xf32>
    %333 = vector.shape_cast %332 : vector<1x32x2048xf32> to vector<32x2048xf32>
    %cst_147 = arith.constant dense<0.000000e+00> : vector<16x2048xf32>
    %334 = tpu.matmul %331, %333, %cst_147 {dimension_numbers = #tpu.dot_dimension_numbers<[1], [0], [0], [1], [0, 0, 1, 1], [], []>} : vector<16x32xf32>, vector<32x2048xf32>, vector<16x2048xf32> -> vector<16x2048xf32>
    %c0_148 = arith.constant 0 : index
    %c0_149 = arith.constant 0 : index
    %c0_150 = arith.constant 0 : index
    %335 = vector.load %arg26[%c0_148, %c0_149, %c0_150] : memref<1x1x2048xf32, #tpu.memory_space<vmem>>, vector<1x1x2048xf32>
    %336 = vector.shape_cast %335 : vector<1x1x2048xf32> to vector<1x2048xf32>
    %337 = vector.broadcast %336 : vector<1x2048xf32> to vector<16x2048xf32>
    %338 = arith.addf %334, %337 : vector<16x2048xf32>
    %cst_151 = arith.constant 0.000000e+00 : f32
    %339 = vector.broadcast %cst_151 : f32 to vector<16x2048xf32>
    %340 = arith.maximumf %338, %339 : vector<16x2048xf32>
    %c0_152 = arith.constant 0 : index
    %c0_153 = arith.constant 0 : index
    %c0_154 = arith.constant 0 : index
    %341 = vector.load %arg27[%c0_152, %c0_153, %c0_154] : memref<1x2048x32xf32, #tpu.memory_space<vmem>>, vector<1x2048x32xf32>
    %342 = vector.shape_cast %341 : vector<1x2048x32xf32> to vector<2048x32xf32>
    %cst_155 = arith.constant dense<0.000000e+00> : vector<16x32xf32>
    %343 = tpu.matmul %340, %342, %cst_155 {dimension_numbers = #tpu.dot_dimension_numbers<[1], [0], [0], [1], [0, 0, 1, 1], [], []>} : vector<16x2048xf32>, vector<2048x32xf32>, vector<16x32xf32> -> vector<16x32xf32>
    %c0_156 = arith.constant 0 : index
    %c0_157 = arith.constant 0 : index
    %c0_158 = arith.constant 0 : index
    %344 = vector.load %arg28[%c0_156, %c0_157, %c0_158] : memref<1x1x32xf32, #tpu.memory_space<vmem>>, vector<1x1x32xf32>
    %345 = vector.shape_cast %344 : vector<1x1x32xf32> to vector<1x32xf32>
    %346 = vector.broadcast %345 : vector<1x32xf32> to vector<16x32xf32>
    %347 = arith.addf %343, %346 : vector<16x32xf32>
    %348 = arith.addf %331, %347 : vector<16x32xf32>
    %c0_159 = arith.constant 0 : index
    %c0_160 = arith.constant 0 : index
    %c0_161 = arith.constant 0 : index
    %349 = vector.load %arg23[%c0_159, %c0_160, %c0_161] : memref<1x1x32xf32, #tpu.memory_space<vmem>>, vector<1x1x32xf32>
    %350 = vector.shape_cast %349 : vector<1x1x32xf32> to vector<1x32xf32>
    %c0_162 = arith.constant 0 : index
    %c0_163 = arith.constant 0 : index
    %c0_164 = arith.constant 0 : index
    %351 = vector.load %arg24[%c0_162, %c0_163, %c0_164] : memref<1x1x32xf32, #tpu.memory_space<vmem>>, vector<1x1x32xf32>
    %352 = vector.shape_cast %351 : vector<1x1x32xf32> to vector<1x32xf32>
    %cst_165 = arith.constant dense<0.000000e+00> : vector<16xf32>
    %353 = vector.multi_reduction <add>, %348, %cst_165 [1] : vector<16x32xf32> to vector<16xf32>
    %354 = vector.shape_cast %353 : vector<16xf32> to vector<16x1xf32>
    %cst_166 = arith.constant 3.200000e+01 : f32
    %355 = vector.broadcast %cst_166 : f32 to vector<16x1xf32>
    %356 = arith.divf %354, %355 : vector<16x1xf32>
    %357 = vector.broadcast %356 : vector<16x1xf32> to vector<16x32xf32>
    %358 = arith.subf %348, %357 : vector<16x32xf32>
    %359 = arith.mulf %358, %358 : vector<16x32xf32>
    %cst_167 = arith.constant dense<0.000000e+00> : vector<16xf32>
    %360 = vector.multi_reduction <add>, %359, %cst_167 [1] : vector<16x32xf32> to vector<16xf32>
    %361 = vector.shape_cast %360 : vector<16xf32> to vector<16x1xf32>
    %cst_168 = arith.constant 3.200000e+01 : f32
    %362 = vector.broadcast %cst_168 : f32 to vector<16x1xf32>
    %363 = arith.divf %361, %362 : vector<16x1xf32>
    %cst_169 = arith.constant 9.99999974E-6 : f32
    %364 = vector.broadcast %cst_169 : f32 to vector<16x1xf32>
    %365 = arith.addf %363, %364 : vector<16x1xf32>
    %366 = math.rsqrt %365 : vector<16x1xf32>
    %367 = vector.broadcast %366 : vector<16x1xf32> to vector<16x32xf32>
    %368 = arith.mulf %358, %367 : vector<16x32xf32>
    %369 = vector.broadcast %350 : vector<1x32xf32> to vector<16x32xf32>
    %370 = arith.mulf %368, %369 : vector<16x32xf32>
    %371 = vector.broadcast %352 : vector<1x32xf32> to vector<16x32xf32>
    %372 = arith.addf %370, %371 : vector<16x32xf32>
    %c0_170 = arith.constant 0 : index
    %c0_171 = arith.constant 0 : index
    %373 = vector.load %arg34[%c0_170, %c0_171] : memref<16x32xf32, #tpu.memory_space<vmem>>, vector<16x32xf32>
    tpu.vector_store %arg34[%c0_170, %c0_171], %372 {strides = array<i32>} : memref<16x32xf32, #tpu.memory_space<vmem>>, vector<16x32xf32>,
    %c1_i32 = arith.constant 1 : i32
    %374 = arith.cmpi eq, %arg0, %c1_i32 : i32
    %375 = arith.extui %374 : i1 to i32
    %c0_i32_172 = arith.constant 0 : i32
    %376 = arith.cmpi ne, %375, %c0_i32_172 : i32
    scf.if %376 {
      %c0_173 = arith.constant 0 : index
      %c0_174 = arith.constant 0 : index
      %377 = vector.load %arg29[%c0_173, %c0_174] : memref<1x32xf32, #tpu.memory_space<vmem>>, vector<1x32xf32>
      %c0_175 = arith.constant 0 : index
      %c0_176 = arith.constant 0 : index
      %378 = vector.load %arg30[%c0_175, %c0_176] : memref<1x32xf32, #tpu.memory_space<vmem>>, vector<1x32xf32>
      %cst_177 = arith.constant dense<0.000000e+00> : vector<16xf32>
      %379 = vector.multi_reduction <add>, %372, %cst_177 [1] : vector<16x32xf32> to vector<16xf32>
      %380 = vector.shape_cast %379 : vector<16xf32> to vector<16x1xf32>
      %cst_178 = arith.constant 3.200000e+01 : f32
      %381 = vector.broadcast %cst_178 : f32 to vector<16x1xf32>
      %382 = arith.divf %380, %381 : vector<16x1xf32>
      %383 = vector.broadcast %382 : vector<16x1xf32> to vector<16x32xf32>
      %384 = arith.subf %372, %383 : vector<16x32xf32>
      %385 = arith.mulf %384, %384 : vector<16x32xf32>
      %cst_179 = arith.constant dense<0.000000e+00> : vector<16xf32>
      %386 = vector.multi_reduction <add>, %385, %cst_179 [1] : vector<16x32xf32> to vector<16xf32>
      %387 = vector.shape_cast %386 : vector<16xf32> to vector<16x1xf32>
      %cst_180 = arith.constant 3.200000e+01 : f32
      %388 = vector.broadcast %cst_180 : f32 to vector<16x1xf32>
      %389 = arith.divf %387, %388 : vector<16x1xf32>
      %cst_181 = arith.constant 9.99999974E-6 : f32
      %390 = vector.broadcast %cst_181 : f32 to vector<16x1xf32>
      %391 = arith.addf %389, %390 : vector<16x1xf32>
      %392 = math.rsqrt %391 : vector<16x1xf32>
      %393 = vector.broadcast %392 : vector<16x1xf32> to vector<16x32xf32>
      %394 = arith.mulf %384, %393 : vector<16x32xf32>
      %395 = vector.broadcast %377 : vector<1x32xf32> to vector<16x32xf32>
      %396 = arith.mulf %394, %395 : vector<16x32xf32>
      %397 = vector.broadcast %378 : vector<1x32xf32> to vector<16x32xf32>
      %398 = arith.addf %396, %397 : vector<16x32xf32>
      %c0_182 = arith.constant 0 : index
      %c0_183 = arith.constant 0 : index
      %399 = vector.load %arg31[%c0_182, %c0_183] : memref<32x128xf32, #tpu.memory_space<vmem>>, vector<32x128xf32>
      %cst_184 = arith.constant dense<0.000000e+00> : vector<16x128xf32>
      %400 = tpu.matmul %398, %399, %cst_184 {dimension_numbers = #tpu.dot_dimension_numbers<[1], [0], [0], [1], [0, 0, 1, 1], [], []>} : vector<16x32xf32>, vector<32x128xf32>, vector<16x128xf32> -> vector<16x128xf32>
      %c0_185 = arith.constant 0 : index
      %c0_186 = arith.constant 0 : index
      %401 = vector.load %arg32[%c0_185, %c0_186] : memref<1x128xf32, #tpu.memory_space<vmem>>, vector<1x128xf32>
      %402 = vector.broadcast %401 : vector<1x128xf32> to vector<16x128xf32>
      %403 = arith.addf %400, %402 : vector<16x128xf32>
      %c0_187 = arith.constant 0 : index
      %c0_188 = arith.constant 0 : index
      %404 = vector.load %arg33[%c0_187, %c0_188] : memref<16x128xf32, #tpu.memory_space<vmem>>, vector<16x128xf32>
      tpu.vector_store %arg33[%c0_187, %c0_188], %403 {strides = array<i32>} : memref<16x128xf32, #tpu.memory_space<vmem>>, vector<16x128xf32>,
    } else {
    }
    return
  }
  func.func @transform_0(%arg0: i32) -> (i32, i32) {
    %c0_i32 = arith.constant 0 : i32
    %c0_i32_0 = arith.constant 0 : i32
    %c0_i32_1 = arith.constant 0 : i32
    return %c0_i32, %c0_i32_0 : i32, i32
  }
  func.func @transform_1(%arg0: i32) -> (i32, i32, i32) {
    %c0_i32 = arith.constant 0 : i32
    %c0_i32_0 = arith.constant 0 : i32
    %c0_i32_1 = arith.constant 0 : i32
    %c0_i32_2 = arith.constant 0 : i32
    return %c0_i32, %c0_i32_0, %c0_i32_1 : i32, i32, i32
  }
  func.func @transform_2(%arg0: i32) -> (i32, i32, i32) {
    %c0_i32 = arith.constant 0 : i32
    %c0_i32_0 = arith.constant 0 : i32
    %c0_i32_1 = arith.constant 0 : i32
    return %arg0, %c0_i32, %c0_i32_0 : i32, i32, i32
  }
  func.func @transform_3(%arg0: i32) -> (i32, i32, i32) {
    %c0_i32 = arith.constant 0 : i32
    %c0_i32_0 = arith.constant 0 : i32
    %c0_i32_1 = arith.constant 0 : i32
    return %arg0, %c0_i32, %c0_i32_0 : i32, i32, i32
  }
  func.func @transform_4(%arg0: i32) -> (i32, i32, i32) {
    %c0_i32 = arith.constant 0 : i32
    %c0_i32_0 = arith.constant 0 : i32
    %c0_i32_1 = arith.constant 0 : i32
    return %arg0, %c0_i32, %c0_i32_0 : i32, i32, i32
  }
  func.func @transform_5(%arg0: i32) -> (i32, i32, i32) {
    %c0_i32 = arith.constant 0 : i32
    %c0_i32_0 = arith.constant 0 : i32
    %c0_i32_1 = arith.constant 0 : i32
    return %arg0, %c0_i32, %c0_i32_0 : i32, i32, i32
  }
  func.func @transform_6(%arg0: i32) -> (i32, i32, i32) {
    %c0_i32 = arith.constant 0 : i32
    %c0_i32_0 = arith.constant 0 : i32
    %c0_i32_1 = arith.constant 0 : i32
    return %arg0, %c0_i32, %c0_i32_0 : i32, i32, i32
  }
  func.func @transform_7(%arg0: i32) -> (i32, i32, i32) {
    %c0_i32 = arith.constant 0 : i32
    %c0_i32_0 = arith.constant 0 : i32
    %c0_i32_1 = arith.constant 0 : i32
    return %arg0, %c0_i32, %c0_i32_0 : i32, i32, i32
  }
  func.func @transform_8(%arg0: i32) -> (i32, i32, i32) {
    %c0_i32 = arith.constant 0 : i32
    %c0_i32_0 = arith.constant 0 : i32
    %c0_i32_1 = arith.constant 0 : i32
    return %arg0, %c0_i32, %c0_i32_0 : i32, i32, i32
  }
  func.func @transform_9(%arg0: i32) -> (i32, i32, i32) {
    %c0_i32 = arith.constant 0 : i32
    %c0_i32_0 = arith.constant 0 : i32
    %c0_i32_1 = arith.constant 0 : i32
    return %arg0, %c0_i32, %c0_i32_0 : i32, i32, i32
  }
  func.func @transform_10(%arg0: i32) -> (i32, i32, i32) {
    %c0_i32 = arith.constant 0 : i32
    %c0_i32_0 = arith.constant 0 : i32
    %c0_i32_1 = arith.constant 0 : i32
    return %arg0, %c0_i32, %c0_i32_0 : i32, i32, i32
  }
  func.func @transform_11(%arg0: i32) -> (i32, i32, i32) {
    %c0_i32 = arith.constant 0 : i32
    %c0_i32_0 = arith.constant 0 : i32
    %c0_i32_1 = arith.constant 0 : i32
    return %arg0, %c0_i32, %c0_i32_0 : i32, i32, i32
  }
  func.func @transform_12(%arg0: i32) -> (i32, i32, i32) {
    %c0_i32 = arith.constant 0 : i32
    %c0_i32_0 = arith.constant 0 : i32
    %c0_i32_1 = arith.constant 0 : i32
    return %arg0, %c0_i32, %c0_i32_0 : i32, i32, i32
  }
  func.func @transform_13(%arg0: i32) -> (i32, i32, i32) {
    %c0_i32 = arith.constant 0 : i32
    %c0_i32_0 = arith.constant 0 : i32
    %c0_i32_1 = arith.constant 0 : i32
    return %arg0, %c0_i32, %c0_i32_0 : i32, i32, i32
  }
  func.func @transform_14(%arg0: i32) -> (i32, i32, i32) {
    %c0_i32 = arith.constant 0 : i32
    %c0_i32_0 = arith.constant 0 : i32
    %c0_i32_1 = arith.constant 0 : i32
    return %arg0, %c0_i32, %c0_i32_0 : i32, i32, i32
  }
  func.func @transform_15(%arg0: i32) -> (i32, i32, i32) {
    %c0_i32 = arith.constant 0 : i32
    %c0_i32_0 = arith.constant 0 : i32
    %c0_i32_1 = arith.constant 0 : i32
    return %arg0, %c0_i32, %c0_i32_0 : i32, i32, i32
  }
  func.func @transform_16(%arg0: i32) -> (i32, i32, i32) {
    %c0_i32 = arith.constant 0 : i32
    %c0_i32_0 = arith.constant 0 : i32
    %c0_i32_1 = arith.constant 0 : i32
    return %arg0, %c0_i32, %c0_i32_0 : i32, i32, i32
  }
  func.func @transform_17(%arg0: i32) -> (i32, i32, i32) {
    %c0_i32 = arith.constant 0 : i32
    %c0_i32_0 = arith.constant 0 : i32
    %c0_i32_1 = arith.constant 0 : i32
    return %arg0, %c0_i32, %c0_i32_0 : i32, i32, i32
  }
  func.func @transform_18(%arg0: i32) -> (i32, i32, i32) {
    %c0_i32 = arith.constant 0 : i32
    %c0_i32_0 = arith.constant 0 : i32
    %c0_i32_1 = arith.constant 0 : i32
    return %arg0, %c0_i32, %c0_i32_0 : i32, i32, i32
  }
  func.func @transform_19(%arg0: i32) -> (i32, i32, i32) {
    %c0_i32 = arith.constant 0 : i32
    %c0_i32_0 = arith.constant 0 : i32
    %c0_i32_1 = arith.constant 0 : i32
    return %arg0, %c0_i32, %c0_i32_0 : i32, i32, i32
  }
  func.func @transform_20(%arg0: i32) -> (i32, i32, i32) {
    %c0_i32 = arith.constant 0 : i32
    %c0_i32_0 = arith.constant 0 : i32
    %c0_i32_1 = arith.constant 0 : i32
    return %arg0, %c0_i32, %c0_i32_0 : i32, i32, i32
  }
  func.func @transform_21(%arg0: i32) -> (i32, i32, i32) {
    %c0_i32 = arith.constant 0 : i32
    %c0_i32_0 = arith.constant 0 : i32
    %c0_i32_1 = arith.constant 0 : i32
    return %arg0, %c0_i32, %c0_i32_0 : i32, i32, i32
  }
  func.func @transform_22(%arg0: i32) -> (i32, i32, i32) {
    %c0_i32 = arith.constant 0 : i32
    %c0_i32_0 = arith.constant 0 : i32
    %c0_i32_1 = arith.constant 0 : i32
    return %arg0, %c0_i32, %c0_i32_0 : i32, i32, i32
  }
  func.func @transform_23(%arg0: i32) -> (i32, i32, i32) {
    %c0_i32 = arith.constant 0 : i32
    %c0_i32_0 = arith.constant 0 : i32
    %c0_i32_1 = arith.constant 0 : i32
    return %arg0, %c0_i32, %c0_i32_0 : i32, i32, i32
  }
  func.func @transform_24(%arg0: i32) -> (i32, i32, i32) {
    %c0_i32 = arith.constant 0 : i32
    %c0_i32_0 = arith.constant 0 : i32
    %c0_i32_1 = arith.constant 0 : i32
    return %arg0, %c0_i32, %c0_i32_0 : i32, i32, i32
  }
  func.func @transform_25(%arg0: i32) -> (i32, i32, i32) {
    %c0_i32 = arith.constant 0 : i32
    %c0_i32_0 = arith.constant 0 : i32
    %c0_i32_1 = arith.constant 0 : i32
    return %arg0, %c0_i32, %c0_i32_0 : i32, i32, i32
  }
  func.func @transform_26(%arg0: i32) -> (i32, i32, i32) {
    %c0_i32 = arith.constant 0 : i32
    %c0_i32_0 = arith.constant 0 : i32
    %c0_i32_1 = arith.constant 0 : i32
    return %arg0, %c0_i32, %c0_i32_0 : i32, i32, i32
  }
  func.func @transform_27(%arg0: i32) -> (i32, i32, i32) {
    %c0_i32 = arith.constant 0 : i32
    %c0_i32_0 = arith.constant 0 : i32
    %c0_i32_1 = arith.constant 0 : i32
    return %arg0, %c0_i32, %c0_i32_0 : i32, i32, i32
  }
  func.func @transform_28(%arg0: i32) -> (i32, i32) {
    %c0_i32 = arith.constant 0 : i32
    %c0_i32_0 = arith.constant 0 : i32
    %c0_i32_1 = arith.constant 0 : i32
    return %c0_i32, %c0_i32_0 : i32, i32
  }
  func.func @transform_29(%arg0: i32) -> (i32, i32) {
    %c0_i32 = arith.constant 0 : i32
    %c0_i32_0 = arith.constant 0 : i32
    %c0_i32_1 = arith.constant 0 : i32
    return %c0_i32, %c0_i32_0 : i32, i32
  }
  func.func @transform_30(%arg0: i32) -> (i32, i32) {
    %c0_i32 = arith.constant 0 : i32
    %c0_i32_0 = arith.constant 0 : i32
    %c0_i32_1 = arith.constant 0 : i32
    return %c0_i32, %c0_i32_0 : i32, i32
  }
  func.func @transform_31(%arg0: i32) -> (i32, i32) {
    %c0_i32 = arith.constant 0 : i32
    %c0_i32_0 = arith.constant 0 : i32
    %c0_i32_1 = arith.constant 0 : i32
    return %c0_i32, %c0_i32_0 : i32, i32
  }
  func.func @transform_32(%arg0: i32) -> (i32, i32) {
    %c0_i32 = arith.constant 0 : i32
    %c0_i32_0 = arith.constant 0 : i32
    %c0_i32_1 = arith.constant 0 : i32
    return %c0_i32, %c0_i32_0 : i32, i32
  }
}

</mosaic_0001>

<llo_original>
// kernel: tpu_custom_call.1
$region0: #{tpu_custom_call.1}
  #allocation0 [shape = 'u32[]', space=smem, size = 0x4, offset = 0x4, fixed_abs, tag = 'smem constant byte address 0x4 - core index']
  #allocation1 [shape = 'u32[144,128]{1,0:T(1,128)}', space=vmem, size = 0x12000, scoped, tag = 'internal scratch']
  #allocation2 [shape = 'f32[16,32]{1,0:T(8,128)}', space=vmem, size = 0x2000, scoped, tag = 'scratch operand']
  %s0 = inlined_call_operand.smem [shape: u32[33], index: -1, kind: input, shape index: {}]
  %s1 = sld [smem:[%s0]]
  %s2 = scalar_lea.smem %s0, 1
  %s3 = sld [smem:[%s2]]
  %s4 = scalar_lea.smem %s0, 2
  %s5 = sld [smem:[%s4]]
  %s6 = scalar_lea.smem %s0, 3
  %s7 = sld [smem:[%s6]]
  %s8 = scalar_lea.smem %s0, 4
  %s9 = sld [smem:[%s8]]
  %s10 = scalar_lea.smem %s0, 5
  %s11 = sld [smem:[%s10]]
  %s12 = scalar_lea.smem %s0, 6
  %s13 = sld [smem:[%s12]]
  %s14 = scalar_lea.smem %s0, 7
  %s15 = sld [smem:[%s14]]
  %s16 = scalar_lea.smem %s0, 8
  %s17 = sld [smem:[%s16]]
  %s18 = scalar_lea.smem %s0, 9
  %s19 = sld [smem:[%s18]]
  %s20 = scalar_lea.smem %s0, 10
  %s21 = sld [smem:[%s20]]
  %s22 = scalar_lea.smem %s0, 11
  %s23 = sld [smem:[%s22]]
  %s24 = scalar_lea.smem %s0, 12
  %s25 = sld [smem:[%s24]]
  %s26 = scalar_lea.smem %s0, 13
  %s27 = sld [smem:[%s26]]
  %s28 = scalar_lea.smem %s0, 14
  %s29 = sld [smem:[%s28]]
  %s30 = scalar_lea.smem %s0, 15
  %s31 = sld [smem:[%s30]]
  %s32 = scalar_lea.smem %s0, 16
  %s33 = sld [smem:[%s32]]
  %s34 = scalar_lea.smem %s0, 17
  %s35 = sld [smem:[%s34]]
  %s36 = scalar_lea.smem %s0, 18
  %s37 = sld [smem:[%s36]]
  %s38 = scalar_lea.smem %s0, 19
  %s39 = sld [smem:[%s38]]
  %s40 = scalar_lea.smem %s0, 20
  %s41 = sld [smem:[%s40]]
  %s42 = scalar_lea.smem %s0, 21
  %s43 = sld [smem:[%s42]]
  %s44 = scalar_lea.smem %s0, 22
  %s45 = sld [smem:[%s44]]
  %s46 = scalar_lea.smem %s0, 23
  %s47 = sld [smem:[%s46]]
  %s48 = scalar_lea.smem %s0, 24
  %s49 = sld [smem:[%s48]]
  %s50 = scalar_lea.smem %s0, 25
  %s51 = sld [smem:[%s50]]
  %s52 = scalar_lea.smem %s0, 26
  %s53 = sld [smem:[%s52]]
  %s54 = scalar_lea.smem %s0, 27
  %s55 = sld [smem:[%s54]]
  %s56 = scalar_lea.smem %s0, 28
  %s57 = sld [smem:[%s56]]
  %s58 = scalar_lea.smem %s0, 29
  %s59 = sld [smem:[%s58]]
  %s60 = scalar_lea.smem %s0, 30
  %s61 = sld [smem:[%s60]]
  %s62 = scalar_lea.smem %s0, 31
  %s63 = sld [smem:[%s62]]
  %s64 = scalar_lea.smem %s0, 32
  %s65 = sld [smem:[%s64]]
  %s66 = sld [smem:[#allocation0]]
  $region169: #{tpu_custom_call.1} parent=0
    _
  %s68 = ssub.s32 1, %s66
  %s69 = scalar_select 0, %s68, %s66
  $region1: #{tpu_custom_call.1} parent=0
    #allocation3 [shape = 'u8[8192]{0}', space=vmem, size = 0x2000, scoped, tag = 'output window, operand 0, single buffered']
    #allocation4 [shape = 's32[2]{0}', space=sflag, size = 0x8, scoped, tag = 'scoped memory for tpu_custom_call.1']
    %70 = vsyncpa [#allocation4], 0
    loop: start=0, step=1, limit=4
    $region2: #{tpu_custom_call.1} parent=1 // loop_pre_header
      _
    $region3: #{tpu_custom_call.1} parent=1 // loop_header
      %s72 = sphi 0, %s76
      %p73 = scmp.ge.s32.totalorder %s72, 4
      %s80 = sphi 0, %s80
      %s82 = sphi 0, %s80
      %s83 = sphi 0, %s82
      %s97 = sphi 0, %s83
      %s101 = sphi 0, %s101
      %s103 = sphi 0, %s101
      %s104 = sphi 0, %s103
      %s118 = sphi 0, %s104
      %s124 = sphi 0, %s126
      %s127 = sphi 0, %s124
      %s128 = sphi 0, %s127
      %s144 = sphi 0, %s128
      %s150 = sphi 0, %s152
      %s153 = sphi 0, %s150
      %s154 = sphi 0, %s153
      %s170 = sphi 0, %s154
      %s176 = sphi 0, %s178
      %s179 = sphi 0, %s176
      %s180 = sphi 0, %s179
      %s196 = sphi 0, %s180
      %s202 = sphi 0, %s204
      %s205 = sphi 0, %s202
      %s206 = sphi 0, %s205
      %s222 = sphi 0, %s206
      %s228 = sphi 0, %s230
      %s231 = sphi 0, %s228
      %s232 = sphi 0, %s231
      %s248 = sphi 0, %s232
      %s254 = sphi 0, %s256
      %s257 = sphi 0, %s254
      %s258 = sphi 0, %s257
      %s274 = sphi 0, %s258
      %s280 = sphi 0, %s282
      %s283 = sphi 0, %s280
      %s284 = sphi 0, %s283
      %s300 = sphi 0, %s284
      %s306 = sphi 0, %s308
      %s309 = sphi 0, %s306
      %s310 = sphi 0, %s309
      %s326 = sphi 0, %s310
      %s332 = sphi 0, %s334
      %s335 = sphi 0, %s332
      %s336 = sphi 0, %s335
      %s352 = sphi 0, %s336
      %s358 = sphi 0, %s360
      %s361 = sphi 0, %s358
      %s362 = sphi 0, %s361
      %s378 = sphi 0, %s362
      %s384 = sphi 0, %s386
      %s387 = sphi 0, %s384
      %s388 = sphi 0, %s387
      %s404 = sphi 0, %s388
      %s410 = sphi 0, %s412
      %s413 = sphi 0, %s410
      %s414 = sphi 0, %s413
      %s430 = sphi 0, %s414
      %s436 = sphi 0, %s438
      %s439 = sphi 0, %s436
      %s440 = sphi 0, %s439
      %s456 = sphi 0, %s440
      %s462 = sphi 0, %s464
      %s465 = sphi 0, %s462
      %s466 = sphi 0, %s465
      %s482 = sphi 0, %s466
      %s488 = sphi 0, %s490
      %s491 = sphi 0, %s488
      %s492 = sphi 0, %s491
      %s508 = sphi 0, %s492
      %s514 = sphi 0, %s516
      %s517 = sphi 0, %s514
      %s518 = sphi 0, %s517
      %s534 = sphi 0, %s518
      %s540 = sphi 0, %s542
      %s543 = sphi 0, %s540
      %s544 = sphi 0, %s543
      %s560 = sphi 0, %s544
      %s566 = sphi 0, %s568
      %s569 = sphi 0, %s566
      %s570 = sphi 0, %s569
      %s586 = sphi 0, %s570
      %s592 = sphi 0, %s594
      %s595 = sphi 0, %s592
      %s596 = sphi 0, %s595
      %s612 = sphi 0, %s596
      %s618 = sphi 0, %s620
      %s621 = sphi 0, %s618
      %s622 = sphi 0, %s621
      %s638 = sphi 0, %s622
      %s644 = sphi 0, %s646
      %s647 = sphi 0, %s644
      %s648 = sphi 0, %s647
      %s664 = sphi 0, %s648
      %s670 = sphi 0, %s672
      %s673 = sphi 0, %s670
      %s674 = sphi 0, %s673
      %s690 = sphi 0, %s674
      %s696 = sphi 0, %s698
      %s699 = sphi 0, %s696
      %s700 = sphi 0, %s699
      %s716 = sphi 0, %s700
      %s722 = sphi 0, %s724
      %s725 = sphi 0, %s722
      %s726 = sphi 0, %s725
      %s742 = sphi 0, %s726
      %s748 = sphi 0, %s750
      %s751 = sphi 0, %s748
      %s752 = sphi 0, %s751
      %s768 = sphi 0, %s752
      %s774 = sphi 0, %s776
      %s777 = sphi 0, %s774
      %s778 = sphi 0, %s777
      %s794 = sphi 0, %s778
      %s798 = sphi 0, %s798
      %s800 = sphi 0, %s798
      %s801 = sphi 0, %s800
      %s815 = sphi 0, %s801
      %s819 = sphi 0, %s819
      %s821 = sphi 0, %s819
      %s822 = sphi 0, %s821
      %s836 = sphi 0, %s822
      %s840 = sphi 0, %s840
      %s842 = sphi 0, %s840
      %s843 = sphi 0, %s842
      %s857 = sphi 0, %s843
      %s861 = sphi 0, %s861
      %s863 = sphi 0, %s861
      %s864 = sphi 0, %s863
      %s878 = sphi 0, %s864
      %s882 = sphi 0, %s882
      %s884 = sphi 0, %s882
      %s885 = sphi 0, %s884
      %s899 = sphi 0, %s885
    $region4: #{tpu_custom_call.1} parent=1 // loop_header_branch
      %75 = sbr.rel (%p73) target = $region8
    $region5: #{tpu_custom_call.1} parent=1 // loop_body
      %s77 = ssub.s32 %s72, 1
      %s78 = ssub.s32 %s72, 2
      %s79 = sadd.s32 %s72, 1
      %s81 = sadd.s32 %s80, 1
      %p84 = scmp.eq.s32.totalorder %s72, 1
      %p85 = scmp.ne.s32.totalorder %s80, %s82
      %p86 = scmp.eq.s32.totalorder %s72, 0
      %p87 = por %p85, %p86
      %p88 = scmp.ne.s32.totalorder %s80, %s82
      %p89 = scmp.eq.s32.totalorder %s77, 1
      %p90 = por %p88, %p89
      %p91 = scmp.ne.s32.totalorder %s82, %s83
      %p92 = scmp.eq.s32.totalorder %s77, 0
      %p93 = por %p91, %p92
      %p94 = scmp.ne.s32.totalorder %s82, %s83
      %p95 = scmp.eq.s32.totalorder %s78, 1
      %p96 = por %p94, %p95
      %p98 = scmp.ne.s32.totalorder %s83, %s97
      %p99 = scmp.eq.s32.totalorder %s78, 0
      %p100 = por %p98, %p99
      %s102 = sadd.s32 %s101, 1
      %p105 = scmp.eq.s32.totalorder %s72, 1
      %p106 = scmp.ne.s32.totalorder %s101, %s103
      %p107 = scmp.eq.s32.totalorder %s72, 0
      %p108 = por %p106, %p107
      %p109 = scmp.ne.s32.totalorder %s101, %s103
      %p110 = scmp.eq.s32.totalorder %s77, 1
      %p111 = por %p109, %p110
      %p112 = scmp.ne.s32.totalorder %s103, %s104
      %p113 = scmp.eq.s32.totalorder %s77, 0
      %p114 = por %p112, %p113
      %p115 = scmp.ne.s32.totalorder %s103, %s104
      %p116 = scmp.eq.s32.totalorder %s78, 1
      %p117 = por %p115, %p116
      %p119 = scmp.ne.s32.totalorder %s104, %s118
      %p120 = scmp.eq.s32.totalorder %s78, 0
      %p121 = por %p119, %p120
      %s122 = ssub.s32 %s72, %s79
      %p123 = scmp.eq.s32.totalorder %s122, 0
      %s125 = sadd.s32 %s124, 1
      %s126 = scalar_select %p123, %s124, %s125
      %p129 = pneg %p123
      %p130 = scmp.eq.s32.totalorder %s72, 1
      %p131 = por %p129, %p130
      %p132 = scmp.ne.s32.totalorder %s124, %s127
      %p133 = scmp.eq.s32.totalorder %s72, 0
      %p134 = por %p132, %p133
      %p135 = scmp.ne.s32.totalorder %s124, %s127
      %p136 = scmp.eq.s32.totalorder %s77, 1
      %p137 = por %p135, %p136
      %p138 = scmp.ne.s32.totalorder %s127, %s128
      %p139 = scmp.eq.s32.totalorder %s77, 0
      %p140 = por %p138, %p139
      %p141 = scmp.ne.s32.totalorder %s127, %s128
      %p142 = scmp.eq.s32.totalorder %s78, 1
      %p143 = por %p141, %p142
      %p145 = scmp.ne.s32.totalorder %s128, %s144
      %p146 = scmp.eq.s32.totalorder %s78, 0
      %p147 = por %p145, %p146
      %s148 = ssub.s32 %s72, %s79
      %p149 = scmp.eq.s32.totalorder %s148, 0
      %s151 = sadd.s32 %s150, 1
      %s152 = scalar_select %p149, %s150, %s151
      %p155 = pneg %p149
      %p156 = scmp.eq.s32.totalorder %s72, 1
      %p157 = por %p155, %p156
      %p158 = scmp.ne.s32.totalorder %s150, %s153
      %p159 = scmp.eq.s32.totalorder %s72, 0
      %p160 = por %p158, %p159
      %p161 = scmp.ne.s32.totalorder %s150, %s153
      %p162 = scmp.eq.s32.totalorder %s77, 1
      %p163 = por %p161, %p162
      %p164 = scmp.ne.s32.totalorder %s153, %s154
      %p165 = scmp.eq.s32.totalorder %s77, 0
      %p166 = por %p164, %p165
      %p167 = scmp.ne.s32.totalorder %s153, %s154
      %p168 = scmp.eq.s32.totalorder %s78, 1
      %p169 = por %p167, %p168
      %p171 = scmp.ne.s32.totalorder %s154, %s170
      %p172 = scmp.eq.s32.totalorder %s78, 0
      %p173 = por %p171, %p172
      %s174 = ssub.s32 %s72, %s79
      %p175 = scmp.eq.s32.totalorder %s174, 0
      %s177 = sadd.s32 %s176, 1
      %s178 = scalar_select %p175, %s176, %s177
      %p181 = pneg %p175
      %p182 = scmp.eq.s32.totalorder %s72, 1
      %p183 = por %p181, %p182
      %p184 = scmp.ne.s32.totalorder %s176, %s179
      %p185 = scmp.eq.s32.totalorder %s72, 0
      %p186 = por %p184, %p185
      %p187 = scmp.ne.s32.totalorder %s176, %s179
      %p188 = scmp.eq.s32.totalorder %s77, 1
      %p189 = por %p187, %p188
      %p190 = scmp.ne.s32.totalorder %s179, %s180
      %p191 = scmp.eq.s32.totalorder %s77, 0
      %p192 = por %p190, %p191
      %p193 = scmp.ne.s32.totalorder %s179, %s180
      %p194 = scmp.eq.s32.totalorder %s78, 1
      %p195 = por %p193, %p194
      %p197 = scmp.ne.s32.totalorder %s180, %s196
      %p198 = scmp.eq.s32.totalorder %s78, 0
      %p199 = por %p197, %p198
      %s200 = ssub.s32 %s72, %s79
      %p201 = scmp.eq.s32.totalorder %s200, 0
      %s203 = sadd.s32 %s202, 1
      %s204 = scalar_select %p201, %s202, %s203
      %p207 = pneg %p201
      %p208 = scmp.eq.s32.totalorder %s72, 1
      %p209 = por %p207, %p208
      %p210 = scmp.ne.s32.totalorder %s202, %s205
      %p211 = scmp.eq.s32.totalorder %s72, 0
      %p212 = por %p210, %p211
      %p213 = scmp.ne.s32.totalorder %s202, %s205
      %p214 = scmp.eq.s32.totalorder %s77, 1
      %p215 = por %p213, %p214
      %p216 = scmp.ne.s32.totalorder %s205, %s206
      %p217 = scmp.eq.s32.totalorder %s77, 0
      %p218 = por %p216, %p217
      %p219 = scmp.ne.s32.totalorder %s205, %s206
      %p220 = scmp.eq.s32.totalorder %s78, 1
      %p221 = por %p219, %p220
      %p223 = scmp.ne.s32.totalorder %s206, %s222
      %p224 = scmp.eq.s32.totalorder %s78, 0
      %p225 = por %p223, %p224
      %s226 = ssub.s32 %s72, %s79
      %p227 = scmp.eq.s32.totalorder %s226, 0
      %s229 = sadd.s32 %s228, 1
      %s230 = scalar_select %p227, %s228, %s229
      %p233 = pneg %p227
      %p234 = scmp.eq.s32.totalorder %s72, 1
      %p235 = por %p233, %p234
      %p236 = scmp.ne.s32.totalorder %s228, %s231
      %p237 = scmp.eq.s32.totalorder %s72, 0
      %p238 = por %p236, %p237
      %p239 = scmp.ne.s32.totalorder %s228, %s231
      %p240 = scmp.eq.s32.totalorder %s77, 1
      %p241 = por %p239, %p240
      %p242 = scmp.ne.s32.totalorder %s231, %s232
      %p243 = scmp.eq.s32.totalorder %s77, 0
      %p244 = por %p242, %p243
      %p245 = scmp.ne.s32.totalorder %s231, %s232
      %p246 = scmp.eq.s32.totalorder %s78, 1
      %p247 = por %p245, %p246
      %p249 = scmp.ne.s32.totalorder %s232, %s248
      %p250 = scmp.eq.s32.totalorder %s78, 0
      %p251 = por %p249, %p250
      %s252 = ssub.s32 %s72, %s79
      %p253 = scmp.eq.s32.totalorder %s252, 0
      %s255 = sadd.s32 %s254, 1
      %s256 = scalar_select %p253, %s254, %s255
      %p259 = pneg %p253
      %p260 = scmp.eq.s32.totalorder %s72, 1
      %p261 = por %p259, %p260
      %p262 = scmp.ne.s32.totalorder %s254, %s257
      %p263 = scmp.eq.s32.totalorder %s72, 0
      %p264 = por %p262, %p263
      %p265 = scmp.ne.s32.totalorder %s254, %s257
      %p266 = scmp.eq.s32.totalorder %s77, 1
      %p267 = por %p265, %p266
      %p268 = scmp.ne.s32.totalorder %s257, %s258
      %p269 = scmp.eq.s32.totalorder %s77, 0
      %p270 = por %p268, %p269
      %p271 = scmp.ne.s32.totalorder %s257, %s258
      %p272 = scmp.eq.s32.totalorder %s78, 1
      %p273 = por %p271, %p272
      %p275 = scmp.ne.s32.totalorder %s258, %s274
      %p276 = scmp.eq.s32.totalorder %s78, 0
      %p277 = por %p275, %p276
      %s278 = ssub.s32 %s72, %s79
      %p279 = scmp.eq.s32.totalorder %s278, 0
      %s281 = sadd.s32 %s280, 1
      %s282 = scalar_select %p279, %s280, %s281
      %p285 = pneg %p279
      %p286 = scmp.eq.s32.totalorder %s72, 1
      %p287 = por %p285, %p286
      %p288 = scmp.ne.s32.totalorder %s280, %s283
      %p289 = scmp.eq.s32.totalorder %s72, 0
      %p290 = por %p288, %p289
      %p291 = scmp.ne.s32.totalorder %s280, %s283
      %p292 = scmp.eq.s32.totalorder %s77, 1
      %p293 = por %p291, %p292
      %p294 = scmp.ne.s32.totalorder %s283, %s284
      %p295 = scmp.eq.s32.totalorder %s77, 0
      %p296 = por %p294, %p295
      %p297 = scmp.ne.s32.totalorder %s283, %s284
      %p298 = scmp.eq.s32.totalorder %s78, 1
      %p299 = por %p297, %p298
      %p301 = scmp.ne.s32.totalorder %s284, %s300
      %p302 = scmp.eq.s32.totalorder %s78, 0
      %p303 = por %p301, %p302
      %s304 = ssub.s32 %s72, %s79
      %p305 = scmp.eq.s32.totalorder %s304, 0
      %s307 = sadd.s32 %s306, 1
      %s308 = scalar_select %p305, %s306, %s307
      %p311 = pneg %p305
      %p312 = scmp.eq.s32.totalorder %s72, 1
      %p313 = por %p311, %p312
      %p314 = scmp.ne.s32.totalorder %s306, %s309
      %p315 = scmp.eq.s32.totalorder %s72, 0
      %p316 = por %p314, %p315
      %p317 = scmp.ne.s32.totalorder %s306, %s309
      %p318 = scmp.eq.s32.totalorder %s77, 1
      %p319 = por %p317, %p318
      %p320 = scmp.ne.s32.totalorder %s309, %s310
      %p321 = scmp.eq.s32.totalorder %s77, 0
      %p322 = por %p320, %p321
      %p323 = scmp.ne.s32.totalorder %s309, %s310
      %p324 = scmp.eq.s32.totalorder %s78, 1
      %p325 = por %p323, %p324
      %p327 = scmp.ne.s32.totalorder %s310, %s326
      %p328 = scmp.eq.s32.totalorder %s78, 0
      %p329 = por %p327, %p328
      %s330 = ssub.s32 %s72, %s79
      %p331 = scmp.eq.s32.totalorder %s330, 0
      %s333 = sadd.s32 %s332, 1
      %s334 = scalar_select %p331, %s332, %s333
      %p337 = pneg %p331
      %p338 = scmp.eq.s32.totalorder %s72, 1
      %p339 = por %p337, %p338
      %p340 = scmp.ne.s32.totalorder %s332, %s335
      %p341 = scmp.eq.s32.totalorder %s72, 0
      %p342 = por %p340, %p341
      %p343 = scmp.ne.s32.totalorder %s332, %s335
      %p344 = scmp.eq.s32.totalorder %s77, 1
      %p345 = por %p343, %p344
      %p346 = scmp.ne.s32.totalorder %s335, %s336
      %p347 = scmp.eq.s32.totalorder %s77, 0
      %p348 = por %p346, %p347
      %p349 = scmp.ne.s32.totalorder %s335, %s336
      %p350 = scmp.eq.s32.totalorder %s78, 1
      %p351 = por %p349, %p350
      %p353 = scmp.ne.s32.totalorder %s336, %s352
      %p354 = scmp.eq.s32.totalorder %s78, 0
      %p355 = por %p353, %p354
      %s356 = ssub.s32 %s72, %s79
      %p357 = scmp.eq.s32.totalorder %s356, 0
      %s359 = sadd.s32 %s358, 1
      %s360 = scalar_select %p357, %s358, %s359
      %p363 = pneg %p357
      %p364 = scmp.eq.s32.totalorder %s72, 1
      %p365 = por %p363, %p364
      %p366 = scmp.ne.s32.totalorder %s358, %s361
      %p367 = scmp.eq.s32.totalorder %s72, 0
      %p368 = por %p366, %p367
      %p369 = scmp.ne.s32.totalorder %s358, %s361
      %p370 = scmp.eq.s32.totalorder %s77, 1
      %p371 = por %p369, %p370
      %p372 = scmp.ne.s32.totalorder %s361, %s362
      %p373 = scmp.eq.s32.totalorder %s77, 0
      %p374 = por %p372, %p373
      %p375 = scmp.ne.s32.totalorder %s361, %s362
      %p376 = scmp.eq.s32.totalorder %s78, 1
      %p377 = por %p375, %p376
      %p379 = scmp.ne.s32.totalorder %s362, %s378
      %p380 = scmp.eq.s32.totalorder %s78, 0
      %p381 = por %p379, %p380
      %s382 = ssub.s32 %s72, %s79
      %p383 = scmp.eq.s32.totalorder %s382, 0
      %s385 = sadd.s32 %s384, 1
      %s386 = scalar_select %p383, %s384, %s385
      %p389 = pneg %p383
      %p390 = scmp.eq.s32.totalorder %s72, 1
      %p391 = por %p389, %p390
      %p392 = scmp.ne.s32.totalorder %s384, %s387
      %p393 = scmp.eq.s32.totalorder %s72, 0
      %p394 = por %p392, %p393
      %p395 = scmp.ne.s32.totalorder %s384, %s387
      %p396 = scmp.eq.s32.totalorder %s77, 1
      %p397 = por %p395, %p396
      %p398 = scmp.ne.s32.totalorder %s387, %s388
      %p399 = scmp.eq.s32.totalorder %s77, 0
      %p400 = por %p398, %p399
      %p401 = scmp.ne.s32.totalorder %s387, %s388
      %p402 = scmp.eq.s32.totalorder %s78, 1
      %p403 = por %p401, %p402
      %p405 = scmp.ne.s32.totalorder %s388, %s404
      %p406 = scmp.eq.s32.totalorder %s78, 0
      %p407 = por %p405, %p406
      %s408 = ssub.s32 %s72, %s79
      %p409 = scmp.eq.s32.totalorder %s408, 0
      %s411 = sadd.s32 %s410, 1
      %s412 = scalar_select %p409, %s410, %s411
      %p415 = pneg %p409
      %p416 = scmp.eq.s32.totalorder %s72, 1
      %p417 = por %p415, %p416
      %p418 = scmp.ne.s32.totalorder %s410, %s413
      %p419 = scmp.eq.s32.totalorder %s72, 0
      %p420 = por %p418, %p419
      %p421 = scmp.ne.s32.totalorder %s410, %s413
      %p422 = scmp.eq.s32.totalorder %s77, 1
      %p423 = por %p421, %p422
      %p424 = scmp.ne.s32.totalorder %s413, %s414
      %p425 = scmp.eq.s32.totalorder %s77, 0
      %p426 = por %p424, %p425
      %p427 = scmp.ne.s32.totalorder %s413, %s414
      %p428 = scmp.eq.s32.totalorder %s78, 1
      %p429 = por %p427, %p428
      %p431 = scmp.ne.s32.totalorder %s414, %s430
      %p432 = scmp.eq.s32.totalorder %s78, 0
      %p433 = por %p431, %p432
      %s434 = ssub.s32 %s72, %s79
      %p435 = scmp.eq.s32.totalorder %s434, 0
      %s437 = sadd.s32 %s436, 1
      %s438 = scalar_select %p435, %s436, %s437
      %p441 = pneg %p435
      %p442 = scmp.eq.s32.totalorder %s72, 1
      %p443 = por %p441, %p442
      %p444 = scmp.ne.s32.totalorder %s436, %s439
      %p445 = scmp.eq.s32.totalorder %s72, 0
      %p446 = por %p444, %p445
      %p447 = scmp.ne.s32.totalorder %s436, %s439
      %p448 = scmp.eq.s32.totalorder %s77, 1
      %p449 = por %p447, %p448
      %p450 = scmp.ne.s32.totalorder %s439, %s440
      %p451 = scmp.eq.s32.totalorder %s77, 0
      %p452 = por %p450, %p451
      %p453 = scmp.ne.s32.totalorder %s439, %s440
      %p454 = scmp.eq.s32.totalorder %s78, 1
      %p455 = por %p453, %p454
      %p457 = scmp.ne.s32.totalorder %s440, %s456
      %p458 = scmp.eq.s32.totalorder %s78, 0
      %p459 = por %p457, %p458
      %s460 = ssub.s32 %s72, %s79
      %p461 = scmp.eq.s32.totalorder %s460, 0
      %s463 = sadd.s32 %s462, 1
      %s464 = scalar_select %p461, %s462, %s463
      %p467 = pneg %p461
      %p468 = scmp.eq.s32.totalorder %s72, 1
      %p469 = por %p467, %p468
      %p470 = scmp.ne.s32.totalorder %s462, %s465
      %p471 = scmp.eq.s32.totalorder %s72, 0
      %p472 = por %p470, %p471
      %p473 = scmp.ne.s32.totalorder %s462, %s465
      %p474 = scmp.eq.s32.totalorder %s77, 1
      %p475 = por %p473, %p474
      %p476 = scmp.ne.s32.totalorder %s465, %s466
      %p477 = scmp.eq.s32.totalorder %s77, 0
      %p478 = por %p476, %p477
      %p479 = scmp.ne.s32.totalorder %s465, %s466
      %p480 = scmp.eq.s32.totalorder %s78, 1
      %p481 = por %p479, %p480
      %p483 = scmp.ne.s32.totalorder %s466, %s482
      %p484 = scmp.eq.s32.totalorder %s78, 0
      %p485 = por %p483, %p484
      %s486 = ssub.s32 %s72, %s79
      %p487 = scmp.eq.s32.totalorder %s486, 0
      %s489 = sadd.s32 %s488, 1
      %s490 = scalar_select %p487, %s488, %s489
      %p493 = pneg %p487
      %p494 = scmp.eq.s32.totalorder %s72, 1
      %p495 = por %p493, %p494
      %p496 = scmp.ne.s32.totalorder %s488, %s491
      %p497 = scmp.eq.s32.totalorder %s72, 0
      %p498 = por %p496, %p497
      %p499 = scmp.ne.s32.totalorder %s488, %s491
      %p500 = scmp.eq.s32.totalorder %s77, 1
      %p501 = por %p499, %p500
      %p502 = scmp.ne.s32.totalorder %s491, %s492
      %p503 = scmp.eq.s32.totalorder %s77, 0
      %p504 = por %p502, %p503
      %p505 = scmp.ne.s32.totalorder %s491, %s492
      %p506 = scmp.eq.s32.totalorder %s78, 1
      %p507 = por %p505, %p506
      %p509 = scmp.ne.s32.totalorder %s492, %s508
      %p510 = scmp.eq.s32.totalorder %s78, 0
      %p511 = por %p509, %p510
      %s512 = ssub.s32 %s72, %s79
      %p513 = scmp.eq.s32.totalorder %s512, 0
      %s515 = sadd.s32 %s514, 1
      %s516 = scalar_select %p513, %s514, %s515
      %p519 = pneg %p513
      %p520 = scmp.eq.s32.totalorder %s72, 1
      %p521 = por %p519, %p520
      %p522 = scmp.ne.s32.totalorder %s514, %s517
      %p523 = scmp.eq.s32.totalorder %s72, 0
      %p524 = por %p522, %p523
      %p525 = scmp.ne.s32.totalorder %s514, %s517
      %p526 = scmp.eq.s32.totalorder %s77, 1
      %p527 = por %p525, %p526
      %p528 = scmp.ne.s32.totalorder %s517, %s518
      %p529 = scmp.eq.s32.totalorder %s77, 0
      %p530 = por %p528, %p529
      %p531 = scmp.ne.s32.totalorder %s517, %s518
      %p532 = scmp.eq.s32.totalorder %s78, 1
      %p533 = por %p531, %p532
      %p535 = scmp.ne.s32.totalorder %s518, %s534
      %p536 = scmp.eq.s32.totalorder %s78, 0
      %p537 = por %p535, %p536
      %s538 = ssub.s32 %s72, %s79
      %p539 = scmp.eq.s32.totalorder %s538, 0
      %s541 = sadd.s32 %s540, 1
      %s542 = scalar_select %p539, %s540, %s541
      %p545 = pneg %p539
      %p546 = scmp.eq.s32.totalorder %s72, 1
      %p547 = por %p545, %p546
      %p548 = scmp.ne.s32.totalorder %s540, %s543
      %p549 = scmp.eq.s32.totalorder %s72, 0
      %p550 = por %p548, %p549
      %p551 = scmp.ne.s32.totalorder %s540, %s543
      %p552 = scmp.eq.s32.totalorder %s77, 1
      %p553 = por %p551, %p552
      %p554 = scmp.ne.s32.totalorder %s543, %s544
      %p555 = scmp.eq.s32.totalorder %s77, 0
      %p556 = por %p554, %p555
      %p557 = scmp.ne.s32.totalorder %s543, %s544
      %p558 = scmp.eq.s32.totalorder %s78, 1
      %p559 = por %p557, %p558
      %p561 = scmp.ne.s32.totalorder %s544, %s560
      %p562 = scmp.eq.s32.totalorder %s78, 0
      %p563 = por %p561, %p562
      %s564 = ssub.s32 %s72, %s79
      %p565 = scmp.eq.s32.totalorder %s564, 0
      %s567 = sadd.s32 %s566, 1
      %s568 = scalar_select %p565, %s566, %s567
      %p571 = pneg %p565
      %p572 = scmp.eq.s32.totalorder %s72, 1
      %p573 = por %p571, %p572
      %p574 = scmp.ne.s32.totalorder %s566, %s569
      %p575 = scmp.eq.s32.totalorder %s72, 0
      %p576 = por %p574, %p575
      %p577 = scmp.ne.s32.totalorder %s566, %s569
      %p578 = scmp.eq.s32.totalorder %s77, 1
      %p579 = por %p577, %p578
      %p580 = scmp.ne.s32.totalorder %s569, %s570
      %p581 = scmp.eq.s32.totalorder %s77, 0
      %p582 = por %p580, %p581
      %p583 = scmp.ne.s32.totalorder %s569, %s570
      %p584 = scmp.eq.s32.totalorder %s78, 1
      %p585 = por %p583, %p584
      %p587 = scmp.ne.s32.totalorder %s570, %s586
      %p588 = scmp.eq.s32.totalorder %s78, 0
      %p589 = por %p587, %p588
      %s590 = ssub.s32 %s72, %s79
      %p591 = scmp.eq.s32.totalorder %s590, 0
      %s593 = sadd.s32 %s592, 1
      %s594 = scalar_select %p591, %s592, %s593
      %p597 = pneg %p591
      %p598 = scmp.eq.s32.totalorder %s72, 1
      %p599 = por %p597, %p598
      %p600 = scmp.ne.s32.totalorder %s592, %s595
      %p601 = scmp.eq.s32.totalorder %s72, 0
      %p602 = por %p600, %p601
      %p603 = scmp.ne.s32.totalorder %s592, %s595
      %p604 = scmp.eq.s32.totalorder %s77, 1
      %p605 = por %p603, %p604
      %p606 = scmp.ne.s32.totalorder %s595, %s596
      %p607 = scmp.eq.s32.totalorder %s77, 0
      %p608 = por %p606, %p607
      %p609 = scmp.ne.s32.totalorder %s595, %s596
      %p610 = scmp.eq.s32.totalorder %s78, 1
      %p611 = por %p609, %p610
      %p613 = scmp.ne.s32.totalorder %s596, %s612
      %p614 = scmp.eq.s32.totalorder %s78, 0
      %p615 = por %p613, %p614
      %s616 = ssub.s32 %s72, %s79
      %p617 = scmp.eq.s32.totalorder %s616, 0
      %s619 = sadd.s32 %s618, 1
      %s620 = scalar_select %p617, %s618, %s619
      %p623 = pneg %p617
      %p624 = scmp.eq.s32.totalorder %s72, 1
      %p625 = por %p623, %p624
      %p626 = scmp.ne.s32.totalorder %s618, %s621
      %p627 = scmp.eq.s32.totalorder %s72, 0
      %p628 = por %p626, %p627
      %p629 = scmp.ne.s32.totalorder %s618, %s621
      %p630 = scmp.eq.s32.totalorder %s77, 1
      %p631 = por %p629, %p630
      %p632 = scmp.ne.s32.totalorder %s621, %s622
      %p633 = scmp.eq.s32.totalorder %s77, 0
      %p634 = por %p632, %p633
      %p635 = scmp.ne.s32.totalorder %s621, %s622
      %p636 = scmp.eq.s32.totalorder %s78, 1
      %p637 = por %p635, %p636
      %p639 = scmp.ne.s32.totalorder %s622, %s638
      %p640 = scmp.eq.s32.totalorder %s78, 0
      %p641 = por %p639, %p640
      %s642 = ssub.s32 %s72, %s79
      %p643 = scmp.eq.s32.totalorder %s642, 0
      %s645 = sadd.s32 %s644, 1
      %s646 = scalar_select %p643, %s644, %s645
      %p649 = pneg %p643
      %p650 = scmp.eq.s32.totalorder %s72, 1
      %p651 = por %p649, %p650
      %p652 = scmp.ne.s32.totalorder %s644, %s647
      %p653 = scmp.eq.s32.totalorder %s72, 0
      %p654 = por %p652, %p653
      %p655 = scmp.ne.s32.totalorder %s644, %s647
      %p656 = scmp.eq.s32.totalorder %s77, 1
      %p657 = por %p655, %p656
      %p658 = scmp.ne.s32.totalorder %s647, %s648
      %p659 = scmp.eq.s32.totalorder %s77, 0
      %p660 = por %p658, %p659
      %p661 = scmp.ne.s32.totalorder %s647, %s648
      %p662 = scmp.eq.s32.totalorder %s78, 1
      %p663 = por %p661, %p662
      %p665 = scmp.ne.s32.totalorder %s648, %s664
      %p666 = scmp.eq.s32.totalorder %s78, 0
      %p667 = por %p665, %p666
      %s668 = ssub.s32 %s72, %s79
      %p669 = scmp.eq.s32.totalorder %s668, 0
      %s671 = sadd.s32 %s670, 1
      %s672 = scalar_select %p669, %s670, %s671
      %p675 = pneg %p669
      %p676 = scmp.eq.s32.totalorder %s72, 1
      %p677 = por %p675, %p676
      %p678 = scmp.ne.s32.totalorder %s670, %s673
      %p679 = scmp.eq.s32.totalorder %s72, 0
      %p680 = por %p678, %p679
      %p681 = scmp.ne.s32.totalorder %s670, %s673
      %p682 = scmp.eq.s32.totalorder %s77, 1
      %p683 = por %p681, %p682
      %p684 = scmp.ne.s32.totalorder %s673, %s674
      %p685 = scmp.eq.s32.totalorder %s77, 0
      %p686 = por %p684, %p685
      %p687 = scmp.ne.s32.totalorder %s673, %s674
      %p688 = scmp.eq.s32.totalorder %s78, 1
      %p689 = por %p687, %p688
      %p691 = scmp.ne.s32.totalorder %s674, %s690
      %p692 = scmp.eq.s32.totalorder %s78, 0
      %p693 = por %p691, %p692
      %s694 = ssub.s32 %s72, %s79
      %p695 = scmp.eq.s32.totalorder %s694, 0
      %s697 = sadd.s32 %s696, 1
      %s698 = scalar_select %p695, %s696, %s697
      %p701 = pneg %p695
      %p702 = scmp.eq.s32.totalorder %s72, 1
      %p703 = por %p701, %p702
      %p704 = scmp.ne.s32.totalorder %s696, %s699
      %p705 = scmp.eq.s32.totalorder %s72, 0
      %p706 = por %p704, %p705
      %p707 = scmp.ne.s32.totalorder %s696, %s699
      %p708 = scmp.eq.s32.totalorder %s77, 1
      %p709 = por %p707, %p708
      %p710 = scmp.ne.s32.totalorder %s699, %s700
      %p711 = scmp.eq.s32.totalorder %s77, 0
      %p712 = por %p710, %p711
      %p713 = scmp.ne.s32.totalorder %s699, %s700
      %p714 = scmp.eq.s32.totalorder %s78, 1
      %p715 = por %p713, %p714
      %p717 = scmp.ne.s32.totalorder %s700, %s716
      %p718 = scmp.eq.s32.totalorder %s78, 0
      %p719 = por %p717, %p718
      %s720 = ssub.s32 %s72, %s79
      %p721 = scmp.eq.s32.totalorder %s720, 0
      %s723 = sadd.s32 %s722, 1
      %s724 = scalar_select %p721, %s722, %s723
      %p727 = pneg %p721
      %p728 = scmp.eq.s32.totalorder %s72, 1
      %p729 = por %p727, %p728
      %p730 = scmp.ne.s32.totalorder %s722, %s725
      %p731 = scmp.eq.s32.totalorder %s72, 0
      %p732 = por %p730, %p731
      %p733 = scmp.ne.s32.totalorder %s722, %s725
      %p734 = scmp.eq.s32.totalorder %s77, 1
      %p735 = por %p733, %p734
      %p736 = scmp.ne.s32.totalorder %s725, %s726
      %p737 = scmp.eq.s32.totalorder %s77, 0
      %p738 = por %p736, %p737
      %p739 = scmp.ne.s32.totalorder %s725, %s726
      %p740 = scmp.eq.s32.totalorder %s78, 1
      %p741 = por %p739, %p740
      %p743 = scmp.ne.s32.totalorder %s726, %s742
      %p744 = scmp.eq.s32.totalorder %s78, 0
      %p745 = por %p743, %p744
      %s746 = ssub.s32 %s72, %s79
      %p747 = scmp.eq.s32.totalorder %s746, 0
      %s749 = sadd.s32 %s748, 1
      %s750 = scalar_select %p747, %s748, %s749
      %p753 = pneg %p747
      %p754 = scmp.eq.s32.totalorder %s72, 1
      %p755 = por %p753, %p754
      %p756 = scmp.ne.s32.totalorder %s748, %s751
      %p757 = scmp.eq.s32.totalorder %s72, 0
      %p758 = por %p756, %p757
      %p759 = scmp.ne.s32.totalorder %s748, %s751
      %p760 = scmp.eq.s32.totalorder %s77, 1
      %p761 = por %p759, %p760
      %p762 = scmp.ne.s32.totalorder %s751, %s752
      %p763 = scmp.eq.s32.totalorder %s77, 0
      %p764 = por %p762, %p763
      %p765 = scmp.ne.s32.totalorder %s751, %s752
      %p766 = scmp.eq.s32.totalorder %s78, 1
      %p767 = por %p765, %p766
      %p769 = scmp.ne.s32.totalorder %s752, %s768
      %p770 = scmp.eq.s32.totalorder %s78, 0
      %p771 = por %p769, %p770
      %s772 = ssub.s32 %s72, %s79
      %p773 = scmp.eq.s32.totalorder %s772, 0
      %s775 = sadd.s32 %s774, 1
      %s776 = scalar_select %p773, %s774, %s775
      %p779 = pneg %p773
      %p780 = scmp.eq.s32.totalorder %s72, 1
      %p781 = por %p779, %p780
      %p782 = scmp.ne.s32.totalorder %s774, %s777
      %p783 = scmp.eq.s32.totalorder %s72, 0
      %p784 = por %p782, %p783
      %p785 = scmp.ne.s32.totalorder %s774, %s777
      %p786 = scmp.eq.s32.totalorder %s77, 1
      %p787 = por %p785, %p786
      %p788 = scmp.ne.s32.totalorder %s777, %s778
      %p789 = scmp.eq.s32.totalorder %s77, 0
      %p790 = por %p788, %p789
      %p791 = scmp.ne.s32.totalorder %s777, %s778
      %p792 = scmp.eq.s32.totalorder %s78, 1
      %p793 = por %p791, %p792
      %p795 = scmp.ne.s32.totalorder %s778, %s794
      %p796 = scmp.eq.s32.totalorder %s78, 0
      %p797 = por %p795, %p796
      %s799 = sadd.s32 %s798, 1
      %p802 = scmp.eq.s32.totalorder %s72, 1
      %p803 = scmp.ne.s32.totalorder %s798, %s800
      %p804 = scmp.eq.s32.totalorder %s72, 0
      %p805 = por %p803, %p804
      %p806 = scmp.ne.s32.totalorder %s798, %s800
      %p807 = scmp.eq.s32.totalorder %s77, 1
      %p808 = por %p806, %p807
      %p809 = scmp.ne.s32.totalorder %s800, %s801
      %p810 = scmp.eq.s32.totalorder %s77, 0
      %p811 = por %p809, %p810
      %p812 = scmp.ne.s32.totalorder %s800, %s801
      %p813 = scmp.eq.s32.totalorder %s78, 1
      %p814 = por %p812, %p813
      %p816 = scmp.ne.s32.totalorder %s801, %s815
      %p817 = scmp.eq.s32.totalorder %s78, 0
      %p818 = por %p816, %p817
      %s820 = sadd.s32 %s819, 1
      %p823 = scmp.eq.s32.totalorder %s72, 1
      %p824 = scmp.ne.s32.totalorder %s819, %s821
      %p825 = scmp.eq.s32.totalorder %s72, 0
      %p826 = por %p824, %p825
      %p827 = scmp.ne.s32.totalorder %s819, %s821
      %p828 = scmp.eq.s32.totalorder %s77, 1
      %p829 = por %p827, %p828
      %p830 = scmp.ne.s32.totalorder %s821, %s822
      %p831 = scmp.eq.s32.totalorder %s77, 0
      %p832 = por %p830, %p831
      %p833 = scmp.ne.s32.totalorder %s821, %s822
      %p834 = scmp.eq.s32.totalorder %s78, 1
      %p835 = por %p833, %p834
      %p837 = scmp.ne.s32.totalorder %s822, %s836
      %p838 = scmp.eq.s32.totalorder %s78, 0
      %p839 = por %p837, %p838
      %s841 = sadd.s32 %s840, 1
      %p844 = scmp.eq.s32.totalorder %s72, 1
      %p845 = scmp.ne.s32.totalorder %s840, %s842
      %p846 = scmp.eq.s32.totalorder %s72, 0
      %p847 = por %p845, %p846
      %p848 = scmp.ne.s32.totalorder %s840, %s842
      %p849 = scmp.eq.s32.totalorder %s77, 1
      %p850 = por %p848, %p849
      %p851 = scmp.ne.s32.totalorder %s842, %s843
      %p852 = scmp.eq.s32.totalorder %s77, 0
      %p853 = por %p851, %p852
      %p854 = scmp.ne.s32.totalorder %s842, %s843
      %p855 = scmp.eq.s32.totalorder %s78, 1
      %p856 = por %p854, %p855
      %p858 = scmp.ne.s32.totalorder %s843, %s857
      %p859 = scmp.eq.s32.totalorder %s78, 0
      %p860 = por %p858, %p859
      %s862 = sadd.s32 %s861, 1
      %p865 = scmp.eq.s32.totalorder %s72, 1
      %p866 = scmp.ne.s32.totalorder %s861, %s863
      %p867 = scmp.eq.s32.totalorder %s72, 0
      %p868 = por %p866, %p867
      %p869 = scmp.ne.s32.totalorder %s861, %s863
      %p870 = scmp.eq.s32.totalorder %s77, 1
      %p871 = por %p869, %p870
      %p872 = scmp.ne.s32.totalorder %s863, %s864
      %p873 = scmp.eq.s32.totalorder %s77, 0
      %p874 = por %p872, %p873
      %p875 = scmp.ne.s32.totalorder %s863, %s864
      %p876 = scmp.eq.s32.totalorder %s78, 1
      %p877 = por %p875, %p876
      %p879 = scmp.ne.s32.totalorder %s864, %s878
      %p880 = scmp.eq.s32.totalorder %s78, 0
      %p881 = por %p879, %p880
      %s883 = sadd.s32 %s882, 1
      %p886 = scmp.eq.s32.totalorder %s72, 1
      %p887 = scmp.ne.s32.totalorder %s882, %s884
      %p888 = scmp.eq.s32.totalorder %s72, 0
      %p889 = por %p887, %p888
      %p890 = scmp.ne.s32.totalorder %s882, %s884
      %p891 = scmp.eq.s32.totalorder %s77, 1
      %p892 = por %p890, %p891
      %p893 = scmp.ne.s32.totalorder %s884, %s885
      %p894 = scmp.eq.s32.totalorder %s77, 0
      %p895 = por %p893, %p894
      %p896 = scmp.ne.s32.totalorder %s884, %s885
      %p897 = scmp.eq.s32.totalorder %s78, 1
      %p898 = por %p896, %p897
      %p900 = scmp.ne.s32.totalorder %s885, %s899
      %p901 = scmp.eq.s32.totalorder %s78, 0
      %p902 = por %p900, %p901
      %p903 = scmp.le.s32.totalorder 1, %s72
      %p904 = scmp.lt.s32.totalorder %s72, 3
      %p905 = pnand %p903, %p904
      %p906 = pneg %p905
      // Predicated region
      $region9: #{tpu_custom_call.1} parent=5 // pred_check
        _
      $region10: #{tpu_custom_call.1} parent=5 // pred_check_branch
        %908 = sbr.rel (%p905) target = $region12
      $region11: #{tpu_custom_call.1} parent=5 // pred_region
        %s909 = ssub.s32 %s72, 1
        // Predicated region
        $region13: #{tpu_custom_call.1} parent=11 // pred_check
          %p910 = pneg %p93
        $region14: #{tpu_custom_call.1} parent=11 // pred_check_branch
          %912 = sbr.rel (%p910) target = $region16
        $region15: #{tpu_custom_call.1} parent=11 // pred_region
          _
        $region16: #{tpu_custom_call.1} parent=11 // pred_fallthru
          _
        // Predicated region
        $region17: #{tpu_custom_call.1} parent=11 // pred_check
          %p913 = pneg %p114
        $region18: #{tpu_custom_call.1} parent=11 // pred_check_branch
          %915 = sbr.rel (%p913) target = $region20
        $region19: #{tpu_custom_call.1} parent=11 // pred_region
          _
        $region20: #{tpu_custom_call.1} parent=11 // pred_fallthru
          _
        // Predicated region
        $region21: #{tpu_custom_call.1} parent=11 // pred_check
          %p916 = pneg %p811
        $region22: #{tpu_custom_call.1} parent=11 // pred_check_branch
          %918 = sbr.rel (%p916) target = $region24
        $region23: #{tpu_custom_call.1} parent=11 // pred_region
          _
        $region24: #{tpu_custom_call.1} parent=11 // pred_fallthru
          _
        // Predicated region
        $region25: #{tpu_custom_call.1} parent=11 // pred_check
          %p919 = pneg %p832
        $region26: #{tpu_custom_call.1} parent=11 // pred_check_branch
          %921 = sbr.rel (%p919) target = $region28
        $region27: #{tpu_custom_call.1} parent=11 // pred_region
          _
        $region28: #{tpu_custom_call.1} parent=11 // pred_fallthru
          _
        // Predicated region
        $region29: #{tpu_custom_call.1} parent=11 // pred_check
          %p922 = pneg %p853
        $region30: #{tpu_custom_call.1} parent=11 // pred_check_branch
          %924 = sbr.rel (%p922) target = $region32
        $region31: #{tpu_custom_call.1} parent=11 // pred_region
          _
        $region32: #{tpu_custom_call.1} parent=11 // pred_fallthru
          _
        // Predicated region
        $region33: #{tpu_custom_call.1} parent=11 // pred_check
          %p925 = pneg %p874
        $region34: #{tpu_custom_call.1} parent=11 // pred_check_branch
          %927 = sbr.rel (%p925) target = $region36
        $region35: #{tpu_custom_call.1} parent=11 // pred_region
          _
        $region36: #{tpu_custom_call.1} parent=11 // pred_fallthru
          _
      $region12: #{tpu_custom_call.1} parent=5 // pred_fallthru
        _
      %p928 = scmp.lt.s32.totalorder %s72, 2
      // Predicated region
      $region37: #{tpu_custom_call.1} parent=5 // pred_check
        %p929 = pneg %p928
      $region38: #{tpu_custom_call.1} parent=5 // pred_check_branch
        %931 = sbr.rel (%p929) target = $region40
      $region39: #{tpu_custom_call.1} parent=5 // pred_region
        // Predicated region
        $region41: #{tpu_custom_call.1} parent=39 // pred_check
          %p932 = pneg %p134
        $region42: #{tpu_custom_call.1} parent=39 // pred_check_branch
          %934 = sbr.rel (%p932) target = $region44
        $region43: #{tpu_custom_call.1} parent=39 // pred_region
          %p935 = scmp.lt.s32.totalorder %s72, 1
          %s936 = scalar_select %p935, %s72, 1
          %s937 = smul.addr %s936, 4
          %s938 = smul.addr %s937, 8
          %s939 = scalar_lea.vmem %s5, %s938
        $region44: #{tpu_custom_call.1} parent=39 // pred_fallthru
          _
        // Predicated region
        $region45: #{tpu_custom_call.1} parent=39 // pred_check
          %p940 = pneg %p160
        $region46: #{tpu_custom_call.1} parent=39 // pred_check_branch
          %942 = sbr.rel (%p940) target = $region48
        $region47: #{tpu_custom_call.1} parent=39 // pred_region
          %p943 = scmp.lt.s32.totalorder %s72, 1
          %s944 = scalar_select %p943, %s72, 1
          %s945 = smul.addr %s944, 4
          %s946 = smul.addr %s945, 8
          %s947 = scalar_lea.vmem %s7, %s946
        $region48: #{tpu_custom_call.1} parent=39 // pred_fallthru
          _
        // Predicated region
        $region49: #{tpu_custom_call.1} parent=39 // pred_check
          %p948 = pneg %p186
        $region50: #{tpu_custom_call.1} parent=39 // pred_check_branch
          %950 = sbr.rel (%p948) target = $region52
        $region51: #{tpu_custom_call.1} parent=39 // pred_region
          %p951 = scmp.lt.s32.totalorder %s72, 1
          %s952 = scalar_select %p951, %s72, 1
          %s953 = smul.addr %s952, 4
          %s954 = smul.addr %s953, 8
          %s955 = scalar_lea.vmem %s9, %s954
        $region52: #{tpu_custom_call.1} parent=39 // pred_fallthru
          _
        // Predicated region
        $region53: #{tpu_custom_call.1} parent=39 // pred_check
          %p956 = pneg %p212
        $region54: #{tpu_custom_call.1} parent=39 // pred_check_branch
          %958 = sbr.rel (%p956) target = $region56
        $region55: #{tpu_custom_call.1} parent=39 // pred_region
          %p959 = scmp.lt.s32.totalorder %s72, 1
          %s960 = scalar_select %p959, %s72, 1
          %s961 = scalar_lea.vmem %s11, %s960
        $region56: #{tpu_custom_call.1} parent=39 // pred_fallthru
          _
        // Predicated region
        $region57: #{tpu_custom_call.1} parent=39 // pred_check
          %p962 = pneg %p238
        $region58: #{tpu_custom_call.1} parent=39 // pred_check_branch
          %964 = sbr.rel (%p962) target = $region60
        $region59: #{tpu_custom_call.1} parent=39 // pred_region
          %p965 = scmp.lt.s32.totalorder %s72, 1
          %s966 = scalar_select %p965, %s72, 1
          %s967 = scalar_lea.vmem %s13, %s966
        $region60: #{tpu_custom_call.1} parent=39 // pred_fallthru
          _
        // Predicated region
        $region61: #{tpu_custom_call.1} parent=39 // pred_check
          %p968 = pneg %p264
        $region62: #{tpu_custom_call.1} parent=39 // pred_check_branch
          %970 = sbr.rel (%p968) target = $region64
        $region63: #{tpu_custom_call.1} parent=39 // pred_region
          %p971 = scmp.lt.s32.totalorder %s72, 1
          %s972 = scalar_select %p971, %s72, 1
          %s973 = scalar_lea.vmem %s15, %s972
        $region64: #{tpu_custom_call.1} parent=39 // pred_fallthru
          _
        // Predicated region
        $region65: #{tpu_custom_call.1} parent=39 // pred_check
          %p974 = pneg %p290
        $region66: #{tpu_custom_call.1} parent=39 // pred_check_branch
          %976 = sbr.rel (%p974) target = $region68
        $region67: #{tpu_custom_call.1} parent=39 // pred_region
          %p977 = scmp.lt.s32.totalorder %s72, 1
          %s978 = scalar_select %p977, %s72, 1
          %s979 = smul.addr %s978, 4
          %s980 = smul.addr %s979, 8
          %s981 = scalar_lea.vmem %s17, %s980
        $region68: #{tpu_custom_call.1} parent=39 // pred_fallthru
          _
        // Predicated region
        $region69: #{tpu_custom_call.1} parent=39 // pred_check
          %p982 = pneg %p316
        $region70: #{tpu_custom_call.1} parent=39 // pred_check_branch
          %984 = sbr.rel (%p982) target = $region72
        $region71: #{tpu_custom_call.1} parent=39 // pred_region
          %p985 = scmp.lt.s32.totalorder %s72, 1
          %s986 = scalar_select %p985, %s72, 1
          %s987 = scalar_lea.vmem %s19, %s986
        $region72: #{tpu_custom_call.1} parent=39 // pred_fallthru
          _
        // Predicated region
        $region73: #{tpu_custom_call.1} parent=39 // pred_check
          %p988 = pneg %p342
        $region74: #{tpu_custom_call.1} parent=39 // pred_check_branch
          %990 = sbr.rel (%p988) target = $region76
        $region75: #{tpu_custom_call.1} parent=39 // pred_region
          %p991 = scmp.lt.s32.totalorder %s72, 1
          %s992 = scalar_select %p991, %s72, 1
          %s993 = smul.addr %s992, 4
          %s994 = smul.addr %s993, 8
          %s995 = scalar_lea.vmem %s21, %s994
        $region76: #{tpu_custom_call.1} parent=39 // pred_fallthru
          _
        // Predicated region
        $region77: #{tpu_custom_call.1} parent=39 // pred_check
          %p996 = pneg %p368
        $region78: #{tpu_custom_call.1} parent=39 // pred_check_branch
          %998 = sbr.rel (%p996) target = $region80
        $region79: #{tpu_custom_call.1} parent=39 // pred_region
          %p999 = scmp.lt.s32.totalorder %s72, 1
          %s1000 = scalar_select %p999, %s72, 1
          %s1001 = smul.addr %s1000, 4
          %s1002 = smul.addr %s1001, 8
          %s1003 = scalar_lea.vmem %s23, %s1002
        $region80: #{tpu_custom_call.1} parent=39 // pred_fallthru
          _
        // Predicated region
        $region81: #{tpu_custom_call.1} parent=39 // pred_check
          %p1004 = pneg %p394
        $region82: #{tpu_custom_call.1} parent=39 // pred_check_branch
          %1006 = sbr.rel (%p1004) target = $region84
        $region83: #{tpu_custom_call.1} parent=39 // pred_region
          %p1007 = scmp.lt.s32.totalorder %s72, 1
          %s1008 = scalar_select %p1007, %s72, 1
          %s1009 = smul.addr %s1008, 4
          %s1010 = smul.addr %s1009, 8
          %s1011 = scalar_lea.vmem %s25, %s1010
        $region84: #{tpu_custom_call.1} parent=39 // pred_fallthru
          _
        // Predicated region
        $region85: #{tpu_custom_call.1} parent=39 // pred_check
          %p1012 = pneg %p420
        $region86: #{tpu_custom_call.1} parent=39 // pred_check_branch
          %1014 = sbr.rel (%p1012) target = $region88
        $region87: #{tpu_custom_call.1} parent=39 // pred_region
          %p1015 = scmp.lt.s32.totalorder %s72, 1
          %s1016 = scalar_select %p1015, %s72, 1
          %s1017 = scalar_lea.vmem %s27, %s1016
        $region88: #{tpu_custom_call.1} parent=39 // pred_fallthru
          _
        // Predicated region
        $region89: #{tpu_custom_call.1} parent=39 // pred_check
          %p1018 = pneg %p446
        $region90: #{tpu_custom_call.1} parent=39 // pred_check_branch
          %1020 = sbr.rel (%p1018) target = $region92
        $region91: #{tpu_custom_call.1} parent=39 // pred_region
          %p1021 = scmp.lt.s32.totalorder %s72, 1
          %s1022 = scalar_select %p1021, %s72, 1
          %s1023 = scalar_lea.vmem %s29, %s1022
        $region92: #{tpu_custom_call.1} parent=39 // pred_fallthru
          _
        // Predicated region
        $region93: #{tpu_custom_call.1} parent=39 // pred_check
          %p1024 = pneg %p472
        $region94: #{tpu_custom_call.1} parent=39 // pred_check_branch
          %1026 = sbr.rel (%p1024) target = $region96
        $region95: #{tpu_custom_call.1} parent=39 // pred_region
          %p1027 = scmp.lt.s32.totalorder %s72, 1
          %s1028 = scalar_select %p1027, %s72, 1
          %s1029 = scalar_lea.vmem %s31, %s1028
        $region96: #{tpu_custom_call.1} parent=39 // pred_fallthru
          _
        // Predicated region
        $region97: #{tpu_custom_call.1} parent=39 // pred_check
          %p1030 = pneg %p498
        $region98: #{tpu_custom_call.1} parent=39 // pred_check_branch
          %1032 = sbr.rel (%p1030) target = $region100
        $region99: #{tpu_custom_call.1} parent=39 // pred_region
          %p1033 = scmp.lt.s32.totalorder %s72, 1
          %s1034 = scalar_select %p1033, %s72, 1
          %s1035 = smul.addr %s1034, 4
          %s1036 = smul.addr %s1035, 8
          %s1037 = scalar_lea.vmem %s33, %s1036
        $region100: #{tpu_custom_call.1} parent=39 // pred_fallthru
          _
        // Predicated region
        $region101: #{tpu_custom_call.1} parent=39 // pred_check
          %p1038 = pneg %p524
        $region102: #{tpu_custom_call.1} parent=39 // pred_check_branch
          %1040 = sbr.rel (%p1038) target = $region104
        $region103: #{tpu_custom_call.1} parent=39 // pred_region
          %p1041 = scmp.lt.s32.totalorder %s72, 1
          %s1042 = scalar_select %p1041, %s72, 1
          %s1043 = scalar_lea.vmem %s35, %s1042
        $region104: #{tpu_custom_call.1} parent=39 // pred_fallthru
          _
        // Predicated region
        $region105: #{tpu_custom_call.1} parent=39 // pred_check
          %p1044 = pneg %p550
        $region106: #{tpu_custom_call.1} parent=39 // pred_check_branch
          %1046 = sbr.rel (%p1044) target = $region108
        $region107: #{tpu_custom_call.1} parent=39 // pred_region
          %p1047 = scmp.lt.s32.totalorder %s72, 1
          %s1048 = scalar_select %p1047, %s72, 1
          %s1049 = scalar_lea.vmem %s37, %s1048
        $region108: #{tpu_custom_call.1} parent=39 // pred_fallthru
          _
        // Predicated region
        $region109: #{tpu_custom_call.1} parent=39 // pred_check
          %p1050 = pneg %p576
        $region110: #{tpu_custom_call.1} parent=39 // pred_check_branch
          %1052 = sbr.rel (%p1050) target = $region112
        $region111: #{tpu_custom_call.1} parent=39 // pred_region
          %p1053 = scmp.lt.s32.totalorder %s72, 1
          %s1054 = scalar_select %p1053, %s72, 1
          %s1055 = scalar_lea.vmem %s39, %s1054
        $region112: #{tpu_custom_call.1} parent=39 // pred_fallthru
          _
        // Predicated region
        $region113: #{tpu_custom_call.1} parent=39 // pred_check
          %p1056 = pneg %p602
        $region114: #{tpu_custom_call.1} parent=39 // pred_check_branch
          %1058 = sbr.rel (%p1056) target = $region116
        $region115: #{tpu_custom_call.1} parent=39 // pred_region
          %p1059 = scmp.lt.s32.totalorder %s72, 1
          %s1060 = scalar_select %p1059, %s72, 1
          %s1061 = scalar_lea.vmem %s41, %s1060
        $region116: #{tpu_custom_call.1} parent=39 // pred_fallthru
          _
        // Predicated region
        $region117: #{tpu_custom_call.1} parent=39 // pred_check
          %p1062 = pneg %p628
        $region118: #{tpu_custom_call.1} parent=39 // pred_check_branch
          %1064 = sbr.rel (%p1062) target = $region120
        $region119: #{tpu_custom_call.1} parent=39 // pred_region
          %p1065 = scmp.lt.s32.totalorder %s72, 1
          %s1066 = scalar_select %p1065, %s72, 1
          %s1067 = scalar_lea.vmem %s43, %s1066
        $region120: #{tpu_custom_call.1} parent=39 // pred_fallthru
          _
        // Predicated region
        $region121: #{tpu_custom_call.1} parent=39 // pred_check
          %p1068 = pneg %p654
        $region122: #{tpu_custom_call.1} parent=39 // pred_check_branch
          %1070 = sbr.rel (%p1068) target = $region124
        $region123: #{tpu_custom_call.1} parent=39 // pred_region
          %p1071 = scmp.lt.s32.totalorder %s72, 1
          %s1072 = scalar_select %p1071, %s72, 1
          %s1073 = scalar_lea.vmem %s45, %s1072
        $region124: #{tpu_custom_call.1} parent=39 // pred_fallthru
          _
        // Predicated region
        $region125: #{tpu_custom_call.1} parent=39 // pred_check
          %p1074 = pneg %p680
        $region126: #{tpu_custom_call.1} parent=39 // pred_check_branch
          %1076 = sbr.rel (%p1074) target = $region128
        $region127: #{tpu_custom_call.1} parent=39 // pred_region
          %p1077 = scmp.lt.s32.totalorder %s72, 1
          %s1078 = scalar_select %p1077, %s72, 1
          %s1079 = scalar_lea.vmem %s47, %s1078
        $region128: #{tpu_custom_call.1} parent=39 // pred_fallthru
          _
        // Predicated region
        $region129: #{tpu_custom_call.1} parent=39 // pred_check
          %p1080 = pneg %p706
        $region130: #{tpu_custom_call.1} parent=39 // pred_check_branch
          %1082 = sbr.rel (%p1080) target = $region132
        $region131: #{tpu_custom_call.1} parent=39 // pred_region
          %p1083 = scmp.lt.s32.totalorder %s72, 1
          %s1084 = scalar_select %p1083, %s72, 1
          %s1085 = smul.addr %s1084, 64
          %s1086 = smul.addr %s1085, 8
          %s1087 = scalar_lea.vmem %s49, %s1086
        $region132: #{tpu_custom_call.1} parent=39 // pred_fallthru
          _
        // Predicated region
        $region133: #{tpu_custom_call.1} parent=39 // pred_check
          %p1088 = pneg %p732
        $region134: #{tpu_custom_call.1} parent=39 // pred_check_branch
          %1090 = sbr.rel (%p1088) target = $region136
        $region135: #{tpu_custom_call.1} parent=39 // pred_region
          %p1091 = scmp.lt.s32.totalorder %s72, 1
          %s1092 = scalar_select %p1091, %s72, 1
          %s1093 = smul.addr %s1092, 16
          %s1094 = scalar_lea.vmem %s51, %s1093
        $region136: #{tpu_custom_call.1} parent=39 // pred_fallthru
          _
        // Predicated region
        $region137: #{tpu_custom_call.1} parent=39 // pred_check
          %p1095 = pneg %p758
        $region138: #{tpu_custom_call.1} parent=39 // pred_check_branch
          %1097 = sbr.rel (%p1095) target = $region140
        $region139: #{tpu_custom_call.1} parent=39 // pred_region
          %p1098 = scmp.lt.s32.totalorder %s72, 1
          %s1099 = scalar_select %p1098, %s72, 1
          %s1100 = smul.addr %s1099, 256
          %s1101 = smul.addr %s1100, 8
          %s1102 = scalar_lea.vmem %s53, %s1101
        $region140: #{tpu_custom_call.1} parent=39 // pred_fallthru
          _
        // Predicated region
        $region141: #{tpu_custom_call.1} parent=39 // pred_check
          %p1103 = pneg %p784
        $region142: #{tpu_custom_call.1} parent=39 // pred_check_branch
          %1105 = sbr.rel (%p1103) target = $region144
        $region143: #{tpu_custom_call.1} parent=39 // pred_region
          %p1106 = scmp.lt.s32.totalorder %s72, 1
          %s1107 = scalar_select %p1106, %s72, 1
          %s1108 = scalar_lea.vmem %s55, %s1107
        $region144: #{tpu_custom_call.1} parent=39 // pred_fallthru
          _
      $region40: #{tpu_custom_call.1} parent=5 // pred_fallthru
        _
      %p1109 = scmp.le.s32.totalorder 1, %s72
      %p1110 = scmp.lt.s32.totalorder %s72, 3
      %p1111 = pnand %p1109, %p1110
      %p1112 = pneg %p1111
      // Predicated region
      $region145: #{tpu_custom_call.1} parent=5 // pred_check
        _
      $region146: #{tpu_custom_call.1} parent=5 // pred_check_branch
        %1114 = sbr.rel (%p1111) target = $region148
      $region147: #{tpu_custom_call.1} parent=5 // pred_region
        %s1115 = ssub.s32 %s72, 1
        %p1116 = pneg %p93
        %p1117 = pneg %p90
        %p1118 = pneg %p114
        %p1119 = pneg %p111
        %p1120 = scmp.lt.s32.totalorder %s77, 1
        %s1121 = scalar_select %p1120, %s77, 1
        %s1122 = smul.addr %s1121, 4
        %s1123 = smul.addr %s1122, 8
        %s1124 = scalar_lea.vmem %s5, %s1123
        %p1125 = pneg %p140
        %p1126 = pneg %p137
        %p1127 = scmp.lt.s32.totalorder %s77, 1
        %s1128 = scalar_select %p1127, %s77, 1
        %s1129 = smul.addr %s1128, 4
        %s1130 = smul.addr %s1129, 8
        %s1131 = scalar_lea.vmem %s7, %s1130
        %p1132 = pneg %p166
        %p1133 = pneg %p163
        %p1134 = scmp.lt.s32.totalorder %s77, 1
        %s1135 = scalar_select %p1134, %s77, 1
        %s1136 = smul.addr %s1135, 4
        %s1137 = smul.addr %s1136, 8
        %s1138 = scalar_lea.vmem %s9, %s1137
        %p1139 = pneg %p192
        %p1140 = pneg %p189
        %p1141 = scmp.lt.s32.totalorder %s77, 1
        %s1142 = scalar_select %p1141, %s77, 1
        %s1143 = scalar_lea.vmem %s11, %s1142
        %p1144 = pneg %p218
        %p1145 = pneg %p215
        %p1146 = scmp.lt.s32.totalorder %s77, 1
        %s1147 = scalar_select %p1146, %s77, 1
        %s1148 = scalar_lea.vmem %s13, %s1147
        %p1149 = pneg %p244
        %p1150 = pneg %p241
        %p1151 = scmp.lt.s32.totalorder %s77, 1
        %s1152 = scalar_select %p1151, %s77, 1
        %s1153 = scalar_lea.vmem %s15, %s1152
        %p1154 = pneg %p270
        %p1155 = pneg %p267
        %p1156 = scmp.lt.s32.totalorder %s77, 1
        %s1157 = scalar_select %p1156, %s77, 1
        %s1158 = smul.addr %s1157, 4
        %s1159 = smul.addr %s1158, 8
        %s1160 = scalar_lea.vmem %s17, %s1159
        %p1161 = pneg %p296
        %p1162 = pneg %p293
        %p1163 = scmp.lt.s32.totalorder %s77, 1
        %s1164 = scalar_select %p1163, %s77, 1
        %s1165 = scalar_lea.vmem %s19, %s1164
        %p1166 = pneg %p322
        %p1167 = pneg %p319
        %p1168 = scmp.lt.s32.totalorder %s77, 1
        %s1169 = scalar_select %p1168, %s77, 1
        %s1170 = smul.addr %s1169, 4
        %s1171 = smul.addr %s1170, 8
        %s1172 = scalar_lea.vmem %s21, %s1171
        %p1173 = pneg %p348
        %p1174 = pneg %p345
        %p1175 = scmp.lt.s32.totalorder %s77, 1
        %s1176 = scalar_select %p1175, %s77, 1
        %s1177 = smul.addr %s1176, 4
        %s1178 = smul.addr %s1177, 8
        %s1179 = scalar_lea.vmem %s23, %s1178
        %p1180 = pneg %p374
        %p1181 = pneg %p371
        %p1182 = scmp.lt.s32.totalorder %s77, 1
        %s1183 = scalar_select %p1182, %s77, 1
        %s1184 = smul.addr %s1183, 4
        %s1185 = smul.addr %s1184, 8
        %s1186 = scalar_lea.vmem %s25, %s1185
        %p1187 = pneg %p400
        %p1188 = pneg %p397
        %p1189 = scmp.lt.s32.totalorder %s77, 1
        %s1190 = scalar_select %p1189, %s77, 1
        %s1191 = scalar_lea.vmem %s27, %s1190
        %p1192 = pneg %p426
        %p1193 = pneg %p423
        %p1194 = scmp.lt.s32.totalorder %s77, 1
        %s1195 = scalar_select %p1194, %s77, 1
        %s1196 = scalar_lea.vmem %s29, %s1195
        %p1197 = pneg %p452
        %p1198 = pneg %p449
        %p1199 = scmp.lt.s32.totalorder %s77, 1
        %s1200 = scalar_select %p1199, %s77, 1
        %s1201 = scalar_lea.vmem %s31, %s1200
        %p1202 = pneg %p478
        %p1203 = pneg %p475
        %p1204 = scmp.lt.s32.totalorder %s77, 1
        %s1205 = scalar_select %p1204, %s77, 1
        %s1206 = smul.addr %s1205, 4
        %s1207 = smul.addr %s1206, 8
        %s1208 = scalar_lea.vmem %s33, %s1207
        %p1209 = pneg %p504
        %p1210 = pneg %p501
        %p1211 = scmp.lt.s32.totalorder %s77, 1
        %s1212 = scalar_select %p1211, %s77, 1
        %s1213 = scalar_lea.vmem %s35, %s1212
        %p1214 = pneg %p530
        %p1215 = pneg %p527
        %p1216 = scmp.lt.s32.totalorder %s77, 1
        %s1217 = scalar_select %p1216, %s77, 1
        %s1218 = scalar_lea.vmem %s37, %s1217
        %p1219 = pneg %p556
        %p1220 = pneg %p553
        %p1221 = scmp.lt.s32.totalorder %s77, 1
        %s1222 = scalar_select %p1221, %s77, 1
        %s1223 = scalar_lea.vmem %s39, %s1222
        %p1224 = pneg %p582
        %p1225 = pneg %p579
        %p1226 = scmp.lt.s32.totalorder %s77, 1
        %s1227 = scalar_select %p1226, %s77, 1
        %s1228 = scalar_lea.vmem %s41, %s1227
        %p1229 = pneg %p608
        %p1230 = pneg %p605
        %p1231 = scmp.lt.s32.totalorder %s77, 1
        %s1232 = scalar_select %p1231, %s77, 1
        %s1233 = scalar_lea.vmem %s43, %s1232
        %p1234 = pneg %p634
        %p1235 = pneg %p631
        %p1236 = scmp.lt.s32.totalorder %s77, 1
        %s1237 = scalar_select %p1236, %s77, 1
        %s1238 = scalar_lea.vmem %s45, %s1237
        %p1239 = pneg %p660
        %p1240 = pneg %p657
        %p1241 = scmp.lt.s32.totalorder %s77, 1
        %s1242 = scalar_select %p1241, %s77, 1
        %s1243 = scalar_lea.vmem %s47, %s1242
        %p1244 = pneg %p686
        %p1245 = pneg %p683
        %p1246 = scmp.lt.s32.totalorder %s77, 1
        %s1247 = scalar_select %p1246, %s77, 1
        %s1248 = smul.addr %s1247, 64
        %s1249 = smul.addr %s1248, 8
        %s1250 = scalar_lea.vmem %s49, %s1249
        %p1251 = pneg %p712
        %p1252 = pneg %p709
        %p1253 = scmp.lt.s32.totalorder %s77, 1
        %s1254 = scalar_select %p1253, %s77, 1
        %s1255 = smul.addr %s1254, 16
        %s1256 = scalar_lea.vmem %s51, %s1255
        %p1257 = pneg %p738
        %p1258 = pneg %p735
        %p1259 = scmp.lt.s32.totalorder %s77, 1
        %s1260 = scalar_select %p1259, %s77, 1
        %s1261 = smul.addr %s1260, 256
        %s1262 = smul.addr %s1261, 8
        %s1263 = scalar_lea.vmem %s53, %s1262
        %p1264 = pneg %p764
        %p1265 = pneg %p761
        %p1266 = scmp.lt.s32.totalorder %s77, 1
        %s1267 = scalar_select %p1266, %s77, 1
        %s1268 = scalar_lea.vmem %s55, %s1267
        %p1269 = pneg %p790
        %p1270 = pneg %p787
        %p1271 = pneg %p811
        %p1272 = pneg %p808
        %p1273 = pneg %p832
        %p1274 = pneg %p829
        %p1275 = pneg %p853
        %p1276 = pneg %p850
        %p1277 = pneg %p874
        %p1278 = pneg %p871
        %p1279 = pneg %p895
        %p1280 = pneg %p892
        %p1281 = scmp.lt.s32.totalorder %s77, 1
        %s1282 = scalar_select %p1281, %s77, 1
        %s1283 = smul.addr %s1282, 4
        %s1284 = smul.addr %s1283, 8
        %s1285 = scalar_lea.vmem %s5, %s1284
        %p1286 = scmp.lt.s32.totalorder %s77, 1
        %s1287 = scalar_select %p1286, %s77, 1
        %s1288 = smul.addr %s1287, 4
        %s1289 = smul.addr %s1288, 8
        %s1290 = scalar_lea.vmem %s7, %s1289
        %p1291 = scmp.lt.s32.totalorder %s77, 1
        %s1292 = scalar_select %p1291, %s77, 1
        %s1293 = smul.addr %s1292, 4
        %s1294 = smul.addr %s1293, 8
        %s1295 = scalar_lea.vmem %s9, %s1294
        %p1296 = scmp.lt.s32.totalorder %s77, 1
        %s1297 = scalar_select %p1296, %s77, 1
        %s1298 = scalar_lea.vmem %s11, %s1297
        %p1299 = scmp.lt.s32.totalorder %s77, 1
        %s1300 = scalar_select %p1299, %s77, 1
        %s1301 = scalar_lea.vmem %s13, %s1300
        %p1302 = scmp.lt.s32.totalorder %s77, 1
        %s1303 = scalar_select %p1302, %s77, 1
        %s1304 = scalar_lea.vmem %s15, %s1303
        %p1305 = scmp.lt.s32.totalorder %s77, 1
        %s1306 = scalar_select %p1305, %s77, 1
        %s1307 = smul.addr %s1306, 4
        %s1308 = smul.addr %s1307, 8
        %s1309 = scalar_lea.vmem %s17, %s1308
        %p1310 = scmp.lt.s32.totalorder %s77, 1
        %s1311 = scalar_select %p1310, %s77, 1
        %s1312 = scalar_lea.vmem %s19, %s1311
        %p1313 = scmp.lt.s32.totalorder %s77, 1
        %s1314 = scalar_select %p1313, %s77, 1
        %s1315 = smul.addr %s1314, 4
        %s1316 = smul.addr %s1315, 8
        %s1317 = scalar_lea.vmem %s21, %s1316
        %p1318 = scmp.lt.s32.totalorder %s77, 1
        %s1319 = scalar_select %p1318, %s77, 1
        %s1320 = smul.addr %s1319, 4
        %s1321 = smul.addr %s1320, 8
        %s1322 = scalar_lea.vmem %s23, %s1321
        %p1323 = scmp.lt.s32.totalorder %s77, 1
        %s1324 = scalar_select %p1323, %s77, 1
        %s1325 = smul.addr %s1324, 4
        %s1326 = smul.addr %s1325, 8
        %s1327 = scalar_lea.vmem %s25, %s1326
        %p1328 = scmp.lt.s32.totalorder %s77, 1
        %s1329 = scalar_select %p1328, %s77, 1
        %s1330 = scalar_lea.vmem %s27, %s1329
        %p1331 = scmp.lt.s32.totalorder %s77, 1
        %s1332 = scalar_select %p1331, %s77, 1
        %s1333 = scalar_lea.vmem %s29, %s1332
        %p1334 = scmp.lt.s32.totalorder %s77, 1
        %s1335 = scalar_select %p1334, %s77, 1
        %s1336 = scalar_lea.vmem %s31, %s1335
        %p1337 = scmp.lt.s32.totalorder %s77, 1
        %s1338 = scalar_select %p1337, %s77, 1
        %s1339 = smul.addr %s1338, 4
        %s1340 = smul.addr %s1339, 8
        %s1341 = scalar_lea.vmem %s33, %s1340
        %p1342 = scmp.lt.s32.totalorder %s77, 1
        %s1343 = scalar_select %p1342, %s77, 1
        %s1344 = scalar_lea.vmem %s35, %s1343
        %p1345 = scmp.lt.s32.totalorder %s77, 1
        %s1346 = scalar_select %p1345, %s77, 1
        %s1347 = scalar_lea.vmem %s37, %s1346
        %p1348 = scmp.lt.s32.totalorder %s77, 1
        %s1349 = scalar_select %p1348, %s77, 1
        %s1350 = scalar_lea.vmem %s39, %s1349
        %p1351 = scmp.lt.s32.totalorder %s77, 1
        %s1352 = scalar_select %p1351, %s77, 1
        %s1353 = scalar_lea.vmem %s41, %s1352
        %p1354 = scmp.lt.s32.totalorder %s77, 1
        %s1355 = scalar_select %p1354, %s77, 1
        %s1356 = scalar_lea.vmem %s43, %s1355
        %p1357 = scmp.lt.s32.totalorder %s77, 1
        %s1358 = scalar_select %p1357, %s77, 1
        %s1359 = scalar_lea.vmem %s45, %s1358
        %p1360 = scmp.lt.s32.totalorder %s77, 1
        %s1361 = scalar_select %p1360, %s77, 1
        %s1362 = scalar_lea.vmem %s47, %s1361
        %p1363 = scmp.lt.s32.totalorder %s77, 1
        %s1364 = scalar_select %p1363, %s77, 1
        %s1365 = smul.addr %s1364, 64
        %s1366 = smul.addr %s1365, 8
        %s1367 = scalar_lea.vmem %s49, %s1366
        %p1368 = scmp.lt.s32.totalorder %s77, 1
        %s1369 = scalar_select %p1368, %s77, 1
        %s1370 = smul.addr %s1369, 16
        %s1371 = scalar_lea.vmem %s51, %s1370
        %p1372 = scmp.lt.s32.totalorder %s77, 1
        %s1373 = scalar_select %p1372, %s77, 1
        %s1374 = smul.addr %s1373, 256
        %s1375 = smul.addr %s1374, 8
        %s1376 = scalar_lea.vmem %s53, %s1375
        %p1377 = scmp.lt.s32.totalorder %s77, 1
        %s1378 = scalar_select %p1377, %s77, 1
        %s1379 = scalar_lea.vmem %s55, %s1378
        %p1380 = scmp.eq.s32.totalorder %s77, 0
        // Predicated region
        $region149: #{tpu_custom_call.1} parent=147 // pred_check
          %p1381 = pneg %p1380
        $region150: #{tpu_custom_call.1} parent=147 // pred_check_branch
          %1383 = sbr.rel (%p1381) target = $region152
        $region151: #{tpu_custom_call.1} parent=147 // pred_region
          %v1384 = vld [vmem:[%s1] sm:$0xff]
          %vm1385 = vcmask 261120
          %1386 = vst.msk [vmem:[#allocation2] sm:$0xff] %vm1385, %v1384
          %1387 = vst.msk [vmem:[#allocation2 + $0x8] sm:$0xff] %vm1385, %v1384
        $region152: #{tpu_custom_call.1} parent=147 // pred_fallthru
          _
        %v1388 = vld [vmem:[#allocation2] sm:$0xff]
        %v1389 = vld [vmem:[#allocation2 + $0x8] sm:$0xff]
        %v1390 = vld [vmem:[%s3] sm:$0xff]
        %v1391 = vld [vmem:[%s3 + $0x8] sm:$0xff]
        %v1392 = vld [vmem:[%s1285] sm:$0xff]
        %v1393 = vld [vmem:[%s1285 + $0x8] sm:$0xff]
        %v1394 = vld [vmem:[%s1285 + $0x10] sm:$0xff]
        %v1395 = vld [vmem:[%s1285 + $0x18] sm:$0xff]
        %v1396 = vld [vmem:[%s1290] sm:$0xff]
        %v1397 = vld [vmem:[%s1290 + $0x8] sm:$0xff]
        %v1398 = vld [vmem:[%s1290 + $0x10] sm:$0xff]
        %v1399 = vld [vmem:[%s1290 + $0x18] sm:$0xff]
        %v1400 = vld [vmem:[%s1295] sm:$0xff]
        %v1401 = vld [vmem:[%s1295 + $0x8] sm:$0xff]
        %v1402 = vld [vmem:[%s1295 + $0x10] sm:$0xff]
        %v1403 = vld [vmem:[%s1295 + $0x18] sm:$0xff]
        %v1404 = vld [vmem:[%s1298] sm:$0x1]
        %v1405 = vld [vmem:[%s1301] sm:$0x1]
        %v1406 = vld [vmem:[%s1304] sm:$0x1]
        %v1407 = vld [vmem:[%s1309] sm:$0xff]
        %v1408 = vld [vmem:[%s1309 + $0x8] sm:$0xff]
        %v1409 = vld [vmem:[%s1309 + $0x10] sm:$0xff]
        %v1410 = vld [vmem:[%s1309 + $0x18] sm:$0xff]
        %v1411 = vld [vmem:[%s1312] sm:$0x1]
        %v1413 = vlaneseq
        %v1414 = vshrl.u32 %v1413, 7
        %v1415 = vsub.s32 0, %v1414
        %v1416 = vrot.slane %v1404, %v1415
        %vm1418 = vcmask 261120
        %v1420 = vsel %vm1418, %v1388, 0
        %v1423 = vsel %vm1418, %v1389, 0
        %1425 = vmatprep.subr.mxu0 0.0
        %1426 = vmatpush1.msra.mxu0 0.0
        %1427 = vmatprep.subr.mxu0 0.0
        %1428 = vmatpush1.msra.mxu0 0.0
        %1429 = vmatprep.subr.mxu0 0.0
        %1430 = vmatpush1.msra.mxu0 0.0
        %1431 = vmatprep.subr.mxu0 0.0
        %1432 = vmatpush1.msra.mxu0 0.0
        %1433 = vmatprep.subr.mxu0 0.0
        %1434 = vmatpush1.msra.mxu0 0.0
        %1435 = vmatprep.subr.mxu0 0.0
        %1436 = vmatpush1.msra.mxu0 0.0
        %1437 = vmatprep.subr.mxu0 0.0
        %1438 = vmatpush1.msra.mxu0 0.0
        %1439 = vmatprep.subr.mxu0 0.0
        %1440 = vmatpush1.msra.mxu0 0.0
        %1441 = vmatprep.subr.mxu0 0.0
        %1442 = vmatpush1.msra.mxu0 0.0
        %1443 = vmatprep.subr.mxu0 0.0
        %1444 = vmatpush1.msra.mxu0 0.0
        %1445 = vmatprep.subr.mxu0 0.0
        %1446 = vmatpush1.msra.mxu0 0.0
        %1447 = vmatprep.subr.mxu0 0.0
        %1448 = vmatpush1.msra.mxu0 0.0
        %1449 = vmatprep.subr.mxu0 0.0
        %1450 = vmatpush1.msra.mxu0 %v1395
        %1451 = vmatprep.subr.mxu0 0.0
        %1452 = vmatpush1.msra.mxu0 %v1394
        %1453 = vmatprep.subr.mxu0 0.0
        %1454 = vmatpush1.msra.mxu0 %v1393
        %1455 = vmatprep.subr.mxu0 0.0
        %1456 = vmatpush1.msra.mxu0 %v1392
        %1457 = vmatprep.subr.mxu0 0.0
        %1458 = vmatpush2.msra.mxu0 0.0
        %1459 = vmatprep.subr.mxu0 0.0
        %1460 = vmatpush2.msra.mxu0 0.0
        %1461 = vmatprep.subr.mxu0 0.0
        %1462 = vmatpush2.msra.mxu0 0.0
        %1463 = vmatprep.subr.mxu0 0.0
        %1464 = vmatpush2.msra.mxu0 0.0
        %1465 = vmatprep.subr.mxu0 0.0
        %1466 = vmatpush2.msra.mxu0 0.0
        %1467 = vmatprep.subr.mxu0 0.0
        %1468 = vmatpush2.msra.mxu0 0.0
        %1469 = vmatprep.subr.mxu0 0.0
        %1470 = vmatpush2.msra.mxu0 0.0
        %1471 = vmatprep.subr.mxu0 0.0
        %1472 = vmatpush2.msra.mxu0 0.0
        %1473 = vmatprep.subr.mxu0 0.0
        %1474 = vmatpush2.msra.mxu0 0.0
        %1475 = vmatprep.subr.mxu0 0.0
        %1476 = vmatpush2.msra.mxu0 0.0
        %1477 = vmatprep.subr.mxu0 0.0
        %1478 = vmatpush2.msra.mxu0 0.0
        %1479 = vmatprep.subr.mxu0 0.0
        %1480 = vmatpush2.msra.mxu0 0.0
        %1481 = vmatprep.subr.mxu0 0.0
        %1482 = vmatpush2.msra.mxu0 0.0
        %1483 = vmatprep.subr.mxu0 0.0
        %1484 = vmatpush2.msra.mxu0 0.0
        %1485 = vmatprep.subr.mxu0 0.0
        %1486 = vmatpush2.msra.mxu0 0.0
        %1487 = vmatprep.subr.mxu0 0.0
        %1488 = vmatpush2.msra.mxu0 0.0
        %1489 = vmatprep.mubr.f32.mxu0 0.0
        %1490 = vmatmul.mubr.f32.gmra.mxu0 %v1420
        %v1491 = vpop.f32.mrf.mxu0
        %v1492 = vadd.f32 %v1416, %v1491
        %v1493 = vpop.f32.mrf.mxu0
        %1494 = vmatprep.mubr.f32.mxu0 0.0
        %1495 = vmatmul.mubr.f32.gmra.mxu0 %v1423
        %v1496 = vpop.f32.mrf.mxu0
        %v1497 = vadd.f32 %v1416, %v1496
        %v1498 = vpop.f32.mrf.mxu0
        %1499 = vdwg.mxu0
        %v1501 = vlaneseq
        %v1502 = vshrl.u32 %v1501, 7
        %v1503 = vsub.s32 0, %v1502
        %v1504 = vrot.slane %v1405, %v1503
        %1506 = vmatprep.subr.mxu0 0.0
        %1507 = vmatpush1.msra.mxu0 0.0
        %1508 = vmatprep.subr.mxu0 0.0
        %1509 = vmatpush1.msra.mxu0 0.0
        %1510 = vmatprep.subr.mxu0 0.0
        %1511 = vmatpush1.msra.mxu0 0.0
        %1512 = vmatprep.subr.mxu0 0.0
        %1513 = vmatpush1.msra.mxu0 0.0
        %1514 = vmatprep.subr.mxu0 0.0
        %1515 = vmatpush1.msra.mxu0 0.0
        %1516 = vmatprep.subr.mxu0 0.0
        %1517 = vmatpush1.msra.mxu0 0.0
        %1518 = vmatprep.subr.mxu0 0.0
        %1519 = vmatpush1.msra.mxu0 0.0
        %1520 = vmatprep.subr.mxu0 0.0
        %1521 = vmatpush1.msra.mxu0 0.0
        %1522 = vmatprep.subr.mxu0 0.0
        %1523 = vmatpush1.msra.mxu0 0.0
        %1524 = vmatprep.subr.mxu0 0.0
        %1525 = vmatpush1.msra.mxu0 0.0
        %1526 = vmatprep.subr.mxu0 0.0
        %1527 = vmatpush1.msra.mxu0 0.0
        %1528 = vmatprep.subr.mxu0 0.0
        %1529 = vmatpush1.msra.mxu0 0.0
        %1530 = vmatprep.subr.mxu0 0.0
        %1531 = vmatpush1.msra.mxu0 %v1399
        %1532 = vmatprep.subr.mxu0 0.0
        %1533 = vmatpush1.msra.mxu0 %v1398
        %1534 = vmatprep.subr.mxu0 0.0
        %1535 = vmatpush1.msra.mxu0 %v1397
        %1536 = vmatprep.subr.mxu0 0.0
        %1537 = vmatpush1.msra.mxu0 %v1396
        %1538 = vmatprep.subr.mxu0 0.0
        %1539 = vmatpush2.msra.mxu0 0.0
        %1540 = vmatprep.subr.mxu0 0.0
        %1541 = vmatpush2.msra.mxu0 0.0
        %1542 = vmatprep.subr.mxu0 0.0
        %1543 = vmatpush2.msra.mxu0 0.0
        %1544 = vmatprep.subr.mxu0 0.0
        %1545 = vmatpush2.msra.mxu0 0.0
        %1546 = vmatprep.subr.mxu0 0.0
        %1547 = vmatpush2.msra.mxu0 0.0
        %1548 = vmatprep.subr.mxu0 0.0
        %1549 = vmatpush2.msra.mxu0 0.0
        %1550 = vmatprep.subr.mxu0 0.0
        %1551 = vmatpush2.msra.mxu0 0.0
        %1552 = vmatprep.subr.mxu0 0.0
        %1553 = vmatpush2.msra.mxu0 0.0
        %1554 = vmatprep.subr.mxu0 0.0
        %1555 = vmatpush2.msra.mxu0 0.0
        %1556 = vmatprep.subr.mxu0 0.0
        %1557 = vmatpush2.msra.mxu0 0.0
        %1558 = vmatprep.subr.mxu0 0.0
        %1559 = vmatpush2.msra.mxu0 0.0
        %1560 = vmatprep.subr.mxu0 0.0
        %1561 = vmatpush2.msra.mxu0 0.0
        %1562 = vmatprep.subr.mxu0 0.0
        %1563 = vmatpush2.msra.mxu0 0.0
        %1564 = vmatprep.subr.mxu0 0.0
        %1565 = vmatpush2.msra.mxu0 0.0
        %1566 = vmatprep.subr.mxu0 0.0
        %1567 = vmatpush2.msra.mxu0 0.0
        %1568 = vmatprep.subr.mxu0 0.0
        %1569 = vmatpush2.msra.mxu0 0.0
        %1570 = vmatprep.mubr.f32.mxu0 0.0
        %1571 = vmatmul.mubr.f32.gmra.mxu0 %v1420
        %v1572 = vpop.f32.mrf.mxu0
        %v1573 = vadd.f32 %v1504, %v1572
        %v1574 = vpop.f32.mrf.mxu0
        %1575 = vmatprep.mubr.f32.mxu0 0.0
        %1576 = vmatmul.mubr.f32.gmra.mxu0 %v1423
        %v1577 = vpop.f32.mrf.mxu0
        %v1578 = vadd.f32 %v1504, %v1577
        %v1579 = vpop.f32.mrf.mxu0
        %1580 = vdwg.mxu0
        %v1582 = vlaneseq
        %v1583 = vshrl.u32 %v1582, 7
        %v1584 = vsub.s32 0, %v1583
        %v1585 = vrot.slane %v1406, %v1584
        %1587 = vmatprep.subr.mxu0 0.0
        %1588 = vmatpush1.msra.mxu0 0.0
        %1589 = vmatprep.subr.mxu0 0.0
        %1590 = vmatpush1.msra.mxu0 0.0
        %1591 = vmatprep.subr.mxu0 0.0
        %1592 = vmatpush1.msra.mxu0 0.0
        %1593 = vmatprep.subr.mxu0 0.0
        %1594 = vmatpush1.msra.mxu0 0.0
        %1595 = vmatprep.subr.mxu0 0.0
        %1596 = vmatpush1.msra.mxu0 0.0
        %1597 = vmatprep.subr.mxu0 0.0
        %1598 = vmatpush1.msra.mxu0 0.0
        %1599 = vmatprep.subr.mxu0 0.0
        %1600 = vmatpush1.msra.mxu0 0.0
        %1601 = vmatprep.subr.mxu0 0.0
        %1602 = vmatpush1.msra.mxu0 0.0
        %1603 = vmatprep.subr.mxu0 0.0
        %1604 = vmatpush1.msra.mxu0 0.0
        %1605 = vmatprep.subr.mxu0 0.0
        %1606 = vmatpush1.msra.mxu0 0.0
        %1607 = vmatprep.subr.mxu0 0.0
        %1608 = vmatpush1.msra.mxu0 0.0
        %1609 = vmatprep.subr.mxu0 0.0
        %1610 = vmatpush1.msra.mxu0 0.0
        %1611 = vmatprep.subr.mxu0 0.0
        %1612 = vmatpush1.msra.mxu0 %v1403
        %1613 = vmatprep.subr.mxu0 0.0
        %1614 = vmatpush1.msra.mxu0 %v1402
        %1615 = vmatprep.subr.mxu0 0.0
        %1616 = vmatpush1.msra.mxu0 %v1401
        %1617 = vmatprep.subr.mxu0 0.0
        %1618 = vmatpush1.msra.mxu0 %v1400
        %1619 = vmatprep.subr.mxu0 0.0
        %1620 = vmatpush2.msra.mxu0 0.0
        %1621 = vmatprep.subr.mxu0 0.0
        %1622 = vmatpush2.msra.mxu0 0.0
        %1623 = vmatprep.subr.mxu0 0.0
        %1624 = vmatpush2.msra.mxu0 0.0
        %1625 = vmatprep.subr.mxu0 0.0
        %1626 = vmatpush2.msra.mxu0 0.0
        %1627 = vmatprep.subr.mxu0 0.0
        %1628 = vmatpush2.msra.mxu0 0.0
        %1629 = vmatprep.subr.mxu0 0.0
        %1630 = vmatpush2.msra.mxu0 0.0
        %1631 = vmatprep.subr.mxu0 0.0
        %1632 = vmatpush2.msra.mxu0 0.0
        %1633 = vmatprep.subr.mxu0 0.0
        %1634 = vmatpush2.msra.mxu0 0.0
        %1635 = vmatprep.subr.mxu0 0.0
        %1636 = vmatpush2.msra.mxu0 0.0
        %1637 = vmatprep.subr.mxu0 0.0
        %1638 = vmatpush2.msra.mxu0 0.0
        %1639 = vmatprep.subr.mxu0 0.0
        %1640 = vmatpush2.msra.mxu0 0.0
        %1641 = vmatprep.subr.mxu0 0.0
        %1642 = vmatpush2.msra.mxu0 0.0
        %1643 = vmatprep.subr.mxu0 0.0
        %1644 = vmatpush2.msra.mxu0 0.0
        %1645 = vmatprep.subr.mxu0 0.0
        %1646 = vmatpush2.msra.mxu0 0.0
        %1647 = vmatprep.subr.mxu0 0.0
        %1648 = vmatpush2.msra.mxu0 0.0
        %1649 = vmatprep.subr.mxu0 0.0
        %1650 = vmatpush2.msra.mxu0 0.0
        %1651 = vmatprep.mubr.f32.mxu0 0.0
        %1652 = vmatmul.mubr.f32.gmra.mxu0 %v1420
        %v1653 = vpop.f32.mrf.mxu0
        %v1654 = vadd.f32 %v1585, %v1653
        %v1655 = vpop.f32.mrf.mxu0
        %1656 = vmatprep.mubr.f32.mxu0 0.0
        %1657 = vmatmul.mubr.f32.gmra.mxu0 %v1423
        %v1658 = vpop.f32.mrf.mxu0
        %v1659 = vadd.f32 %v1585, %v1658
        %v1660 = vpop.f32.mrf.mxu0
        %1661 = vdwg.mxu0
        %v1662 = vlaneseq
        %v1663 = vand.u32 %v1662, 127
        %v1664 = vmul.f32 %v1492, 0.35355338
        %v1665 = vmul.f32 %v1497, 0.35355338
        %vm1666 = vcmask 64512
        %v1668 = vsel %vm1666, %v1664, 0
        %v1671 = vsel %vm1666, %v1573, 0
        %1673 = vmatprep.subr.mxu0 0.0
        %1674 = vmatpush1.xpose.msra.mxu0 0.0
        %1675 = vmatprep.subr.mxu0 0.0
        %1676 = vmatpush1.xpose.msra.mxu0 0.0
        %1677 = vmatprep.subr.mxu0 0.0
        %1678 = vmatpush1.xpose.msra.mxu0 0.0
        %1679 = vmatprep.subr.mxu0 0.0
        %1680 = vmatpush1.xpose.msra.mxu0 0.0
        %1681 = vmatprep.subr.mxu0 0.0
        %1682 = vmatpush1.xpose.msra.mxu0 0.0
        %1683 = vmatprep.subr.mxu0 0.0
        %1684 = vmatpush1.xpose.msra.mxu0 0.0
        %1685 = vmatprep.subr.mxu0 0.0
        %1686 = vmatpush1.xpose.msra.mxu0 0.0
        %1687 = vmatprep.subr.mxu0 0.0
        %1688 = vmatpush1.xpose.msra.mxu0 0.0
        %1689 = vmatprep.subr.mxu0 0.0
        %1690 = vmatpush1.xpose.msra.mxu0 0.0
        %1691 = vmatprep.subr.mxu0 0.0
        %1692 = vmatpush1.xpose.msra.mxu0 0.0
        %1693 = vmatprep.subr.mxu0 0.0
        %1694 = vmatpush1.xpose.msra.mxu0 0.0
        %1695 = vmatprep.subr.mxu0 0.0
        %1696 = vmatpush1.xpose.msra.mxu0 0.0
        %1697 = vmatprep.subr.mxu0 0.0
        %1698 = vmatpush1.xpose.msra.mxu0 0.0
        %1699 = vmatprep.subr.mxu0 0.0
        %1700 = vmatpush1.xpose.msra.mxu0 0.0
        %1701 = vmatprep.subr.mxu0 0.0
        %1702 = vmatpush1.xpose.msra.mxu0 0.0
        %1703 = vmatprep.subr.mxu0 0.0
        %1704 = vmatpush1.xpose.msra.mxu0 %v1671
        %1705 = vmatprep.subr.mxu0 0.0
        %1706 = vmatpush2.xpose.msra.mxu0 0.0
        %1707 = vmatprep.subr.mxu0 0.0
        %1708 = vmatpush2.xpose.msra.mxu0 0.0
        %1709 = vmatprep.subr.mxu0 0.0
        %1710 = vmatpush2.xpose.msra.mxu0 0.0
        %1711 = vmatprep.subr.mxu0 0.0
        %1712 = vmatpush2.xpose.msra.mxu0 0.0
        %1713 = vmatprep.subr.mxu0 0.0
        %1714 = vmatpush2.xpose.msra.mxu0 0.0
        %1715 = vmatprep.subr.mxu0 0.0
        %1716 = vmatpush2.xpose.msra.mxu0 0.0
        %1717 = vmatprep.subr.mxu0 0.0
        %1718 = vmatpush2.xpose.msra.mxu0 0.0
        %1719 = vmatprep.subr.mxu0 0.0
        %1720 = vmatpush2.xpose.msra.mxu0 0.0
        %1721 = vmatprep.subr.mxu0 0.0
        %1722 = vmatpush2.xpose.msra.mxu0 0.0
        %1723 = vmatprep.subr.mxu0 0.0
        %1724 = vmatpush2.xpose.msra.mxu0 0.0
        %1725 = vmatprep.subr.mxu0 0.0
        %1726 = vmatpush2.xpose.msra.mxu0 0.0
        %1727 = vmatprep.subr.mxu0 0.0
        %1728 = vmatpush2.xpose.msra.mxu0 0.0
        %1729 = vmatprep.subr.mxu0 0.0
        %1730 = vmatpush2.xpose.msra.mxu0 0.0
        %1731 = vmatprep.subr.mxu0 0.0
        %1732 = vmatpush2.xpose.msra.mxu0 0.0
        %1733 = vmatprep.subr.mxu0 0.0
        %1734 = vmatpush2.xpose.msra.mxu0 0.0
        %1735 = vmatprep.subr.mxu0 0.0
        %1736 = vmatpush2.xpose.msra.mxu0 0.0
        %1737 = vmatprep.mubr.f32.mxu0 0.0
        %1738 = vmatmul.mubr.f32.gmra.mxu0 %v1668
        %v1739 = vpop.f32.mrf.mxu0
        %v1740 = vadd.f32 0.0, %v1739
        %v1741 = vpop.f32.mrf.mxu0
        %1742 = vdwg.mxu0
        %v1744 = vsel %vm1666, %v1665, 0
        %v1747 = vsel %vm1666, %v1578, 0
        %1749 = vmatprep.subr.mxu0 0.0
        %1750 = vmatpush1.xpose.msra.mxu0 0.0
        %1751 = vmatprep.subr.mxu0 0.0
        %1752 = vmatpush1.xpose.msra.mxu0 0.0
        %1753 = vmatprep.subr.mxu0 0.0
        %1754 = vmatpush1.xpose.msra.mxu0 0.0
        %1755 = vmatprep.subr.mxu0 0.0
        %1756 = vmatpush1.xpose.msra.mxu0 0.0
        %1757 = vmatprep.subr.mxu0 0.0
        %1758 = vmatpush1.xpose.msra.mxu0 0.0
        %1759 = vmatprep.subr.mxu0 0.0
        %1760 = vmatpush1.xpose.msra.mxu0 0.0
        %1761 = vmatprep.subr.mxu0 0.0
        %1762 = vmatpush1.xpose.msra.mxu0 0.0
        %1763 = vmatprep.subr.mxu0 0.0
        %1764 = vmatpush1.xpose.msra.mxu0 0.0
        %1765 = vmatprep.subr.mxu0 0.0
        %1766 = vmatpush1.xpose.msra.mxu0 0.0
        %1767 = vmatprep.subr.mxu0 0.0
        %1768 = vmatpush1.xpose.msra.mxu0 0.0
        %1769 = vmatprep.subr.mxu0 0.0
        %1770 = vmatpush1.xpose.msra.mxu0 0.0
        %1771 = vmatprep.subr.mxu0 0.0
        %1772 = vmatpush1.xpose.msra.mxu0 0.0
        %1773 = vmatprep.subr.mxu0 0.0
        %1774 = vmatpush1.xpose.msra.mxu0 0.0
        %1775 = vmatprep.subr.mxu0 0.0
        %1776 = vmatpush1.xpose.msra.mxu0 0.0
        %1777 = vmatprep.subr.mxu0 0.0
        %1778 = vmatpush1.xpose.msra.mxu0 0.0
        %1779 = vmatprep.subr.mxu0 0.0
        %1780 = vmatpush1.xpose.msra.mxu0 %v1747
        %1781 = vmatprep.subr.mxu0 0.0
        %1782 = vmatpush2.xpose.msra.mxu0 0.0
        %1783 = vmatprep.subr.mxu0 0.0
        %1784 = vmatpush2.xpose.msra.mxu0 0.0
        %1785 = vmatprep.subr.mxu0 0.0
        %1786 = vmatpush2.xpose.msra.mxu0 0.0
        %1787 = vmatprep.subr.mxu0 0.0
        %1788 = vmatpush2.xpose.msra.mxu0 0.0
        %1789 = vmatprep.subr.mxu0 0.0
        %1790 = vmatpush2.xpose.msra.mxu0 0.0
        %1791 = vmatprep.subr.mxu0 0.0
        %1792 = vmatpush2.xpose.msra.mxu0 0.0
        %1793 = vmatprep.subr.mxu0 0.0
        %1794 = vmatpush2.xpose.msra.mxu0 0.0
        %1795 = vmatprep.subr.mxu0 0.0
        %1796 = vmatpush2.xpose.msra.mxu0 0.0
        %1797 = vmatprep.subr.mxu0 0.0
        %1798 = vmatpush2.xpose.msra.mxu0 0.0
        %1799 = vmatprep.subr.mxu0 0.0
        %1800 = vmatpush2.xpose.msra.mxu0 0.0
        %1801 = vmatprep.subr.mxu0 0.0
        %1802 = vmatpush2.xpose.msra.mxu0 0.0
        %1803 = vmatprep.subr.mxu0 0.0
        %1804 = vmatpush2.xpose.msra.mxu0 0.0
        %1805 = vmatprep.subr.mxu0 0.0
        %1806 = vmatpush2.xpose.msra.mxu0 0.0
        %1807 = vmatprep.subr.mxu0 0.0
        %1808 = vmatpush2.xpose.msra.mxu0 0.0
        %1809 = vmatprep.subr.mxu0 0.0
        %1810 = vmatpush2.xpose.msra.mxu0 0.0
        %1811 = vmatprep.subr.mxu0 0.0
        %1812 = vmatpush2.xpose.msra.mxu0 0.0
        %1813 = vmatprep.mubr.f32.mxu0 0.0
        %1814 = vmatmul.mubr.f32.gmra.mxu0 %v1744
        %v1815 = vpop.f32.mrf.mxu0
        %v1816 = vadd.f32 0.0, %v1815
        %v1817 = vpop.f32.mrf.mxu0
        %1818 = vdwg.mxu0
        %v1819 = vsel %vm1666, %v1740, -inf
        %1820 = vmax.xlane.f32.xlu0 %v1819
        %v1821 = vpop.xlane.xlu0 %1820
        %v1822 = vsel %vm1666, %v1816, -inf
        %1823 = vmax.xlane.f32.xlu0 %v1822
        %v1824 = vpop.xlane.xlu0 %1823
        %v1825 = vsub.f32 %v1740, %v1821
        %v1826 = vsub.f32 %v1816, %v1824
        %v1827 = vmul.f32 %v1825, 1.442695
        %v1828 = vpow.pop %v1827
        %v1829 = vmul.f32 %v1826, 1.442695
        %v1830 = vpow.pop %v1829
        %v1831 = vsel %vm1666, %v1828, 0.0
        %1832 = vadd.xlane.f32.xlu0 %v1831
        %v1833 = vpop.xlane.xlu0 %1832
        %v1834 = vsel %vm1666, %v1830, 0.0
        %1835 = vadd.xlane.f32.xlu0 %v1834
        %v1836 = vpop.xlane.xlu0 %1835
        %v1837 = vrcp.pop %v1833
        %v1838 = vrcp.pop %v1836
        %v1839 = vmul.f32 %v1828, %v1837
        %v1840 = vmul.f32 %v1830, %v1838
        %vm1841 = vcmp.ge.s32.totalorder %v1663, 0
        %vm1842 = vcmp.lt.s32.totalorder %v1663, 8
        %vm1843 = vmand %vm1841, %vm1842
        %v1844 = vsel %vm1843, 1, 0
        %vm1845 = vcmp.eq.s32.totalorder %v1844, 1
        %v1846 = vsel %vm1845, %v1654, 0.0
        %v1847 = vsel %vm1845, %v1659, 0.0
        %1848 = vrot.lane.b32.xlu0 %v1664, 120
        %v1849 = vpop.permute.xlu0 %1848
        %1850 = vrot.lane.b32.xlu0 %v1573, 120
        %v1851 = vpop.permute.xlu0 %1850
        %v1852 = vsel %vm1666, %v1849, 0
        %v1854 = vsel %vm1666, %v1851, 0
        %1856 = vmatprep.subr.mxu0 0.0
        %1857 = vmatpush1.xpose.msra.mxu0 0.0
        %1858 = vmatprep.subr.mxu0 0.0
        %1859 = vmatpush1.xpose.msra.mxu0 0.0
        %1860 = vmatprep.subr.mxu0 0.0
        %1861 = vmatpush1.xpose.msra.mxu0 0.0
        %1862 = vmatprep.subr.mxu0 0.0
        %1863 = vmatpush1.xpose.msra.mxu0 0.0
        %1864 = vmatprep.subr.mxu0 0.0
        %1865 = vmatpush1.xpose.msra.mxu0 0.0
        %1866 = vmatprep.subr.mxu0 0.0
        %1867 = vmatpush1.xpose.msra.mxu0 0.0
        %1868 = vmatprep.subr.mxu0 0.0
        %1869 = vmatpush1.xpose.msra.mxu0 0.0
        %1870 = vmatprep.subr.mxu0 0.0
        %1871 = vmatpush1.xpose.msra.mxu0 0.0
        %1872 = vmatprep.subr.mxu0 0.0
        %1873 = vmatpush1.xpose.msra.mxu0 0.0
        %1874 = vmatprep.subr.mxu0 0.0
        %1875 = vmatpush1.xpose.msra.mxu0 0.0
        %1876 = vmatprep.subr.mxu0 0.0
        %1877 = vmatpush1.xpose.msra.mxu0 0.0
        %1878 = vmatprep.subr.mxu0 0.0
        %1879 = vmatpush1.xpose.msra.mxu0 0.0
        %1880 = vmatprep.subr.mxu0 0.0
        %1881 = vmatpush1.xpose.msra.mxu0 0.0
        %1882 = vmatprep.subr.mxu0 0.0
        %1883 = vmatpush1.xpose.msra.mxu0 0.0
        %1884 = vmatprep.subr.mxu0 0.0
        %1885 = vmatpush1.xpose.msra.mxu0 0.0
        %1886 = vmatprep.subr.mxu0 0.0
        %1887 = vmatpush1.xpose.msra.mxu0 %v1854
        %1888 = vmatprep.subr.mxu0 0.0
        %1889 = vmatpush2.xpose.msra.mxu0 0.0
        %1890 = vmatprep.subr.mxu0 0.0
        %1891 = vmatpush2.xpose.msra.mxu0 0.0
        %1892 = vmatprep.subr.mxu0 0.0
        %1893 = vmatpush2.xpose.msra.mxu0 0.0
        %1894 = vmatprep.subr.mxu0 0.0
        %1895 = vmatpush2.xpose.msra.mxu0 0.0
        %1896 = vmatprep.subr.mxu0 0.0
        %1897 = vmatpush2.xpose.msra.mxu0 0.0
        %1898 = vmatprep.subr.mxu0 0.0
        %1899 = vmatpush2.xpose.msra.mxu0 0.0
        %1900 = vmatprep.subr.mxu0 0.0
        %1901 = vmatpush2.xpose.msra.mxu0 0.0
        %1902 = vmatprep.subr.mxu0 0.0
        %1903 = vmatpush2.xpose.msra.mxu0 0.0
        %1904 = vmatprep.subr.mxu0 0.0
        %1905 = vmatpush2.xpose.msra.mxu0 0.0
        %1906 = vmatprep.subr.mxu0 0.0
        %1907 = vmatpush2.xpose.msra.mxu0 0.0
        %1908 = vmatprep.subr.mxu0 0.0
        %1909 = vmatpush2.xpose.msra.mxu0 0.0
        %1910 = vmatprep.subr.mxu0 0.0
        %1911 = vmatpush2.xpose.msra.mxu0 0.0
        %1912 = vmatprep.subr.mxu0 0.0
        %1913 = vmatpush2.xpose.msra.mxu0 0.0
        %1914 = vmatprep.subr.mxu0 0.0
        %1915 = vmatpush2.xpose.msra.mxu0 0.0
        %1916 = vmatprep.subr.mxu0 0.0
        %1917 = vmatpush2.xpose.msra.mxu0 0.0
        %1918 = vmatprep.subr.mxu0 0.0
        %1919 = vmatpush2.xpose.msra.mxu0 0.0
        %1920 = vmatprep.mubr.f32.mxu0 0.0
        %1921 = vmatmul.mubr.f32.gmra.mxu0 %v1852
        %v1922 = vpop.f32.mrf.mxu0
        %v1923 = vadd.f32 0.0, %v1922
        %v1924 = vpop.f32.mrf.mxu0
        %1925 = vdwg.mxu0
        %1926 = vrot.lane.b32.xlu0 %v1665, 120
        %v1927 = vpop.permute.xlu0 %1926
        %1928 = vrot.lane.b32.xlu0 %v1578, 120
        %v1929 = vpop.permute.xlu0 %1928
        %v1930 = vsel %vm1666, %v1927, 0
        %v1932 = vsel %vm1666, %v1929, 0
        %1934 = vmatprep.subr.mxu0 0.0
        %1935 = vmatpush1.xpose.msra.mxu0 0.0
        %1936 = vmatprep.subr.mxu0 0.0
        %1937 = vmatpush1.xpose.msra.mxu0 0.0
        %1938 = vmatprep.subr.mxu0 0.0
        %1939 = vmatpush1.xpose.msra.mxu0 0.0
        %1940 = vmatprep.subr.mxu0 0.0
        %1941 = vmatpush1.xpose.msra.mxu0 0.0
        %1942 = vmatprep.subr.mxu0 0.0
        %1943 = vmatpush1.xpose.msra.mxu0 0.0
        %1944 = vmatprep.subr.mxu0 0.0
        %1945 = vmatpush1.xpose.msra.mxu0 0.0
        %1946 = vmatprep.subr.mxu0 0.0
        %1947 = vmatpush1.xpose.msra.mxu0 0.0
        %1948 = vmatprep.subr.mxu0 0.0
        %1949 = vmatpush1.xpose.msra.mxu0 0.0
        %1950 = vmatprep.subr.mxu0 0.0
        %1951 = vmatpush1.xpose.msra.mxu0 0.0
        %1952 = vmatprep.subr.mxu0 0.0
        %1953 = vmatpush1.xpose.msra.mxu0 0.0
        %1954 = vmatprep.subr.mxu0 0.0
        %1955 = vmatpush1.xpose.msra.mxu0 0.0
        %1956 = vmatprep.subr.mxu0 0.0
        %1957 = vmatpush1.xpose.msra.mxu0 0.0
        %1958 = vmatprep.subr.mxu0 0.0
        %1959 = vmatpush1.xpose.msra.mxu0 0.0
        %1960 = vmatprep.subr.mxu0 0.0
        %1961 = vmatpush1.xpose.msra.mxu0 0.0
        %1962 = vmatprep.subr.mxu0 0.0
        %1963 = vmatpush1.xpose.msra.mxu0 0.0
        %1964 = vmatprep.subr.mxu0 0.0
        %1965 = vmatpush1.xpose.msra.mxu0 %v1932
        %1966 = vmatprep.subr.mxu0 0.0
        %1967 = vmatpush2.xpose.msra.mxu0 0.0
        %1968 = vmatprep.subr.mxu0 0.0
        %1969 = vmatpush2.xpose.msra.mxu0 0.0
        %1970 = vmatprep.subr.mxu0 0.0
        %1971 = vmatpush2.xpose.msra.mxu0 0.0
        %1972 = vmatprep.subr.mxu0 0.0
        %1973 = vmatpush2.xpose.msra.mxu0 0.0
        %1974 = vmatprep.subr.mxu0 0.0
        %1975 = vmatpush2.xpose.msra.mxu0 0.0
        %1976 = vmatprep.subr.mxu0 0.0
        %1977 = vmatpush2.xpose.msra.mxu0 0.0
        %1978 = vmatprep.subr.mxu0 0.0
        %1979 = vmatpush2.xpose.msra.mxu0 0.0
        %1980 = vmatprep.subr.mxu0 0.0
        %1981 = vmatpush2.xpose.msra.mxu0 0.0
        %1982 = vmatprep.subr.mxu0 0.0
        %1983 = vmatpush2.xpose.msra.mxu0 0.0
        %1984 = vmatprep.subr.mxu0 0.0
        %1985 = vmatpush2.xpose.msra.mxu0 0.0
        %1986 = vmatprep.subr.mxu0 0.0
        %1987 = vmatpush2.xpose.msra.mxu0 0.0
        %1988 = vmatprep.subr.mxu0 0.0
        %1989 = vmatpush2.xpose.msra.mxu0 0.0
        %1990 = vmatprep.subr.mxu0 0.0
        %1991 = vmatpush2.xpose.msra.mxu0 0.0
        %1992 = vmatprep.subr.mxu0 0.0
        %1993 = vmatpush2.xpose.msra.mxu0 0.0
        %1994 = vmatprep.subr.mxu0 0.0
        %1995 = vmatpush2.xpose.msra.mxu0 0.0
        %1996 = vmatprep.subr.mxu0 0.0
        %1997 = vmatpush2.xpose.msra.mxu0 0.0
        %1998 = vmatprep.mubr.f32.mxu0 0.0
        %1999 = vmatmul.mubr.f32.gmra.mxu0 %v1930
        %v2000 = vpop.f32.mrf.mxu0
        %v2001 = vadd.f32 0.0, %v2000
        %v2002 = vpop.f32.mrf.mxu0
        %2003 = vdwg.mxu0
        %v2004 = vsel %vm1666, %v1923, -inf
        %2005 = vmax.xlane.f32.xlu0 %v2004
        %v2006 = vpop.xlane.xlu0 %2005
        %v2007 = vsel %vm1666, %v2001, -inf
        %2008 = vmax.xlane.f32.xlu0 %v2007
        %v2009 = vpop.xlane.xlu0 %2008
        %v2010 = vsub.f32 %v1923, %v2006
        %v2011 = vsub.f32 %v2001, %v2009
        %v2012 = vmul.f32 %v2010, 1.442695
        %v2013 = vpow.pop %v2012
        %v2014 = vmul.f32 %v2011, 1.442695
        %v2015 = vpow.pop %v2014
        %v2016 = vsel %vm1666, %v2013, 0.0
        %2017 = vadd.xlane.f32.xlu0 %v2016
        %v2018 = vpop.xlane.xlu0 %2017
        %v2019 = vsel %vm1666, %v2015, 0.0
        %2020 = vadd.xlane.f32.xlu0 %v2019
        %v2021 = vpop.xlane.xlu0 %2020
        %v2022 = vrcp.pop %v2018
        %v2023 = vrcp.pop %v2021
        %v2024 = vmul.f32 %v2013, %v2022
        %v2025 = vmul.f32 %v2015, %v2023
        %vm2026 = vcmp.ge.s32.totalorder %v1663, 8
        %vm2027 = vcmp.lt.s32.totalorder %v1663, 16
        %vm2028 = vmand %vm2026, %vm2027
        %v2029 = vsel %vm2028, 1, 0
        %vm2030 = vcmp.eq.s32.totalorder %v2029, 1
        %v2031 = vsel %vm2030, %v1654, 0.0
        %v2032 = vsel %vm2030, %v1659, 0.0
        %v2034 = vsel %vm1666, %v2024, 0
        %2036 = vmatprep.subr.mxu0 0.0
        %2037 = vmatpush1.msra.mxu0 0.0
        %2038 = vmatprep.subr.mxu0 0.0
        %2039 = vmatpush1.msra.mxu0 0.0
        %2040 = vmatprep.subr.mxu0 0.0
        %2041 = vmatpush1.msra.mxu0 0.0
        %2042 = vmatprep.subr.mxu0 0.0
        %2043 = vmatpush1.msra.mxu0 0.0
        %2044 = vmatprep.subr.mxu0 0.0
        %2045 = vmatpush1.msra.mxu0 0.0
        %2046 = vmatprep.subr.mxu0 0.0
        %2047 = vmatpush1.msra.mxu0 0.0
        %2048 = vmatprep.subr.mxu0 0.0
        %2049 = vmatpush1.msra.mxu0 0.0
        %2050 = vmatprep.subr.mxu0 0.0
        %2051 = vmatpush1.msra.mxu0 0.0
        %2052 = vmatprep.subr.mxu0 0.0
        %2053 = vmatpush1.msra.mxu0 0.0
        %2054 = vmatprep.subr.mxu0 0.0
        %2055 = vmatpush1.msra.mxu0 0.0
        %2056 = vmatprep.subr.mxu0 0.0
        %2057 = vmatpush1.msra.mxu0 0.0
        %2058 = vmatprep.subr.mxu0 0.0
        %2059 = vmatpush1.msra.mxu0 0.0
        %2060 = vmatprep.subr.mxu0 0.0
        %2061 = vmatpush1.msra.mxu0 0.0
        %2062 = vmatprep.subr.mxu0 0.0
        %2063 = vmatpush1.msra.mxu0 0.0
        %2064 = vmatprep.subr.mxu0 0.0
        %2065 = vmatpush1.msra.mxu0 0.0
        %2066 = vmatprep.subr.mxu0 0.0
        %2067 = vmatpush1.msra.mxu0 %v2031
        %2068 = vmatprep.subr.mxu0 0.0
        %2069 = vmatpush2.msra.mxu0 0.0
        %2070 = vmatprep.subr.mxu0 0.0
        %2071 = vmatpush2.msra.mxu0 0.0
        %2072 = vmatprep.subr.mxu0 0.0
        %2073 = vmatpush2.msra.mxu0 0.0
        %2074 = vmatprep.subr.mxu0 0.0
        %2075 = vmatpush2.msra.mxu0 0.0
        %2076 = vmatprep.subr.mxu0 0.0
        %2077 = vmatpush2.msra.mxu0 0.0
        %2078 = vmatprep.subr.mxu0 0.0
        %2079 = vmatpush2.msra.mxu0 0.0
        %2080 = vmatprep.subr.mxu0 0.0
        %2081 = vmatpush2.msra.mxu0 0.0
        %2082 = vmatprep.subr.mxu0 0.0
        %2083 = vmatpush2.msra.mxu0 0.0
        %2084 = vmatprep.subr.mxu0 0.0
        %2085 = vmatpush2.msra.mxu0 0.0
        %2086 = vmatprep.subr.mxu0 0.0
        %2087 = vmatpush2.msra.mxu0 0.0
        %2088 = vmatprep.subr.mxu0 0.0
        %2089 = vmatpush2.msra.mxu0 0.0
        %2090 = vmatprep.subr.mxu0 0.0
        %2091 = vmatpush2.msra.mxu0 0.0
        %2092 = vmatprep.subr.mxu0 0.0
        %2093 = vmatpush2.msra.mxu0 0.0
        %2094 = vmatprep.subr.mxu0 0.0
        %2095 = vmatpush2.msra.mxu0 0.0
        %2096 = vmatprep.subr.mxu0 0.0
        %2097 = vmatpush2.msra.mxu0 0.0
        %2098 = vmatprep.subr.mxu0 0.0
        %2099 = vmatpush2.msra.mxu0 0.0
        %2100 = vmatprep.mubr.f32.mxu0 0.0
        %2101 = vmatmul.mubr.f32.gmra.mxu0 %v2034
        %v2102 = vpop.f32.mrf.mxu0
        %v2103 = vadd.f32 0.0, %v2102
        %v2104 = vpop.f32.mrf.mxu0
        %2105 = vdwg.mxu0
        %v2107 = vsel %vm1666, %v2025, 0
        %2109 = vmatprep.subr.mxu0 0.0
        %2110 = vmatpush1.msra.mxu0 0.0
        %2111 = vmatprep.subr.mxu0 0.0
        %2112 = vmatpush1.msra.mxu0 0.0
        %2113 = vmatprep.subr.mxu0 0.0
        %2114 = vmatpush1.msra.mxu0 0.0
        %2115 = vmatprep.subr.mxu0 0.0
        %2116 = vmatpush1.msra.mxu0 0.0
        %2117 = vmatprep.subr.mxu0 0.0
        %2118 = vmatpush1.msra.mxu0 0.0
        %2119 = vmatprep.subr.mxu0 0.0
        %2120 = vmatpush1.msra.mxu0 0.0
        %2121 = vmatprep.subr.mxu0 0.0
        %2122 = vmatpush1.msra.mxu0 0.0
        %2123 = vmatprep.subr.mxu0 0.0
        %2124 = vmatpush1.msra.mxu0 0.0
        %2125 = vmatprep.subr.mxu0 0.0
        %2126 = vmatpush1.msra.mxu0 0.0
        %2127 = vmatprep.subr.mxu0 0.0
        %2128 = vmatpush1.msra.mxu0 0.0
        %2129 = vmatprep.subr.mxu0 0.0
        %2130 = vmatpush1.msra.mxu0 0.0
        %2131 = vmatprep.subr.mxu0 0.0
        %2132 = vmatpush1.msra.mxu0 0.0
        %2133 = vmatprep.subr.mxu0 0.0
        %2134 = vmatpush1.msra.mxu0 0.0
        %2135 = vmatprep.subr.mxu0 0.0
        %2136 = vmatpush1.msra.mxu0 0.0
        %2137 = vmatprep.subr.mxu0 0.0
        %2138 = vmatpush1.msra.mxu0 0.0
        %2139 = vmatprep.subr.mxu0 0.0
        %2140 = vmatpush1.msra.mxu0 %v2032
        %2141 = vmatprep.subr.mxu0 0.0
        %2142 = vmatpush2.msra.mxu0 0.0
        %2143 = vmatprep.subr.mxu0 0.0
        %2144 = vmatpush2.msra.mxu0 0.0
        %2145 = vmatprep.subr.mxu0 0.0
        %2146 = vmatpush2.msra.mxu0 0.0
        %2147 = vmatprep.subr.mxu0 0.0
        %2148 = vmatpush2.msra.mxu0 0.0
        %2149 = vmatprep.subr.mxu0 0.0
        %2150 = vmatpush2.msra.mxu0 0.0
        %2151 = vmatprep.subr.mxu0 0.0
        %2152 = vmatpush2.msra.mxu0 0.0
        %2153 = vmatprep.subr.mxu0 0.0
        %2154 = vmatpush2.msra.mxu0 0.0
        %2155 = vmatprep.subr.mxu0 0.0
        %2156 = vmatpush2.msra.mxu0 0.0
        %2157 = vmatprep.subr.mxu0 0.0
        %2158 = vmatpush2.msra.mxu0 0.0
        %2159 = vmatprep.subr.mxu0 0.0
        %2160 = vmatpush2.msra.mxu0 0.0
        %2161 = vmatprep.subr.mxu0 0.0
        %2162 = vmatpush2.msra.mxu0 0.0
        %2163 = vmatprep.subr.mxu0 0.0
        %2164 = vmatpush2.msra.mxu0 0.0
        %2165 = vmatprep.subr.mxu0 0.0
        %2166 = vmatpush2.msra.mxu0 0.0
        %2167 = vmatprep.subr.mxu0 0.0
        %2168 = vmatpush2.msra.mxu0 0.0
        %2169 = vmatprep.subr.mxu0 0.0
        %2170 = vmatpush2.msra.mxu0 0.0
        %2171 = vmatprep.subr.mxu0 0.0
        %2172 = vmatpush2.msra.mxu0 0.0
        %2173 = vmatprep.mubr.f32.mxu0 0.0
        %2174 = vmatmul.mubr.f32.gmra.mxu0 %v2107
        %v2175 = vpop.f32.mrf.mxu0
        %v2176 = vadd.f32 0.0, %v2175
        %v2177 = vpop.f32.mrf.mxu0
        %2178 = vdwg.mxu0
        %v2180 = vsel %vm1666, %v1839, 0
        %2182 = vmatprep.subr.mxu0 0.0
        %2183 = vmatpush1.msra.mxu0 0.0
        %2184 = vmatprep.subr.mxu0 0.0
        %2185 = vmatpush1.msra.mxu0 0.0
        %2186 = vmatprep.subr.mxu0 0.0
        %2187 = vmatpush1.msra.mxu0 0.0
        %2188 = vmatprep.subr.mxu0 0.0
        %2189 = vmatpush1.msra.mxu0 0.0
        %2190 = vmatprep.subr.mxu0 0.0
        %2191 = vmatpush1.msra.mxu0 0.0
        %2192 = vmatprep.subr.mxu0 0.0
        %2193 = vmatpush1.msra.mxu0 0.0
        %2194 = vmatprep.subr.mxu0 0.0
        %2195 = vmatpush1.msra.mxu0 0.0
        %2196 = vmatprep.subr.mxu0 0.0
        %2197 = vmatpush1.msra.mxu0 0.0
        %2198 = vmatprep.subr.mxu0 0.0
        %2199 = vmatpush1.msra.mxu0 0.0
        %2200 = vmatprep.subr.mxu0 0.0
        %2201 = vmatpush1.msra.mxu0 0.0
        %2202 = vmatprep.subr.mxu0 0.0
        %2203 = vmatpush1.msra.mxu0 0.0
        %2204 = vmatprep.subr.mxu0 0.0
        %2205 = vmatpush1.msra.mxu0 0.0
        %2206 = vmatprep.subr.mxu0 0.0
        %2207 = vmatpush1.msra.mxu0 0.0
        %2208 = vmatprep.subr.mxu0 0.0
        %2209 = vmatpush1.msra.mxu0 0.0
        %2210 = vmatprep.subr.mxu0 0.0
        %2211 = vmatpush1.msra.mxu0 0.0
        %2212 = vmatprep.subr.mxu0 0.0
        %2213 = vmatpush1.msra.mxu0 %v1846
        %2214 = vmatprep.subr.mxu0 0.0
        %2215 = vmatpush2.msra.mxu0 0.0
        %2216 = vmatprep.subr.mxu0 0.0
        %2217 = vmatpush2.msra.mxu0 0.0
        %2218 = vmatprep.subr.mxu0 0.0
        %2219 = vmatpush2.msra.mxu0 0.0
        %2220 = vmatprep.subr.mxu0 0.0
        %2221 = vmatpush2.msra.mxu0 0.0
        %2222 = vmatprep.subr.mxu0 0.0
        %2223 = vmatpush2.msra.mxu0 0.0
        %2224 = vmatprep.subr.mxu0 0.0
        %2225 = vmatpush2.msra.mxu0 0.0
        %2226 = vmatprep.subr.mxu0 0.0
        %2227 = vmatpush2.msra.mxu0 0.0
        %2228 = vmatprep.subr.mxu0 0.0
        %2229 = vmatpush2.msra.mxu0 0.0
        %2230 = vmatprep.subr.mxu0 0.0
        %2231 = vmatpush2.msra.mxu0 0.0
        %2232 = vmatprep.subr.mxu0 0.0
        %2233 = vmatpush2.msra.mxu0 0.0
        %2234 = vmatprep.subr.mxu0 0.0
        %2235 = vmatpush2.msra.mxu0 0.0
        %2236 = vmatprep.subr.mxu0 0.0
        %2237 = vmatpush2.msra.mxu0 0.0
        %2238 = vmatprep.subr.mxu0 0.0
        %2239 = vmatpush2.msra.mxu0 0.0
        %2240 = vmatprep.subr.mxu0 0.0
        %2241 = vmatpush2.msra.mxu0 0.0
        %2242 = vmatprep.subr.mxu0 0.0
        %2243 = vmatpush2.msra.mxu0 0.0
        %2244 = vmatprep.subr.mxu0 0.0
        %2245 = vmatpush2.msra.mxu0 0.0
        %2246 = vmatprep.mubr.f32.mxu0 0.0
        %2247 = vmatmul.mubr.f32.gmra.mxu0 %v2180
        %v2248 = vpop.f32.mrf.mxu0
        %v2249 = vadd.f32 %v2103, %v2248
        %v2250 = vpop.f32.mrf.mxu0
        %2251 = vdwg.mxu0
        %v2253 = vsel %vm1666, %v1840, 0
        %2255 = vmatprep.subr.mxu0 0.0
        %2256 = vmatpush1.msra.mxu0 0.0
        %2257 = vmatprep.subr.mxu0 0.0
        %2258 = vmatpush1.msra.mxu0 0.0
        %2259 = vmatprep.subr.mxu0 0.0
        %2260 = vmatpush1.msra.mxu0 0.0
        %2261 = vmatprep.subr.mxu0 0.0
        %2262 = vmatpush1.msra.mxu0 0.0
        %2263 = vmatprep.subr.mxu0 0.0
        %2264 = vmatpush1.msra.mxu0 0.0
        %2265 = vmatprep.subr.mxu0 0.0
        %2266 = vmatpush1.msra.mxu0 0.0
        %2267 = vmatprep.subr.mxu0 0.0
        %2268 = vmatpush1.msra.mxu0 0.0
        %2269 = vmatprep.subr.mxu0 0.0
        %2270 = vmatpush1.msra.mxu0 0.0
        %2271 = vmatprep.subr.mxu0 0.0
        %2272 = vmatpush1.msra.mxu0 0.0
        %2273 = vmatprep.subr.mxu0 0.0
        %2274 = vmatpush1.msra.mxu0 0.0
        %2275 = vmatprep.subr.mxu0 0.0
        %2276 = vmatpush1.msra.mxu0 0.0
        %2277 = vmatprep.subr.mxu0 0.0
        %2278 = vmatpush1.msra.mxu0 0.0
        %2279 = vmatprep.subr.mxu0 0.0
        %2280 = vmatpush1.msra.mxu0 0.0
        %2281 = vmatprep.subr.mxu0 0.0
        %2282 = vmatpush1.msra.mxu0 0.0
        %2283 = vmatprep.subr.mxu0 0.0
        %2284 = vmatpush1.msra.mxu0 0.0
        %2285 = vmatprep.subr.mxu0 0.0
        %2286 = vmatpush1.msra.mxu0 %v1847
        %2287 = vmatprep.subr.mxu0 0.0
        %2288 = vmatpush2.msra.mxu0 0.0
        %2289 = vmatprep.subr.mxu0 0.0
        %2290 = vmatpush2.msra.mxu0 0.0
        %2291 = vmatprep.subr.mxu0 0.0
        %2292 = vmatpush2.msra.mxu0 0.0
        %2293 = vmatprep.subr.mxu0 0.0
        %2294 = vmatpush2.msra.mxu0 0.0
        %2295 = vmatprep.subr.mxu0 0.0
        %2296 = vmatpush2.msra.mxu0 0.0
        %2297 = vmatprep.subr.mxu0 0.0
        %2298 = vmatpush2.msra.mxu0 0.0
        %2299 = vmatprep.subr.mxu0 0.0
        %2300 = vmatpush2.msra.mxu0 0.0
        %2301 = vmatprep.subr.mxu0 0.0
        %2302 = vmatpush2.msra.mxu0 0.0
        %2303 = vmatprep.subr.mxu0 0.0
        %2304 = vmatpush2.msra.mxu0 0.0
        %2305 = vmatprep.subr.mxu0 0.0
        %2306 = vmatpush2.msra.mxu0 0.0
        %2307 = vmatprep.subr.mxu0 0.0
        %2308 = vmatpush2.msra.mxu0 0.0
        %2309 = vmatprep.subr.mxu0 0.0
        %2310 = vmatpush2.msra.mxu0 0.0
        %2311 = vmatprep.subr.mxu0 0.0
        %2312 = vmatpush2.msra.mxu0 0.0
        %2313 = vmatprep.subr.mxu0 0.0
        %2314 = vmatpush2.msra.mxu0 0.0
        %2315 = vmatprep.subr.mxu0 0.0
        %2316 = vmatpush2.msra.mxu0 0.0
        %2317 = vmatprep.subr.mxu0 0.0
        %2318 = vmatpush2.msra.mxu0 0.0
        %2319 = vmatprep.mubr.f32.mxu0 0.0
        %2320 = vmatmul.mubr.f32.gmra.mxu0 %v2253
        %v2321 = vpop.f32.mrf.mxu0
        %v2322 = vadd.f32 %v2176, %v2321
        %v2323 = vpop.f32.mrf.mxu0
        %2324 = vdwg.mxu0
        %2325 = vrot.lane.b32.xlu0 %v1664, 112
        %v2326 = vpop.permute.xlu0 %2325
        %2327 = vrot.lane.b32.xlu0 %v1573, 112
        %v2328 = vpop.permute.xlu0 %2327
        %v2329 = vsel %vm1666, %v2326, 0
        %v2331 = vsel %vm1666, %v2328, 0
        %2333 = vmatprep.subr.mxu0 0.0
        %2334 = vmatpush1.xpose.msra.mxu0 0.0
        %2335 = vmatprep.subr.mxu0 0.0
        %2336 = vmatpush1.xpose.msra.mxu0 0.0
        %2337 = vmatprep.subr.mxu0 0.0
        %2338 = vmatpush1.xpose.msra.mxu0 0.0
        %2339 = vmatprep.subr.mxu0 0.0
        %2340 = vmatpush1.xpose.msra.mxu0 0.0
        %2341 = vmatprep.subr.mxu0 0.0
        %2342 = vmatpush1.xpose.msra.mxu0 0.0
        %2343 = vmatprep.subr.mxu0 0.0
        %2344 = vmatpush1.xpose.msra.mxu0 0.0
        %2345 = vmatprep.subr.mxu0 0.0
        %2346 = vmatpush1.xpose.msra.mxu0 0.0
        %2347 = vmatprep.subr.mxu0 0.0
        %2348 = vmatpush1.xpose.msra.mxu0 0.0
        %2349 = vmatprep.subr.mxu0 0.0
        %2350 = vmatpush1.xpose.msra.mxu0 0.0
        %2351 = vmatprep.subr.mxu0 0.0
        %2352 = vmatpush1.xpose.msra.mxu0 0.0
        %2353 = vmatprep.subr.mxu0 0.0
        %2354 = vmatpush1.xpose.msra.mxu0 0.0
        %2355 = vmatprep.subr.mxu0 0.0
        %2356 = vmatpush1.xpose.msra.mxu0 0.0
        %2357 = vmatprep.subr.mxu0 0.0
        %2358 = vmatpush1.xpose.msra.mxu0 0.0
        %2359 = vmatprep.subr.mxu0 0.0
        %2360 = vmatpush1.xpose.msra.mxu0 0.0
        %2361 = vmatprep.subr.mxu0 0.0
        %2362 = vmatpush1.xpose.msra.mxu0 0.0
        %2363 = vmatprep.subr.mxu0 0.0
        %2364 = vmatpush1.xpose.msra.mxu0 %v2331
        %2365 = vmatprep.subr.mxu0 0.0
        %2366 = vmatpush2.xpose.msra.mxu0 0.0
        %2367 = vmatprep.subr.mxu0 0.0
        %2368 = vmatpush2.xpose.msra.mxu0 0.0
        %2369 = vmatprep.subr.mxu0 0.0
        %2370 = vmatpush2.xpose.msra.mxu0 0.0
        %2371 = vmatprep.subr.mxu0 0.0
        %2372 = vmatpush2.xpose.msra.mxu0 0.0
        %2373 = vmatprep.subr.mxu0 0.0
        %2374 = vmatpush2.xpose.msra.mxu0 0.0
        %2375 = vmatprep.subr.mxu0 0.0
        %2376 = vmatpush2.xpose.msra.mxu0 0.0
        %2377 = vmatprep.subr.mxu0 0.0
        %2378 = vmatpush2.xpose.msra.mxu0 0.0
        %2379 = vmatprep.subr.mxu0 0.0
        %2380 = vmatpush2.xpose.msra.mxu0 0.0
        %2381 = vmatprep.subr.mxu0 0.0
        %2382 = vmatpush2.xpose.msra.mxu0 0.0
        %2383 = vmatprep.subr.mxu0 0.0
        %2384 = vmatpush2.xpose.msra.mxu0 0.0
        %2385 = vmatprep.subr.mxu0 0.0
        %2386 = vmatpush2.xpose.msra.mxu0 0.0
        %2387 = vmatprep.subr.mxu0 0.0
        %2388 = vmatpush2.xpose.msra.mxu0 0.0
        %2389 = vmatprep.subr.mxu0 0.0
        %2390 = vmatpush2.xpose.msra.mxu0 0.0
        %2391 = vmatprep.subr.mxu0 0.0
        %2392 = vmatpush2.xpose.msra.mxu0 0.0
        %2393 = vmatprep.subr.mxu0 0.0
        %2394 = vmatpush2.xpose.msra.mxu0 0.0
        %2395 = vmatprep.subr.mxu0 0.0
        %2396 = vmatpush2.xpose.msra.mxu0 0.0
        %2397 = vmatprep.mubr.f32.mxu0 0.0
        %2398 = vmatmul.mubr.f32.gmra.mxu0 %v2329
        %v2399 = vpop.f32.mrf.mxu0
        %v2400 = vadd.f32 0.0, %v2399
        %v2401 = vpop.f32.mrf.mxu0
        %2402 = vdwg.mxu0
        %2403 = vrot.lane.b32.xlu0 %v1665, 112
        %v2404 = vpop.permute.xlu0 %2403
        %2405 = vrot.lane.b32.xlu0 %v1578, 112
        %v2406 = vpop.permute.xlu0 %2405
        %v2407 = vsel %vm1666, %v2404, 0
        %v2409 = vsel %vm1666, %v2406, 0
        %2411 = vmatprep.subr.mxu0 0.0
        %2412 = vmatpush1.xpose.msra.mxu0 0.0
        %2413 = vmatprep.subr.mxu0 0.0
        %2414 = vmatpush1.xpose.msra.mxu0 0.0
        %2415 = vmatprep.subr.mxu0 0.0
        %2416 = vmatpush1.xpose.msra.mxu0 0.0
        %2417 = vmatprep.subr.mxu0 0.0
        %2418 = vmatpush1.xpose.msra.mxu0 0.0
        %2419 = vmatprep.subr.mxu0 0.0
        %2420 = vmatpush1.xpose.msra.mxu0 0.0
        %2421 = vmatprep.subr.mxu0 0.0
        %2422 = vmatpush1.xpose.msra.mxu0 0.0
        %2423 = vmatprep.subr.mxu0 0.0
        %2424 = vmatpush1.xpose.msra.mxu0 0.0
        %2425 = vmatprep.subr.mxu0 0.0
        %2426 = vmatpush1.xpose.msra.mxu0 0.0
        %2427 = vmatprep.subr.mxu0 0.0
        %2428 = vmatpush1.xpose.msra.mxu0 0.0
        %2429 = vmatprep.subr.mxu0 0.0
        %2430 = vmatpush1.xpose.msra.mxu0 0.0
        %2431 = vmatprep.subr.mxu0 0.0
        %2432 = vmatpush1.xpose.msra.mxu0 0.0
        %2433 = vmatprep.subr.mxu0 0.0
        %2434 = vmatpush1.xpose.msra.mxu0 0.0
        %2435 = vmatprep.subr.mxu0 0.0
        %2436 = vmatpush1.xpose.msra.mxu0 0.0
        %2437 = vmatprep.subr.mxu0 0.0
        %2438 = vmatpush1.xpose.msra.mxu0 0.0
        %2439 = vmatprep.subr.mxu0 0.0
        %2440 = vmatpush1.xpose.msra.mxu0 0.0
        %2441 = vmatprep.subr.mxu0 0.0
        %2442 = vmatpush1.xpose.msra.mxu0 %v2409
        %2443 = vmatprep.subr.mxu0 0.0
        %2444 = vmatpush2.xpose.msra.mxu0 0.0
        %2445 = vmatprep.subr.mxu0 0.0
        %2446 = vmatpush2.xpose.msra.mxu0 0.0
        %2447 = vmatprep.subr.mxu0 0.0
        %2448 = vmatpush2.xpose.msra.mxu0 0.0
        %2449 = vmatprep.subr.mxu0 0.0
        %2450 = vmatpush2.xpose.msra.mxu0 0.0
        %2451 = vmatprep.subr.mxu0 0.0
        %2452 = vmatpush2.xpose.msra.mxu0 0.0
        %2453 = vmatprep.subr.mxu0 0.0
        %2454 = vmatpush2.xpose.msra.mxu0 0.0
        %2455 = vmatprep.subr.mxu0 0.0
        %2456 = vmatpush2.xpose.msra.mxu0 0.0
        %2457 = vmatprep.subr.mxu0 0.0
        %2458 = vmatpush2.xpose.msra.mxu0 0.0
        %2459 = vmatprep.subr.mxu0 0.0
        %2460 = vmatpush2.xpose.msra.mxu0 0.0
        %2461 = vmatprep.subr.mxu0 0.0
        %2462 = vmatpush2.xpose.msra.mxu0 0.0
        %2463 = vmatprep.subr.mxu0 0.0
        %2464 = vmatpush2.xpose.msra.mxu0 0.0
        %2465 = vmatprep.subr.mxu0 0.0
        %2466 = vmatpush2.xpose.msra.mxu0 0.0
        %2467 = vmatprep.subr.mxu0 0.0
        %2468 = vmatpush2.xpose.msra.mxu0 0.0
        %2469 = vmatprep.subr.mxu0 0.0
        %2470 = vmatpush2.xpose.msra.mxu0 0.0
        %2471 = vmatprep.subr.mxu0 0.0
        %2472 = vmatpush2.xpose.msra.mxu0 0.0
        %2473 = vmatprep.subr.mxu0 0.0
        %2474 = vmatpush2.xpose.msra.mxu0 0.0
        %2475 = vmatprep.mubr.f32.mxu0 0.0
        %2476 = vmatmul.mubr.f32.gmra.mxu0 %v2407
        %v2477 = vpop.f32.mrf.mxu0
        %v2478 = vadd.f32 0.0, %v2477
        %v2479 = vpop.f32.mrf.mxu0
        %2480 = vdwg.mxu0
        %v2481 = vsel %vm1666, %v2400, -inf
        %2482 = vmax.xlane.f32.xlu0 %v2481
        %v2483 = vpop.xlane.xlu0 %2482
        %v2484 = vsel %vm1666, %v2478, -inf
        %2485 = vmax.xlane.f32.xlu0 %v2484
        %v2486 = vpop.xlane.xlu0 %2485
        %v2487 = vsub.f32 %v2400, %v2483
        %v2488 = vsub.f32 %v2478, %v2486
        %v2489 = vmul.f32 %v2487, 1.442695
        %v2490 = vpow.pop %v2489
        %v2491 = vmul.f32 %v2488, 1.442695
        %v2492 = vpow.pop %v2491
        %v2493 = vsel %vm1666, %v2490, 0.0
        %2494 = vadd.xlane.f32.xlu0 %v2493
        %v2495 = vpop.xlane.xlu0 %2494
        %v2496 = vsel %vm1666, %v2492, 0.0
        %2497 = vadd.xlane.f32.xlu0 %v2496
        %v2498 = vpop.xlane.xlu0 %2497
        %v2499 = vrcp.pop %v2495
        %v2500 = vrcp.pop %v2498
        %v2501 = vmul.f32 %v2490, %v2499
        %v2502 = vmul.f32 %v2492, %v2500
        %vm2503 = vcmp.ge.s32.totalorder %v1663, 16
        %vm2504 = vcmp.lt.s32.totalorder %v1663, 24
        %vm2505 = vmand %vm2503, %vm2504
        %v2506 = vsel %vm2505, 1, 0
        %vm2507 = vcmp.eq.s32.totalorder %v2506, 1
        %v2508 = vsel %vm2507, %v1654, 0.0
        %v2509 = vsel %vm2507, %v1659, 0.0
        %v2511 = vsel %vm1666, %v2501, 0
        %2513 = vmatprep.subr.mxu0 0.0
        %2514 = vmatpush1.msra.mxu0 0.0
        %2515 = vmatprep.subr.mxu0 0.0
        %2516 = vmatpush1.msra.mxu0 0.0
        %2517 = vmatprep.subr.mxu0 0.0
        %2518 = vmatpush1.msra.mxu0 0.0
        %2519 = vmatprep.subr.mxu0 0.0
        %2520 = vmatpush1.msra.mxu0 0.0
        %2521 = vmatprep.subr.mxu0 0.0
        %2522 = vmatpush1.msra.mxu0 0.0
        %2523 = vmatprep.subr.mxu0 0.0
        %2524 = vmatpush1.msra.mxu0 0.0
        %2525 = vmatprep.subr.mxu0 0.0
        %2526 = vmatpush1.msra.mxu0 0.0
        %2527 = vmatprep.subr.mxu0 0.0
        %2528 = vmatpush1.msra.mxu0 0.0
        %2529 = vmatprep.subr.mxu0 0.0
        %2530 = vmatpush1.msra.mxu0 0.0
        %2531 = vmatprep.subr.mxu0 0.0
        %2532 = vmatpush1.msra.mxu0 0.0
        %2533 = vmatprep.subr.mxu0 0.0
        %2534 = vmatpush1.msra.mxu0 0.0
        %2535 = vmatprep.subr.mxu0 0.0
        %2536 = vmatpush1.msra.mxu0 0.0
        %2537 = vmatprep.subr.mxu0 0.0
        %2538 = vmatpush1.msra.mxu0 0.0
        %2539 = vmatprep.subr.mxu0 0.0
        %2540 = vmatpush1.msra.mxu0 0.0
        %2541 = vmatprep.subr.mxu0 0.0
        %2542 = vmatpush1.msra.mxu0 0.0
        %2543 = vmatprep.subr.mxu0 0.0
        %2544 = vmatpush1.msra.mxu0 %v2508
        %2545 = vmatprep.subr.mxu0 0.0
        %2546 = vmatpush2.msra.mxu0 0.0
        %2547 = vmatprep.subr.mxu0 0.0
        %2548 = vmatpush2.msra.mxu0 0.0
        %2549 = vmatprep.subr.mxu0 0.0
        %2550 = vmatpush2.msra.mxu0 0.0
        %2551 = vmatprep.subr.mxu0 0.0
        %2552 = vmatpush2.msra.mxu0 0.0
        %2553 = vmatprep.subr.mxu0 0.0
        %2554 = vmatpush2.msra.mxu0 0.0
        %2555 = vmatprep.subr.mxu0 0.0
        %2556 = vmatpush2.msra.mxu0 0.0
        %2557 = vmatprep.subr.mxu0 0.0
        %2558 = vmatpush2.msra.mxu0 0.0
        %2559 = vmatprep.subr.mxu0 0.0
        %2560 = vmatpush2.msra.mxu0 0.0
        %2561 = vmatprep.subr.mxu0 0.0
        %2562 = vmatpush2.msra.mxu0 0.0
        %2563 = vmatprep.subr.mxu0 0.0
        %2564 = vmatpush2.msra.mxu0 0.0
        %2565 = vmatprep.subr.mxu0 0.0
        %2566 = vmatpush2.msra.mxu0 0.0
        %2567 = vmatprep.subr.mxu0 0.0
        %2568 = vmatpush2.msra.mxu0 0.0
        %2569 = vmatprep.subr.mxu0 0.0
        %2570 = vmatpush2.msra.mxu0 0.0
        %2571 = vmatprep.subr.mxu0 0.0
        %2572 = vmatpush2.msra.mxu0 0.0
        %2573 = vmatprep.subr.mxu0 0.0
        %2574 = vmatpush2.msra.mxu0 0.0
        %2575 = vmatprep.subr.mxu0 0.0
        %2576 = vmatpush2.msra.mxu0 0.0
        %2577 = vmatprep.mubr.f32.mxu0 0.0
        %2578 = vmatmul.mubr.f32.gmra.mxu0 %v2511
        %v2579 = vpop.f32.mrf.mxu0
        %v2580 = vadd.f32 0.0, %v2579
        %v2581 = vpop.f32.mrf.mxu0
        %2582 = vdwg.mxu0
        %v2584 = vsel %vm1666, %v2502, 0
        %2586 = vmatprep.subr.mxu0 0.0
        %2587 = vmatpush1.msra.mxu0 0.0
        %2588 = vmatprep.subr.mxu0 0.0
        %2589 = vmatpush1.msra.mxu0 0.0
        %2590 = vmatprep.subr.mxu0 0.0
        %2591 = vmatpush1.msra.mxu0 0.0
        %2592 = vmatprep.subr.mxu0 0.0
        %2593 = vmatpush1.msra.mxu0 0.0
        %2594 = vmatprep.subr.mxu0 0.0
        %2595 = vmatpush1.msra.mxu0 0.0
        %2596 = vmatprep.subr.mxu0 0.0
        %2597 = vmatpush1.msra.mxu0 0.0
        %2598 = vmatprep.subr.mxu0 0.0
        %2599 = vmatpush1.msra.mxu0 0.0
        %2600 = vmatprep.subr.mxu0 0.0
        %2601 = vmatpush1.msra.mxu0 0.0
        %2602 = vmatprep.subr.mxu0 0.0
        %2603 = vmatpush1.msra.mxu0 0.0
        %2604 = vmatprep.subr.mxu0 0.0
        %2605 = vmatpush1.msra.mxu0 0.0
        %2606 = vmatprep.subr.mxu0 0.0
        %2607 = vmatpush1.msra.mxu0 0.0
        %2608 = vmatprep.subr.mxu0 0.0
        %2609 = vmatpush1.msra.mxu0 0.0
        %2610 = vmatprep.subr.mxu0 0.0
        %2611 = vmatpush1.msra.mxu0 0.0
        %2612 = vmatprep.subr.mxu0 0.0
        %2613 = vmatpush1.msra.mxu0 0.0
        %2614 = vmatprep.subr.mxu0 0.0
        %2615 = vmatpush1.msra.mxu0 0.0
        %2616 = vmatprep.subr.mxu0 0.0
        %2617 = vmatpush1.msra.mxu0 %v2509
        %2618 = vmatprep.subr.mxu0 0.0
        %2619 = vmatpush2.msra.mxu0 0.0
        %2620 = vmatprep.subr.mxu0 0.0
        %2621 = vmatpush2.msra.mxu0 0.0
        %2622 = vmatprep.subr.mxu0 0.0
        %2623 = vmatpush2.msra.mxu0 0.0
        %2624 = vmatprep.subr.mxu0 0.0
        %2625 = vmatpush2.msra.mxu0 0.0
        %2626 = vmatprep.subr.mxu0 0.0
        %2627 = vmatpush2.msra.mxu0 0.0
        %2628 = vmatprep.subr.mxu0 0.0
        %2629 = vmatpush2.msra.mxu0 0.0
        %2630 = vmatprep.subr.mxu0 0.0
        %2631 = vmatpush2.msra.mxu0 0.0
        %2632 = vmatprep.subr.mxu0 0.0
        %2633 = vmatpush2.msra.mxu0 0.0
        %2634 = vmatprep.subr.mxu0 0.0
        %2635 = vmatpush2.msra.mxu0 0.0
        %2636 = vmatprep.subr.mxu0 0.0
        %2637 = vmatpush2.msra.mxu0 0.0
        %2638 = vmatprep.subr.mxu0 0.0
        %2639 = vmatpush2.msra.mxu0 0.0
        %2640 = vmatprep.subr.mxu0 0.0
        %2641 = vmatpush2.msra.mxu0 0.0
        %2642 = vmatprep.subr.mxu0 0.0
        %2643 = vmatpush2.msra.mxu0 0.0
        %2644 = vmatprep.subr.mxu0 0.0
        %2645 = vmatpush2.msra.mxu0 0.0
        %2646 = vmatprep.subr.mxu0 0.0
        %2647 = vmatpush2.msra.mxu0 0.0
        %2648 = vmatprep.subr.mxu0 0.0
        %2649 = vmatpush2.msra.mxu0 0.0
        %2650 = vmatprep.mubr.f32.mxu0 0.0
        %2651 = vmatmul.mubr.f32.gmra.mxu0 %v2584
        %v2652 = vpop.f32.mrf.mxu0
        %v2653 = vadd.f32 0.0, %v2652
        %v2654 = vpop.f32.mrf.mxu0
        %2655 = vdwg.mxu0
        %v2656 = vadd.f32 %v2249, %v2580
        %v2657 = vadd.f32 %v2322, %v2653
        %2658 = vrot.lane.b32.xlu0 %v1664, 104
        %v2659 = vpop.permute.xlu0 %2658
        %2660 = vrot.lane.b32.xlu0 %v1573, 104
        %v2661 = vpop.permute.xlu0 %2660
        %v2662 = vsel %vm1666, %v2659, 0
        %v2664 = vsel %vm1666, %v2661, 0
        %2666 = vmatprep.subr.mxu0 0.0
        %2667 = vmatpush1.xpose.msra.mxu0 0.0
        %2668 = vmatprep.subr.mxu0 0.0
        %2669 = vmatpush1.xpose.msra.mxu0 0.0
        %2670 = vmatprep.subr.mxu0 0.0
        %2671 = vmatpush1.xpose.msra.mxu0 0.0
        %2672 = vmatprep.subr.mxu0 0.0
        %2673 = vmatpush1.xpose.msra.mxu0 0.0
        %2674 = vmatprep.subr.mxu0 0.0
        %2675 = vmatpush1.xpose.msra.mxu0 0.0
        %2676 = vmatprep.subr.mxu0 0.0
        %2677 = vmatpush1.xpose.msra.mxu0 0.0
        %2678 = vmatprep.subr.mxu0 0.0
        %2679 = vmatpush1.xpose.msra.mxu0 0.0
        %2680 = vmatprep.subr.mxu0 0.0
        %2681 = vmatpush1.xpose.msra.mxu0 0.0
        %2682 = vmatprep.subr.mxu0 0.0
        %2683 = vmatpush1.xpose.msra.mxu0 0.0
        %2684 = vmatprep.subr.mxu0 0.0
        %2685 = vmatpush1.xpose.msra.mxu0 0.0
        %2686 = vmatprep.subr.mxu0 0.0
        %2687 = vmatpush1.xpose.msra.mxu0 0.0
        %2688 = vmatprep.subr.mxu0 0.0
        %2689 = vmatpush1.xpose.msra.mxu0 0.0
        %2690 = vmatprep.subr.mxu0 0.0
        %2691 = vmatpush1.xpose.msra.mxu0 0.0
        %2692 = vmatprep.subr.mxu0 0.0
        %2693 = vmatpush1.xpose.msra.mxu0 0.0
        %2694 = vmatprep.subr.mxu0 0.0
        %2695 = vmatpush1.xpose.msra.mxu0 0.0
        %2696 = vmatprep.subr.mxu0 0.0
        %2697 = vmatpush1.xpose.msra.mxu0 %v2664
        %2698 = vmatprep.subr.mxu0 0.0
        %2699 = vmatpush2.xpose.msra.mxu0 0.0
        %2700 = vmatprep.subr.mxu0 0.0
        %2701 = vmatpush2.xpose.msra.mxu0 0.0
        %2702 = vmatprep.subr.mxu0 0.0
        %2703 = vmatpush2.xpose.msra.mxu0 0.0
        %2704 = vmatprep.subr.mxu0 0.0
        %2705 = vmatpush2.xpose.msra.mxu0 0.0
        %2706 = vmatprep.subr.mxu0 0.0
        %2707 = vmatpush2.xpose.msra.mxu0 0.0
        %2708 = vmatprep.subr.mxu0 0.0
        %2709 = vmatpush2.xpose.msra.mxu0 0.0
        %2710 = vmatprep.subr.mxu0 0.0
        %2711 = vmatpush2.xpose.msra.mxu0 0.0
        %2712 = vmatprep.subr.mxu0 0.0
        %2713 = vmatpush2.xpose.msra.mxu0 0.0
        %2714 = vmatprep.subr.mxu0 0.0
        %2715 = vmatpush2.xpose.msra.mxu0 0.0
        %2716 = vmatprep.subr.mxu0 0.0
        %2717 = vmatpush2.xpose.msra.mxu0 0.0
        %2718 = vmatprep.subr.mxu0 0.0
        %2719 = vmatpush2.xpose.msra.mxu0 0.0
        %2720 = vmatprep.subr.mxu0 0.0
        %2721 = vmatpush2.xpose.msra.mxu0 0.0
        %2722 = vmatprep.subr.mxu0 0.0
        %2723 = vmatpush2.xpose.msra.mxu0 0.0
        %2724 = vmatprep.subr.mxu0 0.0
        %2725 = vmatpush2.xpose.msra.mxu0 0.0
        %2726 = vmatprep.subr.mxu0 0.0
        %2727 = vmatpush2.xpose.msra.mxu0 0.0
        %2728 = vmatprep.subr.mxu0 0.0
        %2729 = vmatpush2.xpose.msra.mxu0 0.0
        %2730 = vmatprep.mubr.f32.mxu0 0.0
        %2731 = vmatmul.mubr.f32.gmra.mxu0 %v2662
        %v2732 = vpop.f32.mrf.mxu0
        %v2733 = vadd.f32 0.0, %v2732
        %v2734 = vpop.f32.mrf.mxu0
        %2735 = vdwg.mxu0
        %2736 = vrot.lane.b32.xlu0 %v1665, 104
        %v2737 = vpop.permute.xlu0 %2736
        %2738 = vrot.lane.b32.xlu0 %v1578, 104
        %v2739 = vpop.permute.xlu0 %2738
        %v2740 = vsel %vm1666, %v2737, 0
        %v2742 = vsel %vm1666, %v2739, 0
        %2744 = vmatprep.subr.mxu0 0.0
        %2745 = vmatpush1.xpose.msra.mxu0 0.0
        %2746 = vmatprep.subr.mxu0 0.0
        %2747 = vmatpush1.xpose.msra.mxu0 0.0
        %2748 = vmatprep.subr.mxu0 0.0
        %2749 = vmatpush1.xpose.msra.mxu0 0.0
        %2750 = vmatprep.subr.mxu0 0.0
        %2751 = vmatpush1.xpose.msra.mxu0 0.0
        %2752 = vmatprep.subr.mxu0 0.0
        %2753 = vmatpush1.xpose.msra.mxu0 0.0
        %2754 = vmatprep.subr.mxu0 0.0
        %2755 = vmatpush1.xpose.msra.mxu0 0.0
        %2756 = vmatprep.subr.mxu0 0.0
        %2757 = vmatpush1.xpose.msra.mxu0 0.0
        %2758 = vmatprep.subr.mxu0 0.0
        %2759 = vmatpush1.xpose.msra.mxu0 0.0
        %2760 = vmatprep.subr.mxu0 0.0
        %2761 = vmatpush1.xpose.msra.mxu0 0.0
        %2762 = vmatprep.subr.mxu0 0.0
        %2763 = vmatpush1.xpose.msra.mxu0 0.0
        %2764 = vmatprep.subr.mxu0 0.0
        %2765 = vmatpush1.xpose.msra.mxu0 0.0
        %2766 = vmatprep.subr.mxu0 0.0
        %2767 = vmatpush1.xpose.msra.mxu0 0.0
        %2768 = vmatprep.subr.mxu0 0.0
        %2769 = vmatpush1.xpose.msra.mxu0 0.0
        %2770 = vmatprep.subr.mxu0 0.0
        %2771 = vmatpush1.xpose.msra.mxu0 0.0
        %2772 = vmatprep.subr.mxu0 0.0
        %2773 = vmatpush1.xpose.msra.mxu0 0.0
        %2774 = vmatprep.subr.mxu0 0.0
        %2775 = vmatpush1.xpose.msra.mxu0 %v2742
        %2776 = vmatprep.subr.mxu0 0.0
        %2777 = vmatpush2.xpose.msra.mxu0 0.0
        %2778 = vmatprep.subr.mxu0 0.0
        %2779 = vmatpush2.xpose.msra.mxu0 0.0
        %2780 = vmatprep.subr.mxu0 0.0
        %2781 = vmatpush2.xpose.msra.mxu0 0.0
        %2782 = vmatprep.subr.mxu0 0.0
        %2783 = vmatpush2.xpose.msra.mxu0 0.0
        %2784 = vmatprep.subr.mxu0 0.0
        %2785 = vmatpush2.xpose.msra.mxu0 0.0
        %2786 = vmatprep.subr.mxu0 0.0
        %2787 = vmatpush2.xpose.msra.mxu0 0.0
        %2788 = vmatprep.subr.mxu0 0.0
        %2789 = vmatpush2.xpose.msra.mxu0 0.0
        %2790 = vmatprep.subr.mxu0 0.0
        %2791 = vmatpush2.xpose.msra.mxu0 0.0
        %2792 = vmatprep.subr.mxu0 0.0
        %2793 = vmatpush2.xpose.msra.mxu0 0.0
        %2794 = vmatprep.subr.mxu0 0.0
        %2795 = vmatpush2.xpose.msra.mxu0 0.0
        %2796 = vmatprep.subr.mxu0 0.0
        %2797 = vmatpush2.xpose.msra.mxu0 0.0
        %2798 = vmatprep.subr.mxu0 0.0
        %2799 = vmatpush2.xpose.msra.mxu0 0.0
        %2800 = vmatprep.subr.mxu0 0.0
        %2801 = vmatpush2.xpose.msra.mxu0 0.0
        %2802 = vmatprep.subr.mxu0 0.0
        %2803 = vmatpush2.xpose.msra.mxu0 0.0
        %2804 = vmatprep.subr.mxu0 0.0
        %2805 = vmatpush2.xpose.msra.mxu0 0.0
        %2806 = vmatprep.subr.mxu0 0.0
        %2807 = vmatpush2.xpose.msra.mxu0 0.0
        %2808 = vmatprep.mubr.f32.mxu0 0.0
        %2809 = vmatmul.mubr.f32.gmra.mxu0 %v2740
        %v2810 = vpop.f32.mrf.mxu0
        %v2811 = vadd.f32 0.0, %v2810
        %v2812 = vpop.f32.mrf.mxu0
        %2813 = vdwg.mxu0
        %v2814 = vsel %vm1666, %v2733, -inf
        %2815 = vmax.xlane.f32.xlu0 %v2814
        %v2816 = vpop.xlane.xlu0 %2815
        %v2817 = vsel %vm1666, %v2811, -inf
        %2818 = vmax.xlane.f32.xlu0 %v2817
        %v2819 = vpop.xlane.xlu0 %2818
        %v2820 = vsub.f32 %v2733, %v2816
        %v2821 = vsub.f32 %v2811, %v2819
        %v2822 = vmul.f32 %v2820, 1.442695
        %v2823 = vpow.pop %v2822
        %v2824 = vmul.f32 %v2821, 1.442695
        %v2825 = vpow.pop %v2824
        %v2826 = vsel %vm1666, %v2823, 0.0
        %2827 = vadd.xlane.f32.xlu0 %v2826
        %v2828 = vpop.xlane.xlu0 %2827
        %v2829 = vsel %vm1666, %v2825, 0.0
        %2830 = vadd.xlane.f32.xlu0 %v2829
        %v2831 = vpop.xlane.xlu0 %2830
        %v2832 = vrcp.pop %v2828
        %v2833 = vrcp.pop %v2831
        %v2834 = vmul.f32 %v2823, %v2832
        %v2835 = vmul.f32 %v2825, %v2833
        %vm2836 = vcmp.ge.s32.totalorder %v1663, 24
        %vm2837 = vcmp.lt.s32.totalorder %v1663, 32
        %vm2838 = vmand %vm2836, %vm2837
        %v2839 = vsel %vm2838, 1, 0
        %vm2840 = vcmp.eq.s32.totalorder %v2839, 1
        %v2841 = vsel %vm2840, %v1654, 0.0
        %v2842 = vsel %vm2840, %v1659, 0.0
        %v2844 = vsel %vm1666, %v2834, 0
        %2846 = vmatprep.subr.mxu0 0.0
        %2847 = vmatpush1.msra.mxu0 0.0
        %2848 = vmatprep.subr.mxu0 0.0
        %2849 = vmatpush1.msra.mxu0 0.0
        %2850 = vmatprep.subr.mxu0 0.0
        %2851 = vmatpush1.msra.mxu0 0.0
        %2852 = vmatprep.subr.mxu0 0.0
        %2853 = vmatpush1.msra.mxu0 0.0
        %2854 = vmatprep.subr.mxu0 0.0
        %2855 = vmatpush1.msra.mxu0 0.0
        %2856 = vmatprep.subr.mxu0 0.0
        %2857 = vmatpush1.msra.mxu0 0.0
        %2858 = vmatprep.subr.mxu0 0.0
        %2859 = vmatpush1.msra.mxu0 0.0
        %2860 = vmatprep.subr.mxu0 0.0
        %2861 = vmatpush1.msra.mxu0 0.0
        %2862 = vmatprep.subr.mxu0 0.0
        %2863 = vmatpush1.msra.mxu0 0.0
        %2864 = vmatprep.subr.mxu0 0.0
        %2865 = vmatpush1.msra.mxu0 0.0
        %2866 = vmatprep.subr.mxu0 0.0
        %2867 = vmatpush1.msra.mxu0 0.0
        %2868 = vmatprep.subr.mxu0 0.0
        %2869 = vmatpush1.msra.mxu0 0.0
        %2870 = vmatprep.subr.mxu0 0.0
        %2871 = vmatpush1.msra.mxu0 0.0
        %2872 = vmatprep.subr.mxu0 0.0
        %2873 = vmatpush1.msra.mxu0 0.0
        %2874 = vmatprep.subr.mxu0 0.0
        %2875 = vmatpush1.msra.mxu0 0.0
        %2876 = vmatprep.subr.mxu0 0.0
        %2877 = vmatpush1.msra.mxu0 %v2841
        %2878 = vmatprep.subr.mxu0 0.0
        %2879 = vmatpush2.msra.mxu0 0.0
        %2880 = vmatprep.subr.mxu0 0.0
        %2881 = vmatpush2.msra.mxu0 0.0
        %2882 = vmatprep.subr.mxu0 0.0
        %2883 = vmatpush2.msra.mxu0 0.0
        %2884 = vmatprep.subr.mxu0 0.0
        %2885 = vmatpush2.msra.mxu0 0.0
        %2886 = vmatprep.subr.mxu0 0.0
        %2887 = vmatpush2.msra.mxu0 0.0
        %2888 = vmatprep.subr.mxu0 0.0
        %2889 = vmatpush2.msra.mxu0 0.0
        %2890 = vmatprep.subr.mxu0 0.0
        %2891 = vmatpush2.msra.mxu0 0.0
        %2892 = vmatprep.subr.mxu0 0.0
        %2893 = vmatpush2.msra.mxu0 0.0
        %2894 = vmatprep.subr.mxu0 0.0
        %2895 = vmatpush2.msra.mxu0 0.0
        %2896 = vmatprep.subr.mxu0 0.0
        %2897 = vmatpush2.msra.mxu0 0.0
        %2898 = vmatprep.subr.mxu0 0.0
        %2899 = vmatpush2.msra.mxu0 0.0
        %2900 = vmatprep.subr.mxu0 0.0
        %2901 = vmatpush2.msra.mxu0 0.0
        %2902 = vmatprep.subr.mxu0 0.0
        %2903 = vmatpush2.msra.mxu0 0.0
        %2904 = vmatprep.subr.mxu0 0.0
        %2905 = vmatpush2.msra.mxu0 0.0
        %2906 = vmatprep.subr.mxu0 0.0
        %2907 = vmatpush2.msra.mxu0 0.0
        %2908 = vmatprep.subr.mxu0 0.0
        %2909 = vmatpush2.msra.mxu0 0.0
        %2910 = vmatprep.mubr.f32.mxu0 0.0
        %2911 = vmatmul.mubr.f32.gmra.mxu0 %v2844
        %v2912 = vpop.f32.mrf.mxu0
        %v2913 = vadd.f32 0.0, %v2912
        %v2914 = vpop.f32.mrf.mxu0
        %2915 = vdwg.mxu0
        %v2917 = vsel %vm1666, %v2835, 0
        %2919 = vmatprep.subr.mxu0 0.0
        %2920 = vmatpush1.msra.mxu0 0.0
        %2921 = vmatprep.subr.mxu0 0.0
        %2922 = vmatpush1.msra.mxu0 0.0
        %2923 = vmatprep.subr.mxu0 0.0
        %2924 = vmatpush1.msra.mxu0 0.0
        %2925 = vmatprep.subr.mxu0 0.0
        %2926 = vmatpush1.msra.mxu0 0.0
        %2927 = vmatprep.subr.mxu0 0.0
        %2928 = vmatpush1.msra.mxu0 0.0
        %2929 = vmatprep.subr.mxu0 0.0
        %2930 = vmatpush1.msra.mxu0 0.0
        %2931 = vmatprep.subr.mxu0 0.0
        %2932 = vmatpush1.msra.mxu0 0.0
        %2933 = vmatprep.subr.mxu0 0.0
        %2934 = vmatpush1.msra.mxu0 0.0
        %2935 = vmatprep.subr.mxu0 0.0
        %2936 = vmatpush1.msra.mxu0 0.0
        %2937 = vmatprep.subr.mxu0 0.0
        %2938 = vmatpush1.msra.mxu0 0.0
        %2939 = vmatprep.subr.mxu0 0.0
        %2940 = vmatpush1.msra.mxu0 0.0
        %2941 = vmatprep.subr.mxu0 0.0
        %2942 = vmatpush1.msra.mxu0 0.0
        %2943 = vmatprep.subr.mxu0 0.0
        %2944 = vmatpush1.msra.mxu0 0.0
        %2945 = vmatprep.subr.mxu0 0.0
        %2946 = vmatpush1.msra.mxu0 0.0
        %2947 = vmatprep.subr.mxu0 0.0
        %2948 = vmatpush1.msra.mxu0 0.0
        %2949 = vmatprep.subr.mxu0 0.0
        %2950 = vmatpush1.msra.mxu0 %v2842
        %2951 = vmatprep.subr.mxu0 0.0
        %2952 = vmatpush2.msra.mxu0 0.0
        %2953 = vmatprep.subr.mxu0 0.0
        %2954 = vmatpush2.msra.mxu0 0.0
        %2955 = vmatprep.subr.mxu0 0.0
        %2956 = vmatpush2.msra.mxu0 0.0
        %2957 = vmatprep.subr.mxu0 0.0
        %2958 = vmatpush2.msra.mxu0 0.0
        %2959 = vmatprep.subr.mxu0 0.0
        %2960 = vmatpush2.msra.mxu0 0.0
        %2961 = vmatprep.subr.mxu0 0.0
        %2962 = vmatpush2.msra.mxu0 0.0
        %2963 = vmatprep.subr.mxu0 0.0
        %2964 = vmatpush2.msra.mxu0 0.0
        %2965 = vmatprep.subr.mxu0 0.0
        %2966 = vmatpush2.msra.mxu0 0.0
        %2967 = vmatprep.subr.mxu0 0.0
        %2968 = vmatpush2.msra.mxu0 0.0
        %2969 = vmatprep.subr.mxu0 0.0
        %2970 = vmatpush2.msra.mxu0 0.0
        %2971 = vmatprep.subr.mxu0 0.0
        %2972 = vmatpush2.msra.mxu0 0.0
        %2973 = vmatprep.subr.mxu0 0.0
        %2974 = vmatpush2.msra.mxu0 0.0
        %2975 = vmatprep.subr.mxu0 0.0
        %2976 = vmatpush2.msra.mxu0 0.0
        %2977 = vmatprep.subr.mxu0 0.0
        %2978 = vmatpush2.msra.mxu0 0.0
        %2979 = vmatprep.subr.mxu0 0.0
        %2980 = vmatpush2.msra.mxu0 0.0
        %2981 = vmatprep.subr.mxu0 0.0
        %2982 = vmatpush2.msra.mxu0 0.0
        %2983 = vmatprep.mubr.f32.mxu0 0.0
        %2984 = vmatmul.mubr.f32.gmra.mxu0 %v2917
        %v2985 = vpop.f32.mrf.mxu0
        %v2986 = vadd.f32 0.0, %v2985
        %v2987 = vpop.f32.mrf.mxu0
        %2988 = vdwg.mxu0
        %v2989 = vadd.f32 %v2656, %v2913
        %v2990 = vadd.f32 %v2657, %v2986
        %v2992 = vlaneseq
        %v2993 = vshrl.u32 %v2992, 7
        %v2994 = vsub.s32 0, %v2993
        %v2995 = vrot.slane %v1411, %v2994
        %v2998 = vsel %vm1418, %v2989, 0
        %v3001 = vsel %vm1418, %v2990, 0
        %3003 = vmatprep.subr.mxu0 0.0
        %3004 = vmatpush1.msra.mxu0 0.0
        %3005 = vmatprep.subr.mxu0 0.0
        %3006 = vmatpush1.msra.mxu0 0.0
        %3007 = vmatprep.subr.mxu0 0.0
        %3008 = vmatpush1.msra.mxu0 0.0
        %3009 = vmatprep.subr.mxu0 0.0
        %3010 = vmatpush1.msra.mxu0 0.0
        %3011 = vmatprep.subr.mxu0 0.0
        %3012 = vmatpush1.msra.mxu0 0.0
        %3013 = vmatprep.subr.mxu0 0.0
        %3014 = vmatpush1.msra.mxu0 0.0
        %3015 = vmatprep.subr.mxu0 0.0
        %3016 = vmatpush1.msra.mxu0 0.0
        %3017 = vmatprep.subr.mxu0 0.0
        %3018 = vmatpush1.msra.mxu0 0.0
        %3019 = vmatprep.subr.mxu0 0.0
        %3020 = vmatpush1.msra.mxu0 0.0
        %3021 = vmatprep.subr.mxu0 0.0
        %3022 = vmatpush1.msra.mxu0 0.0
        %3023 = vmatprep.subr.mxu0 0.0
        %3024 = vmatpush1.msra.mxu0 0.0
        %3025 = vmatprep.subr.mxu0 0.0
        %3026 = vmatpush1.msra.mxu0 0.0
        %3027 = vmatprep.subr.mxu0 0.0
        %3028 = vmatpush1.msra.mxu0 %v1410
        %3029 = vmatprep.subr.mxu0 0.0
        %3030 = vmatpush1.msra.mxu0 %v1409
        %3031 = vmatprep.subr.mxu0 0.0
        %3032 = vmatpush1.msra.mxu0 %v1408
        %3033 = vmatprep.subr.mxu0 0.0
        %3034 = vmatpush1.msra.mxu0 %v1407
        %3035 = vmatprep.subr.mxu0 0.0
        %3036 = vmatpush2.msra.mxu0 0.0
        %3037 = vmatprep.subr.mxu0 0.0
        %3038 = vmatpush2.msra.mxu0 0.0
        %3039 = vmatprep.subr.mxu0 0.0
        %3040 = vmatpush2.msra.mxu0 0.0
        %3041 = vmatprep.subr.mxu0 0.0
        %3042 = vmatpush2.msra.mxu0 0.0
        %3043 = vmatprep.subr.mxu0 0.0
        %3044 = vmatpush2.msra.mxu0 0.0
        %3045 = vmatprep.subr.mxu0 0.0
        %3046 = vmatpush2.msra.mxu0 0.0
        %3047 = vmatprep.subr.mxu0 0.0
        %3048 = vmatpush2.msra.mxu0 0.0
        %3049 = vmatprep.subr.mxu0 0.0
        %3050 = vmatpush2.msra.mxu0 0.0
        %3051 = vmatprep.subr.mxu0 0.0
        %3052 = vmatpush2.msra.mxu0 0.0
        %3053 = vmatprep.subr.mxu0 0.0
        %3054 = vmatpush2.msra.mxu0 0.0
        %3055 = vmatprep.subr.mxu0 0.0
        %3056 = vmatpush2.msra.mxu0 0.0
        %3057 = vmatprep.subr.mxu0 0.0
        %3058 = vmatpush2.msra.mxu0 0.0
        %3059 = vmatprep.subr.mxu0 0.0
        %3060 = vmatpush2.msra.mxu0 0.0
        %3061 = vmatprep.subr.mxu0 0.0
        %3062 = vmatpush2.msra.mxu0 0.0
        %3063 = vmatprep.subr.mxu0 0.0
        %3064 = vmatpush2.msra.mxu0 0.0
        %3065 = vmatprep.subr.mxu0 0.0
        %3066 = vmatpush2.msra.mxu0 0.0
        %3067 = vmatprep.mubr.f32.mxu0 0.0
        %3068 = vmatmul.mubr.f32.gmra.mxu0 %v2998
        %v3069 = vpop.f32.mrf.mxu0
        %v3070 = vadd.f32 %v2995, %v3069
        %v3071 = vpop.f32.mrf.mxu0
        %3072 = vmatprep.mubr.f32.mxu0 0.0
        %3073 = vmatmul.mubr.f32.gmra.mxu0 %v3001
        %v3074 = vpop.f32.mrf.mxu0
        %v3075 = vadd.f32 %v2995, %v3074
        %v3076 = vpop.f32.mrf.mxu0
        %3077 = vdwg.mxu0
        %v3078 = vadd.f32 %v1388, %v3070
        %v3079 = vadd.f32 %v1389, %v3075
        %v3080 = vld [vmem:[%s1347] sm:$0x1]
        %v3081 = vld [vmem:[%s1350] sm:$0x1]
        %v3082 = vsel %vm1418, %v3078, 0.0
        %3083 = vadd.xlane.f32.xlu0 %v3082
        %v3084 = vpop.xlane.xlu0 %3083
        %v3085 = vsel %vm1418, %v3079, 0.0
        %3086 = vadd.xlane.f32.xlu0 %v3085
        %v3087 = vpop.xlane.xlu0 %3086
        %v3088 = vrcp.pop 32.0
        %v3089 = vmul.f32 %v3084, %v3088
        %v3090 = vmul.f32 %v3087, %v3088
        %v3091 = vsub.f32 %v3078, %v3089
        %v3092 = vsub.f32 %v3079, %v3090
        %v3093 = vmul.f32 %v3091, %v3091
        %v3094 = vmul.f32 %v3092, %v3092
        %v3095 = vsel %vm1418, %v3093, 0.0
        %3096 = vadd.xlane.f32.xlu0 %v3095
        %v3097 = vpop.xlane.xlu0 %3096
        %v3098 = vsel %vm1418, %v3094, 0.0
        %3099 = vadd.xlane.f32.xlu0 %v3098
        %v3100 = vpop.xlane.xlu0 %3099
        %v3101 = vmul.f32 %v3097, %v3088
        %v3102 = vmul.f32 %v3100, %v3088
        %v3103 = vadd.f32 %v3101, 1e-05
        %v3104 = vadd.f32 %v3102, 1e-05
        %v3105 = vrsqrt.pop %v3103
        %v3106 = vrsqrt.pop %v3104
        %v3107 = vmul.f32 %v3091, %v3105
        %v3108 = vmul.f32 %v3092, %v3106
        %v3110 = vlaneseq
        %v3111 = vshrl.u32 %v3110, 7
        %v3112 = vsub.s32 0, %v3111
        %v3113 = vrot.slane %v3080, %v3112
        %v3115 = vmul.f32 %v3107, %v3113
        %v3116 = vmul.f32 %v3108, %v3113
        %v3118 = vlaneseq
        %v3119 = vshrl.u32 %v3118, 7
        %v3120 = vsub.s32 0, %v3119
        %v3121 = vrot.slane %v3081, %v3120
        %v3123 = vadd.f32 %v3115, %v3121
        %v3124 = vadd.f32 %v3116, %v3121
        %v3125 = vld [vmem:[%s1317] sm:$0xff]
        %v3126 = vld [vmem:[%s1317 + $0x8] sm:$0xff]
        %v3127 = vld [vmem:[%s1317 + $0x10] sm:$0xff]
        %v3128 = vld [vmem:[%s1317 + $0x18] sm:$0xff]
        %v3129 = vld [vmem:[%s1322] sm:$0xff]
        %v3130 = vld [vmem:[%s1322 + $0x8] sm:$0xff]
        %v3131 = vld [vmem:[%s1322 + $0x10] sm:$0xff]
        %v3132 = vld [vmem:[%s1322 + $0x18] sm:$0xff]
        %v3133 = vld [vmem:[%s1327] sm:$0xff]
        %v3134 = vld [vmem:[%s1327 + $0x8] sm:$0xff]
        %v3135 = vld [vmem:[%s1327 + $0x10] sm:$0xff]
        %v3136 = vld [vmem:[%s1327 + $0x18] sm:$0xff]
        %v3137 = vld [vmem:[%s1330] sm:$0x1]
        %v3138 = vld [vmem:[%s1333] sm:$0x1]
        %v3139 = vld [vmem:[%s1336] sm:$0x1]
        %v3140 = vld [vmem:[%s1341] sm:$0xff]
        %v3141 = vld [vmem:[%s1341 + $0x8] sm:$0xff]
        %v3142 = vld [vmem:[%s1341 + $0x10] sm:$0xff]
        %v3143 = vld [vmem:[%s1341 + $0x18] sm:$0xff]
        %v3144 = vld [vmem:[%s1344] sm:$0x1]
        %v3146 = vlaneseq
        %v3147 = vshrl.u32 %v3146, 7
        %v3148 = vsub.s32 0, %v3147
        %v3149 = vrot.slane %v3137, %v3148
        %v3152 = vsel %vm1418, %v3123, 0
        %v3155 = vsel %vm1418, %v3124, 0
        %3157 = vmatprep.subr.mxu0 0.0
        %3158 = vmatpush1.msra.mxu0 0.0
        %3159 = vmatprep.subr.mxu0 0.0
        %3160 = vmatpush1.msra.mxu0 0.0
        %3161 = vmatprep.subr.mxu0 0.0
        %3162 = vmatpush1.msra.mxu0 0.0
        %3163 = vmatprep.subr.mxu0 0.0
        %3164 = vmatpush1.msra.mxu0 0.0
        %3165 = vmatprep.subr.mxu0 0.0
        %3166 = vmatpush1.msra.mxu0 0.0
        %3167 = vmatprep.subr.mxu0 0.0
        %3168 = vmatpush1.msra.mxu0 0.0
        %3169 = vmatprep.subr.mxu0 0.0
        %3170 = vmatpush1.msra.mxu0 0.0
        %3171 = vmatprep.subr.mxu0 0.0
        %3172 = vmatpush1.msra.mxu0 0.0
        %3173 = vmatprep.subr.mxu0 0.0
        %3174 = vmatpush1.msra.mxu0 0.0
        %3175 = vmatprep.subr.mxu0 0.0
        %3176 = vmatpush1.msra.mxu0 0.0
        %3177 = vmatprep.subr.mxu0 0.0
        %3178 = vmatpush1.msra.mxu0 0.0
        %3179 = vmatprep.subr.mxu0 0.0
        %3180 = vmatpush1.msra.mxu0 0.0
        %3181 = vmatprep.subr.mxu0 0.0
        %3182 = vmatpush1.msra.mxu0 %v3128
        %3183 = vmatprep.subr.mxu0 0.0
        %3184 = vmatpush1.msra.mxu0 %v3127
        %3185 = vmatprep.subr.mxu0 0.0
        %3186 = vmatpush1.msra.mxu0 %v3126
        %3187 = vmatprep.subr.mxu0 0.0
        %3188 = vmatpush1.msra.mxu0 %v3125
        %3189 = vmatprep.subr.mxu0 0.0
        %3190 = vmatpush2.msra.mxu0 0.0
        %3191 = vmatprep.subr.mxu0 0.0
        %3192 = vmatpush2.msra.mxu0 0.0
        %3193 = vmatprep.subr.mxu0 0.0
        %3194 = vmatpush2.msra.mxu0 0.0
        %3195 = vmatprep.subr.mxu0 0.0
        %3196 = vmatpush2.msra.mxu0 0.0
        %3197 = vmatprep.subr.mxu0 0.0
        %3198 = vmatpush2.msra.mxu0 0.0
        %3199 = vmatprep.subr.mxu0 0.0
        %3200 = vmatpush2.msra.mxu0 0.0
        %3201 = vmatprep.subr.mxu0 0.0
        %3202 = vmatpush2.msra.mxu0 0.0
        %3203 = vmatprep.subr.mxu0 0.0
        %3204 = vmatpush2.msra.mxu0 0.0
        %3205 = vmatprep.subr.mxu0 0.0
        %3206 = vmatpush2.msra.mxu0 0.0
        %3207 = vmatprep.subr.mxu0 0.0
        %3208 = vmatpush2.msra.mxu0 0.0
        %3209 = vmatprep.subr.mxu0 0.0
        %3210 = vmatpush2.msra.mxu0 0.0
        %3211 = vmatprep.subr.mxu0 0.0
        %3212 = vmatpush2.msra.mxu0 0.0
        %3213 = vmatprep.subr.mxu0 0.0
        %3214 = vmatpush2.msra.mxu0 0.0
        %3215 = vmatprep.subr.mxu0 0.0
        %3216 = vmatpush2.msra.mxu0 0.0
        %3217 = vmatprep.subr.mxu0 0.0
        %3218 = vmatpush2.msra.mxu0 0.0
        %3219 = vmatprep.subr.mxu0 0.0
        %3220 = vmatpush2.msra.mxu0 0.0
        %3221 = vmatprep.mubr.f32.mxu0 0.0
        %3222 = vmatmul.mubr.f32.gmra.mxu0 %v3152
        %v3223 = vpop.f32.mrf.mxu0
        %v3224 = vadd.f32 %v3149, %v3223
        %v3225 = vpop.f32.mrf.mxu0
        %3226 = vmatprep.mubr.f32.mxu0 0.0
        %3227 = vmatmul.mubr.f32.gmra.mxu0 %v3155
        %v3228 = vpop.f32.mrf.mxu0
        %v3229 = vadd.f32 %v3149, %v3228
        %v3230 = vpop.f32.mrf.mxu0
        %3231 = vdwg.mxu0
        %v3233 = vlaneseq
        %v3234 = vshrl.u32 %v3233, 7
        %v3235 = vsub.s32 0, %v3234
        %v3236 = vrot.slane %v3138, %v3235
        %v3239 = vsel %vm1418, %v1390, 0
        %v3242 = vsel %vm1418, %v1391, 0
        %3244 = vmatprep.subr.mxu0 0.0
        %3245 = vmatpush1.msra.mxu0 0.0
        %3246 = vmatprep.subr.mxu0 0.0
        %3247 = vmatpush1.msra.mxu0 0.0
        %3248 = vmatprep.subr.mxu0 0.0
        %3249 = vmatpush1.msra.mxu0 0.0
        %3250 = vmatprep.subr.mxu0 0.0
        %3251 = vmatpush1.msra.mxu0 0.0
        %3252 = vmatprep.subr.mxu0 0.0
        %3253 = vmatpush1.msra.mxu0 0.0
        %3254 = vmatprep.subr.mxu0 0.0
        %3255 = vmatpush1.msra.mxu0 0.0
        %3256 = vmatprep.subr.mxu0 0.0
        %3257 = vmatpush1.msra.mxu0 0.0
        %3258 = vmatprep.subr.mxu0 0.0
        %3259 = vmatpush1.msra.mxu0 0.0
        %3260 = vmatprep.subr.mxu0 0.0
        %3261 = vmatpush1.msra.mxu0 0.0
        %3262 = vmatprep.subr.mxu0 0.0
        %3263 = vmatpush1.msra.mxu0 0.0
        %3264 = vmatprep.subr.mxu0 0.0
        %3265 = vmatpush1.msra.mxu0 0.0
        %3266 = vmatprep.subr.mxu0 0.0
        %3267 = vmatpush1.msra.mxu0 0.0
        %3268 = vmatprep.subr.mxu0 0.0
        %3269 = vmatpush1.msra.mxu0 %v3132
        %3270 = vmatprep.subr.mxu0 0.0
        %3271 = vmatpush1.msra.mxu0 %v3131
        %3272 = vmatprep.subr.mxu0 0.0
        %3273 = vmatpush1.msra.mxu0 %v3130
        %3274 = vmatprep.subr.mxu0 0.0
        %3275 = vmatpush1.msra.mxu0 %v3129
        %3276 = vmatprep.subr.mxu0 0.0
        %3277 = vmatpush2.msra.mxu0 0.0
        %3278 = vmatprep.subr.mxu0 0.0
        %3279 = vmatpush2.msra.mxu0 0.0
        %3280 = vmatprep.subr.mxu0 0.0
        %3281 = vmatpush2.msra.mxu0 0.0
        %3282 = vmatprep.subr.mxu0 0.0
        %3283 = vmatpush2.msra.mxu0 0.0
        %3284 = vmatprep.subr.mxu0 0.0
        %3285 = vmatpush2.msra.mxu0 0.0
        %3286 = vmatprep.subr.mxu0 0.0
        %3287 = vmatpush2.msra.mxu0 0.0
        %3288 = vmatprep.subr.mxu0 0.0
        %3289 = vmatpush2.msra.mxu0 0.0
        %3290 = vmatprep.subr.mxu0 0.0
        %3291 = vmatpush2.msra.mxu0 0.0
        %3292 = vmatprep.subr.mxu0 0.0
        %3293 = vmatpush2.msra.mxu0 0.0
        %3294 = vmatprep.subr.mxu0 0.0
        %3295 = vmatpush2.msra.mxu0 0.0
        %3296 = vmatprep.subr.mxu0 0.0
        %3297 = vmatpush2.msra.mxu0 0.0
        %3298 = vmatprep.subr.mxu0 0.0
        %3299 = vmatpush2.msra.mxu0 0.0
        %3300 = vmatprep.subr.mxu0 0.0
        %3301 = vmatpush2.msra.mxu0 0.0
        %3302 = vmatprep.subr.mxu0 0.0
        %3303 = vmatpush2.msra.mxu0 0.0
        %3304 = vmatprep.subr.mxu0 0.0
        %3305 = vmatpush2.msra.mxu0 0.0
        %3306 = vmatprep.subr.mxu0 0.0
        %3307 = vmatpush2.msra.mxu0 0.0
        %3308 = vmatprep.mubr.f32.mxu0 0.0
        %3309 = vmatmul.mubr.f32.gmra.mxu0 %v3239
        %v3310 = vpop.f32.mrf.mxu0
        %v3311 = vadd.f32 %v3236, %v3310
        %v3312 = vpop.f32.mrf.mxu0
        %3313 = vmatprep.mubr.f32.mxu0 0.0
        %3314 = vmatmul.mubr.f32.gmra.mxu0 %v3242
        %v3315 = vpop.f32.mrf.mxu0
        %v3316 = vadd.f32 %v3236, %v3315
        %v3317 = vpop.f32.mrf.mxu0
        %3318 = vdwg.mxu0
        %v3320 = vlaneseq
        %v3321 = vshrl.u32 %v3320, 7
        %v3322 = vsub.s32 0, %v3321
        %v3323 = vrot.slane %v3139, %v3322
        %3325 = vmatprep.subr.mxu0 0.0
        %3326 = vmatpush1.msra.mxu0 0.0
        %3327 = vmatprep.subr.mxu0 0.0
        %3328 = vmatpush1.msra.mxu0 0.0
        %3329 = vmatprep.subr.mxu0 0.0
        %3330 = vmatpush1.msra.mxu0 0.0
        %3331 = vmatprep.subr.mxu0 0.0
        %3332 = vmatpush1.msra.mxu0 0.0
        %3333 = vmatprep.subr.mxu0 0.0
        %3334 = vmatpush1.msra.mxu0 0.0
        %3335 = vmatprep.subr.mxu0 0.0
        %3336 = vmatpush1.msra.mxu0 0.0
        %3337 = vmatprep.subr.mxu0 0.0
        %3338 = vmatpush1.msra.mxu0 0.0
        %3339 = vmatprep.subr.mxu0 0.0
        %3340 = vmatpush1.msra.mxu0 0.0
        %3341 = vmatprep.subr.mxu0 0.0
        %3342 = vmatpush1.msra.mxu0 0.0
        %3343 = vmatprep.subr.mxu0 0.0
        %3344 = vmatpush1.msra.mxu0 0.0
        %3345 = vmatprep.subr.mxu0 0.0
        %3346 = vmatpush1.msra.mxu0 0.0
        %3347 = vmatprep.subr.mxu0 0.0
        %3348 = vmatpush1.msra.mxu0 0.0
        %3349 = vmatprep.subr.mxu0 0.0
        %3350 = vmatpush1.msra.mxu0 %v3136
        %3351 = vmatprep.subr.mxu0 0.0
        %3352 = vmatpush1.msra.mxu0 %v3135
        %3353 = vmatprep.subr.mxu0 0.0
        %3354 = vmatpush1.msra.mxu0 %v3134
        %3355 = vmatprep.subr.mxu0 0.0
        %3356 = vmatpush1.msra.mxu0 %v3133
        %3357 = vmatprep.subr.mxu0 0.0
        %3358 = vmatpush2.msra.mxu0 0.0
        %3359 = vmatprep.subr.mxu0 0.0
        %3360 = vmatpush2.msra.mxu0 0.0
        %3361 = vmatprep.subr.mxu0 0.0
        %3362 = vmatpush2.msra.mxu0 0.0
        %3363 = vmatprep.subr.mxu0 0.0
        %3364 = vmatpush2.msra.mxu0 0.0
        %3365 = vmatprep.subr.mxu0 0.0
        %3366 = vmatpush2.msra.mxu0 0.0
        %3367 = vmatprep.subr.mxu0 0.0
        %3368 = vmatpush2.msra.mxu0 0.0
        %3369 = vmatprep.subr.mxu0 0.0
        %3370 = vmatpush2.msra.mxu0 0.0
        %3371 = vmatprep.subr.mxu0 0.0
        %3372 = vmatpush2.msra.mxu0 0.0
        %3373 = vmatprep.subr.mxu0 0.0
        %3374 = vmatpush2.msra.mxu0 0.0
        %3375 = vmatprep.subr.mxu0 0.0
        %3376 = vmatpush2.msra.mxu0 0.0
        %3377 = vmatprep.subr.mxu0 0.0
        %3378 = vmatpush2.msra.mxu0 0.0
        %3379 = vmatprep.subr.mxu0 0.0
        %3380 = vmatpush2.msra.mxu0 0.0
        %3381 = vmatprep.subr.mxu0 0.0
        %3382 = vmatpush2.msra.mxu0 0.0
        %3383 = vmatprep.subr.mxu0 0.0
        %3384 = vmatpush2.msra.mxu0 0.0
        %3385 = vmatprep.subr.mxu0 0.0
        %3386 = vmatpush2.msra.mxu0 0.0
        %3387 = vmatprep.subr.mxu0 0.0
        %3388 = vmatpush2.msra.mxu0 0.0
        %3389 = vmatprep.mubr.f32.mxu0 0.0
        %3390 = vmatmul.mubr.f32.gmra.mxu0 %v3239
        %v3391 = vpop.f32.mrf.mxu0
        %v3392 = vadd.f32 %v3323, %v3391
        %v3393 = vpop.f32.mrf.mxu0
        %3394 = vmatprep.mubr.f32.mxu0 0.0
        %3395 = vmatmul.mubr.f32.gmra.mxu0 %v3242
        %v3396 = vpop.f32.mrf.mxu0
        %v3397 = vadd.f32 %v3323, %v3396
        %v3398 = vpop.f32.mrf.mxu0
        %3399 = vdwg.mxu0
        %v3400 = vmul.f32 %v3224, 0.35355338
        %v3401 = vmul.f32 %v3229, 0.35355338
        %v3403 = vsel %vm1666, %v3400, 0
        %v3406 = vsel %vm1666, %v3311, 0
        %3408 = vmatprep.subr.mxu0 0.0
        %3409 = vmatpush1.xpose.msra.mxu0 0.0
        %3410 = vmatprep.subr.mxu0 0.0
        %3411 = vmatpush1.xpose.msra.mxu0 0.0
        %3412 = vmatprep.subr.mxu0 0.0
        %3413 = vmatpush1.xpose.msra.mxu0 0.0
        %3414 = vmatprep.subr.mxu0 0.0
        %3415 = vmatpush1.xpose.msra.mxu0 0.0
        %3416 = vmatprep.subr.mxu0 0.0
        %3417 = vmatpush1.xpose.msra.mxu0 0.0
        %3418 = vmatprep.subr.mxu0 0.0
        %3419 = vmatpush1.xpose.msra.mxu0 0.0
        %3420 = vmatprep.subr.mxu0 0.0
        %3421 = vmatpush1.xpose.msra.mxu0 0.0
        %3422 = vmatprep.subr.mxu0 0.0
        %3423 = vmatpush1.xpose.msra.mxu0 0.0
        %3424 = vmatprep.subr.mxu0 0.0
        %3425 = vmatpush1.xpose.msra.mxu0 0.0
        %3426 = vmatprep.subr.mxu0 0.0
        %3427 = vmatpush1.xpose.msra.mxu0 0.0
        %3428 = vmatprep.subr.mxu0 0.0
        %3429 = vmatpush1.xpose.msra.mxu0 0.0
        %3430 = vmatprep.subr.mxu0 0.0
        %3431 = vmatpush1.xpose.msra.mxu0 0.0
        %3432 = vmatprep.subr.mxu0 0.0
        %3433 = vmatpush1.xpose.msra.mxu0 0.0
        %3434 = vmatprep.subr.mxu0 0.0
        %3435 = vmatpush1.xpose.msra.mxu0 0.0
        %3436 = vmatprep.subr.mxu0 0.0
        %3437 = vmatpush1.xpose.msra.mxu0 0.0
        %3438 = vmatprep.subr.mxu0 0.0
        %3439 = vmatpush1.xpose.msra.mxu0 %v3406
        %3440 = vmatprep.subr.mxu0 0.0
        %3441 = vmatpush2.xpose.msra.mxu0 0.0
        %3442 = vmatprep.subr.mxu0 0.0
        %3443 = vmatpush2.xpose.msra.mxu0 0.0
        %3444 = vmatprep.subr.mxu0 0.0
        %3445 = vmatpush2.xpose.msra.mxu0 0.0
        %3446 = vmatprep.subr.mxu0 0.0
        %3447 = vmatpush2.xpose.msra.mxu0 0.0
        %3448 = vmatprep.subr.mxu0 0.0
        %3449 = vmatpush2.xpose.msra.mxu0 0.0
        %3450 = vmatprep.subr.mxu0 0.0
        %3451 = vmatpush2.xpose.msra.mxu0 0.0
        %3452 = vmatprep.subr.mxu0 0.0
        %3453 = vmatpush2.xpose.msra.mxu0 0.0
        %3454 = vmatprep.subr.mxu0 0.0
        %3455 = vmatpush2.xpose.msra.mxu0 0.0
        %3456 = vmatprep.subr.mxu0 0.0
        %3457 = vmatpush2.xpose.msra.mxu0 0.0
        %3458 = vmatprep.subr.mxu0 0.0
        %3459 = vmatpush2.xpose.msra.mxu0 0.0
        %3460 = vmatprep.subr.mxu0 0.0
        %3461 = vmatpush2.xpose.msra.mxu0 0.0
        %3462 = vmatprep.subr.mxu0 0.0
        %3463 = vmatpush2.xpose.msra.mxu0 0.0
        %3464 = vmatprep.subr.mxu0 0.0
        %3465 = vmatpush2.xpose.msra.mxu0 0.0
        %3466 = vmatprep.subr.mxu0 0.0
        %3467 = vmatpush2.xpose.msra.mxu0 0.0
        %3468 = vmatprep.subr.mxu0 0.0
        %3469 = vmatpush2.xpose.msra.mxu0 0.0
        %3470 = vmatprep.subr.mxu0 0.0
        %3471 = vmatpush2.xpose.msra.mxu0 0.0
        %3472 = vmatprep.mubr.f32.mxu0 0.0
        %3473 = vmatmul.mubr.f32.gmra.mxu0 %v3403
        %v3474 = vpop.f32.mrf.mxu0
        %v3475 = vadd.f32 0.0, %v3474
        %v3476 = vpop.f32.mrf.mxu0
        %3477 = vdwg.mxu0
        %v3479 = vsel %vm1666, %v3401, 0
        %v3482 = vsel %vm1666, %v3316, 0
        %3484 = vmatprep.subr.mxu0 0.0
        %3485 = vmatpush1.xpose.msra.mxu0 0.0
        %3486 = vmatprep.subr.mxu0 0.0
        %3487 = vmatpush1.xpose.msra.mxu0 0.0
        %3488 = vmatprep.subr.mxu0 0.0
        %3489 = vmatpush1.xpose.msra.mxu0 0.0
        %3490 = vmatprep.subr.mxu0 0.0
        %3491 = vmatpush1.xpose.msra.mxu0 0.0
        %3492 = vmatprep.subr.mxu0 0.0
        %3493 = vmatpush1.xpose.msra.mxu0 0.0
        %3494 = vmatprep.subr.mxu0 0.0
        %3495 = vmatpush1.xpose.msra.mxu0 0.0
        %3496 = vmatprep.subr.mxu0 0.0
        %3497 = vmatpush1.xpose.msra.mxu0 0.0
        %3498 = vmatprep.subr.mxu0 0.0
        %3499 = vmatpush1.xpose.msra.mxu0 0.0
        %3500 = vmatprep.subr.mxu0 0.0
        %3501 = vmatpush1.xpose.msra.mxu0 0.0
        %3502 = vmatprep.subr.mxu0 0.0
        %3503 = vmatpush1.xpose.msra.mxu0 0.0
        %3504 = vmatprep.subr.mxu0 0.0
        %3505 = vmatpush1.xpose.msra.mxu0 0.0
        %3506 = vmatprep.subr.mxu0 0.0
        %3507 = vmatpush1.xpose.msra.mxu0 0.0
        %3508 = vmatprep.subr.mxu0 0.0
        %3509 = vmatpush1.xpose.msra.mxu0 0.0
        %3510 = vmatprep.subr.mxu0 0.0
        %3511 = vmatpush1.xpose.msra.mxu0 0.0
        %3512 = vmatprep.subr.mxu0 0.0
        %3513 = vmatpush1.xpose.msra.mxu0 0.0
        %3514 = vmatprep.subr.mxu0 0.0
        %3515 = vmatpush1.xpose.msra.mxu0 %v3482
        %3516 = vmatprep.subr.mxu0 0.0
        %3517 = vmatpush2.xpose.msra.mxu0 0.0
        %3518 = vmatprep.subr.mxu0 0.0
        %3519 = vmatpush2.xpose.msra.mxu0 0.0
        %3520 = vmatprep.subr.mxu0 0.0
        %3521 = vmatpush2.xpose.msra.mxu0 0.0
        %3522 = vmatprep.subr.mxu0 0.0
        %3523 = vmatpush2.xpose.msra.mxu0 0.0
        %3524 = vmatprep.subr.mxu0 0.0
        %3525 = vmatpush2.xpose.msra.mxu0 0.0
        %3526 = vmatprep.subr.mxu0 0.0
        %3527 = vmatpush2.xpose.msra.mxu0 0.0
        %3528 = vmatprep.subr.mxu0 0.0
        %3529 = vmatpush2.xpose.msra.mxu0 0.0
        %3530 = vmatprep.subr.mxu0 0.0
        %3531 = vmatpush2.xpose.msra.mxu0 0.0
        %3532 = vmatprep.subr.mxu0 0.0
        %3533 = vmatpush2.xpose.msra.mxu0 0.0
        %3534 = vmatprep.subr.mxu0 0.0
        %3535 = vmatpush2.xpose.msra.mxu0 0.0
        %3536 = vmatprep.subr.mxu0 0.0
        %3537 = vmatpush2.xpose.msra.mxu0 0.0
        %3538 = vmatprep.subr.mxu0 0.0
        %3539 = vmatpush2.xpose.msra.mxu0 0.0
        %3540 = vmatprep.subr.mxu0 0.0
        %3541 = vmatpush2.xpose.msra.mxu0 0.0
        %3542 = vmatprep.subr.mxu0 0.0
        %3543 = vmatpush2.xpose.msra.mxu0 0.0
        %3544 = vmatprep.subr.mxu0 0.0
        %3545 = vmatpush2.xpose.msra.mxu0 0.0
        %3546 = vmatprep.subr.mxu0 0.0
        %3547 = vmatpush2.xpose.msra.mxu0 0.0
        %3548 = vmatprep.mubr.f32.mxu0 0.0
        %3549 = vmatmul.mubr.f32.gmra.mxu0 %v3479
        %v3550 = vpop.f32.mrf.mxu0
        %v3551 = vadd.f32 0.0, %v3550
        %v3552 = vpop.f32.mrf.mxu0
        %3553 = vdwg.mxu0
        %v3554 = vsel %vm1666, %v3475, -inf
        %3555 = vmax.xlane.f32.xlu0 %v3554
        %v3556 = vpop.xlane.xlu0 %3555
        %v3557 = vsel %vm1666, %v3551, -inf
        %3558 = vmax.xlane.f32.xlu0 %v3557
        %v3559 = vpop.xlane.xlu0 %3558
        %v3560 = vsub.f32 %v3475, %v3556
        %v3561 = vsub.f32 %v3551, %v3559
        %v3562 = vmul.f32 %v3560, 1.442695
        %v3563 = vpow.pop %v3562
        %v3564 = vmul.f32 %v3561, 1.442695
        %v3565 = vpow.pop %v3564
        %v3566 = vsel %vm1666, %v3563, 0.0
        %3567 = vadd.xlane.f32.xlu0 %v3566
        %v3568 = vpop.xlane.xlu0 %3567
        %v3569 = vsel %vm1666, %v3565, 0.0
        %3570 = vadd.xlane.f32.xlu0 %v3569
        %v3571 = vpop.xlane.xlu0 %3570
        %v3572 = vrcp.pop %v3568
        %v3573 = vrcp.pop %v3571
        %v3574 = vmul.f32 %v3563, %v3572
        %v3575 = vmul.f32 %v3565, %v3573
        %v3576 = vsel %vm1845, %v3392, 0.0
        %v3577 = vsel %vm1845, %v3397, 0.0
        %3578 = vrot.lane.b32.xlu0 %v3400, 120
        %v3579 = vpop.permute.xlu0 %3578
        %3580 = vrot.lane.b32.xlu0 %v3311, 120
        %v3581 = vpop.permute.xlu0 %3580
        %v3582 = vsel %vm1666, %v3579, 0
        %v3584 = vsel %vm1666, %v3581, 0
        %3586 = vmatprep.subr.mxu0 0.0
        %3587 = vmatpush1.xpose.msra.mxu0 0.0
        %3588 = vmatprep.subr.mxu0 0.0
        %3589 = vmatpush1.xpose.msra.mxu0 0.0
        %3590 = vmatprep.subr.mxu0 0.0
        %3591 = vmatpush1.xpose.msra.mxu0 0.0
        %3592 = vmatprep.subr.mxu0 0.0
        %3593 = vmatpush1.xpose.msra.mxu0 0.0
        %3594 = vmatprep.subr.mxu0 0.0
        %3595 = vmatpush1.xpose.msra.mxu0 0.0
        %3596 = vmatprep.subr.mxu0 0.0
        %3597 = vmatpush1.xpose.msra.mxu0 0.0
        %3598 = vmatprep.subr.mxu0 0.0
        %3599 = vmatpush1.xpose.msra.mxu0 0.0
        %3600 = vmatprep.subr.mxu0 0.0
        %3601 = vmatpush1.xpose.msra.mxu0 0.0
        %3602 = vmatprep.subr.mxu0 0.0
        %3603 = vmatpush1.xpose.msra.mxu0 0.0
        %3604 = vmatprep.subr.mxu0 0.0
        %3605 = vmatpush1.xpose.msra.mxu0 0.0
        %3606 = vmatprep.subr.mxu0 0.0
        %3607 = vmatpush1.xpose.msra.mxu0 0.0
        %3608 = vmatprep.subr.mxu0 0.0
        %3609 = vmatpush1.xpose.msra.mxu0 0.0
        %3610 = vmatprep.subr.mxu0 0.0
        %3611 = vmatpush1.xpose.msra.mxu0 0.0
        %3612 = vmatprep.subr.mxu0 0.0
        %3613 = vmatpush1.xpose.msra.mxu0 0.0
        %3614 = vmatprep.subr.mxu0 0.0
        %3615 = vmatpush1.xpose.msra.mxu0 0.0
        %3616 = vmatprep.subr.mxu0 0.0
        %3617 = vmatpush1.xpose.msra.mxu0 %v3584
        %3618 = vmatprep.subr.mxu0 0.0
        %3619 = vmatpush2.xpose.msra.mxu0 0.0
        %3620 = vmatprep.subr.mxu0 0.0
        %3621 = vmatpush2.xpose.msra.mxu0 0.0
        %3622 = vmatprep.subr.mxu0 0.0
        %3623 = vmatpush2.xpose.msra.mxu0 0.0
        %3624 = vmatprep.subr.mxu0 0.0
        %3625 = vmatpush2.xpose.msra.mxu0 0.0
        %3626 = vmatprep.subr.mxu0 0.0
        %3627 = vmatpush2.xpose.msra.mxu0 0.0
        %3628 = vmatprep.subr.mxu0 0.0
        %3629 = vmatpush2.xpose.msra.mxu0 0.0
        %3630 = vmatprep.subr.mxu0 0.0
        %3631 = vmatpush2.xpose.msra.mxu0 0.0
        %3632 = vmatprep.subr.mxu0 0.0
        %3633 = vmatpush2.xpose.msra.mxu0 0.0
        %3634 = vmatprep.subr.mxu0 0.0
        %3635 = vmatpush2.xpose.msra.mxu0 0.0
        %3636 = vmatprep.subr.mxu0 0.0
        %3637 = vmatpush2.xpose.msra.mxu0 0.0
        %3638 = vmatprep.subr.mxu0 0.0
        %3639 = vmatpush2.xpose.msra.mxu0 0.0
        %3640 = vmatprep.subr.mxu0 0.0
        %3641 = vmatpush2.xpose.msra.mxu0 0.0
        %3642 = vmatprep.subr.mxu0 0.0
        %3643 = vmatpush2.xpose.msra.mxu0 0.0
        %3644 = vmatprep.subr.mxu0 0.0
        %3645 = vmatpush2.xpose.msra.mxu0 0.0
        %3646 = vmatprep.subr.mxu0 0.0
        %3647 = vmatpush2.xpose.msra.mxu0 0.0
        %3648 = vmatprep.subr.mxu0 0.0
        %3649 = vmatpush2.xpose.msra.mxu0 0.0
        %3650 = vmatprep.mubr.f32.mxu0 0.0
        %3651 = vmatmul.mubr.f32.gmra.mxu0 %v3582
        %v3652 = vpop.f32.mrf.mxu0
        %v3653 = vadd.f32 0.0, %v3652
        %v3654 = vpop.f32.mrf.mxu0
        %3655 = vdwg.mxu0
        %3656 = vrot.lane.b32.xlu0 %v3401, 120
        %v3657 = vpop.permute.xlu0 %3656
        %3658 = vrot.lane.b32.xlu0 %v3316, 120
        %v3659 = vpop.permute.xlu0 %3658
        %v3660 = vsel %vm1666, %v3657, 0
        %v3662 = vsel %vm1666, %v3659, 0
        %3664 = vmatprep.subr.mxu0 0.0
        %3665 = vmatpush1.xpose.msra.mxu0 0.0
        %3666 = vmatprep.subr.mxu0 0.0
        %3667 = vmatpush1.xpose.msra.mxu0 0.0
        %3668 = vmatprep.subr.mxu0 0.0
        %3669 = vmatpush1.xpose.msra.mxu0 0.0
        %3670 = vmatprep.subr.mxu0 0.0
        %3671 = vmatpush1.xpose.msra.mxu0 0.0
        %3672 = vmatprep.subr.mxu0 0.0
        %3673 = vmatpush1.xpose.msra.mxu0 0.0
        %3674 = vmatprep.subr.mxu0 0.0
        %3675 = vmatpush1.xpose.msra.mxu0 0.0
        %3676 = vmatprep.subr.mxu0 0.0
        %3677 = vmatpush1.xpose.msra.mxu0 0.0
        %3678 = vmatprep.subr.mxu0 0.0
        %3679 = vmatpush1.xpose.msra.mxu0 0.0
        %3680 = vmatprep.subr.mxu0 0.0
        %3681 = vmatpush1.xpose.msra.mxu0 0.0
        %3682 = vmatprep.subr.mxu0 0.0
        %3683 = vmatpush1.xpose.msra.mxu0 0.0
        %3684 = vmatprep.subr.mxu0 0.0
        %3685 = vmatpush1.xpose.msra.mxu0 0.0
        %3686 = vmatprep.subr.mxu0 0.0
        %3687 = vmatpush1.xpose.msra.mxu0 0.0
        %3688 = vmatprep.subr.mxu0 0.0
        %3689 = vmatpush1.xpose.msra.mxu0 0.0
        %3690 = vmatprep.subr.mxu0 0.0
        %3691 = vmatpush1.xpose.msra.mxu0 0.0
        %3692 = vmatprep.subr.mxu0 0.0
        %3693 = vmatpush1.xpose.msra.mxu0 0.0
        %3694 = vmatprep.subr.mxu0 0.0
        %3695 = vmatpush1.xpose.msra.mxu0 %v3662
        %3696 = vmatprep.subr.mxu0 0.0
        %3697 = vmatpush2.xpose.msra.mxu0 0.0
        %3698 = vmatprep.subr.mxu0 0.0
        %3699 = vmatpush2.xpose.msra.mxu0 0.0
        %3700 = vmatprep.subr.mxu0 0.0
        %3701 = vmatpush2.xpose.msra.mxu0 0.0
        %3702 = vmatprep.subr.mxu0 0.0
        %3703 = vmatpush2.xpose.msra.mxu0 0.0
        %3704 = vmatprep.subr.mxu0 0.0
        %3705 = vmatpush2.xpose.msra.mxu0 0.0
        %3706 = vmatprep.subr.mxu0 0.0
        %3707 = vmatpush2.xpose.msra.mxu0 0.0
        %3708 = vmatprep.subr.mxu0 0.0
        %3709 = vmatpush2.xpose.msra.mxu0 0.0
        %3710 = vmatprep.subr.mxu0 0.0
        %3711 = vmatpush2.xpose.msra.mxu0 0.0
        %3712 = vmatprep.subr.mxu0 0.0
        %3713 = vmatpush2.xpose.msra.mxu0 0.0
        %3714 = vmatprep.subr.mxu0 0.0
        %3715 = vmatpush2.xpose.msra.mxu0 0.0
        %3716 = vmatprep.subr.mxu0 0.0
        %3717 = vmatpush2.xpose.msra.mxu0 0.0
        %3718 = vmatprep.subr.mxu0 0.0
        %3719 = vmatpush2.xpose.msra.mxu0 0.0
        %3720 = vmatprep.subr.mxu0 0.0
        %3721 = vmatpush2.xpose.msra.mxu0 0.0
        %3722 = vmatprep.subr.mxu0 0.0
        %3723 = vmatpush2.xpose.msra.mxu0 0.0
        %3724 = vmatprep.subr.mxu0 0.0
        %3725 = vmatpush2.xpose.msra.mxu0 0.0
        %3726 = vmatprep.subr.mxu0 0.0
        %3727 = vmatpush2.xpose.msra.mxu0 0.0
        %3728 = vmatprep.mubr.f32.mxu0 0.0
        %3729 = vmatmul.mubr.f32.gmra.mxu0 %v3660
        %v3730 = vpop.f32.mrf.mxu0
        %v3731 = vadd.f32 0.0, %v3730
        %v3732 = vpop.f32.mrf.mxu0
        %3733 = vdwg.mxu0
        %v3734 = vsel %vm1666, %v3653, -inf
        %3735 = vmax.xlane.f32.xlu0 %v3734
        %v3736 = vpop.xlane.xlu0 %3735
        %v3737 = vsel %vm1666, %v3731, -inf
        %3738 = vmax.xlane.f32.xlu0 %v3737
        %v3739 = vpop.xlane.xlu0 %3738
        %v3740 = vsub.f32 %v3653, %v3736
        %v3741 = vsub.f32 %v3731, %v3739
        %v3742 = vmul.f32 %v3740, 1.442695
        %v3743 = vpow.pop %v3742
        %v3744 = vmul.f32 %v3741, 1.442695
        %v3745 = vpow.pop %v3744
        %v3746 = vsel %vm1666, %v3743, 0.0
        %3747 = vadd.xlane.f32.xlu0 %v3746
        %v3748 = vpop.xlane.xlu0 %3747
        %v3749 = vsel %vm1666, %v3745, 0.0
        %3750 = vadd.xlane.f32.xlu0 %v3749
        %v3751 = vpop.xlane.xlu0 %3750
        %v3752 = vrcp.pop %v3748
        %v3753 = vrcp.pop %v3751
        %v3754 = vmul.f32 %v3743, %v3752
        %v3755 = vmul.f32 %v3745, %v3753
        %v3756 = vsel %vm2030, %v3392, 0.0
        %v3757 = vsel %vm2030, %v3397, 0.0
        %v3759 = vsel %vm1666, %v3754, 0
        %3761 = vmatprep.subr.mxu0 0.0
        %3762 = vmatpush1.msra.mxu0 0.0
        %3763 = vmatprep.subr.mxu0 0.0
        %3764 = vmatpush1.msra.mxu0 0.0
        %3765 = vmatprep.subr.mxu0 0.0
        %3766 = vmatpush1.msra.mxu0 0.0
        %3767 = vmatprep.subr.mxu0 0.0
        %3768 = vmatpush1.msra.mxu0 0.0
        %3769 = vmatprep.subr.mxu0 0.0
        %3770 = vmatpush1.msra.mxu0 0.0
        %3771 = vmatprep.subr.mxu0 0.0
        %3772 = vmatpush1.msra.mxu0 0.0
        %3773 = vmatprep.subr.mxu0 0.0
        %3774 = vmatpush1.msra.mxu0 0.0
        %3775 = vmatprep.subr.mxu0 0.0
        %3776 = vmatpush1.msra.mxu0 0.0
        %3777 = vmatprep.subr.mxu0 0.0
        %3778 = vmatpush1.msra.mxu0 0.0
        %3779 = vmatprep.subr.mxu0 0.0
        %3780 = vmatpush1.msra.mxu0 0.0
        %3781 = vmatprep.subr.mxu0 0.0
        %3782 = vmatpush1.msra.mxu0 0.0
        %3783 = vmatprep.subr.mxu0 0.0
        %3784 = vmatpush1.msra.mxu0 0.0
        %3785 = vmatprep.subr.mxu0 0.0
        %3786 = vmatpush1.msra.mxu0 0.0
        %3787 = vmatprep.subr.mxu0 0.0
        %3788 = vmatpush1.msra.mxu0 0.0
        %3789 = vmatprep.subr.mxu0 0.0
        %3790 = vmatpush1.msra.mxu0 0.0
        %3791 = vmatprep.subr.mxu0 0.0
        %3792 = vmatpush1.msra.mxu0 %v3756
        %3793 = vmatprep.subr.mxu0 0.0
        %3794 = vmatpush2.msra.mxu0 0.0
        %3795 = vmatprep.subr.mxu0 0.0
        %3796 = vmatpush2.msra.mxu0 0.0
        %3797 = vmatprep.subr.mxu0 0.0
        %3798 = vmatpush2.msra.mxu0 0.0
        %3799 = vmatprep.subr.mxu0 0.0
        %3800 = vmatpush2.msra.mxu0 0.0
        %3801 = vmatprep.subr.mxu0 0.0
        %3802 = vmatpush2.msra.mxu0 0.0
        %3803 = vmatprep.subr.mxu0 0.0
        %3804 = vmatpush2.msra.mxu0 0.0
        %3805 = vmatprep.subr.mxu0 0.0
        %3806 = vmatpush2.msra.mxu0 0.0
        %3807 = vmatprep.subr.mxu0 0.0
        %3808 = vmatpush2.msra.mxu0 0.0
        %3809 = vmatprep.subr.mxu0 0.0
        %3810 = vmatpush2.msra.mxu0 0.0
        %3811 = vmatprep.subr.mxu0 0.0
        %3812 = vmatpush2.msra.mxu0 0.0
        %3813 = vmatprep.subr.mxu0 0.0
        %3814 = vmatpush2.msra.mxu0 0.0
        %3815 = vmatprep.subr.mxu0 0.0
        %3816 = vmatpush2.msra.mxu0 0.0
        %3817 = vmatprep.subr.mxu0 0.0
        %3818 = vmatpush2.msra.mxu0 0.0
        %3819 = vmatprep.subr.mxu0 0.0
        %3820 = vmatpush2.msra.mxu0 0.0
        %3821 = vmatprep.subr.mxu0 0.0
        %3822 = vmatpush2.msra.mxu0 0.0
        %3823 = vmatprep.subr.mxu0 0.0
        %3824 = vmatpush2.msra.mxu0 0.0
        %3825 = vmatprep.mubr.f32.mxu0 0.0
        %3826 = vmatmul.mubr.f32.gmra.mxu0 %v3759
        %v3827 = vpop.f32.mrf.mxu0
        %v3828 = vadd.f32 0.0, %v3827
        %v3829 = vpop.f32.mrf.mxu0
        %3830 = vdwg.mxu0
        %v3832 = vsel %vm1666, %v3755, 0
        %3834 = vmatprep.subr.mxu0 0.0
        %3835 = vmatpush1.msra.mxu0 0.0
        %3836 = vmatprep.subr.mxu0 0.0
        %3837 = vmatpush1.msra.mxu0 0.0
        %3838 = vmatprep.subr.mxu0 0.0
        %3839 = vmatpush1.msra.mxu0 0.0
        %3840 = vmatprep.subr.mxu0 0.0
        %3841 = vmatpush1.msra.mxu0 0.0
        %3842 = vmatprep.subr.mxu0 0.0
        %3843 = vmatpush1.msra.mxu0 0.0
        %3844 = vmatprep.subr.mxu0 0.0
        %3845 = vmatpush1.msra.mxu0 0.0
        %3846 = vmatprep.subr.mxu0 0.0
        %3847 = vmatpush1.msra.mxu0 0.0
        %3848 = vmatprep.subr.mxu0 0.0
        %3849 = vmatpush1.msra.mxu0 0.0
        %3850 = vmatprep.subr.mxu0 0.0
        %3851 = vmatpush1.msra.mxu0 0.0
        %3852 = vmatprep.subr.mxu0 0.0
        %3853 = vmatpush1.msra.mxu0 0.0
        %3854 = vmatprep.subr.mxu0 0.0
        %3855 = vmatpush1.msra.mxu0 0.0
        %3856 = vmatprep.subr.mxu0 0.0
        %3857 = vmatpush1.msra.mxu0 0.0
        %3858 = vmatprep.subr.mxu0 0.0
        %3859 = vmatpush1.msra.mxu0 0.0
        %3860 = vmatprep.subr.mxu0 0.0
        %3861 = vmatpush1.msra.mxu0 0.0
        %3862 = vmatprep.subr.mxu0 0.0
        %3863 = vmatpush1.msra.mxu0 0.0
        %3864 = vmatprep.subr.mxu0 0.0
        %3865 = vmatpush1.msra.mxu0 %v3757
        %3866 = vmatprep.subr.mxu0 0.0
        %3867 = vmatpush2.msra.mxu0 0.0
        %3868 = vmatprep.subr.mxu0 0.0
        %3869 = vmatpush2.msra.mxu0 0.0
        %3870 = vmatprep.subr.mxu0 0.0
        %3871 = vmatpush2.msra.mxu0 0.0
        %3872 = vmatprep.subr.mxu0 0.0
        %3873 = vmatpush2.msra.mxu0 0.0
        %3874 = vmatprep.subr.mxu0 0.0
        %3875 = vmatpush2.msra.mxu0 0.0
        %3876 = vmatprep.subr.mxu0 0.0
        %3877 = vmatpush2.msra.mxu0 0.0
        %3878 = vmatprep.subr.mxu0 0.0
        %3879 = vmatpush2.msra.mxu0 0.0
        %3880 = vmatprep.subr.mxu0 0.0
        %3881 = vmatpush2.msra.mxu0 0.0
        %3882 = vmatprep.subr.mxu0 0.0
        %3883 = vmatpush2.msra.mxu0 0.0
        %3884 = vmatprep.subr.mxu0 0.0
        %3885 = vmatpush2.msra.mxu0 0.0
        %3886 = vmatprep.subr.mxu0 0.0
        %3887 = vmatpush2.msra.mxu0 0.0
        %3888 = vmatprep.subr.mxu0 0.0
        %3889 = vmatpush2.msra.mxu0 0.0
        %3890 = vmatprep.subr.mxu0 0.0
        %3891 = vmatpush2.msra.mxu0 0.0
        %3892 = vmatprep.subr.mxu0 0.0
        %3893 = vmatpush2.msra.mxu0 0.0
        %3894 = vmatprep.subr.mxu0 0.0
        %3895 = vmatpush2.msra.mxu0 0.0
        %3896 = vmatprep.subr.mxu0 0.0
        %3897 = vmatpush2.msra.mxu0 0.0
        %3898 = vmatprep.mubr.f32.mxu0 0.0
        %3899 = vmatmul.mubr.f32.gmra.mxu0 %v3832
        %v3900 = vpop.f32.mrf.mxu0
        %v3901 = vadd.f32 0.0, %v3900
        %v3902 = vpop.f32.mrf.mxu0
        %3903 = vdwg.mxu0
        %v3905 = vsel %vm1666, %v3574, 0
        %3907 = vmatprep.subr.mxu0 0.0
        %3908 = vmatpush1.msra.mxu0 0.0
        %3909 = vmatprep.subr.mxu0 0.0
        %3910 = vmatpush1.msra.mxu0 0.0
        %3911 = vmatprep.subr.mxu0 0.0
        %3912 = vmatpush1.msra.mxu0 0.0
        %3913 = vmatprep.subr.mxu0 0.0
        %3914 = vmatpush1.msra.mxu0 0.0
        %3915 = vmatprep.subr.mxu0 0.0
        %3916 = vmatpush1.msra.mxu0 0.0
        %3917 = vmatprep.subr.mxu0 0.0
        %3918 = vmatpush1.msra.mxu0 0.0
        %3919 = vmatprep.subr.mxu0 0.0
        %3920 = vmatpush1.msra.mxu0 0.0
        %3921 = vmatprep.subr.mxu0 0.0
        %3922 = vmatpush1.msra.mxu0 0.0
        %3923 = vmatprep.subr.mxu0 0.0
        %3924 = vmatpush1.msra.mxu0 0.0
        %3925 = vmatprep.subr.mxu0 0.0
        %3926 = vmatpush1.msra.mxu0 0.0
        %3927 = vmatprep.subr.mxu0 0.0
        %3928 = vmatpush1.msra.mxu0 0.0
        %3929 = vmatprep.subr.mxu0 0.0
        %3930 = vmatpush1.msra.mxu0 0.0
        %3931 = vmatprep.subr.mxu0 0.0
        %3932 = vmatpush1.msra.mxu0 0.0
        %3933 = vmatprep.subr.mxu0 0.0
        %3934 = vmatpush1.msra.mxu0 0.0
        %3935 = vmatprep.subr.mxu0 0.0
        %3936 = vmatpush1.msra.mxu0 0.0
        %3937 = vmatprep.subr.mxu0 0.0
        %3938 = vmatpush1.msra.mxu0 %v3576
        %3939 = vmatprep.subr.mxu0 0.0
        %3940 = vmatpush2.msra.mxu0 0.0
        %3941 = vmatprep.subr.mxu0 0.0
        %3942 = vmatpush2.msra.mxu0 0.0
        %3943 = vmatprep.subr.mxu0 0.0
        %3944 = vmatpush2.msra.mxu0 0.0
        %3945 = vmatprep.subr.mxu0 0.0
        %3946 = vmatpush2.msra.mxu0 0.0
        %3947 = vmatprep.subr.mxu0 0.0
        %3948 = vmatpush2.msra.mxu0 0.0
        %3949 = vmatprep.subr.mxu0 0.0
        %3950 = vmatpush2.msra.mxu0 0.0
        %3951 = vmatprep.subr.mxu0 0.0
        %3952 = vmatpush2.msra.mxu0 0.0
        %3953 = vmatprep.subr.mxu0 0.0
        %3954 = vmatpush2.msra.mxu0 0.0
        %3955 = vmatprep.subr.mxu0 0.0
        %3956 = vmatpush2.msra.mxu0 0.0
        %3957 = vmatprep.subr.mxu0 0.0
        %3958 = vmatpush2.msra.mxu0 0.0
        %3959 = vmatprep.subr.mxu0 0.0
        %3960 = vmatpush2.msra.mxu0 0.0
        %3961 = vmatprep.subr.mxu0 0.0
        %3962 = vmatpush2.msra.mxu0 0.0
        %3963 = vmatprep.subr.mxu0 0.0
        %3964 = vmatpush2.msra.mxu0 0.0
        %3965 = vmatprep.subr.mxu0 0.0
        %3966 = vmatpush2.msra.mxu0 0.0
        %3967 = vmatprep.subr.mxu0 0.0
        %3968 = vmatpush2.msra.mxu0 0.0
        %3969 = vmatprep.subr.mxu0 0.0
        %3970 = vmatpush2.msra.mxu0 0.0
        %3971 = vmatprep.mubr.f32.mxu0 0.0
        %3972 = vmatmul.mubr.f32.gmra.mxu0 %v3905
        %v3973 = vpop.f32.mrf.mxu0
        %v3974 = vadd.f32 %v3828, %v3973
        %v3975 = vpop.f32.mrf.mxu0
        %3976 = vdwg.mxu0
        %v3978 = vsel %vm1666, %v3575, 0
        %3980 = vmatprep.subr.mxu0 0.0
        %3981 = vmatpush1.msra.mxu0 0.0
        %3982 = vmatprep.subr.mxu0 0.0
        %3983 = vmatpush1.msra.mxu0 0.0
        %3984 = vmatprep.subr.mxu0 0.0
        %3985 = vmatpush1.msra.mxu0 0.0
        %3986 = vmatprep.subr.mxu0 0.0
        %3987 = vmatpush1.msra.mxu0 0.0
        %3988 = vmatprep.subr.mxu0 0.0
        %3989 = vmatpush1.msra.mxu0 0.0
        %3990 = vmatprep.subr.mxu0 0.0
        %3991 = vmatpush1.msra.mxu0 0.0
        %3992 = vmatprep.subr.mxu0 0.0
        %3993 = vmatpush1.msra.mxu0 0.0
        %3994 = vmatprep.subr.mxu0 0.0
        %3995 = vmatpush1.msra.mxu0 0.0
        %3996 = vmatprep.subr.mxu0 0.0
        %3997 = vmatpush1.msra.mxu0 0.0
        %3998 = vmatprep.subr.mxu0 0.0
        %3999 = vmatpush1.msra.mxu0 0.0
        %4000 = vmatprep.subr.mxu0 0.0
        %4001 = vmatpush1.msra.mxu0 0.0
        %4002 = vmatprep.subr.mxu0 0.0
        %4003 = vmatpush1.msra.mxu0 0.0
        %4004 = vmatprep.subr.mxu0 0.0
        %4005 = vmatpush1.msra.mxu0 0.0
        %4006 = vmatprep.subr.mxu0 0.0
        %4007 = vmatpush1.msra.mxu0 0.0
        %4008 = vmatprep.subr.mxu0 0.0
        %4009 = vmatpush1.msra.mxu0 0.0
        %4010 = vmatprep.subr.mxu0 0.0
        %4011 = vmatpush1.msra.mxu0 %v3577
        %4012 = vmatprep.subr.mxu0 0.0
        %4013 = vmatpush2.msra.mxu0 0.0
        %4014 = vmatprep.subr.mxu0 0.0
        %4015 = vmatpush2.msra.mxu0 0.0
        %4016 = vmatprep.subr.mxu0 0.0
        %4017 = vmatpush2.msra.mxu0 0.0
        %4018 = vmatprep.subr.mxu0 0.0
        %4019 = vmatpush2.msra.mxu0 0.0
        %4020 = vmatprep.subr.mxu0 0.0
        %4021 = vmatpush2.msra.mxu0 0.0
        %4022 = vmatprep.subr.mxu0 0.0
        %4023 = vmatpush2.msra.mxu0 0.0
        %4024 = vmatprep.subr.mxu0 0.0
        %4025 = vmatpush2.msra.mxu0 0.0
        %4026 = vmatprep.subr.mxu0 0.0
        %4027 = vmatpush2.msra.mxu0 0.0
        %4028 = vmatprep.subr.mxu0 0.0
        %4029 = vmatpush2.msra.mxu0 0.0
        %4030 = vmatprep.subr.mxu0 0.0
        %4031 = vmatpush2.msra.mxu0 0.0
        %4032 = vmatprep.subr.mxu0 0.0
        %4033 = vmatpush2.msra.mxu0 0.0
        %4034 = vmatprep.subr.mxu0 0.0
        %4035 = vmatpush2.msra.mxu0 0.0
        %4036 = vmatprep.subr.mxu0 0.0
        %4037 = vmatpush2.msra.mxu0 0.0
        %4038 = vmatprep.subr.mxu0 0.0
        %4039 = vmatpush2.msra.mxu0 0.0
        %4040 = vmatprep.subr.mxu0 0.0
        %4041 = vmatpush2.msra.mxu0 0.0
        %4042 = vmatprep.subr.mxu0 0.0
        %4043 = vmatpush2.msra.mxu0 0.0
        %4044 = vmatprep.mubr.f32.mxu0 0.0
        %4045 = vmatmul.mubr.f32.gmra.mxu0 %v3978
        %v4046 = vpop.f32.mrf.mxu0
        %v4047 = vadd.f32 %v3901, %v4046
        %v4048 = vpop.f32.mrf.mxu0
        %4049 = vdwg.mxu0
        %4050 = vrot.lane.b32.xlu0 %v3400, 112
        %v4051 = vpop.permute.xlu0 %4050
        %4052 = vrot.lane.b32.xlu0 %v3311, 112
        %v4053 = vpop.permute.xlu0 %4052
        %v4054 = vsel %vm1666, %v4051, 0
        %v4056 = vsel %vm1666, %v4053, 0
        %4058 = vmatprep.subr.mxu0 0.0
        %4059 = vmatpush1.xpose.msra.mxu0 0.0
        %4060 = vmatprep.subr.mxu0 0.0
        %4061 = vmatpush1.xpose.msra.mxu0 0.0
        %4062 = vmatprep.subr.mxu0 0.0
        %4063 = vmatpush1.xpose.msra.mxu0 0.0
        %4064 = vmatprep.subr.mxu0 0.0
        %4065 = vmatpush1.xpose.msra.mxu0 0.0
        %4066 = vmatprep.subr.mxu0 0.0
        %4067 = vmatpush1.xpose.msra.mxu0 0.0
        %4068 = vmatprep.subr.mxu0 0.0
        %4069 = vmatpush1.xpose.msra.mxu0 0.0
        %4070 = vmatprep.subr.mxu0 0.0
        %4071 = vmatpush1.xpose.msra.mxu0 0.0
        %4072 = vmatprep.subr.mxu0 0.0
        %4073 = vmatpush1.xpose.msra.mxu0 0.0
        %4074 = vmatprep.subr.mxu0 0.0
        %4075 = vmatpush1.xpose.msra.mxu0 0.0
        %4076 = vmatprep.subr.mxu0 0.0
        %4077 = vmatpush1.xpose.msra.mxu0 0.0
        %4078 = vmatprep.subr.mxu0 0.0
        %4079 = vmatpush1.xpose.msra.mxu0 0.0
        %4080 = vmatprep.subr.mxu0 0.0
        %4081 = vmatpush1.xpose.msra.mxu0 0.0
        %4082 = vmatprep.subr.mxu0 0.0
        %4083 = vmatpush1.xpose.msra.mxu0 0.0
        %4084 = vmatprep.subr.mxu0 0.0
        %4085 = vmatpush1.xpose.msra.mxu0 0.0
        %4086 = vmatprep.subr.mxu0 0.0
        %4087 = vmatpush1.xpose.msra.mxu0 0.0
        %4088 = vmatprep.subr.mxu0 0.0
        %4089 = vmatpush1.xpose.msra.mxu0 %v4056
        %4090 = vmatprep.subr.mxu0 0.0
        %4091 = vmatpush2.xpose.msra.mxu0 0.0
        %4092 = vmatprep.subr.mxu0 0.0
        %4093 = vmatpush2.xpose.msra.mxu0 0.0
        %4094 = vmatprep.subr.mxu0 0.0
        %4095 = vmatpush2.xpose.msra.mxu0 0.0
        %4096 = vmatprep.subr.mxu0 0.0
        %4097 = vmatpush2.xpose.msra.mxu0 0.0
        %4098 = vmatprep.subr.mxu0 0.0
        %4099 = vmatpush2.xpose.msra.mxu0 0.0
        %4100 = vmatprep.subr.mxu0 0.0
        %4101 = vmatpush2.xpose.msra.mxu0 0.0
        %4102 = vmatprep.subr.mxu0 0.0
        %4103 = vmatpush2.xpose.msra.mxu0 0.0
        %4104 = vmatprep.subr.mxu0 0.0
        %4105 = vmatpush2.xpose.msra.mxu0 0.0
        %4106 = vmatprep.subr.mxu0 0.0
        %4107 = vmatpush2.xpose.msra.mxu0 0.0
        %4108 = vmatprep.subr.mxu0 0.0
        %4109 = vmatpush2.xpose.msra.mxu0 0.0
        %4110 = vmatprep.subr.mxu0 0.0
        %4111 = vmatpush2.xpose.msra.mxu0 0.0
        %4112 = vmatprep.subr.mxu0 0.0
        %4113 = vmatpush2.xpose.msra.mxu0 0.0
        %4114 = vmatprep.subr.mxu0 0.0
        %4115 = vmatpush2.xpose.msra.mxu0 0.0
        %4116 = vmatprep.subr.mxu0 0.0
        %4117 = vmatpush2.xpose.msra.mxu0 0.0
        %4118 = vmatprep.subr.mxu0 0.0
        %4119 = vmatpush2.xpose.msra.mxu0 0.0
        %4120 = vmatprep.subr.mxu0 0.0
        %4121 = vmatpush2.xpose.msra.mxu0 0.0
        %4122 = vmatprep.mubr.f32.mxu0 0.0
        %4123 = vmatmul.mubr.f32.gmra.mxu0 %v4054
        %v4124 = vpop.f32.mrf.mxu0
        %v4125 = vadd.f32 0.0, %v4124
        %v4126 = vpop.f32.mrf.mxu0
        %4127 = vdwg.mxu0
        %4128 = vrot.lane.b32.xlu0 %v3401, 112
        %v4129 = vpop.permute.xlu0 %4128
        %4130 = vrot.lane.b32.xlu0 %v3316, 112
        %v4131 = vpop.permute.xlu0 %4130
        %v4132 = vsel %vm1666, %v4129, 0
        %v4134 = vsel %vm1666, %v4131, 0
        %4136 = vmatprep.subr.mxu0 0.0
        %4137 = vmatpush1.xpose.msra.mxu0 0.0
        %4138 = vmatprep.subr.mxu0 0.0
        %4139 = vmatpush1.xpose.msra.mxu0 0.0
        %4140 = vmatprep.subr.mxu0 0.0
        %4141 = vmatpush1.xpose.msra.mxu0 0.0
        %4142 = vmatprep.subr.mxu0 0.0
        %4143 = vmatpush1.xpose.msra.mxu0 0.0
        %4144 = vmatprep.subr.mxu0 0.0
        %4145 = vmatpush1.xpose.msra.mxu0 0.0
        %4146 = vmatprep.subr.mxu0 0.0
        %4147 = vmatpush1.xpose.msra.mxu0 0.0
        %4148 = vmatprep.subr.mxu0 0.0
        %4149 = vmatpush1.xpose.msra.mxu0 0.0
        %4150 = vmatprep.subr.mxu0 0.0
        %4151 = vmatpush1.xpose.msra.mxu0 0.0
        %4152 = vmatprep.subr.mxu0 0.0
        %4153 = vmatpush1.xpose.msra.mxu0 0.0
        %4154 = vmatprep.subr.mxu0 0.0
        %4155 = vmatpush1.xpose.msra.mxu0 0.0
        %4156 = vmatprep.subr.mxu0 0.0
        %4157 = vmatpush1.xpose.msra.mxu0 0.0
        %4158 = vmatprep.subr.mxu0 0.0
        %4159 = vmatpush1.xpose.msra.mxu0 0.0
        %4160 = vmatprep.subr.mxu0 0.0
        %4161 = vmatpush1.xpose.msra.mxu0 0.0
        %4162 = vmatprep.subr.mxu0 0.0
        %4163 = vmatpush1.xpose.msra.mxu0 0.0
        %4164 = vmatprep.subr.mxu0 0.0
        %4165 = vmatpush1.xpose.msra.mxu0 0.0
        %4166 = vmatprep.subr.mxu0 0.0
        %4167 = vmatpush1.xpose.msra.mxu0 %v4134
        %4168 = vmatprep.subr.mxu0 0.0
        %4169 = vmatpush2.xpose.msra.mxu0 0.0
        %4170 = vmatprep.subr.mxu0 0.0
        %4171 = vmatpush2.xpose.msra.mxu0 0.0
        %4172 = vmatprep.subr.mxu0 0.0
        %4173 = vmatpush2.xpose.msra.mxu0 0.0
        %4174 = vmatprep.subr.mxu0 0.0
        %4175 = vmatpush2.xpose.msra.mxu0 0.0
        %4176 = vmatprep.subr.mxu0 0.0
        %4177 = vmatpush2.xpose.msra.mxu0 0.0
        %4178 = vmatprep.subr.mxu0 0.0
        %4179 = vmatpush2.xpose.msra.mxu0 0.0
        %4180 = vmatprep.subr.mxu0 0.0
        %4181 = vmatpush2.xpose.msra.mxu0 0.0
        %4182 = vmatprep.subr.mxu0 0.0
        %4183 = vmatpush2.xpose.msra.mxu0 0.0
        %4184 = vmatprep.subr.mxu0 0.0
        %4185 = vmatpush2.xpose.msra.mxu0 0.0
        %4186 = vmatprep.subr.mxu0 0.0
        %4187 = vmatpush2.xpose.msra.mxu0 0.0
        %4188 = vmatprep.subr.mxu0 0.0
        %4189 = vmatpush2.xpose.msra.mxu0 0.0
        %4190 = vmatprep.subr.mxu0 0.0
        %4191 = vmatpush2.xpose.msra.mxu0 0.0
        %4192 = vmatprep.subr.mxu0 0.0
        %4193 = vmatpush2.xpose.msra.mxu0 0.0
        %4194 = vmatprep.subr.mxu0 0.0
        %4195 = vmatpush2.xpose.msra.mxu0 0.0
        %4196 = vmatprep.subr.mxu0 0.0
        %4197 = vmatpush2.xpose.msra.mxu0 0.0
        %4198 = vmatprep.subr.mxu0 0.0
        %4199 = vmatpush2.xpose.msra.mxu0 0.0
        %4200 = vmatprep.mubr.f32.mxu0 0.0
        %4201 = vmatmul.mubr.f32.gmra.mxu0 %v4132
        %v4202 = vpop.f32.mrf.mxu0
        %v4203 = vadd.f32 0.0, %v4202
        %v4204 = vpop.f32.mrf.mxu0
        %4205 = vdwg.mxu0
        %v4206 = vsel %vm1666, %v4125, -inf
        %4207 = vmax.xlane.f32.xlu0 %v4206
        %v4208 = vpop.xlane.xlu0 %4207
        %v4209 = vsel %vm1666, %v4203, -inf
        %4210 = vmax.xlane.f32.xlu0 %v4209
        %v4211 = vpop.xlane.xlu0 %4210
        %v4212 = vsub.f32 %v4125, %v4208
        %v4213 = vsub.f32 %v4203, %v4211
        %v4214 = vmul.f32 %v4212, 1.442695
        %v4215 = vpow.pop %v4214
        %v4216 = vmul.f32 %v4213, 1.442695
        %v4217 = vpow.pop %v4216
        %v4218 = vsel %vm1666, %v4215, 0.0
        %4219 = vadd.xlane.f32.xlu0 %v4218
        %v4220 = vpop.xlane.xlu0 %4219
        %v4221 = vsel %vm1666, %v4217, 0.0
        %4222 = vadd.xlane.f32.xlu0 %v4221
        %v4223 = vpop.xlane.xlu0 %4222
        %v4224 = vrcp.pop %v4220
        %v4225 = vrcp.pop %v4223
        %v4226 = vmul.f32 %v4215, %v4224
        %v4227 = vmul.f32 %v4217, %v4225
        %v4228 = vsel %vm2507, %v3392, 0.0
        %v4229 = vsel %vm2507, %v3397, 0.0
        %v4231 = vsel %vm1666, %v4226, 0
        %4233 = vmatprep.subr.mxu0 0.0
        %4234 = vmatpush1.msra.mxu0 0.0
        %4235 = vmatprep.subr.mxu0 0.0
        %4236 = vmatpush1.msra.mxu0 0.0
        %4237 = vmatprep.subr.mxu0 0.0
        %4238 = vmatpush1.msra.mxu0 0.0
        %4239 = vmatprep.subr.mxu0 0.0
        %4240 = vmatpush1.msra.mxu0 0.0
        %4241 = vmatprep.subr.mxu0 0.0
        %4242 = vmatpush1.msra.mxu0 0.0
        %4243 = vmatprep.subr.mxu0 0.0
        %4244 = vmatpush1.msra.mxu0 0.0
        %4245 = vmatprep.subr.mxu0 0.0
        %4246 = vmatpush1.msra.mxu0 0.0
        %4247 = vmatprep.subr.mxu0 0.0
        %4248 = vmatpush1.msra.mxu0 0.0
        %4249 = vmatprep.subr.mxu0 0.0
        %4250 = vmatpush1.msra.mxu0 0.0
        %4251 = vmatprep.subr.mxu0 0.0
        %4252 = vmatpush1.msra.mxu0 0.0
        %4253 = vmatprep.subr.mxu0 0.0
        %4254 = vmatpush1.msra.mxu0 0.0
        %4255 = vmatprep.subr.mxu0 0.0
        %4256 = vmatpush1.msra.mxu0 0.0
        %4257 = vmatprep.subr.mxu0 0.0
        %4258 = vmatpush1.msra.mxu0 0.0
        %4259 = vmatprep.subr.mxu0 0.0
        %4260 = vmatpush1.msra.mxu0 0.0
        %4261 = vmatprep.subr.mxu0 0.0
        %4262 = vmatpush1.msra.mxu0 0.0
        %4263 = vmatprep.subr.mxu0 0.0
        %4264 = vmatpush1.msra.mxu0 %v4228
        %4265 = vmatprep.subr.mxu0 0.0
        %4266 = vmatpush2.msra.mxu0 0.0
        %4267 = vmatprep.subr.mxu0 0.0
        %4268 = vmatpush2.msra.mxu0 0.0
        %4269 = vmatprep.subr.mxu0 0.0
        %4270 = vmatpush2.msra.mxu0 0.0
        %4271 = vmatprep.subr.mxu0 0.0
        %4272 = vmatpush2.msra.mxu0 0.0
        %4273 = vmatprep.subr.mxu0 0.0
        %4274 = vmatpush2.msra.mxu0 0.0
        %4275 = vmatprep.subr.mxu0 0.0
        %4276 = vmatpush2.msra.mxu0 0.0
        %4277 = vmatprep.subr.mxu0 0.0
        %4278 = vmatpush2.msra.mxu0 0.0
        %4279 = vmatprep.subr.mxu0 0.0
        %4280 = vmatpush2.msra.mxu0 0.0
        %4281 = vmatprep.subr.mxu0 0.0
        %4282 = vmatpush2.msra.mxu0 0.0
        %4283 = vmatprep.subr.mxu0 0.0
        %4284 = vmatpush2.msra.mxu0 0.0
        %4285 = vmatprep.subr.mxu0 0.0
        %4286 = vmatpush2.msra.mxu0 0.0
        %4287 = vmatprep.subr.mxu0 0.0
        %4288 = vmatpush2.msra.mxu0 0.0
        %4289 = vmatprep.subr.mxu0 0.0
        %4290 = vmatpush2.msra.mxu0 0.0
        %4291 = vmatprep.subr.mxu0 0.0
        %4292 = vmatpush2.msra.mxu0 0.0
        %4293 = vmatprep.subr.mxu0 0.0
        %4294 = vmatpush2.msra.mxu0 0.0
        %4295 = vmatprep.subr.mxu0 0.0
        %4296 = vmatpush2.msra.mxu0 0.0
        %4297 = vmatprep.mubr.f32.mxu0 0.0
        %4298 = vmatmul.mubr.f32.gmra.mxu0 %v4231
        %v4299 = vpop.f32.mrf.mxu0
        %v4300 = vadd.f32 0.0, %v4299
        %v4301 = vpop.f32.mrf.mxu0
        %4302 = vdwg.mxu0
        %v4304 = vsel %vm1666, %v4227, 0
        %4306 = vmatprep.subr.mxu0 0.0
        %4307 = vmatpush1.msra.mxu0 0.0
        %4308 = vmatprep.subr.mxu0 0.0
        %4309 = vmatpush1.msra.mxu0 0.0
        %4310 = vmatprep.subr.mxu0 0.0
        %4311 = vmatpush1.msra.mxu0 0.0
        %4312 = vmatprep.subr.mxu0 0.0
        %4313 = vmatpush1.msra.mxu0 0.0
        %4314 = vmatprep.subr.mxu0 0.0
        %4315 = vmatpush1.msra.mxu0 0.0
        %4316 = vmatprep.subr.mxu0 0.0
        %4317 = vmatpush1.msra.mxu0 0.0
        %4318 = vmatprep.subr.mxu0 0.0
        %4319 = vmatpush1.msra.mxu0 0.0
        %4320 = vmatprep.subr.mxu0 0.0
        %4321 = vmatpush1.msra.mxu0 0.0
        %4322 = vmatprep.subr.mxu0 0.0
        %4323 = vmatpush1.msra.mxu0 0.0
        %4324 = vmatprep.subr.mxu0 0.0
        %4325 = vmatpush1.msra.mxu0 0.0
        %4326 = vmatprep.subr.mxu0 0.0
        %4327 = vmatpush1.msra.mxu0 0.0
        %4328 = vmatprep.subr.mxu0 0.0
        %4329 = vmatpush1.msra.mxu0 0.0
        %4330 = vmatprep.subr.mxu0 0.0
        %4331 = vmatpush1.msra.mxu0 0.0
        %4332 = vmatprep.subr.mxu0 0.0
        %4333 = vmatpush1.msra.mxu0 0.0
        %4334 = vmatprep.subr.mxu0 0.0
        %4335 = vmatpush1.msra.mxu0 0.0
        %4336 = vmatprep.subr.mxu0 0.0
        %4337 = vmatpush1.msra.mxu0 %v4229
        %4338 = vmatprep.subr.mxu0 0.0
        %4339 = vmatpush2.msra.mxu0 0.0
        %4340 = vmatprep.subr.mxu0 0.0
        %4341 = vmatpush2.msra.mxu0 0.0
        %4342 = vmatprep.subr.mxu0 0.0
        %4343 = vmatpush2.msra.mxu0 0.0
        %4344 = vmatprep.subr.mxu0 0.0
        %4345 = vmatpush2.msra.mxu0 0.0
        %4346 = vmatprep.subr.mxu0 0.0
        %4347 = vmatpush2.msra.mxu0 0.0
        %4348 = vmatprep.subr.mxu0 0.0
        %4349 = vmatpush2.msra.mxu0 0.0
        %4350 = vmatprep.subr.mxu0 0.0
        %4351 = vmatpush2.msra.mxu0 0.0
        %4352 = vmatprep.subr.mxu0 0.0
        %4353 = vmatpush2.msra.mxu0 0.0
        %4354 = vmatprep.subr.mxu0 0.0
        %4355 = vmatpush2.msra.mxu0 0.0
        %4356 = vmatprep.subr.mxu0 0.0
        %4357 = vmatpush2.msra.mxu0 0.0
        %4358 = vmatprep.subr.mxu0 0.0
        %4359 = vmatpush2.msra.mxu0 0.0
        %4360 = vmatprep.subr.mxu0 0.0
        %4361 = vmatpush2.msra.mxu0 0.0
        %4362 = vmatprep.subr.mxu0 0.0
        %4363 = vmatpush2.msra.mxu0 0.0
        %4364 = vmatprep.subr.mxu0 0.0
        %4365 = vmatpush2.msra.mxu0 0.0
        %4366 = vmatprep.subr.mxu0 0.0
        %4367 = vmatpush2.msra.mxu0 0.0
        %4368 = vmatprep.subr.mxu0 0.0
        %4369 = vmatpush2.msra.mxu0 0.0
        %4370 = vmatprep.mubr.f32.mxu0 0.0
        %4371 = vmatmul.mubr.f32.gmra.mxu0 %v4304
        %v4372 = vpop.f32.mrf.mxu0
        %v4373 = vadd.f32 0.0, %v4372
        %v4374 = vpop.f32.mrf.mxu0
        %4375 = vdwg.mxu0
        %v4376 = vadd.f32 %v3974, %v4300
        %v4377 = vadd.f32 %v4047, %v4373
        %4378 = vrot.lane.b32.xlu0 %v3400, 104
        %v4379 = vpop.permute.xlu0 %4378
        %4380 = vrot.lane.b32.xlu0 %v3311, 104
        %v4381 = vpop.permute.xlu0 %4380
        %v4382 = vsel %vm1666, %v4379, 0
        %v4384 = vsel %vm1666, %v4381, 0
        %4386 = vmatprep.subr.mxu0 0.0
        %4387 = vmatpush1.xpose.msra.mxu0 0.0
        %4388 = vmatprep.subr.mxu0 0.0
        %4389 = vmatpush1.xpose.msra.mxu0 0.0
        %4390 = vmatprep.subr.mxu0 0.0
        %4391 = vmatpush1.xpose.msra.mxu0 0.0
        %4392 = vmatprep.subr.mxu0 0.0
        %4393 = vmatpush1.xpose.msra.mxu0 0.0
        %4394 = vmatprep.subr.mxu0 0.0
        %4395 = vmatpush1.xpose.msra.mxu0 0.0
        %4396 = vmatprep.subr.mxu0 0.0
        %4397 = vmatpush1.xpose.msra.mxu0 0.0
        %4398 = vmatprep.subr.mxu0 0.0
        %4399 = vmatpush1.xpose.msra.mxu0 0.0
        %4400 = vmatprep.subr.mxu0 0.0
        %4401 = vmatpush1.xpose.msra.mxu0 0.0
        %4402 = vmatprep.subr.mxu0 0.0
        %4403 = vmatpush1.xpose.msra.mxu0 0.0
        %4404 = vmatprep.subr.mxu0 0.0
        %4405 = vmatpush1.xpose.msra.mxu0 0.0
        %4406 = vmatprep.subr.mxu0 0.0
        %4407 = vmatpush1.xpose.msra.mxu0 0.0
        %4408 = vmatprep.subr.mxu0 0.0
        %4409 = vmatpush1.xpose.msra.mxu0 0.0
        %4410 = vmatprep.subr.mxu0 0.0
        %4411 = vmatpush1.xpose.msra.mxu0 0.0
        %4412 = vmatprep.subr.mxu0 0.0
        %4413 = vmatpush1.xpose.msra.mxu0 0.0
        %4414 = vmatprep.subr.mxu0 0.0
        %4415 = vmatpush1.xpose.msra.mxu0 0.0
        %4416 = vmatprep.subr.mxu0 0.0
        %4417 = vmatpush1.xpose.msra.mxu0 %v4384
        %4418 = vmatprep.subr.mxu0 0.0
        %4419 = vmatpush2.xpose.msra.mxu0 0.0
        %4420 = vmatprep.subr.mxu0 0.0
        %4421 = vmatpush2.xpose.msra.mxu0 0.0
        %4422 = vmatprep.subr.mxu0 0.0
        %4423 = vmatpush2.xpose.msra.mxu0 0.0
        %4424 = vmatprep.subr.mxu0 0.0
        %4425 = vmatpush2.xpose.msra.mxu0 0.0
        %4426 = vmatprep.subr.mxu0 0.0
        %4427 = vmatpush2.xpose.msra.mxu0 0.0
        %4428 = vmatprep.subr.mxu0 0.0
        %4429 = vmatpush2.xpose.msra.mxu0 0.0
        %4430 = vmatprep.subr.mxu0 0.0
        %4431 = vmatpush2.xpose.msra.mxu0 0.0
        %4432 = vmatprep.subr.mxu0 0.0
        %4433 = vmatpush2.xpose.msra.mxu0 0.0
        %4434 = vmatprep.subr.mxu0 0.0
        %4435 = vmatpush2.xpose.msra.mxu0 0.0
        %4436 = vmatprep.subr.mxu0 0.0
        %4437 = vmatpush2.xpose.msra.mxu0 0.0
        %4438 = vmatprep.subr.mxu0 0.0
        %4439 = vmatpush2.xpose.msra.mxu0 0.0
        %4440 = vmatprep.subr.mxu0 0.0
        %4441 = vmatpush2.xpose.msra.mxu0 0.0
        %4442 = vmatprep.subr.mxu0 0.0
        %4443 = vmatpush2.xpose.msra.mxu0 0.0
        %4444 = vmatprep.subr.mxu0 0.0
        %4445 = vmatpush2.xpose.msra.mxu0 0.0
        %4446 = vmatprep.subr.mxu0 0.0
        %4447 = vmatpush2.xpose.msra.mxu0 0.0
        %4448 = vmatprep.subr.mxu0 0.0
        %4449 = vmatpush2.xpose.msra.mxu0 0.0
        %4450 = vmatprep.mubr.f32.mxu0 0.0
        %4451 = vmatmul.mubr.f32.gmra.mxu0 %v4382
        %v4452 = vpop.f32.mrf.mxu0
        %v4453 = vadd.f32 0.0, %v4452
        %v4454 = vpop.f32.mrf.mxu0
        %4455 = vdwg.mxu0
        %4456 = vrot.lane.b32.xlu0 %v3401, 104
        %v4457 = vpop.permute.xlu0 %4456
        %4458 = vrot.lane.b32.xlu0 %v3316, 104
        %v4459 = vpop.permute.xlu0 %4458
        %v4460 = vsel %vm1666, %v4457, 0
        %v4462 = vsel %vm1666, %v4459, 0
        %4464 = vmatprep.subr.mxu0 0.0
        %4465 = vmatpush1.xpose.msra.mxu0 0.0
        %4466 = vmatprep.subr.mxu0 0.0
        %4467 = vmatpush1.xpose.msra.mxu0 0.0
        %4468 = vmatprep.subr.mxu0 0.0
        %4469 = vmatpush1.xpose.msra.mxu0 0.0
        %4470 = vmatprep.subr.mxu0 0.0
        %4471 = vmatpush1.xpose.msra.mxu0 0.0
        %4472 = vmatprep.subr.mxu0 0.0
        %4473 = vmatpush1.xpose.msra.mxu0 0.0
        %4474 = vmatprep.subr.mxu0 0.0
        %4475 = vmatpush1.xpose.msra.mxu0 0.0
        %4476 = vmatprep.subr.mxu0 0.0
        %4477 = vmatpush1.xpose.msra.mxu0 0.0
        %4478 = vmatprep.subr.mxu0 0.0
        %4479 = vmatpush1.xpose.msra.mxu0 0.0
        %4480 = vmatprep.subr.mxu0 0.0
        %4481 = vmatpush1.xpose.msra.mxu0 0.0
        %4482 = vmatprep.subr.mxu0 0.0
        %4483 = vmatpush1.xpose.msra.mxu0 0.0
        %4484 = vmatprep.subr.mxu0 0.0
        %4485 = vmatpush1.xpose.msra.mxu0 0.0
        %4486 = vmatprep.subr.mxu0 0.0
        %4487 = vmatpush1.xpose.msra.mxu0 0.0
        %4488 = vmatprep.subr.mxu0 0.0
        %4489 = vmatpush1.xpose.msra.mxu0 0.0
        %4490 = vmatprep.subr.mxu0 0.0
        %4491 = vmatpush1.xpose.msra.mxu0 0.0
        %4492 = vmatprep.subr.mxu0 0.0
        %4493 = vmatpush1.xpose.msra.mxu0 0.0
        %4494 = vmatprep.subr.mxu0 0.0
        %4495 = vmatpush1.xpose.msra.mxu0 %v4462
        %4496 = vmatprep.subr.mxu0 0.0
        %4497 = vmatpush2.xpose.msra.mxu0 0.0
        %4498 = vmatprep.subr.mxu0 0.0
        %4499 = vmatpush2.xpose.msra.mxu0 0.0
        %4500 = vmatprep.subr.mxu0 0.0
        %4501 = vmatpush2.xpose.msra.mxu0 0.0
        %4502 = vmatprep.subr.mxu0 0.0
        %4503 = vmatpush2.xpose.msra.mxu0 0.0
        %4504 = vmatprep.subr.mxu0 0.0
        %4505 = vmatpush2.xpose.msra.mxu0 0.0
        %4506 = vmatprep.subr.mxu0 0.0
        %4507 = vmatpush2.xpose.msra.mxu0 0.0
        %4508 = vmatprep.subr.mxu0 0.0
        %4509 = vmatpush2.xpose.msra.mxu0 0.0
        %4510 = vmatprep.subr.mxu0 0.0
        %4511 = vmatpush2.xpose.msra.mxu0 0.0
        %4512 = vmatprep.subr.mxu0 0.0
        %4513 = vmatpush2.xpose.msra.mxu0 0.0
        %4514 = vmatprep.subr.mxu0 0.0
        %4515 = vmatpush2.xpose.msra.mxu0 0.0
        %4516 = vmatprep.subr.mxu0 0.0
        %4517 = vmatpush2.xpose.msra.mxu0 0.0
        %4518 = vmatprep.subr.mxu0 0.0
        %4519 = vmatpush2.xpose.msra.mxu0 0.0
        %4520 = vmatprep.subr.mxu0 0.0
        %4521 = vmatpush2.xpose.msra.mxu0 0.0
        %4522 = vmatprep.subr.mxu0 0.0
        %4523 = vmatpush2.xpose.msra.mxu0 0.0
        %4524 = vmatprep.subr.mxu0 0.0
        %4525 = vmatpush2.xpose.msra.mxu0 0.0
        %4526 = vmatprep.subr.mxu0 0.0
        %4527 = vmatpush2.xpose.msra.mxu0 0.0
        %4528 = vmatprep.mubr.f32.mxu0 0.0
        %4529 = vmatmul.mubr.f32.gmra.mxu0 %v4460
        %v4530 = vpop.f32.mrf.mxu0
        %v4531 = vadd.f32 0.0, %v4530
        %v4532 = vpop.f32.mrf.mxu0
        %4533 = vdwg.mxu0
        %v4534 = vsel %vm1666, %v4453, -inf
        %4535 = vmax.xlane.f32.xlu0 %v4534
        %v4536 = vpop.xlane.xlu0 %4535
        %v4537 = vsel %vm1666, %v4531, -inf
        %4538 = vmax.xlane.f32.xlu0 %v4537
        %v4539 = vpop.xlane.xlu0 %4538
        %v4540 = vsub.f32 %v4453, %v4536
        %v4541 = vsub.f32 %v4531, %v4539
        %v4542 = vmul.f32 %v4540, 1.442695
        %v4543 = vpow.pop %v4542
        %v4544 = vmul.f32 %v4541, 1.442695
        %v4545 = vpow.pop %v4544
        %v4546 = vsel %vm1666, %v4543, 0.0
        %4547 = vadd.xlane.f32.xlu0 %v4546
        %v4548 = vpop.xlane.xlu0 %4547
        %v4549 = vsel %vm1666, %v4545, 0.0
        %4550 = vadd.xlane.f32.xlu0 %v4549
        %v4551 = vpop.xlane.xlu0 %4550
        %v4552 = vrcp.pop %v4548
        %v4553 = vrcp.pop %v4551
        %v4554 = vmul.f32 %v4543, %v4552
        %v4555 = vmul.f32 %v4545, %v4553
        %v4556 = vsel %vm2840, %v3392, 0.0
        %v4557 = vsel %vm2840, %v3397, 0.0
        %v4559 = vsel %vm1666, %v4554, 0
        %4561 = vmatprep.subr.mxu0 0.0
        %4562 = vmatpush1.msra.mxu0 0.0
        %4563 = vmatprep.subr.mxu0 0.0
        %4564 = vmatpush1.msra.mxu0 0.0
        %4565 = vmatprep.subr.mxu0 0.0
        %4566 = vmatpush1.msra.mxu0 0.0
        %4567 = vmatprep.subr.mxu0 0.0
        %4568 = vmatpush1.msra.mxu0 0.0
        %4569 = vmatprep.subr.mxu0 0.0
        %4570 = vmatpush1.msra.mxu0 0.0
        %4571 = vmatprep.subr.mxu0 0.0
        %4572 = vmatpush1.msra.mxu0 0.0
        %4573 = vmatprep.subr.mxu0 0.0
        %4574 = vmatpush1.msra.mxu0 0.0
        %4575 = vmatprep.subr.mxu0 0.0
        %4576 = vmatpush1.msra.mxu0 0.0
        %4577 = vmatprep.subr.mxu0 0.0
        %4578 = vmatpush1.msra.mxu0 0.0
        %4579 = vmatprep.subr.mxu0 0.0
        %4580 = vmatpush1.msra.mxu0 0.0
        %4581 = vmatprep.subr.mxu0 0.0
        %4582 = vmatpush1.msra.mxu0 0.0
        %4583 = vmatprep.subr.mxu0 0.0
        %4584 = vmatpush1.msra.mxu0 0.0
        %4585 = vmatprep.subr.mxu0 0.0
        %4586 = vmatpush1.msra.mxu0 0.0
        %4587 = vmatprep.subr.mxu0 0.0
        %4588 = vmatpush1.msra.mxu0 0.0
        %4589 = vmatprep.subr.mxu0 0.0
        %4590 = vmatpush1.msra.mxu0 0.0
        %4591 = vmatprep.subr.mxu0 0.0
        %4592 = vmatpush1.msra.mxu0 %v4556
        %4593 = vmatprep.subr.mxu0 0.0
        %4594 = vmatpush2.msra.mxu0 0.0
        %4595 = vmatprep.subr.mxu0 0.0
        %4596 = vmatpush2.msra.mxu0 0.0
        %4597 = vmatprep.subr.mxu0 0.0
        %4598 = vmatpush2.msra.mxu0 0.0
        %4599 = vmatprep.subr.mxu0 0.0
        %4600 = vmatpush2.msra.mxu0 0.0
        %4601 = vmatprep.subr.mxu0 0.0
        %4602 = vmatpush2.msra.mxu0 0.0
        %4603 = vmatprep.subr.mxu0 0.0
        %4604 = vmatpush2.msra.mxu0 0.0
        %4605 = vmatprep.subr.mxu0 0.0
        %4606 = vmatpush2.msra.mxu0 0.0
        %4607 = vmatprep.subr.mxu0 0.0
        %4608 = vmatpush2.msra.mxu0 0.0
        %4609 = vmatprep.subr.mxu0 0.0
        %4610 = vmatpush2.msra.mxu0 0.0
        %4611 = vmatprep.subr.mxu0 0.0
        %4612 = vmatpush2.msra.mxu0 0.0
        %4613 = vmatprep.subr.mxu0 0.0
        %4614 = vmatpush2.msra.mxu0 0.0
        %4615 = vmatprep.subr.mxu0 0.0
        %4616 = vmatpush2.msra.mxu0 0.0
        %4617 = vmatprep.subr.mxu0 0.0
        %4618 = vmatpush2.msra.mxu0 0.0
        %4619 = vmatprep.subr.mxu0 0.0
        %4620 = vmatpush2.msra.mxu0 0.0
        %4621 = vmatprep.subr.mxu0 0.0
        %4622 = vmatpush2.msra.mxu0 0.0
        %4623 = vmatprep.subr.mxu0 0.0
        %4624 = vmatpush2.msra.mxu0 0.0
        %4625 = vmatprep.mubr.f32.mxu0 0.0
        %4626 = vmatmul.mubr.f32.gmra.mxu0 %v4559
        %v4627 = vpop.f32.mrf.mxu0
        %v4628 = vadd.f32 0.0, %v4627
        %v4629 = vpop.f32.mrf.mxu0
        %4630 = vdwg.mxu0
        %v4632 = vsel %vm1666, %v4555, 0
        %4634 = vmatprep.subr.mxu0 0.0
        %4635 = vmatpush1.msra.mxu0 0.0
        %4636 = vmatprep.subr.mxu0 0.0
        %4637 = vmatpush1.msra.mxu0 0.0
        %4638 = vmatprep.subr.mxu0 0.0
        %4639 = vmatpush1.msra.mxu0 0.0
        %4640 = vmatprep.subr.mxu0 0.0
        %4641 = vmatpush1.msra.mxu0 0.0
        %4642 = vmatprep.subr.mxu0 0.0
        %4643 = vmatpush1.msra.mxu0 0.0
        %4644 = vmatprep.subr.mxu0 0.0
        %4645 = vmatpush1.msra.mxu0 0.0
        %4646 = vmatprep.subr.mxu0 0.0
        %4647 = vmatpush1.msra.mxu0 0.0
        %4648 = vmatprep.subr.mxu0 0.0
        %4649 = vmatpush1.msra.mxu0 0.0
        %4650 = vmatprep.subr.mxu0 0.0
        %4651 = vmatpush1.msra.mxu0 0.0
        %4652 = vmatprep.subr.mxu0 0.0
        %4653 = vmatpush1.msra.mxu0 0.0
        %4654 = vmatprep.subr.mxu0 0.0
        %4655 = vmatpush1.msra.mxu0 0.0
        %4656 = vmatprep.subr.mxu0 0.0
        %4657 = vmatpush1.msra.mxu0 0.0
        %4658 = vmatprep.subr.mxu0 0.0
        %4659 = vmatpush1.msra.mxu0 0.0
        %4660 = vmatprep.subr.mxu0 0.0
        %4661 = vmatpush1.msra.mxu0 0.0
        %4662 = vmatprep.subr.mxu0 0.0
        %4663 = vmatpush1.msra.mxu0 0.0
        %4664 = vmatprep.subr.mxu0 0.0
        %4665 = vmatpush1.msra.mxu0 %v4557
        %4666 = vmatprep.subr.mxu0 0.0
        %4667 = vmatpush2.msra.mxu0 0.0
        %4668 = vmatprep.subr.mxu0 0.0
        %4669 = vmatpush2.msra.mxu0 0.0
        %4670 = vmatprep.subr.mxu0 0.0
        %4671 = vmatpush2.msra.mxu0 0.0
        %4672 = vmatprep.subr.mxu0 0.0
        %4673 = vmatpush2.msra.mxu0 0.0
        %4674 = vmatprep.subr.mxu0 0.0
        %4675 = vmatpush2.msra.mxu0 0.0
        %4676 = vmatprep.subr.mxu0 0.0
        %4677 = vmatpush2.msra.mxu0 0.0
        %4678 = vmatprep.subr.mxu0 0.0
        %4679 = vmatpush2.msra.mxu0 0.0
        %4680 = vmatprep.subr.mxu0 0.0
        %4681 = vmatpush2.msra.mxu0 0.0
        %4682 = vmatprep.subr.mxu0 0.0
        %4683 = vmatpush2.msra.mxu0 0.0
        %4684 = vmatprep.subr.mxu0 0.0
        %4685 = vmatpush2.msra.mxu0 0.0
        %4686 = vmatprep.subr.mxu0 0.0
        %4687 = vmatpush2.msra.mxu0 0.0
        %4688 = vmatprep.subr.mxu0 0.0
        %4689 = vmatpush2.msra.mxu0 0.0
        %4690 = vmatprep.subr.mxu0 0.0
        %4691 = vmatpush2.msra.mxu0 0.0
        %4692 = vmatprep.subr.mxu0 0.0
        %4693 = vmatpush2.msra.mxu0 0.0
        %4694 = vmatprep.subr.mxu0 0.0
        %4695 = vmatpush2.msra.mxu0 0.0
        %4696 = vmatprep.subr.mxu0 0.0
        %4697 = vmatpush2.msra.mxu0 0.0
        %4698 = vmatprep.mubr.f32.mxu0 0.0
        %4699 = vmatmul.mubr.f32.gmra.mxu0 %v4632
        %v4700 = vpop.f32.mrf.mxu0
        %v4701 = vadd.f32 0.0, %v4700
        %v4702 = vpop.f32.mrf.mxu0
        %4703 = vdwg.mxu0
        %v4704 = vadd.f32 %v4376, %v4628
        %v4705 = vadd.f32 %v4377, %v4701
        %v4707 = vlaneseq
        %v4708 = vshrl.u32 %v4707, 7
        %v4709 = vsub.s32 0, %v4708
        %v4710 = vrot.slane %v3144, %v4709
        %v4713 = vsel %vm1418, %v4704, 0
        %v4716 = vsel %vm1418, %v4705, 0
        %4718 = vmatprep.subr.mxu0 0.0
        %4719 = vmatpush1.msra.mxu0 0.0
        %4720 = vmatprep.subr.mxu0 0.0
        %4721 = vmatpush1.msra.mxu0 0.0
        %4722 = vmatprep.subr.mxu0 0.0
        %4723 = vmatpush1.msra.mxu0 0.0
        %4724 = vmatprep.subr.mxu0 0.0
        %4725 = vmatpush1.msra.mxu0 0.0
        %4726 = vmatprep.subr.mxu0 0.0
        %4727 = vmatpush1.msra.mxu0 0.0
        %4728 = vmatprep.subr.mxu0 0.0
        %4729 = vmatpush1.msra.mxu0 0.0
        %4730 = vmatprep.subr.mxu0 0.0
        %4731 = vmatpush1.msra.mxu0 0.0
        %4732 = vmatprep.subr.mxu0 0.0
        %4733 = vmatpush1.msra.mxu0 0.0
        %4734 = vmatprep.subr.mxu0 0.0
        %4735 = vmatpush1.msra.mxu0 0.0
        %4736 = vmatprep.subr.mxu0 0.0
        %4737 = vmatpush1.msra.mxu0 0.0
        %4738 = vmatprep.subr.mxu0 0.0
        %4739 = vmatpush1.msra.mxu0 0.0
        %4740 = vmatprep.subr.mxu0 0.0
        %4741 = vmatpush1.msra.mxu0 0.0
        %4742 = vmatprep.subr.mxu0 0.0
        %4743 = vmatpush1.msra.mxu0 %v3143
        %4744 = vmatprep.subr.mxu0 0.0
        %4745 = vmatpush1.msra.mxu0 %v3142
        %4746 = vmatprep.subr.mxu0 0.0
        %4747 = vmatpush1.msra.mxu0 %v3141
        %4748 = vmatprep.subr.mxu0 0.0
        %4749 = vmatpush1.msra.mxu0 %v3140
        %4750 = vmatprep.subr.mxu0 0.0
        %4751 = vmatpush2.msra.mxu0 0.0
        %4752 = vmatprep.subr.mxu0 0.0
        %4753 = vmatpush2.msra.mxu0 0.0
        %4754 = vmatprep.subr.mxu0 0.0
        %4755 = vmatpush2.msra.mxu0 0.0
        %4756 = vmatprep.subr.mxu0 0.0
        %4757 = vmatpush2.msra.mxu0 0.0
        %4758 = vmatprep.subr.mxu0 0.0
        %4759 = vmatpush2.msra.mxu0 0.0
        %4760 = vmatprep.subr.mxu0 0.0
        %4761 = vmatpush2.msra.mxu0 0.0
        %4762 = vmatprep.subr.mxu0 0.0
        %4763 = vmatpush2.msra.mxu0 0.0
        %4764 = vmatprep.subr.mxu0 0.0
        %4765 = vmatpush2.msra.mxu0 0.0
        %4766 = vmatprep.subr.mxu0 0.0
        %4767 = vmatpush2.msra.mxu0 0.0
        %4768 = vmatprep.subr.mxu0 0.0
        %4769 = vmatpush2.msra.mxu0 0.0
        %4770 = vmatprep.subr.mxu0 0.0
        %4771 = vmatpush2.msra.mxu0 0.0
        %4772 = vmatprep.subr.mxu0 0.0
        %4773 = vmatpush2.msra.mxu0 0.0
        %4774 = vmatprep.subr.mxu0 0.0
        %4775 = vmatpush2.msra.mxu0 0.0
        %4776 = vmatprep.subr.mxu0 0.0
        %4777 = vmatpush2.msra.mxu0 0.0
        %4778 = vmatprep.subr.mxu0 0.0
        %4779 = vmatpush2.msra.mxu0 0.0
        %4780 = vmatprep.subr.mxu0 0.0
        %4781 = vmatpush2.msra.mxu0 0.0
        %4782 = vmatprep.mubr.f32.mxu0 0.0
        %4783 = vmatmul.mubr.f32.gmra.mxu0 %v4713
        %v4784 = vpop.f32.mrf.mxu0
        %v4785 = vadd.f32 %v4710, %v4784
        %v4786 = vpop.f32.mrf.mxu0
        %4787 = vmatprep.mubr.f32.mxu0 0.0
        %4788 = vmatmul.mubr.f32.gmra.mxu0 %v4716
        %v4789 = vpop.f32.mrf.mxu0
        %v4790 = vadd.f32 %v4710, %v4789
        %v4791 = vpop.f32.mrf.mxu0
        %4792 = vdwg.mxu0
        %v4793 = vadd.f32 %v3123, %v4785
        %v4794 = vadd.f32 %v3124, %v4790
        %v4795 = vld [vmem:[%s1353] sm:$0x1]
        %v4796 = vld [vmem:[%s1356] sm:$0x1]
        %v4797 = vsel %vm1418, %v4793, 0.0
        %4798 = vadd.xlane.f32.xlu0 %v4797
        %v4799 = vpop.xlane.xlu0 %4798
        %v4800 = vsel %vm1418, %v4794, 0.0
        %4801 = vadd.xlane.f32.xlu0 %v4800
        %v4802 = vpop.xlane.xlu0 %4801
        %v4803 = vmul.f32 %v4799, %v3088
        %v4804 = vmul.f32 %v4802, %v3088
        %v4805 = vsub.f32 %v4793, %v4803
        %v4806 = vsub.f32 %v4794, %v4804
        %v4807 = vmul.f32 %v4805, %v4805
        %v4808 = vmul.f32 %v4806, %v4806
        %v4809 = vsel %vm1418, %v4807, 0.0
        %4810 = vadd.xlane.f32.xlu0 %v4809
        %v4811 = vpop.xlane.xlu0 %4810
        %v4812 = vsel %vm1418, %v4808, 0.0
        %4813 = vadd.xlane.f32.xlu0 %v4812
        %v4814 = vpop.xlane.xlu0 %4813
        %v4815 = vmul.f32 %v4811, %v3088
        %v4816 = vmul.f32 %v4814, %v3088
        %v4817 = vadd.f32 %v4815, 1e-05
        %v4818 = vadd.f32 %v4816, 1e-05
        %v4819 = vrsqrt.pop %v4817
        %v4820 = vrsqrt.pop %v4818
        %v4821 = vmul.f32 %v4805, %v4819
        %v4822 = vmul.f32 %v4806, %v4820
        %v4824 = vlaneseq
        %v4825 = vshrl.u32 %v4824, 7
        %v4826 = vsub.s32 0, %v4825
        %v4827 = vrot.slane %v4795, %v4826
        %v4829 = vmul.f32 %v4821, %v4827
        %v4830 = vmul.f32 %v4822, %v4827
        %v4832 = vlaneseq
        %v4833 = vshrl.u32 %v4832, 7
        %v4834 = vsub.s32 0, %v4833
        %v4835 = vrot.slane %v4796, %v4834
        %v4837 = vadd.f32 %v4829, %v4835
        %v4838 = vadd.f32 %v4830, %v4835
        %v4839 = vld [vmem:[%s1367] sm:$0xff]
        %v4840 = vld [vmem:[%s1367 + $0x8] sm:$0xff]
        %v4841 = vld [vmem:[%s1367 + $0x10] sm:$0xff]
        %v4842 = vld [vmem:[%s1367 + $0x18] sm:$0xff]
        %v4843 = vld [vmem:[%s1367 + $0x20] sm:$0xff]
        %v4844 = vld [vmem:[%s1367 + $0x28] sm:$0xff]
        %v4845 = vld [vmem:[%s1367 + $0x30] sm:$0xff]
        %v4846 = vld [vmem:[%s1367 + $0x38] sm:$0xff]
        %v4847 = vld [vmem:[%s1367 + $0x40] sm:$0xff]
        %v4848 = vld [vmem:[%s1367 + $0x48] sm:$0xff]
        %v4849 = vld [vmem:[%s1367 + $0x50] sm:$0xff]
        %v4850 = vld [vmem:[%s1367 + $0x58] sm:$0xff]
        %v4851 = vld [vmem:[%s1367 + $0x60] sm:$0xff]
        %v4852 = vld [vmem:[%s1367 + $0x68] sm:$0xff]
        %v4853 = vld [vmem:[%s1367 + $0x70] sm:$0xff]
        %v4854 = vld [vmem:[%s1367 + $0x78] sm:$0xff]
        %v4855 = vld [vmem:[%s1367 + $0x80] sm:$0xff]
        %v4856 = vld [vmem:[%s1367 + $0x88] sm:$0xff]
        %v4857 = vld [vmem:[%s1367 + $0x90] sm:$0xff]
        %v4858 = vld [vmem:[%s1367 + $0x98] sm:$0xff]
        %v4859 = vld [vmem:[%s1367 + $0xa0] sm:$0xff]
        %v4860 = vld [vmem:[%s1367 + $0xa8] sm:$0xff]
        %v4861 = vld [vmem:[%s1367 + $0xb0] sm:$0xff]
        %v4862 = vld [vmem:[%s1367 + $0xb8] sm:$0xff]
        %v4863 = vld [vmem:[%s1367 + $0xc0] sm:$0xff]
        %v4864 = vld [vmem:[%s1367 + $0xc8] sm:$0xff]
        %v4865 = vld [vmem:[%s1367 + $0xd0] sm:$0xff]
        %v4866 = vld [vmem:[%s1367 + $0xd8] sm:$0xff]
        %v4867 = vld [vmem:[%s1367 + $0xe0] sm:$0xff]
        %v4868 = vld [vmem:[%s1367 + $0xe8] sm:$0xff]
        %v4869 = vld [vmem:[%s1367 + $0xf0] sm:$0xff]
        %v4870 = vld [vmem:[%s1367 + $0xf8] sm:$0xff]
        %v4871 = vld [vmem:[%s1367 + $0x100] sm:$0xff]
        %v4872 = vld [vmem:[%s1367 + $0x108] sm:$0xff]
        %v4873 = vld [vmem:[%s1367 + $0x110] sm:$0xff]
        %v4874 = vld [vmem:[%s1367 + $0x118] sm:$0xff]
        %v4875 = vld [vmem:[%s1367 + $0x120] sm:$0xff]
        %v4876 = vld [vmem:[%s1367 + $0x128] sm:$0xff]
        %v4877 = vld [vmem:[%s1367 + $0x130] sm:$0xff]
        %v4878 = vld [vmem:[%s1367 + $0x138] sm:$0xff]
        %v4879 = vld [vmem:[%s1367 + $0x140] sm:$0xff]
        %v4880 = vld [vmem:[%s1367 + $0x148] sm:$0xff]
        %v4881 = vld [vmem:[%s1367 + $0x150] sm:$0xff]
        %v4882 = vld [vmem:[%s1367 + $0x158] sm:$0xff]
        %v4883 = vld [vmem:[%s1367 + $0x160] sm:$0xff]
        %v4884 = vld [vmem:[%s1367 + $0x168] sm:$0xff]
        %v4885 = vld [vmem:[%s1367 + $0x170] sm:$0xff]
        %v4886 = vld [vmem:[%s1367 + $0x178] sm:$0xff]
        %v4887 = vld [vmem:[%s1367 + $0x180] sm:$0xff]
        %v4888 = vld [vmem:[%s1367 + $0x188] sm:$0xff]
        %v4889 = vld [vmem:[%s1367 + $0x190] sm:$0xff]
        %v4890 = vld [vmem:[%s1367 + $0x198] sm:$0xff]
        %v4891 = vld [vmem:[%s1367 + $0x1a0] sm:$0xff]
        %v4892 = vld [vmem:[%s1367 + $0x1a8] sm:$0xff]
        %v4893 = vld [vmem:[%s1367 + $0x1b0] sm:$0xff]
        %v4894 = vld [vmem:[%s1367 + $0x1b8] sm:$0xff]
        %v4895 = vld [vmem:[%s1367 + $0x1c0] sm:$0xff]
        %v4896 = vld [vmem:[%s1367 + $0x1c8] sm:$0xff]
        %v4897 = vld [vmem:[%s1367 + $0x1d0] sm:$0xff]
        %v4898 = vld [vmem:[%s1367 + $0x1d8] sm:$0xff]
        %v4899 = vld [vmem:[%s1367 + $0x1e0] sm:$0xff]
        %v4900 = vld [vmem:[%s1367 + $0x1e8] sm:$0xff]
        %v4901 = vld [vmem:[%s1367 + $0x1f0] sm:$0xff]
        %v4902 = vld [vmem:[%s1367 + $0x1f8] sm:$0xff]
        %v4903 = vld [vmem:[%s1371] sm:$0xff]
        %v4904 = vld [vmem:[%s1371 + $0x8] sm:$0xff]
        %v4907 = vlaneseq
        %v4908 = vshrl.u32 %v4907, 7
        %v4909 = vsub.s32 0, %v4908
        %v4910 = vrot.slane %v4903, %v4909
        %v4911 = vlaneseq
        %v4912 = vshrl.u32 %v4911, 7
        %v4913 = vsub.s32 1, %v4912
        %v4914 = vrot.slane %v4903, %v4913
        %v4915 = vlaneseq
        %v4916 = vshrl.u32 %v4915, 7
        %v4917 = vsub.s32 2, %v4916
        %v4918 = vrot.slane %v4903, %v4917
        %v4919 = vlaneseq
        %v4920 = vshrl.u32 %v4919, 7
        %v4921 = vsub.s32 3, %v4920
        %v4922 = vrot.slane %v4903, %v4921
        %v4923 = vlaneseq
        %v4924 = vshrl.u32 %v4923, 7
        %v4925 = vsub.s32 4, %v4924
        %v4926 = vrot.slane %v4903, %v4925
        %v4927 = vlaneseq
        %v4928 = vshrl.u32 %v4927, 7
        %v4929 = vsub.s32 5, %v4928
        %v4930 = vrot.slane %v4903, %v4929
        %v4931 = vlaneseq
        %v4932 = vshrl.u32 %v4931, 7
        %v4933 = vsub.s32 6, %v4932
        %v4934 = vrot.slane %v4903, %v4933
        %v4935 = vlaneseq
        %v4936 = vshrl.u32 %v4935, 7
        %v4937 = vsub.s32 7, %v4936
        %v4938 = vrot.slane %v4903, %v4937
        %v4939 = vlaneseq
        %v4940 = vshrl.u32 %v4939, 7
        %v4941 = vsub.s32 0, %v4940
        %v4942 = vrot.slane %v4904, %v4941
        %v4943 = vlaneseq
        %v4944 = vshrl.u32 %v4943, 7
        %v4945 = vsub.s32 1, %v4944
        %v4946 = vrot.slane %v4904, %v4945
        %v4947 = vlaneseq
        %v4948 = vshrl.u32 %v4947, 7
        %v4949 = vsub.s32 2, %v4948
        %v4950 = vrot.slane %v4904, %v4949
        %v4951 = vlaneseq
        %v4952 = vshrl.u32 %v4951, 7
        %v4953 = vsub.s32 3, %v4952
        %v4954 = vrot.slane %v4904, %v4953
        %v4955 = vlaneseq
        %v4956 = vshrl.u32 %v4955, 7
        %v4957 = vsub.s32 4, %v4956
        %v4958 = vrot.slane %v4904, %v4957
        %v4959 = vlaneseq
        %v4960 = vshrl.u32 %v4959, 7
        %v4961 = vsub.s32 5, %v4960
        %v4962 = vrot.slane %v4904, %v4961
        %v4963 = vlaneseq
        %v4964 = vshrl.u32 %v4963, 7
        %v4965 = vsub.s32 6, %v4964
        %v4966 = vrot.slane %v4904, %v4965
        %v4967 = vlaneseq
        %v4968 = vshrl.u32 %v4967, 7
        %v4969 = vsub.s32 7, %v4968
        %v4970 = vrot.slane %v4904, %v4969
        %v4988 = vsel %vm1418, %v4837, 0
        %v4991 = vsel %vm1418, %v4838, 0
        %4993 = vmatprep.subr.mxu0 0.0
        %4994 = vmatpush1.msra.mxu0 0.0
        %4995 = vmatprep.subr.mxu0 0.0
        %4996 = vmatpush1.msra.mxu0 0.0
        %4997 = vmatprep.subr.mxu0 0.0
        %4998 = vmatpush1.msra.mxu0 0.0
        %4999 = vmatprep.subr.mxu0 0.0
        %5000 = vmatpush1.msra.mxu0 0.0
        %5001 = vmatprep.subr.mxu0 0.0
        %5002 = vmatpush1.msra.mxu0 0.0
        %5003 = vmatprep.subr.mxu0 0.0
        %5004 = vmatpush1.msra.mxu0 0.0
        %5005 = vmatprep.subr.mxu0 0.0
        %5006 = vmatpush1.msra.mxu0 0.0
        %5007 = vmatprep.subr.mxu0 0.0
        %5008 = vmatpush1.msra.mxu0 0.0
        %5009 = vmatprep.subr.mxu0 0.0
        %5010 = vmatpush1.msra.mxu0 0.0
        %5011 = vmatprep.subr.mxu0 0.0
        %5012 = vmatpush1.msra.mxu0 0.0
        %5013 = vmatprep.subr.mxu0 0.0
        %5014 = vmatpush1.msra.mxu0 0.0
        %5015 = vmatprep.subr.mxu0 0.0
        %5016 = vmatpush1.msra.mxu0 0.0
        %5017 = vmatprep.subr.mxu0 %v4888
        %5018 = vmatpush1.msra.mxu0 %v4887
        %5019 = vmatprep.subr.mxu0 %v4872
        %5020 = vmatpush1.msra.mxu0 %v4871
        %5021 = vmatprep.subr.mxu0 %v4856
        %5022 = vmatpush1.msra.mxu0 %v4855
        %5023 = vmatprep.subr.mxu0 %v4840
        %5024 = vmatpush1.msra.mxu0 %v4839
        %5025 = vmatprep.subr.mxu0 0.0
        %5026 = vmatpush2.msra.mxu0 0.0
        %5027 = vmatprep.subr.mxu0 0.0
        %5028 = vmatpush2.msra.mxu0 0.0
        %5029 = vmatprep.subr.mxu0 0.0
        %5030 = vmatpush2.msra.mxu0 0.0
        %5031 = vmatprep.subr.mxu0 0.0
        %5032 = vmatpush2.msra.mxu0 0.0
        %5033 = vmatprep.subr.mxu0 0.0
        %5034 = vmatpush2.msra.mxu0 0.0
        %5035 = vmatprep.subr.mxu0 0.0
        %5036 = vmatpush2.msra.mxu0 0.0
        %5037 = vmatprep.subr.mxu0 0.0
        %5038 = vmatpush2.msra.mxu0 0.0
        %5039 = vmatprep.subr.mxu0 0.0
        %5040 = vmatpush2.msra.mxu0 0.0
        %5041 = vmatprep.subr.mxu0 0.0
        %5042 = vmatpush2.msra.mxu0 0.0
        %5043 = vmatprep.subr.mxu0 0.0
        %5044 = vmatpush2.msra.mxu0 0.0
        %5045 = vmatprep.subr.mxu0 0.0
        %5046 = vmatpush2.msra.mxu0 0.0
        %5047 = vmatprep.subr.mxu0 0.0
        %5048 = vmatpush2.msra.mxu0 0.0
        %5049 = vmatprep.subr.mxu0 0.0
        %5050 = vmatpush2.msra.mxu0 0.0
        %5051 = vmatprep.subr.mxu0 0.0
        %5052 = vmatpush2.msra.mxu0 0.0
        %5053 = vmatprep.subr.mxu0 0.0
        %5054 = vmatpush2.msra.mxu0 0.0
        %5055 = vmatprep.subr.mxu0 0.0
        %5056 = vmatpush2.msra.mxu0 0.0
        %5057 = vmatprep.mubr.f32.mxu0 0.0
        %5058 = vmatmul.mubr.f32.gmra.mxu0 %v4988
        %v5059 = vpop.f32.mrf.mxu0
        %v5060 = vadd.f32 %v4910, %v5059
        %v5061 = vpop.f32.mrf.mxu0
        %v5062 = vadd.f32 %v4914, %v5061
        %5063 = vmatprep.mubr.f32.mxu0 0.0
        %5064 = vmatmul.mubr.f32.gmra.mxu0 %v4991
        %v5065 = vpop.f32.mrf.mxu0
        %v5066 = vadd.f32 %v4910, %v5065
        %v5067 = vpop.f32.mrf.mxu0
        %v5068 = vadd.f32 %v4914, %v5067
        %5069 = vdwg.mxu0
        %5070 = vmatprep.subr.mxu0 0.0
        %5071 = vmatpush1.msra.mxu0 0.0
        %5072 = vmatprep.subr.mxu0 0.0
        %5073 = vmatpush1.msra.mxu0 0.0
        %5074 = vmatprep.subr.mxu0 0.0
        %5075 = vmatpush1.msra.mxu0 0.0
        %5076 = vmatprep.subr.mxu0 0.0
        %5077 = vmatpush1.msra.mxu0 0.0
        %5078 = vmatprep.subr.mxu0 0.0
        %5079 = vmatpush1.msra.mxu0 0.0
        %5080 = vmatprep.subr.mxu0 0.0
        %5081 = vmatpush1.msra.mxu0 0.0
        %5082 = vmatprep.subr.mxu0 0.0
        %5083 = vmatpush1.msra.mxu0 0.0
        %5084 = vmatprep.subr.mxu0 0.0
        %5085 = vmatpush1.msra.mxu0 0.0
        %5086 = vmatprep.subr.mxu0 0.0
        %5087 = vmatpush1.msra.mxu0 0.0
        %5088 = vmatprep.subr.mxu0 0.0
        %5089 = vmatpush1.msra.mxu0 0.0
        %5090 = vmatprep.subr.mxu0 0.0
        %5091 = vmatpush1.msra.mxu0 0.0
        %5092 = vmatprep.subr.mxu0 0.0
        %5093 = vmatpush1.msra.mxu0 0.0
        %5094 = vmatprep.subr.mxu0 %v4890
        %5095 = vmatpush1.msra.mxu0 %v4889
        %5096 = vmatprep.subr.mxu0 %v4874
        %5097 = vmatpush1.msra.mxu0 %v4873
        %5098 = vmatprep.subr.mxu0 %v4858
        %5099 = vmatpush1.msra.mxu0 %v4857
        %5100 = vmatprep.subr.mxu0 %v4842
        %5101 = vmatpush1.msra.mxu0 %v4841
        %5102 = vmatprep.subr.mxu0 0.0
        %5103 = vmatpush2.msra.mxu0 0.0
        %5104 = vmatprep.subr.mxu0 0.0
        %5105 = vmatpush2.msra.mxu0 0.0
        %5106 = vmatprep.subr.mxu0 0.0
        %5107 = vmatpush2.msra.mxu0 0.0
        %5108 = vmatprep.subr.mxu0 0.0
        %5109 = vmatpush2.msra.mxu0 0.0
        %5110 = vmatprep.subr.mxu0 0.0
        %5111 = vmatpush2.msra.mxu0 0.0
        %5112 = vmatprep.subr.mxu0 0.0
        %5113 = vmatpush2.msra.mxu0 0.0
        %5114 = vmatprep.subr.mxu0 0.0
        %5115 = vmatpush2.msra.mxu0 0.0
        %5116 = vmatprep.subr.mxu0 0.0
        %5117 = vmatpush2.msra.mxu0 0.0
        %5118 = vmatprep.subr.mxu0 0.0
        %5119 = vmatpush2.msra.mxu0 0.0
        %5120 = vmatprep.subr.mxu0 0.0
        %5121 = vmatpush2.msra.mxu0 0.0
        %5122 = vmatprep.subr.mxu0 0.0
        %5123 = vmatpush2.msra.mxu0 0.0
        %5124 = vmatprep.subr.mxu0 0.0
        %5125 = vmatpush2.msra.mxu0 0.0
        %5126 = vmatprep.subr.mxu0 0.0
        %5127 = vmatpush2.msra.mxu0 0.0
        %5128 = vmatprep.subr.mxu0 0.0
        %5129 = vmatpush2.msra.mxu0 0.0
        %5130 = vmatprep.subr.mxu0 0.0
        %5131 = vmatpush2.msra.mxu0 0.0
        %5132 = vmatprep.subr.mxu0 0.0
        %5133 = vmatpush2.msra.mxu0 0.0
        %5134 = vmatprep.mubr.f32.mxu0 0.0
        %5135 = vmatmul.mubr.f32.gmra.mxu0 %v4988
        %v5136 = vpop.f32.mrf.mxu0
        %v5137 = vadd.f32 %v4918, %v5136
        %v5138 = vpop.f32.mrf.mxu0
        %v5139 = vadd.f32 %v4922, %v5138
        %5140 = vmatprep.mubr.f32.mxu0 0.0
        %5141 = vmatmul.mubr.f32.gmra.mxu0 %v4991
        %v5142 = vpop.f32.mrf.mxu0
        %v5143 = vadd.f32 %v4918, %v5142
        %v5144 = vpop.f32.mrf.mxu0
        %v5145 = vadd.f32 %v4922, %v5144
        %5146 = vdwg.mxu0
        %5147 = vmatprep.subr.mxu0 0.0
        %5148 = vmatpush1.msra.mxu0 0.0
        %5149 = vmatprep.subr.mxu0 0.0
        %5150 = vmatpush1.msra.mxu0 0.0
        %5151 = vmatprep.subr.mxu0 0.0
        %5152 = vmatpush1.msra.mxu0 0.0
        %5153 = vmatprep.subr.mxu0 0.0
        %5154 = vmatpush1.msra.mxu0 0.0
        %5155 = vmatprep.subr.mxu0 0.0
        %5156 = vmatpush1.msra.mxu0 0.0
        %5157 = vmatprep.subr.mxu0 0.0
        %5158 = vmatpush1.msra.mxu0 0.0
        %5159 = vmatprep.subr.mxu0 0.0
        %5160 = vmatpush1.msra.mxu0 0.0
        %5161 = vmatprep.subr.mxu0 0.0
        %5162 = vmatpush1.msra.mxu0 0.0
        %5163 = vmatprep.subr.mxu0 0.0
        %5164 = vmatpush1.msra.mxu0 0.0
        %5165 = vmatprep.subr.mxu0 0.0
        %5166 = vmatpush1.msra.mxu0 0.0
        %5167 = vmatprep.subr.mxu0 0.0
        %5168 = vmatpush1.msra.mxu0 0.0
        %5169 = vmatprep.subr.mxu0 0.0
        %5170 = vmatpush1.msra.mxu0 0.0
        %5171 = vmatprep.subr.mxu0 %v4892
        %5172 = vmatpush1.msra.mxu0 %v4891
        %5173 = vmatprep.subr.mxu0 %v4876
        %5174 = vmatpush1.msra.mxu0 %v4875
        %5175 = vmatprep.subr.mxu0 %v4860
        %5176 = vmatpush1.msra.mxu0 %v4859
        %5177 = vmatprep.subr.mxu0 %v4844
        %5178 = vmatpush1.msra.mxu0 %v4843
        %5179 = vmatprep.subr.mxu0 0.0
        %5180 = vmatpush2.msra.mxu0 0.0
        %5181 = vmatprep.subr.mxu0 0.0
        %5182 = vmatpush2.msra.mxu0 0.0
        %5183 = vmatprep.subr.mxu0 0.0
        %5184 = vmatpush2.msra.mxu0 0.0
        %5185 = vmatprep.subr.mxu0 0.0
        %5186 = vmatpush2.msra.mxu0 0.0
        %5187 = vmatprep.subr.mxu0 0.0
        %5188 = vmatpush2.msra.mxu0 0.0
        %5189 = vmatprep.subr.mxu0 0.0
        %5190 = vmatpush2.msra.mxu0 0.0
        %5191 = vmatprep.subr.mxu0 0.0
        %5192 = vmatpush2.msra.mxu0 0.0
        %5193 = vmatprep.subr.mxu0 0.0
        %5194 = vmatpush2.msra.mxu0 0.0
        %5195 = vmatprep.subr.mxu0 0.0
        %5196 = vmatpush2.msra.mxu0 0.0
        %5197 = vmatprep.subr.mxu0 0.0
        %5198 = vmatpush2.msra.mxu0 0.0
        %5199 = vmatprep.subr.mxu0 0.0
        %5200 = vmatpush2.msra.mxu0 0.0
        %5201 = vmatprep.subr.mxu0 0.0
        %5202 = vmatpush2.msra.mxu0 0.0
        %5203 = vmatprep.subr.mxu0 0.0
        %5204 = vmatpush2.msra.mxu0 0.0
        %5205 = vmatprep.subr.mxu0 0.0
        %5206 = vmatpush2.msra.mxu0 0.0
        %5207 = vmatprep.subr.mxu0 0.0
        %5208 = vmatpush2.msra.mxu0 0.0
        %5209 = vmatprep.subr.mxu0 0.0
        %5210 = vmatpush2.msra.mxu0 0.0
        %5211 = vmatprep.mubr.f32.mxu0 0.0
        %5212 = vmatmul.mubr.f32.gmra.mxu0 %v4988
        %v5213 = vpop.f32.mrf.mxu0
        %v5214 = vadd.f32 %v4926, %v5213
        %v5215 = vpop.f32.mrf.mxu0
        %v5216 = vadd.f32 %v4930, %v5215
        %5217 = vmatprep.mubr.f32.mxu0 0.0
        %5218 = vmatmul.mubr.f32.gmra.mxu0 %v4991
        %v5219 = vpop.f32.mrf.mxu0
        %v5220 = vadd.f32 %v4926, %v5219
        %v5221 = vpop.f32.mrf.mxu0
        %v5222 = vadd.f32 %v4930, %v5221
        %5223 = vdwg.mxu0
        %5224 = vmatprep.subr.mxu0 0.0
        %5225 = vmatpush1.msra.mxu0 0.0
        %5226 = vmatprep.subr.mxu0 0.0
        %5227 = vmatpush1.msra.mxu0 0.0
        %5228 = vmatprep.subr.mxu0 0.0
        %5229 = vmatpush1.msra.mxu0 0.0
        %5230 = vmatprep.subr.mxu0 0.0
        %5231 = vmatpush1.msra.mxu0 0.0
        %5232 = vmatprep.subr.mxu0 0.0
        %5233 = vmatpush1.msra.mxu0 0.0
        %5234 = vmatprep.subr.mxu0 0.0
        %5235 = vmatpush1.msra.mxu0 0.0
        %5236 = vmatprep.subr.mxu0 0.0
        %5237 = vmatpush1.msra.mxu0 0.0
        %5238 = vmatprep.subr.mxu0 0.0
        %5239 = vmatpush1.msra.mxu0 0.0
        %5240 = vmatprep.subr.mxu0 0.0
        %5241 = vmatpush1.msra.mxu0 0.0
        %5242 = vmatprep.subr.mxu0 0.0
        %5243 = vmatpush1.msra.mxu0 0.0
        %5244 = vmatprep.subr.mxu0 0.0
        %5245 = vmatpush1.msra.mxu0 0.0
        %5246 = vmatprep.subr.mxu0 0.0
        %5247 = vmatpush1.msra.mxu0 0.0
        %5248 = vmatprep.subr.mxu0 %v4894
        %5249 = vmatpush1.msra.mxu0 %v4893
        %5250 = vmatprep.subr.mxu0 %v4878
        %5251 = vmatpush1.msra.mxu0 %v4877
        %5252 = vmatprep.subr.mxu0 %v4862
        %5253 = vmatpush1.msra.mxu0 %v4861
        %5254 = vmatprep.subr.mxu0 %v4846
        %5255 = vmatpush1.msra.mxu0 %v4845
        %5256 = vmatprep.subr.mxu0 0.0
        %5257 = vmatpush2.msra.mxu0 0.0
        %5258 = vmatprep.subr.mxu0 0.0
        %5259 = vmatpush2.msra.mxu0 0.0
        %5260 = vmatprep.subr.mxu0 0.0
        %5261 = vmatpush2.msra.mxu0 0.0
        %5262 = vmatprep.subr.mxu0 0.0
        %5263 = vmatpush2.msra.mxu0 0.0
        %5264 = vmatprep.subr.mxu0 0.0
        %5265 = vmatpush2.msra.mxu0 0.0
        %5266 = vmatprep.subr.mxu0 0.0
        %5267 = vmatpush2.msra.mxu0 0.0
        %5268 = vmatprep.subr.mxu0 0.0
        %5269 = vmatpush2.msra.mxu0 0.0
        %5270 = vmatprep.subr.mxu0 0.0
        %5271 = vmatpush2.msra.mxu0 0.0
        %5272 = vmatprep.subr.mxu0 0.0
        %5273 = vmatpush2.msra.mxu0 0.0
        %5274 = vmatprep.subr.mxu0 0.0
        %5275 = vmatpush2.msra.mxu0 0.0
        %5276 = vmatprep.subr.mxu0 0.0
        %5277 = vmatpush2.msra.mxu0 0.0
        %5278 = vmatprep.subr.mxu0 0.0
        %5279 = vmatpush2.msra.mxu0 0.0
        %5280 = vmatprep.subr.mxu0 0.0
        %5281 = vmatpush2.msra.mxu0 0.0
        %5282 = vmatprep.subr.mxu0 0.0
        %5283 = vmatpush2.msra.mxu0 0.0
        %5284 = vmatprep.subr.mxu0 0.0
        %5285 = vmatpush2.msra.mxu0 0.0
        %5286 = vmatprep.subr.mxu0 0.0
        %5287 = vmatpush2.msra.mxu0 0.0
        %5288 = vmatprep.mubr.f32.mxu0 0.0
        %5289 = vmatmul.mubr.f32.gmra.mxu0 %v4988
        %v5290 = vpop.f32.mrf.mxu0
        %v5291 = vadd.f32 %v4934, %v5290
        %v5292 = vpop.f32.mrf.mxu0
        %v5293 = vadd.f32 %v4938, %v5292
        %5294 = vmatprep.mubr.f32.mxu0 0.0
        %5295 = vmatmul.mubr.f32.gmra.mxu0 %v4991
        %v5296 = vpop.f32.mrf.mxu0
        %v5297 = vadd.f32 %v4934, %v5296
        %v5298 = vpop.f32.mrf.mxu0
        %v5299 = vadd.f32 %v4938, %v5298
        %5300 = vdwg.mxu0
        %5301 = vmatprep.subr.mxu0 0.0
        %5302 = vmatpush1.msra.mxu0 0.0
        %5303 = vmatprep.subr.mxu0 0.0
        %5304 = vmatpush1.msra.mxu0 0.0
        %5305 = vmatprep.subr.mxu0 0.0
        %5306 = vmatpush1.msra.mxu0 0.0
        %5307 = vmatprep.subr.mxu0 0.0
        %5308 = vmatpush1.msra.mxu0 0.0
        %5309 = vmatprep.subr.mxu0 0.0
        %5310 = vmatpush1.msra.mxu0 0.0
        %5311 = vmatprep.subr.mxu0 0.0
        %5312 = vmatpush1.msra.mxu0 0.0
        %5313 = vmatprep.subr.mxu0 0.0
        %5314 = vmatpush1.msra.mxu0 0.0
        %5315 = vmatprep.subr.mxu0 0.0
        %5316 = vmatpush1.msra.mxu0 0.0
        %5317 = vmatprep.subr.mxu0 0.0
        %5318 = vmatpush1.msra.mxu0 0.0
        %5319 = vmatprep.subr.mxu0 0.0
        %5320 = vmatpush1.msra.mxu0 0.0
        %5321 = vmatprep.subr.mxu0 0.0
        %5322 = vmatpush1.msra.mxu0 0.0
        %5323 = vmatprep.subr.mxu0 0.0
        %5324 = vmatpush1.msra.mxu0 0.0
        %5325 = vmatprep.subr.mxu0 %v4896
        %5326 = vmatpush1.msra.mxu0 %v4895
        %5327 = vmatprep.subr.mxu0 %v4880
        %5328 = vmatpush1.msra.mxu0 %v4879
        %5329 = vmatprep.subr.mxu0 %v4864
        %5330 = vmatpush1.msra.mxu0 %v4863
        %5331 = vmatprep.subr.mxu0 %v4848
        %5332 = vmatpush1.msra.mxu0 %v4847
        %5333 = vmatprep.subr.mxu0 0.0
        %5334 = vmatpush2.msra.mxu0 0.0
        %5335 = vmatprep.subr.mxu0 0.0
        %5336 = vmatpush2.msra.mxu0 0.0
        %5337 = vmatprep.subr.mxu0 0.0
        %5338 = vmatpush2.msra.mxu0 0.0
        %5339 = vmatprep.subr.mxu0 0.0
        %5340 = vmatpush2.msra.mxu0 0.0
        %5341 = vmatprep.subr.mxu0 0.0
        %5342 = vmatpush2.msra.mxu0 0.0
        %5343 = vmatprep.subr.mxu0 0.0
        %5344 = vmatpush2.msra.mxu0 0.0
        %5345 = vmatprep.subr.mxu0 0.0
        %5346 = vmatpush2.msra.mxu0 0.0
        %5347 = vmatprep.subr.mxu0 0.0
        %5348 = vmatpush2.msra.mxu0 0.0
        %5349 = vmatprep.subr.mxu0 0.0
        %5350 = vmatpush2.msra.mxu0 0.0
        %5351 = vmatprep.subr.mxu0 0.0
        %5352 = vmatpush2.msra.mxu0 0.0
        %5353 = vmatprep.subr.mxu0 0.0
        %5354 = vmatpush2.msra.mxu0 0.0
        %5355 = vmatprep.subr.mxu0 0.0
        %5356 = vmatpush2.msra.mxu0 0.0
        %5357 = vmatprep.subr.mxu0 0.0
        %5358 = vmatpush2.msra.mxu0 0.0
        %5359 = vmatprep.subr.mxu0 0.0
        %5360 = vmatpush2.msra.mxu0 0.0
        %5361 = vmatprep.subr.mxu0 0.0
        %5362 = vmatpush2.msra.mxu0 0.0
        %5363 = vmatprep.subr.mxu0 0.0
        %5364 = vmatpush2.msra.mxu0 0.0
        %5365 = vmatprep.mubr.f32.mxu0 0.0
        %5366 = vmatmul.mubr.f32.gmra.mxu0 %v4988
        %v5367 = vpop.f32.mrf.mxu0
        %v5368 = vadd.f32 %v4942, %v5367
        %v5369 = vpop.f32.mrf.mxu0
        %v5370 = vadd.f32 %v4946, %v5369
        %5371 = vmatprep.mubr.f32.mxu0 0.0
        %5372 = vmatmul.mubr.f32.gmra.mxu0 %v4991
        %v5373 = vpop.f32.mrf.mxu0
        %v5374 = vadd.f32 %v4942, %v5373
        %v5375 = vpop.f32.mrf.mxu0
        %v5376 = vadd.f32 %v4946, %v5375
        %5377 = vdwg.mxu0
        %5378 = vmatprep.subr.mxu0 0.0
        %5379 = vmatpush1.msra.mxu0 0.0
        %5380 = vmatprep.subr.mxu0 0.0
        %5381 = vmatpush1.msra.mxu0 0.0
        %5382 = vmatprep.subr.mxu0 0.0
        %5383 = vmatpush1.msra.mxu0 0.0
        %5384 = vmatprep.subr.mxu0 0.0
        %5385 = vmatpush1.msra.mxu0 0.0
        %5386 = vmatprep.subr.mxu0 0.0
        %5387 = vmatpush1.msra.mxu0 0.0
        %5388 = vmatprep.subr.mxu0 0.0
        %5389 = vmatpush1.msra.mxu0 0.0
        %5390 = vmatprep.subr.mxu0 0.0
        %5391 = vmatpush1.msra.mxu0 0.0
        %5392 = vmatprep.subr.mxu0 0.0
        %5393 = vmatpush1.msra.mxu0 0.0
        %5394 = vmatprep.subr.mxu0 0.0
        %5395 = vmatpush1.msra.mxu0 0.0
        %5396 = vmatprep.subr.mxu0 0.0
        %5397 = vmatpush1.msra.mxu0 0.0
        %5398 = vmatprep.subr.mxu0 0.0
        %5399 = vmatpush1.msra.mxu0 0.0
        %5400 = vmatprep.subr.mxu0 0.0
        %5401 = vmatpush1.msra.mxu0 0.0
        %5402 = vmatprep.subr.mxu0 %v4898
        %5403 = vmatpush1.msra.mxu0 %v4897
        %5404 = vmatprep.subr.mxu0 %v4882
        %5405 = vmatpush1.msra.mxu0 %v4881
        %5406 = vmatprep.subr.mxu0 %v4866
        %5407 = vmatpush1.msra.mxu0 %v4865
        %5408 = vmatprep.subr.mxu0 %v4850
        %5409 = vmatpush1.msra.mxu0 %v4849
        %5410 = vmatprep.subr.mxu0 0.0
        %5411 = vmatpush2.msra.mxu0 0.0
        %5412 = vmatprep.subr.mxu0 0.0
        %5413 = vmatpush2.msra.mxu0 0.0
        %5414 = vmatprep.subr.mxu0 0.0
        %5415 = vmatpush2.msra.mxu0 0.0
        %5416 = vmatprep.subr.mxu0 0.0
        %5417 = vmatpush2.msra.mxu0 0.0
        %5418 = vmatprep.subr.mxu0 0.0
        %5419 = vmatpush2.msra.mxu0 0.0
        %5420 = vmatprep.subr.mxu0 0.0
        %5421 = vmatpush2.msra.mxu0 0.0
        %5422 = vmatprep.subr.mxu0 0.0
        %5423 = vmatpush2.msra.mxu0 0.0
        %5424 = vmatprep.subr.mxu0 0.0
        %5425 = vmatpush2.msra.mxu0 0.0
        %5426 = vmatprep.subr.mxu0 0.0
        %5427 = vmatpush2.msra.mxu0 0.0
        %5428 = vmatprep.subr.mxu0 0.0
        %5429 = vmatpush2.msra.mxu0 0.0
        %5430 = vmatprep.subr.mxu0 0.0
        %5431 = vmatpush2.msra.mxu0 0.0
        %5432 = vmatprep.subr.mxu0 0.0
        %5433 = vmatpush2.msra.mxu0 0.0
        %5434 = vmatprep.subr.mxu0 0.0
        %5435 = vmatpush2.msra.mxu0 0.0
        %5436 = vmatprep.subr.mxu0 0.0
        %5437 = vmatpush2.msra.mxu0 0.0
        %5438 = vmatprep.subr.mxu0 0.0
        %5439 = vmatpush2.msra.mxu0 0.0
        %5440 = vmatprep.subr.mxu0 0.0
        %5441 = vmatpush2.msra.mxu0 0.0
        %5442 = vmatprep.mubr.f32.mxu0 0.0
        %5443 = vmatmul.mubr.f32.gmra.mxu0 %v4988
        %v5444 = vpop.f32.mrf.mxu0
        %v5445 = vadd.f32 %v4950, %v5444
        %v5446 = vpop.f32.mrf.mxu0
        %v5447 = vadd.f32 %v4954, %v5446
        %5448 = vmatprep.mubr.f32.mxu0 0.0
        %5449 = vmatmul.mubr.f32.gmra.mxu0 %v4991
        %v5450 = vpop.f32.mrf.mxu0
        %v5451 = vadd.f32 %v4950, %v5450
        %v5452 = vpop.f32.mrf.mxu0
        %v5453 = vadd.f32 %v4954, %v5452
        %5454 = vdwg.mxu0
        %5455 = vmatprep.subr.mxu0 0.0
        %5456 = vmatpush1.msra.mxu0 0.0
        %5457 = vmatprep.subr.mxu0 0.0
        %5458 = vmatpush1.msra.mxu0 0.0
        %5459 = vmatprep.subr.mxu0 0.0
        %5460 = vmatpush1.msra.mxu0 0.0
        %5461 = vmatprep.subr.mxu0 0.0
        %5462 = vmatpush1.msra.mxu0 0.0
        %5463 = vmatprep.subr.mxu0 0.0
        %5464 = vmatpush1.msra.mxu0 0.0
        %5465 = vmatprep.subr.mxu0 0.0
        %5466 = vmatpush1.msra.mxu0 0.0
        %5467 = vmatprep.subr.mxu0 0.0
        %5468 = vmatpush1.msra.mxu0 0.0
        %5469 = vmatprep.subr.mxu0 0.0
        %5470 = vmatpush1.msra.mxu0 0.0
        %5471 = vmatprep.subr.mxu0 0.0
        %5472 = vmatpush1.msra.mxu0 0.0
        %5473 = vmatprep.subr.mxu0 0.0
        %5474 = vmatpush1.msra.mxu0 0.0
        %5475 = vmatprep.subr.mxu0 0.0
        %5476 = vmatpush1.msra.mxu0 0.0
        %5477 = vmatprep.subr.mxu0 0.0
        %5478 = vmatpush1.msra.mxu0 0.0
        %5479 = vmatprep.subr.mxu0 %v4900
        %5480 = vmatpush1.msra.mxu0 %v4899
        %5481 = vmatprep.subr.mxu0 %v4884
        %5482 = vmatpush1.msra.mxu0 %v4883
        %5483 = vmatprep.subr.mxu0 %v4868
        %5484 = vmatpush1.msra.mxu0 %v4867
        %5485 = vmatprep.subr.mxu0 %v4852
        %5486 = vmatpush1.msra.mxu0 %v4851
        %5487 = vmatprep.subr.mxu0 0.0
        %5488 = vmatpush2.msra.mxu0 0.0
        %5489 = vmatprep.subr.mxu0 0.0
        %5490 = vmatpush2.msra.mxu0 0.0
        %5491 = vmatprep.subr.mxu0 0.0
        %5492 = vmatpush2.msra.mxu0 0.0
        %5493 = vmatprep.subr.mxu0 0.0
        %5494 = vmatpush2.msra.mxu0 0.0
        %5495 = vmatprep.subr.mxu0 0.0
        %5496 = vmatpush2.msra.mxu0 0.0
        %5497 = vmatprep.subr.mxu0 0.0
        %5498 = vmatpush2.msra.mxu0 0.0
        %5499 = vmatprep.subr.mxu0 0.0
        %5500 = vmatpush2.msra.mxu0 0.0
        %5501 = vmatprep.subr.mxu0 0.0
        %5502 = vmatpush2.msra.mxu0 0.0
        %5503 = vmatprep.subr.mxu0 0.0
        %5504 = vmatpush2.msra.mxu0 0.0
        %5505 = vmatprep.subr.mxu0 0.0
        %5506 = vmatpush2.msra.mxu0 0.0
        %5507 = vmatprep.subr.mxu0 0.0
        %5508 = vmatpush2.msra.mxu0 0.0
        %5509 = vmatprep.subr.mxu0 0.0
        %5510 = vmatpush2.msra.mxu0 0.0
        %5511 = vmatprep.subr.mxu0 0.0
        %5512 = vmatpush2.msra.mxu0 0.0
        %5513 = vmatprep.subr.mxu0 0.0
        %5514 = vmatpush2.msra.mxu0 0.0
        %5515 = vmatprep.subr.mxu0 0.0
        %5516 = vmatpush2.msra.mxu0 0.0
        %5517 = vmatprep.subr.mxu0 0.0
        %5518 = vmatpush2.msra.mxu0 0.0
        %5519 = vmatprep.mubr.f32.mxu0 0.0
        %5520 = vmatmul.mubr.f32.gmra.mxu0 %v4988
        %v5521 = vpop.f32.mrf.mxu0
        %v5522 = vadd.f32 %v4958, %v5521
        %v5523 = vpop.f32.mrf.mxu0
        %v5524 = vadd.f32 %v4962, %v5523
        %5525 = vmatprep.mubr.f32.mxu0 0.0
        %5526 = vmatmul.mubr.f32.gmra.mxu0 %v4991
        %v5527 = vpop.f32.mrf.mxu0
        %v5528 = vadd.f32 %v4958, %v5527
        %v5529 = vpop.f32.mrf.mxu0
        %v5530 = vadd.f32 %v4962, %v5529
        %5531 = vdwg.mxu0
        %5532 = vmatprep.subr.mxu0 0.0
        %5533 = vmatpush1.msra.mxu0 0.0
        %5534 = vmatprep.subr.mxu0 0.0
        %5535 = vmatpush1.msra.mxu0 0.0
        %5536 = vmatprep.subr.mxu0 0.0
        %5537 = vmatpush1.msra.mxu0 0.0
        %5538 = vmatprep.subr.mxu0 0.0
        %5539 = vmatpush1.msra.mxu0 0.0
        %5540 = vmatprep.subr.mxu0 0.0
        %5541 = vmatpush1.msra.mxu0 0.0
        %5542 = vmatprep.subr.mxu0 0.0
        %5543 = vmatpush1.msra.mxu0 0.0
        %5544 = vmatprep.subr.mxu0 0.0
        %5545 = vmatpush1.msra.mxu0 0.0
        %5546 = vmatprep.subr.mxu0 0.0
        %5547 = vmatpush1.msra.mxu0 0.0
        %5548 = vmatprep.subr.mxu0 0.0
        %5549 = vmatpush1.msra.mxu0 0.0
        %5550 = vmatprep.subr.mxu0 0.0
        %5551 = vmatpush1.msra.mxu0 0.0
        %5552 = vmatprep.subr.mxu0 0.0
        %5553 = vmatpush1.msra.mxu0 0.0
        %5554 = vmatprep.subr.mxu0 0.0
        %5555 = vmatpush1.msra.mxu0 0.0
        %5556 = vmatprep.subr.mxu0 %v4902
        %5557 = vmatpush1.msra.mxu0 %v4901
        %5558 = vmatprep.subr.mxu0 %v4886
        %5559 = vmatpush1.msra.mxu0 %v4885
        %5560 = vmatprep.subr.mxu0 %v4870
        %5561 = vmatpush1.msra.mxu0 %v4869
        %5562 = vmatprep.subr.mxu0 %v4854
        %5563 = vmatpush1.msra.mxu0 %v4853
        %5564 = vmatprep.subr.mxu0 0.0
        %5565 = vmatpush2.msra.mxu0 0.0
        %5566 = vmatprep.subr.mxu0 0.0
        %5567 = vmatpush2.msra.mxu0 0.0
        %5568 = vmatprep.subr.mxu0 0.0
        %5569 = vmatpush2.msra.mxu0 0.0
        %5570 = vmatprep.subr.mxu0 0.0
        %5571 = vmatpush2.msra.mxu0 0.0
        %5572 = vmatprep.subr.mxu0 0.0
        %5573 = vmatpush2.msra.mxu0 0.0
        %5574 = vmatprep.subr.mxu0 0.0
        %5575 = vmatpush2.msra.mxu0 0.0
        %5576 = vmatprep.subr.mxu0 0.0
        %5577 = vmatpush2.msra.mxu0 0.0
        %5578 = vmatprep.subr.mxu0 0.0
        %5579 = vmatpush2.msra.mxu0 0.0
        %5580 = vmatprep.subr.mxu0 0.0
        %5581 = vmatpush2.msra.mxu0 0.0
        %5582 = vmatprep.subr.mxu0 0.0
        %5583 = vmatpush2.msra.mxu0 0.0
        %5584 = vmatprep.subr.mxu0 0.0
        %5585 = vmatpush2.msra.mxu0 0.0
        %5586 = vmatprep.subr.mxu0 0.0
        %5587 = vmatpush2.msra.mxu0 0.0
        %5588 = vmatprep.subr.mxu0 0.0
        %5589 = vmatpush2.msra.mxu0 0.0
        %5590 = vmatprep.subr.mxu0 0.0
        %5591 = vmatpush2.msra.mxu0 0.0
        %5592 = vmatprep.subr.mxu0 0.0
        %5593 = vmatpush2.msra.mxu0 0.0
        %5594 = vmatprep.subr.mxu0 0.0
        %5595 = vmatpush2.msra.mxu0 0.0
        %5596 = vmatprep.mubr.f32.mxu0 0.0
        %5597 = vmatmul.mubr.f32.gmra.mxu0 %v4988
        %v5598 = vpop.f32.mrf.mxu0
        %v5599 = vadd.f32 %v4966, %v5598
        %v5600 = vpop.f32.mrf.mxu0
        %v5601 = vadd.f32 %v4970, %v5600
        %5602 = vmatprep.mubr.f32.mxu0 0.0
        %5603 = vmatmul.mubr.f32.gmra.mxu0 %v4991
        %v5604 = vpop.f32.mrf.mxu0
        %v5605 = vadd.f32 %v4966, %v5604
        %v5606 = vpop.f32.mrf.mxu0
        %v5607 = vadd.f32 %v4970, %v5606
        %5608 = vdwg.mxu0
        %v5609 = vmax.f32 %v5060, 0.0
        %v5610 = vmax.f32 %v5062, 0.0
        %v5611 = vmax.f32 %v5137, 0.0
        %v5612 = vmax.f32 %v5139, 0.0
        %v5613 = vmax.f32 %v5214, 0.0
        %v5614 = vmax.f32 %v5216, 0.0
        %v5615 = vmax.f32 %v5291, 0.0
        %v5616 = vmax.f32 %v5293, 0.0
        %v5617 = vmax.f32 %v5368, 0.0
        %v5618 = vmax.f32 %v5370, 0.0
        %v5619 = vmax.f32 %v5445, 0.0
        %v5620 = vmax.f32 %v5447, 0.0
        %v5621 = vmax.f32 %v5522, 0.0
        %v5622 = vmax.f32 %v5524, 0.0
        %v5623 = vmax.f32 %v5599, 0.0
        %v5624 = vmax.f32 %v5601, 0.0
        %v5625 = vmax.f32 %v5066, 0.0
        %v5626 = vmax.f32 %v5068, 0.0
        %v5627 = vmax.f32 %v5143, 0.0
        %v5628 = vmax.f32 %v5145, 0.0
        %v5629 = vmax.f32 %v5220, 0.0
        %v5630 = vmax.f32 %v5222, 0.0
        %v5631 = vmax.f32 %v5297, 0.0
        %v5632 = vmax.f32 %v5299, 0.0
        %v5633 = vmax.f32 %v5374, 0.0
        %v5634 = vmax.f32 %v5376, 0.0
        %v5635 = vmax.f32 %v5451, 0.0
        %v5636 = vmax.f32 %v5453, 0.0
        %v5637 = vmax.f32 %v5528, 0.0
        %v5638 = vmax.f32 %v5530, 0.0
        %v5639 = vmax.f32 %v5605, 0.0
        %v5640 = vmax.f32 %v5607, 0.0
        %v5641 = vld [vmem:[%s1376] sm:$0xff]
        %v5642 = vld [vmem:[%s1376 + $0x8] sm:$0xff]
        %v5643 = vld [vmem:[%s1376 + $0x10] sm:$0xff]
        %v5644 = vld [vmem:[%s1376 + $0x18] sm:$0xff]
        %v5645 = vld [vmem:[%s1376 + $0x20] sm:$0xff]
        %v5646 = vld [vmem:[%s1376 + $0x28] sm:$0xff]
        %v5647 = vld [vmem:[%s1376 + $0x30] sm:$0xff]
        %v5648 = vld [vmem:[%s1376 + $0x38] sm:$0xff]
        %v5649 = vld [vmem:[%s1376 + $0x40] sm:$0xff]
        %v5650 = vld [vmem:[%s1376 + $0x48] sm:$0xff]
        %v5651 = vld [vmem:[%s1376 + $0x50] sm:$0xff]
        %v5652 = vld [vmem:[%s1376 + $0x58] sm:$0xff]
        %v5653 = vld [vmem:[%s1376 + $0x60] sm:$0xff]
        %v5654 = vld [vmem:[%s1376 + $0x68] sm:$0xff]
        %v5655 = vld [vmem:[%s1376 + $0x70] sm:$0xff]
        %v5656 = vld [vmem:[%s1376 + $0x78] sm:$0xff]
        %v5657 = vld [vmem:[%s1376 + $0x80] sm:$0xff]
        %v5658 = vld [vmem:[%s1376 + $0x88] sm:$0xff]
        %v5659 = vld [vmem:[%s1376 + $0x90] sm:$0xff]
        %v5660 = vld [vmem:[%s1376 + $0x98] sm:$0xff]
        %v5661 = vld [vmem:[%s1376 + $0xa0] sm:$0xff]
        %v5662 = vld [vmem:[%s1376 + $0xa8] sm:$0xff]
        %v5663 = vld [vmem:[%s1376 + $0xb0] sm:$0xff]
        %v5664 = vld [vmem:[%s1376 + $0xb8] sm:$0xff]
        %v5665 = vld [vmem:[%s1376 + $0xc0] sm:$0xff]
        %v5666 = vld [vmem:[%s1376 + $0xc8] sm:$0xff]
        %v5667 = vld [vmem:[%s1376 + $0xd0] sm:$0xff]
        %v5668 = vld [vmem:[%s1376 + $0xd8] sm:$0xff]
        %v5669 = vld [vmem:[%s1376 + $0xe0] sm:$0xff]
        %v5670 = vld [vmem:[%s1376 + $0xe8] sm:$0xff]
        %v5671 = vld [vmem:[%s1376 + $0xf0] sm:$0xff]
        %v5672 = vld [vmem:[%s1376 + $0xf8] sm:$0xff]
        %v5673 = vld [vmem:[%s1376 + $0x100] sm:$0xff]
        %v5674 = vld [vmem:[%s1376 + $0x108] sm:$0xff]
        %v5675 = vld [vmem:[%s1376 + $0x110] sm:$0xff]
        %v5676 = vld [vmem:[%s1376 + $0x118] sm:$0xff]
        %v5677 = vld [vmem:[%s1376 + $0x120] sm:$0xff]
        %v5678 = vld [vmem:[%s1376 + $0x128] sm:$0xff]
        %v5679 = vld [vmem:[%s1376 + $0x130] sm:$0xff]
        %v5680 = vld [vmem:[%s1376 + $0x138] sm:$0xff]
        %v5681 = vld [vmem:[%s1376 + $0x140] sm:$0xff]
        %v5682 = vld [vmem:[%s1376 + $0x148] sm:$0xff]
        %v5683 = vld [vmem:[%s1376 + $0x150] sm:$0xff]
        %v5684 = vld [vmem:[%s1376 + $0x158] sm:$0xff]
        %v5685 = vld [vmem:[%s1376 + $0x160] sm:$0xff]
        %v5686 = vld [vmem:[%s1376 + $0x168] sm:$0xff]
        %v5687 = vld [vmem:[%s1376 + $0x170] sm:$0xff]
        %v5688 = vld [vmem:[%s1376 + $0x178] sm:$0xff]
        %v5689 = vld [vmem:[%s1376 + $0x180] sm:$0xff]
        %v5690 = vld [vmem:[%s1376 + $0x188] sm:$0xff]
        %v5691 = vld [vmem:[%s1376 + $0x190] sm:$0xff]
        %v5692 = vld [vmem:[%s1376 + $0x198] sm:$0xff]
        %v5693 = vld [vmem:[%s1376 + $0x1a0] sm:$0xff]
        %v5694 = vld [vmem:[%s1376 + $0x1a8] sm:$0xff]
        %v5695 = vld [vmem:[%s1376 + $0x1b0] sm:$0xff]
        %v5696 = vld [vmem:[%s1376 + $0x1b8] sm:$0xff]
        %v5697 = vld [vmem:[%s1376 + $0x1c0] sm:$0xff]
        %v5698 = vld [vmem:[%s1376 + $0x1c8] sm:$0xff]
        %v5699 = vld [vmem:[%s1376 + $0x1d0] sm:$0xff]
        %v5700 = vld [vmem:[%s1376 + $0x1d8] sm:$0xff]
        %v5701 = vld [vmem:[%s1376 + $0x1e0] sm:$0xff]
        %v5702 = vld [vmem:[%s1376 + $0x1e8] sm:$0xff]
        %v5703 = vld [vmem:[%s1376 + $0x1f0] sm:$0xff]
        %v5704 = vld [vmem:[%s1376 + $0x1f8] sm:$0xff]
        %v5705 = vld [vmem:[%s1376 + $0x200] sm:$0xff]
        %v5706 = vld [vmem:[%s1376 + $0x208] sm:$0xff]
        %v5707 = vld [vmem:[%s1376 + $0x210] sm:$0xff]
        %v5708 = vld [vmem:[%s1376 + $0x218] sm:$0xff]
        %v5709 = vld [vmem:[%s1376 + $0x220] sm:$0xff]
        %v5710 = vld [vmem:[%s1376 + $0x228] sm:$0xff]
        %v5711 = vld [vmem:[%s1376 + $0x230] sm:$0xff]
        %v5712 = vld [vmem:[%s1376 + $0x238] sm:$0xff]
        %v5713 = vld [vmem:[%s1376 + $0x240] sm:$0xff]
        %v5714 = vld [vmem:[%s1376 + $0x248] sm:$0xff]
        %v5715 = vld [vmem:[%s1376 + $0x250] sm:$0xff]
        %v5716 = vld [vmem:[%s1376 + $0x258] sm:$0xff]
        %v5717 = vld [vmem:[%s1376 + $0x260] sm:$0xff]
        %v5718 = vld [vmem:[%s1376 + $0x268] sm:$0xff]
        %v5719 = vld [vmem:[%s1376 + $0x270] sm:$0xff]
        %v5720 = vld [vmem:[%s1376 + $0x278] sm:$0xff]
        %v5721 = vld [vmem:[%s1376 + $0x280] sm:$0xff]
        %v5722 = vld [vmem:[%s1376 + $0x288] sm:$0xff]
        %v5723 = vld [vmem:[%s1376 + $0x290] sm:$0xff]
        %v5724 = vld [vmem:[%s1376 + $0x298] sm:$0xff]
        %v5725 = vld [vmem:[%s1376 + $0x2a0] sm:$0xff]
        %v5726 = vld [vmem:[%s1376 + $0x2a8] sm:$0xff]
        %v5727 = vld [vmem:[%s1376 + $0x2b0] sm:$0xff]
        %v5728 = vld [vmem:[%s1376 + $0x2b8] sm:$0xff]
        %v5729 = vld [vmem:[%s1376 + $0x2c0] sm:$0xff]
        %v5730 = vld [vmem:[%s1376 + $0x2c8] sm:$0xff]
        %v5731 = vld [vmem:[%s1376 + $0x2d0] sm:$0xff]
        %v5732 = vld [vmem:[%s1376 + $0x2d8] sm:$0xff]
        %v5733 = vld [vmem:[%s1376 + $0x2e0] sm:$0xff]
        %v5734 = vld [vmem:[%s1376 + $0x2e8] sm:$0xff]
        %v5735 = vld [vmem:[%s1376 + $0x2f0] sm:$0xff]
        %v5736 = vld [vmem:[%s1376 + $0x2f8] sm:$0xff]
        %v5737 = vld [vmem:[%s1376 + $0x300] sm:$0xff]
        %v5738 = vld [vmem:[%s1376 + $0x308] sm:$0xff]
        %v5739 = vld [vmem:[%s1376 + $0x310] sm:$0xff]
        %v5740 = vld [vmem:[%s1376 + $0x318] sm:$0xff]
        %v5741 = vld [vmem:[%s1376 + $0x320] sm:$0xff]
        %v5742 = vld [vmem:[%s1376 + $0x328] sm:$0xff]
        %v5743 = vld [vmem:[%s1376 + $0x330] sm:$0xff]
        %v5744 = vld [vmem:[%s1376 + $0x338] sm:$0xff]
        %v5745 = vld [vmem:[%s1376 + $0x340] sm:$0xff]
        %v5746 = vld [vmem:[%s1376 + $0x348] sm:$0xff]
        %v5747 = vld [vmem:[%s1376 + $0x350] sm:$0xff]
        %v5748 = vld [vmem:[%s1376 + $0x358] sm:$0xff]
        %v5749 = vld [vmem:[%s1376 + $0x360] sm:$0xff]
        %v5750 = vld [vmem:[%s1376 + $0x368] sm:$0xff]
        %v5751 = vld [vmem:[%s1376 + $0x370] sm:$0xff]
        %v5752 = vld [vmem:[%s1376 + $0x378] sm:$0xff]
        %v5753 = vld [vmem:[%s1376 + $0x380] sm:$0xff]
        %v5754 = vld [vmem:[%s1376 + $0x388] sm:$0xff]
        %v5755 = vld [vmem:[%s1376 + $0x390] sm:$0xff]
        %v5756 = vld [vmem:[%s1376 + $0x398] sm:$0xff]
        %v5757 = vld [vmem:[%s1376 + $0x3a0] sm:$0xff]
        %v5758 = vld [vmem:[%s1376 + $0x3a8] sm:$0xff]
        %v5759 = vld [vmem:[%s1376 + $0x3b0] sm:$0xff]
        %v5760 = vld [vmem:[%s1376 + $0x3b8] sm:$0xff]
        %v5761 = vld [vmem:[%s1376 + $0x3c0] sm:$0xff]
        %v5762 = vld [vmem:[%s1376 + $0x3c8] sm:$0xff]
        %v5763 = vld [vmem:[%s1376 + $0x3d0] sm:$0xff]
        %v5764 = vld [vmem:[%s1376 + $0x3d8] sm:$0xff]
        %v5765 = vld [vmem:[%s1376 + $0x3e0] sm:$0xff]
        %v5766 = vld [vmem:[%s1376 + $0x3e8] sm:$0xff]
        %v5767 = vld [vmem:[%s1376 + $0x3f0] sm:$0xff]
        %v5768 = vld [vmem:[%s1376 + $0x3f8] sm:$0xff]
        %v5769 = vld [vmem:[%s1376 + $0x400] sm:$0xff]
        %v5770 = vld [vmem:[%s1376 + $0x408] sm:$0xff]
        %v5771 = vld [vmem:[%s1376 + $0x410] sm:$0xff]
        %v5772 = vld [vmem:[%s1376 + $0x418] sm:$0xff]
        %v5773 = vld [vmem:[%s1376 + $0x420] sm:$0xff]
        %v5774 = vld [vmem:[%s1376 + $0x428] sm:$0xff]
        %v5775 = vld [vmem:[%s1376 + $0x430] sm:$0xff]
        %v5776 = vld [vmem:[%s1376 + $0x438] sm:$0xff]
        %v5777 = vld [vmem:[%s1376 + $0x440] sm:$0xff]
        %v5778 = vld [vmem:[%s1376 + $0x448] sm:$0xff]
        %v5779 = vld [vmem:[%s1376 + $0x450] sm:$0xff]
        %v5780 = vld [vmem:[%s1376 + $0x458] sm:$0xff]
        %v5781 = vld [vmem:[%s1376 + $0x460] sm:$0xff]
        %v5782 = vld [vmem:[%s1376 + $0x468] sm:$0xff]
        %v5783 = vld [vmem:[%s1376 + $0x470] sm:$0xff]
        %v5784 = vld [vmem:[%s1376 + $0x478] sm:$0xff]
        %v5785 = vld [vmem:[%s1376 + $0x480] sm:$0xff]
        %v5786 = vld [vmem:[%s1376 + $0x488] sm:$0xff]
        %v5787 = vld [vmem:[%s1376 + $0x490] sm:$0xff]
        %v5788 = vld [vmem:[%s1376 + $0x498] sm:$0xff]
        %v5789 = vld [vmem:[%s1376 + $0x4a0] sm:$0xff]
        %v5790 = vld [vmem:[%s1376 + $0x4a8] sm:$0xff]
        %v5791 = vld [vmem:[%s1376 + $0x4b0] sm:$0xff]
        %v5792 = vld [vmem:[%s1376 + $0x4b8] sm:$0xff]
        %v5793 = vld [vmem:[%s1376 + $0x4c0] sm:$0xff]
        %v5794 = vld [vmem:[%s1376 + $0x4c8] sm:$0xff]
        %v5795 = vld [vmem:[%s1376 + $0x4d0] sm:$0xff]
        %v5796 = vld [vmem:[%s1376 + $0x4d8] sm:$0xff]
        %v5797 = vld [vmem:[%s1376 + $0x4e0] sm:$0xff]
        %v5798 = vld [vmem:[%s1376 + $0x4e8] sm:$0xff]
        %v5799 = vld [vmem:[%s1376 + $0x4f0] sm:$0xff]
        %v5800 = vld [vmem:[%s1376 + $0x4f8] sm:$0xff]
        %v5801 = vld [vmem:[%s1376 + $0x500] sm:$0xff]
        %v5802 = vld [vmem:[%s1376 + $0x508] sm:$0xff]
        %v5803 = vld [vmem:[%s1376 + $0x510] sm:$0xff]
        %v5804 = vld [vmem:[%s1376 + $0x518] sm:$0xff]
        %v5805 = vld [vmem:[%s1376 + $0x520] sm:$0xff]
        %v5806 = vld [vmem:[%s1376 + $0x528] sm:$0xff]
        %v5807 = vld [vmem:[%s1376 + $0x530] sm:$0xff]
        %v5808 = vld [vmem:[%s1376 + $0x538] sm:$0xff]
        %v5809 = vld [vmem:[%s1376 + $0x540] sm:$0xff]
        %v5810 = vld [vmem:[%s1376 + $0x548] sm:$0xff]
        %v5811 = vld [vmem:[%s1376 + $0x550] sm:$0xff]
        %v5812 = vld [vmem:[%s1376 + $0x558] sm:$0xff]
        %v5813 = vld [vmem:[%s1376 + $0x560] sm:$0xff]
        %v5814 = vld [vmem:[%s1376 + $0x568] sm:$0xff]
        %v5815 = vld [vmem:[%s1376 + $0x570] sm:$0xff]
        %v5816 = vld [vmem:[%s1376 + $0x578] sm:$0xff]
        %v5817 = vld [vmem:[%s1376 + $0x580] sm:$0xff]
        %v5818 = vld [vmem:[%s1376 + $0x588] sm:$0xff]
        %v5819 = vld [vmem:[%s1376 + $0x590] sm:$0xff]
        %v5820 = vld [vmem:[%s1376 + $0x598] sm:$0xff]
        %v5821 = vld [vmem:[%s1376 + $0x5a0] sm:$0xff]
        %v5822 = vld [vmem:[%s1376 + $0x5a8] sm:$0xff]
        %v5823 = vld [vmem:[%s1376 + $0x5b0] sm:$0xff]
        %v5824 = vld [vmem:[%s1376 + $0x5b8] sm:$0xff]
        %v5825 = vld [vmem:[%s1376 + $0x5c0] sm:$0xff]
        %v5826 = vld [vmem:[%s1376 + $0x5c8] sm:$0xff]
        %v5827 = vld [vmem:[%s1376 + $0x5d0] sm:$0xff]
        %v5828 = vld [vmem:[%s1376 + $0x5d8] sm:$0xff]
        %v5829 = vld [vmem:[%s1376 + $0x5e0] sm:$0xff]
        %v5830 = vld [vmem:[%s1376 + $0x5e8] sm:$0xff]
        %v5831 = vld [vmem:[%s1376 + $0x5f0] sm:$0xff]
        %v5832 = vld [vmem:[%s1376 + $0x5f8] sm:$0xff]
        %v5833 = vld [vmem:[%s1376 + $0x600] sm:$0xff]
        %v5834 = vld [vmem:[%s1376 + $0x608] sm:$0xff]
        %v5835 = vld [vmem:[%s1376 + $0x610] sm:$0xff]
        %v5836 = vld [vmem:[%s1376 + $0x618] sm:$0xff]
        %v5837 = vld [vmem:[%s1376 + $0x620] sm:$0xff]
        %v5838 = vld [vmem:[%s1376 + $0x628] sm:$0xff]
        %v5839 = vld [vmem:[%s1376 + $0x630] sm:$0xff]
        %v5840 = vld [vmem:[%s1376 + $0x638] sm:$0xff]
        %v5841 = vld [vmem:[%s1376 + $0x640] sm:$0xff]
        %v5842 = vld [vmem:[%s1376 + $0x648] sm:$0xff]
        %v5843 = vld [vmem:[%s1376 + $0x650] sm:$0xff]
        %v5844 = vld [vmem:[%s1376 + $0x658] sm:$0xff]
        %v5845 = vld [vmem:[%s1376 + $0x660] sm:$0xff]
        %v5846 = vld [vmem:[%s1376 + $0x668] sm:$0xff]
        %v5847 = vld [vmem:[%s1376 + $0x670] sm:$0xff]
        %v5848 = vld [vmem:[%s1376 + $0x678] sm:$0xff]
        %v5849 = vld [vmem:[%s1376 + $0x680] sm:$0xff]
        %v5850 = vld [vmem:[%s1376 + $0x688] sm:$0xff]
        %v5851 = vld [vmem:[%s1376 + $0x690] sm:$0xff]
        %v5852 = vld [vmem:[%s1376 + $0x698] sm:$0xff]
        %v5853 = vld [vmem:[%s1376 + $0x6a0] sm:$0xff]
        %v5854 = vld [vmem:[%s1376 + $0x6a8] sm:$0xff]
        %v5855 = vld [vmem:[%s1376 + $0x6b0] sm:$0xff]
        %v5856 = vld [vmem:[%s1376 + $0x6b8] sm:$0xff]
        %v5857 = vld [vmem:[%s1376 + $0x6c0] sm:$0xff]
        %v5858 = vld [vmem:[%s1376 + $0x6c8] sm:$0xff]
        %v5859 = vld [vmem:[%s1376 + $0x6d0] sm:$0xff]
        %v5860 = vld [vmem:[%s1376 + $0x6d8] sm:$0xff]
        %v5861 = vld [vmem:[%s1376 + $0x6e0] sm:$0xff]
        %v5862 = vld [vmem:[%s1376 + $0x6e8] sm:$0xff]
        %v5863 = vld [vmem:[%s1376 + $0x6f0] sm:$0xff]
        %v5864 = vld [vmem:[%s1376 + $0x6f8] sm:$0xff]
        %v5865 = vld [vmem:[%s1376 + $0x700] sm:$0xff]
        %v5866 = vld [vmem:[%s1376 + $0x708] sm:$0xff]
        %v5867 = vld [vmem:[%s1376 + $0x710] sm:$0xff]
        %v5868 = vld [vmem:[%s1376 + $0x718] sm:$0xff]
        %v5869 = vld [vmem:[%s1376 + $0x720] sm:$0xff]
        %v5870 = vld [vmem:[%s1376 + $0x728] sm:$0xff]
        %v5871 = vld [vmem:[%s1376 + $0x730] sm:$0xff]
        %v5872 = vld [vmem:[%s1376 + $0x738] sm:$0xff]
        %v5873 = vld [vmem:[%s1376 + $0x740] sm:$0xff]
        %v5874 = vld [vmem:[%s1376 + $0x748] sm:$0xff]
        %v5875 = vld [vmem:[%s1376 + $0x750] sm:$0xff]
        %v5876 = vld [vmem:[%s1376 + $0x758] sm:$0xff]
        %v5877 = vld [vmem:[%s1376 + $0x760] sm:$0xff]
        %v5878 = vld [vmem:[%s1376 + $0x768] sm:$0xff]
        %v5879 = vld [vmem:[%s1376 + $0x770] sm:$0xff]
        %v5880 = vld [vmem:[%s1376 + $0x778] sm:$0xff]
        %v5881 = vld [vmem:[%s1376 + $0x780] sm:$0xff]
        %v5882 = vld [vmem:[%s1376 + $0x788] sm:$0xff]
        %v5883 = vld [vmem:[%s1376 + $0x790] sm:$0xff]
        %v5884 = vld [vmem:[%s1376 + $0x798] sm:$0xff]
        %v5885 = vld [vmem:[%s1376 + $0x7a0] sm:$0xff]
        %v5886 = vld [vmem:[%s1376 + $0x7a8] sm:$0xff]
        %v5887 = vld [vmem:[%s1376 + $0x7b0] sm:$0xff]
        %v5888 = vld [vmem:[%s1376 + $0x7b8] sm:$0xff]
        %v5889 = vld [vmem:[%s1376 + $0x7c0] sm:$0xff]
        %v5890 = vld [vmem:[%s1376 + $0x7c8] sm:$0xff]
        %v5891 = vld [vmem:[%s1376 + $0x7d0] sm:$0xff]
        %v5892 = vld [vmem:[%s1376 + $0x7d8] sm:$0xff]
        %v5893 = vld [vmem:[%s1376 + $0x7e0] sm:$0xff]
        %v5894 = vld [vmem:[%s1376 + $0x7e8] sm:$0xff]
        %v5895 = vld [vmem:[%s1376 + $0x7f0] sm:$0xff]
        %v5896 = vld [vmem:[%s1376 + $0x7f8] sm:$0xff]
        %v5897 = vld [vmem:[%s1379] sm:$0x1]
        %v5899 = vlaneseq
        %v5900 = vshrl.u32 %v5899, 7
        %v5901 = vsub.s32 0, %v5900
        %v5902 = vrot.slane %v5897, %v5901
        %5904 = vmatprep.subr.mxu0 0.0
        %5905 = vmatpush1.msra.mxu0 %v5656
        %5906 = vmatprep.subr.mxu0 0.0
        %5907 = vmatpush1.msra.mxu0 %v5655
        %5908 = vmatprep.subr.mxu0 0.0
        %5909 = vmatpush1.msra.mxu0 %v5654
        %5910 = vmatprep.subr.mxu0 0.0
        %5911 = vmatpush1.msra.mxu0 %v5653
        %5912 = vmatprep.subr.mxu0 0.0
        %5913 = vmatpush1.msra.mxu0 %v5652
        %5914 = vmatprep.subr.mxu0 0.0
        %5915 = vmatpush1.msra.mxu0 %v5651
        %5916 = vmatprep.subr.mxu0 0.0
        %5917 = vmatpush1.msra.mxu0 %v5650
        %5918 = vmatprep.subr.mxu0 0.0
        %5919 = vmatpush1.msra.mxu0 %v5649
        %5920 = vmatprep.subr.mxu0 0.0
        %5921 = vmatpush1.msra.mxu0 %v5648
        %5922 = vmatprep.subr.mxu0 0.0
        %5923 = vmatpush1.msra.mxu0 %v5647
        %5924 = vmatprep.subr.mxu0 0.0
        %5925 = vmatpush1.msra.mxu0 %v5646
        %5926 = vmatprep.subr.mxu0 0.0
        %5927 = vmatpush1.msra.mxu0 %v5645
        %5928 = vmatprep.subr.mxu0 0.0
        %5929 = vmatpush1.msra.mxu0 %v5644
        %5930 = vmatprep.subr.mxu0 0.0
        %5931 = vmatpush1.msra.mxu0 %v5643
        %5932 = vmatprep.subr.mxu0 0.0
        %5933 = vmatpush1.msra.mxu0 %v5642
        %5934 = vmatprep.subr.mxu0 0.0
        %5935 = vmatpush1.msra.mxu0 %v5641
        %5936 = vmatprep.subr.mxu0 0.0
        %5937 = vmatpush2.msra.mxu0 %v5672
        %5938 = vmatprep.subr.mxu0 0.0
        %5939 = vmatpush2.msra.mxu0 %v5671
        %5940 = vmatprep.subr.mxu0 0.0
        %5941 = vmatpush2.msra.mxu0 %v5670
        %5942 = vmatprep.subr.mxu0 0.0
        %5943 = vmatpush2.msra.mxu0 %v5669
        %5944 = vmatprep.subr.mxu0 0.0
        %5945 = vmatpush2.msra.mxu0 %v5668
        %5946 = vmatprep.subr.mxu0 0.0
        %5947 = vmatpush2.msra.mxu0 %v5667
        %5948 = vmatprep.subr.mxu0 0.0
        %5949 = vmatpush2.msra.mxu0 %v5666
        %5950 = vmatprep.subr.mxu0 0.0
        %5951 = vmatpush2.msra.mxu0 %v5665
        %5952 = vmatprep.subr.mxu0 0.0
        %5953 = vmatpush2.msra.mxu0 %v5664
        %5954 = vmatprep.subr.mxu0 0.0
        %5955 = vmatpush2.msra.mxu0 %v5663
        %5956 = vmatprep.subr.mxu0 0.0
        %5957 = vmatpush2.msra.mxu0 %v5662
        %5958 = vmatprep.subr.mxu0 0.0
        %5959 = vmatpush2.msra.mxu0 %v5661
        %5960 = vmatprep.subr.mxu0 0.0
        %5961 = vmatpush2.msra.mxu0 %v5660
        %5962 = vmatprep.subr.mxu0 0.0
        %5963 = vmatpush2.msra.mxu0 %v5659
        %5964 = vmatprep.subr.mxu0 0.0
        %5965 = vmatpush2.msra.mxu0 %v5658
        %5966 = vmatprep.subr.mxu0 0.0
        %5967 = vmatpush2.msra.mxu0 %v5657
        %5968 = vmatprep.mubr.f32.mxu0 %v5610
        %5969 = vmatmul.mubr.f32.gmra.mxu0 %v5609
        %v5970 = vpop.f32.mrf.mxu0
        %v5971 = vadd.f32 %v5902, %v5970
        %v5972 = vpop.f32.mrf.mxu0
        %5973 = vmatprep.mubr.f32.mxu0 %v5626
        %5974 = vmatmul.mubr.f32.gmra.mxu0 %v5625
        %v5975 = vpop.f32.mrf.mxu0
        %v5976 = vadd.f32 %v5902, %v5975
        %v5977 = vpop.f32.mrf.mxu0
        %5978 = vdwg.mxu0
        %5979 = vmatprep.subr.mxu0 0.0
        %5980 = vmatpush1.msra.mxu0 %v5688
        %5981 = vmatprep.subr.mxu0 0.0
        %5982 = vmatpush1.msra.mxu0 %v5687
        %5983 = vmatprep.subr.mxu0 0.0
        %5984 = vmatpush1.msra.mxu0 %v5686
        %5985 = vmatprep.subr.mxu0 0.0
        %5986 = vmatpush1.msra.mxu0 %v5685
        %5987 = vmatprep.subr.mxu0 0.0
        %5988 = vmatpush1.msra.mxu0 %v5684
        %5989 = vmatprep.subr.mxu0 0.0
        %5990 = vmatpush1.msra.mxu0 %v5683
        %5991 = vmatprep.subr.mxu0 0.0
        %5992 = vmatpush1.msra.mxu0 %v5682
        %5993 = vmatprep.subr.mxu0 0.0
        %5994 = vmatpush1.msra.mxu0 %v5681
        %5995 = vmatprep.subr.mxu0 0.0
        %5996 = vmatpush1.msra.mxu0 %v5680
        %5997 = vmatprep.subr.mxu0 0.0
        %5998 = vmatpush1.msra.mxu0 %v5679
        %5999 = vmatprep.subr.mxu0 0.0
        %6000 = vmatpush1.msra.mxu0 %v5678
        %6001 = vmatprep.subr.mxu0 0.0
        %6002 = vmatpush1.msra.mxu0 %v5677
        %6003 = vmatprep.subr.mxu0 0.0
        %6004 = vmatpush1.msra.mxu0 %v5676
        %6005 = vmatprep.subr.mxu0 0.0
        %6006 = vmatpush1.msra.mxu0 %v5675
        %6007 = vmatprep.subr.mxu0 0.0
        %6008 = vmatpush1.msra.mxu0 %v5674
        %6009 = vmatprep.subr.mxu0 0.0
        %6010 = vmatpush1.msra.mxu0 %v5673
        %6011 = vmatprep.subr.mxu0 0.0
        %6012 = vmatpush2.msra.mxu0 %v5704
        %6013 = vmatprep.subr.mxu0 0.0
        %6014 = vmatpush2.msra.mxu0 %v5703
        %6015 = vmatprep.subr.mxu0 0.0
        %6016 = vmatpush2.msra.mxu0 %v5702
        %6017 = vmatprep.subr.mxu0 0.0
        %6018 = vmatpush2.msra.mxu0 %v5701
        %6019 = vmatprep.subr.mxu0 0.0
        %6020 = vmatpush2.msra.mxu0 %v5700
        %6021 = vmatprep.subr.mxu0 0.0
        %6022 = vmatpush2.msra.mxu0 %v5699
        %6023 = vmatprep.subr.mxu0 0.0
        %6024 = vmatpush2.msra.mxu0 %v5698
        %6025 = vmatprep.subr.mxu0 0.0
        %6026 = vmatpush2.msra.mxu0 %v5697
        %6027 = vmatprep.subr.mxu0 0.0
        %6028 = vmatpush2.msra.mxu0 %v5696
        %6029 = vmatprep.subr.mxu0 0.0
        %6030 = vmatpush2.msra.mxu0 %v5695
        %6031 = vmatprep.subr.mxu0 0.0
        %6032 = vmatpush2.msra.mxu0 %v5694
        %6033 = vmatprep.subr.mxu0 0.0
        %6034 = vmatpush2.msra.mxu0 %v5693
        %6035 = vmatprep.subr.mxu0 0.0
        %6036 = vmatpush2.msra.mxu0 %v5692
        %6037 = vmatprep.subr.mxu0 0.0
        %6038 = vmatpush2.msra.mxu0 %v5691
        %6039 = vmatprep.subr.mxu0 0.0
        %6040 = vmatpush2.msra.mxu0 %v5690
        %6041 = vmatprep.subr.mxu0 0.0
        %6042 = vmatpush2.msra.mxu0 %v5689
        %6043 = vmatprep.mubr.f32.mxu0 %v5612
        %6044 = vmatmul.mubr.f32.gmra.mxu0 %v5611
        %v6045 = vpop.f32.mrf.mxu0
        %v6046 = vadd.f32 %v5971, %v6045
        %v6047 = vpop.f32.mrf.mxu0
        %6048 = vmatprep.mubr.f32.mxu0 %v5628
        %6049 = vmatmul.mubr.f32.gmra.mxu0 %v5627
        %v6050 = vpop.f32.mrf.mxu0
        %v6051 = vadd.f32 %v5976, %v6050
        %v6052 = vpop.f32.mrf.mxu0
        %6053 = vdwg.mxu0
        %6054 = vmatprep.subr.mxu0 0.0
        %6055 = vmatpush1.msra.mxu0 %v5720
        %6056 = vmatprep.subr.mxu0 0.0
        %6057 = vmatpush1.msra.mxu0 %v5719
        %6058 = vmatprep.subr.mxu0 0.0
        %6059 = vmatpush1.msra.mxu0 %v5718
        %6060 = vmatprep.subr.mxu0 0.0
        %6061 = vmatpush1.msra.mxu0 %v5717
        %6062 = vmatprep.subr.mxu0 0.0
        %6063 = vmatpush1.msra.mxu0 %v5716
        %6064 = vmatprep.subr.mxu0 0.0
        %6065 = vmatpush1.msra.mxu0 %v5715
        %6066 = vmatprep.subr.mxu0 0.0
        %6067 = vmatpush1.msra.mxu0 %v5714
        %6068 = vmatprep.subr.mxu0 0.0
        %6069 = vmatpush1.msra.mxu0 %v5713
        %6070 = vmatprep.subr.mxu0 0.0
        %6071 = vmatpush1.msra.mxu0 %v5712
        %6072 = vmatprep.subr.mxu0 0.0
        %6073 = vmatpush1.msra.mxu0 %v5711
        %6074 = vmatprep.subr.mxu0 0.0
        %6075 = vmatpush1.msra.mxu0 %v5710
        %6076 = vmatprep.subr.mxu0 0.0
        %6077 = vmatpush1.msra.mxu0 %v5709
        %6078 = vmatprep.subr.mxu0 0.0
        %6079 = vmatpush1.msra.mxu0 %v5708
        %6080 = vmatprep.subr.mxu0 0.0
        %6081 = vmatpush1.msra.mxu0 %v5707
        %6082 = vmatprep.subr.mxu0 0.0
        %6083 = vmatpush1.msra.mxu0 %v5706
        %6084 = vmatprep.subr.mxu0 0.0
        %6085 = vmatpush1.msra.mxu0 %v5705
        %6086 = vmatprep.subr.mxu0 0.0
        %6087 = vmatpush2.msra.mxu0 %v5736
        %6088 = vmatprep.subr.mxu0 0.0
        %6089 = vmatpush2.msra.mxu0 %v5735
        %6090 = vmatprep.subr.mxu0 0.0
        %6091 = vmatpush2.msra.mxu0 %v5734
        %6092 = vmatprep.subr.mxu0 0.0
        %6093 = vmatpush2.msra.mxu0 %v5733
        %6094 = vmatprep.subr.mxu0 0.0
        %6095 = vmatpush2.msra.mxu0 %v5732
        %6096 = vmatprep.subr.mxu0 0.0
        %6097 = vmatpush2.msra.mxu0 %v5731
        %6098 = vmatprep.subr.mxu0 0.0
        %6099 = vmatpush2.msra.mxu0 %v5730
        %6100 = vmatprep.subr.mxu0 0.0
        %6101 = vmatpush2.msra.mxu0 %v5729
        %6102 = vmatprep.subr.mxu0 0.0
        %6103 = vmatpush2.msra.mxu0 %v5728
        %6104 = vmatprep.subr.mxu0 0.0
        %6105 = vmatpush2.msra.mxu0 %v5727
        %6106 = vmatprep.subr.mxu0 0.0
        %6107 = vmatpush2.msra.mxu0 %v5726
        %6108 = vmatprep.subr.mxu0 0.0
        %6109 = vmatpush2.msra.mxu0 %v5725
        %6110 = vmatprep.subr.mxu0 0.0
        %6111 = vmatpush2.msra.mxu0 %v5724
        %6112 = vmatprep.subr.mxu0 0.0
        %6113 = vmatpush2.msra.mxu0 %v5723
        %6114 = vmatprep.subr.mxu0 0.0
        %6115 = vmatpush2.msra.mxu0 %v5722
        %6116 = vmatprep.subr.mxu0 0.0
        %6117 = vmatpush2.msra.mxu0 %v5721
        %6118 = vmatprep.mubr.f32.mxu0 %v5614
        %6119 = vmatmul.mubr.f32.gmra.mxu0 %v5613
        %v6120 = vpop.f32.mrf.mxu0
        %v6121 = vadd.f32 %v6046, %v6120
        %v6122 = vpop.f32.mrf.mxu0
        %6123 = vmatprep.mubr.f32.mxu0 %v5630
        %6124 = vmatmul.mubr.f32.gmra.mxu0 %v5629
        %v6125 = vpop.f32.mrf.mxu0
        %v6126 = vadd.f32 %v6051, %v6125
        %v6127 = vpop.f32.mrf.mxu0
        %6128 = vdwg.mxu0
        %6129 = vmatprep.subr.mxu0 0.0
        %6130 = vmatpush1.msra.mxu0 %v5752
        %6131 = vmatprep.subr.mxu0 0.0
        %6132 = vmatpush1.msra.mxu0 %v5751
        %6133 = vmatprep.subr.mxu0 0.0
        %6134 = vmatpush1.msra.mxu0 %v5750
        %6135 = vmatprep.subr.mxu0 0.0
        %6136 = vmatpush1.msra.mxu0 %v5749
        %6137 = vmatprep.subr.mxu0 0.0
        %6138 = vmatpush1.msra.mxu0 %v5748
        %6139 = vmatprep.subr.mxu0 0.0
        %6140 = vmatpush1.msra.mxu0 %v5747
        %6141 = vmatprep.subr.mxu0 0.0
        %6142 = vmatpush1.msra.mxu0 %v5746
        %6143 = vmatprep.subr.mxu0 0.0
        %6144 = vmatpush1.msra.mxu0 %v5745
        %6145 = vmatprep.subr.mxu0 0.0
        %6146 = vmatpush1.msra.mxu0 %v5744
        %6147 = vmatprep.subr.mxu0 0.0
        %6148 = vmatpush1.msra.mxu0 %v5743
        %6149 = vmatprep.subr.mxu0 0.0
        %6150 = vmatpush1.msra.mxu0 %v5742
        %6151 = vmatprep.subr.mxu0 0.0
        %6152 = vmatpush1.msra.mxu0 %v5741
        %6153 = vmatprep.subr.mxu0 0.0
        %6154 = vmatpush1.msra.mxu0 %v5740
        %6155 = vmatprep.subr.mxu0 0.0
        %6156 = vmatpush1.msra.mxu0 %v5739
        %6157 = vmatprep.subr.mxu0 0.0
        %6158 = vmatpush1.msra.mxu0 %v5738
        %6159 = vmatprep.subr.mxu0 0.0
        %6160 = vmatpush1.msra.mxu0 %v5737
        %6161 = vmatprep.subr.mxu0 0.0
        %6162 = vmatpush2.msra.mxu0 %v5768
        %6163 = vmatprep.subr.mxu0 0.0
        %6164 = vmatpush2.msra.mxu0 %v5767
        %6165 = vmatprep.subr.mxu0 0.0
        %6166 = vmatpush2.msra.mxu0 %v5766
        %6167 = vmatprep.subr.mxu0 0.0
        %6168 = vmatpush2.msra.mxu0 %v5765
        %6169 = vmatprep.subr.mxu0 0.0
        %6170 = vmatpush2.msra.mxu0 %v5764
        %6171 = vmatprep.subr.mxu0 0.0
        %6172 = vmatpush2.msra.mxu0 %v5763
        %6173 = vmatprep.subr.mxu0 0.0
        %6174 = vmatpush2.msra.mxu0 %v5762
        %6175 = vmatprep.subr.mxu0 0.0
        %6176 = vmatpush2.msra.mxu0 %v5761
        %6177 = vmatprep.subr.mxu0 0.0
        %6178 = vmatpush2.msra.mxu0 %v5760
        %6179 = vmatprep.subr.mxu0 0.0
        %6180 = vmatpush2.msra.mxu0 %v5759
        %6181 = vmatprep.subr.mxu0 0.0
        %6182 = vmatpush2.msra.mxu0 %v5758
        %6183 = vmatprep.subr.mxu0 0.0
        %6184 = vmatpush2.msra.mxu0 %v5757
        %6185 = vmatprep.subr.mxu0 0.0
        %6186 = vmatpush2.msra.mxu0 %v5756
        %6187 = vmatprep.subr.mxu0 0.0
        %6188 = vmatpush2.msra.mxu0 %v5755
        %6189 = vmatprep.subr.mxu0 0.0
        %6190 = vmatpush2.msra.mxu0 %v5754
        %6191 = vmatprep.subr.mxu0 0.0
        %6192 = vmatpush2.msra.mxu0 %v5753
        %6193 = vmatprep.mubr.f32.mxu0 %v5616
        %6194 = vmatmul.mubr.f32.gmra.mxu0 %v5615
        %v6195 = vpop.f32.mrf.mxu0
        %v6196 = vadd.f32 %v6121, %v6195
        %v6197 = vpop.f32.mrf.mxu0
        %6198 = vmatprep.mubr.f32.mxu0 %v5632
        %6199 = vmatmul.mubr.f32.gmra.mxu0 %v5631
        %v6200 = vpop.f32.mrf.mxu0
        %v6201 = vadd.f32 %v6126, %v6200
        %v6202 = vpop.f32.mrf.mxu0
        %6203 = vdwg.mxu0
        %6204 = vmatprep.subr.mxu0 0.0
        %6205 = vmatpush1.msra.mxu0 %v5784
        %6206 = vmatprep.subr.mxu0 0.0
        %6207 = vmatpush1.msra.mxu0 %v5783
        %6208 = vmatprep.subr.mxu0 0.0
        %6209 = vmatpush1.msra.mxu0 %v5782
        %6210 = vmatprep.subr.mxu0 0.0
        %6211 = vmatpush1.msra.mxu0 %v5781
        %6212 = vmatprep.subr.mxu0 0.0
        %6213 = vmatpush1.msra.mxu0 %v5780
        %6214 = vmatprep.subr.mxu0 0.0
        %6215 = vmatpush1.msra.mxu0 %v5779
        %6216 = vmatprep.subr.mxu0 0.0
        %6217 = vmatpush1.msra.mxu0 %v5778
        %6218 = vmatprep.subr.mxu0 0.0
        %6219 = vmatpush1.msra.mxu0 %v5777
        %6220 = vmatprep.subr.mxu0 0.0
        %6221 = vmatpush1.msra.mxu0 %v5776
        %6222 = vmatprep.subr.mxu0 0.0
        %6223 = vmatpush1.msra.mxu0 %v5775
        %6224 = vmatprep.subr.mxu0 0.0
        %6225 = vmatpush1.msra.mxu0 %v5774
        %6226 = vmatprep.subr.mxu0 0.0
        %6227 = vmatpush1.msra.mxu0 %v5773
        %6228 = vmatprep.subr.mxu0 0.0
        %6229 = vmatpush1.msra.mxu0 %v5772
        %6230 = vmatprep.subr.mxu0 0.0
        %6231 = vmatpush1.msra.mxu0 %v5771
        %6232 = vmatprep.subr.mxu0 0.0
        %6233 = vmatpush1.msra.mxu0 %v5770
        %6234 = vmatprep.subr.mxu0 0.0
        %6235 = vmatpush1.msra.mxu0 %v5769
        %6236 = vmatprep.subr.mxu0 0.0
        %6237 = vmatpush2.msra.mxu0 %v5800
        %6238 = vmatprep.subr.mxu0 0.0
        %6239 = vmatpush2.msra.mxu0 %v5799
        %6240 = vmatprep.subr.mxu0 0.0
        %6241 = vmatpush2.msra.mxu0 %v5798
        %6242 = vmatprep.subr.mxu0 0.0
        %6243 = vmatpush2.msra.mxu0 %v5797
        %6244 = vmatprep.subr.mxu0 0.0
        %6245 = vmatpush2.msra.mxu0 %v5796
        %6246 = vmatprep.subr.mxu0 0.0
        %6247 = vmatpush2.msra.mxu0 %v5795
        %6248 = vmatprep.subr.mxu0 0.0
        %6249 = vmatpush2.msra.mxu0 %v5794
        %6250 = vmatprep.subr.mxu0 0.0
        %6251 = vmatpush2.msra.mxu0 %v5793
        %6252 = vmatprep.subr.mxu0 0.0
        %6253 = vmatpush2.msra.mxu0 %v5792
        %6254 = vmatprep.subr.mxu0 0.0
        %6255 = vmatpush2.msra.mxu0 %v5791
        %6256 = vmatprep.subr.mxu0 0.0
        %6257 = vmatpush2.msra.mxu0 %v5790
        %6258 = vmatprep.subr.mxu0 0.0
        %6259 = vmatpush2.msra.mxu0 %v5789
        %6260 = vmatprep.subr.mxu0 0.0
        %6261 = vmatpush2.msra.mxu0 %v5788
        %6262 = vmatprep.subr.mxu0 0.0
        %6263 = vmatpush2.msra.mxu0 %v5787
        %6264 = vmatprep.subr.mxu0 0.0
        %6265 = vmatpush2.msra.mxu0 %v5786
        %6266 = vmatprep.subr.mxu0 0.0
        %6267 = vmatpush2.msra.mxu0 %v5785
        %6268 = vmatprep.mubr.f32.mxu0 %v5618
        %6269 = vmatmul.mubr.f32.gmra.mxu0 %v5617
        %v6270 = vpop.f32.mrf.mxu0
        %v6271 = vadd.f32 %v6196, %v6270
        %v6272 = vpop.f32.mrf.mxu0
        %6273 = vmatprep.mubr.f32.mxu0 %v5634
        %6274 = vmatmul.mubr.f32.gmra.mxu0 %v5633
        %v6275 = vpop.f32.mrf.mxu0
        %v6276 = vadd.f32 %v6201, %v6275
        %v6277 = vpop.f32.mrf.mxu0
        %6278 = vdwg.mxu0
        %6279 = vmatprep.subr.mxu0 0.0
        %6280 = vmatpush1.msra.mxu0 %v5816
        %6281 = vmatprep.subr.mxu0 0.0
        %6282 = vmatpush1.msra.mxu0 %v5815
        %6283 = vmatprep.subr.mxu0 0.0
        %6284 = vmatpush1.msra.mxu0 %v5814
        %6285 = vmatprep.subr.mxu0 0.0
        %6286 = vmatpush1.msra.mxu0 %v5813
        %6287 = vmatprep.subr.mxu0 0.0
        %6288 = vmatpush1.msra.mxu0 %v5812
        %6289 = vmatprep.subr.mxu0 0.0
        %6290 = vmatpush1.msra.mxu0 %v5811
        %6291 = vmatprep.subr.mxu0 0.0
        %6292 = vmatpush1.msra.mxu0 %v5810
        %6293 = vmatprep.subr.mxu0 0.0
        %6294 = vmatpush1.msra.mxu0 %v5809
        %6295 = vmatprep.subr.mxu0 0.0
        %6296 = vmatpush1.msra.mxu0 %v5808
        %6297 = vmatprep.subr.mxu0 0.0
        %6298 = vmatpush1.msra.mxu0 %v5807
        %6299 = vmatprep.subr.mxu0 0.0
        %6300 = vmatpush1.msra.mxu0 %v5806
        %6301 = vmatprep.subr.mxu0 0.0
        %6302 = vmatpush1.msra.mxu0 %v5805
        %6303 = vmatprep.subr.mxu0 0.0
        %6304 = vmatpush1.msra.mxu0 %v5804
        %6305 = vmatprep.subr.mxu0 0.0
        %6306 = vmatpush1.msra.mxu0 %v5803
        %6307 = vmatprep.subr.mxu0 0.0
        %6308 = vmatpush1.msra.mxu0 %v5802
        %6309 = vmatprep.subr.mxu0 0.0
        %6310 = vmatpush1.msra.mxu0 %v5801
        %6311 = vmatprep.subr.mxu0 0.0
        %6312 = vmatpush2.msra.mxu0 %v5832
        %6313 = vmatprep.subr.mxu0 0.0
        %6314 = vmatpush2.msra.mxu0 %v5831
        %6315 = vmatprep.subr.mxu0 0.0
        %6316 = vmatpush2.msra.mxu0 %v5830
        %6317 = vmatprep.subr.mxu0 0.0
        %6318 = vmatpush2.msra.mxu0 %v5829
        %6319 = vmatprep.subr.mxu0 0.0
        %6320 = vmatpush2.msra.mxu0 %v5828
        %6321 = vmatprep.subr.mxu0 0.0
        %6322 = vmatpush2.msra.mxu0 %v5827
        %6323 = vmatprep.subr.mxu0 0.0
        %6324 = vmatpush2.msra.mxu0 %v5826
        %6325 = vmatprep.subr.mxu0 0.0
        %6326 = vmatpush2.msra.mxu0 %v5825
        %6327 = vmatprep.subr.mxu0 0.0
        %6328 = vmatpush2.msra.mxu0 %v5824
        %6329 = vmatprep.subr.mxu0 0.0
        %6330 = vmatpush2.msra.mxu0 %v5823
        %6331 = vmatprep.subr.mxu0 0.0
        %6332 = vmatpush2.msra.mxu0 %v5822
        %6333 = vmatprep.subr.mxu0 0.0
        %6334 = vmatpush2.msra.mxu0 %v5821
        %6335 = vmatprep.subr.mxu0 0.0
        %6336 = vmatpush2.msra.mxu0 %v5820
        %6337 = vmatprep.subr.mxu0 0.0
        %6338 = vmatpush2.msra.mxu0 %v5819
        %6339 = vmatprep.subr.mxu0 0.0
        %6340 = vmatpush2.msra.mxu0 %v5818
        %6341 = vmatprep.subr.mxu0 0.0
        %6342 = vmatpush2.msra.mxu0 %v5817
        %6343 = vmatprep.mubr.f32.mxu0 %v5620
        %6344 = vmatmul.mubr.f32.gmra.mxu0 %v5619
        %v6345 = vpop.f32.mrf.mxu0
        %v6346 = vadd.f32 %v6271, %v6345
        %v6347 = vpop.f32.mrf.mxu0
        %6348 = vmatprep.mubr.f32.mxu0 %v5636
        %6349 = vmatmul.mubr.f32.gmra.mxu0 %v5635
        %v6350 = vpop.f32.mrf.mxu0
        %v6351 = vadd.f32 %v6276, %v6350
        %v6352 = vpop.f32.mrf.mxu0
        %6353 = vdwg.mxu0
        %6354 = vmatprep.subr.mxu0 0.0
        %6355 = vmatpush1.msra.mxu0 %v5848
        %6356 = vmatprep.subr.mxu0 0.0
        %6357 = vmatpush1.msra.mxu0 %v5847
        %6358 = vmatprep.subr.mxu0 0.0
        %6359 = vmatpush1.msra.mxu0 %v5846
        %6360 = vmatprep.subr.mxu0 0.0
        %6361 = vmatpush1.msra.mxu0 %v5845
        %6362 = vmatprep.subr.mxu0 0.0
        %6363 = vmatpush1.msra.mxu0 %v5844
        %6364 = vmatprep.subr.mxu0 0.0
        %6365 = vmatpush1.msra.mxu0 %v5843
        %6366 = vmatprep.subr.mxu0 0.0
        %6367 = vmatpush1.msra.mxu0 %v5842
        %6368 = vmatprep.subr.mxu0 0.0
        %6369 = vmatpush1.msra.mxu0 %v5841
        %6370 = vmatprep.subr.mxu0 0.0
        %6371 = vmatpush1.msra.mxu0 %v5840
        %6372 = vmatprep.subr.mxu0 0.0
        %6373 = vmatpush1.msra.mxu0 %v5839
        %6374 = vmatprep.subr.mxu0 0.0
        %6375 = vmatpush1.msra.mxu0 %v5838
        %6376 = vmatprep.subr.mxu0 0.0
        %6377 = vmatpush1.msra.mxu0 %v5837
        %6378 = vmatprep.subr.mxu0 0.0
        %6379 = vmatpush1.msra.mxu0 %v5836
        %6380 = vmatprep.subr.mxu0 0.0
        %6381 = vmatpush1.msra.mxu0 %v5835
        %6382 = vmatprep.subr.mxu0 0.0
        %6383 = vmatpush1.msra.mxu0 %v5834
        %6384 = vmatprep.subr.mxu0 0.0
        %6385 = vmatpush1.msra.mxu0 %v5833
        %6386 = vmatprep.subr.mxu0 0.0
        %6387 = vmatpush2.msra.mxu0 %v5864
        %6388 = vmatprep.subr.mxu0 0.0
        %6389 = vmatpush2.msra.mxu0 %v5863
        %6390 = vmatprep.subr.mxu0 0.0
        %6391 = vmatpush2.msra.mxu0 %v5862
        %6392 = vmatprep.subr.mxu0 0.0
        %6393 = vmatpush2.msra.mxu0 %v5861
        %6394 = vmatprep.subr.mxu0 0.0
        %6395 = vmatpush2.msra.mxu0 %v5860
        %6396 = vmatprep.subr.mxu0 0.0
        %6397 = vmatpush2.msra.mxu0 %v5859
        %6398 = vmatprep.subr.mxu0 0.0
        %6399 = vmatpush2.msra.mxu0 %v5858
        %6400 = vmatprep.subr.mxu0 0.0
        %6401 = vmatpush2.msra.mxu0 %v5857
        %6402 = vmatprep.subr.mxu0 0.0
        %6403 = vmatpush2.msra.mxu0 %v5856
        %6404 = vmatprep.subr.mxu0 0.0
        %6405 = vmatpush2.msra.mxu0 %v5855
        %6406 = vmatprep.subr.mxu0 0.0
        %6407 = vmatpush2.msra.mxu0 %v5854
        %6408 = vmatprep.subr.mxu0 0.0
        %6409 = vmatpush2.msra.mxu0 %v5853
        %6410 = vmatprep.subr.mxu0 0.0
        %6411 = vmatpush2.msra.mxu0 %v5852
        %6412 = vmatprep.subr.mxu0 0.0
        %6413 = vmatpush2.msra.mxu0 %v5851
        %6414 = vmatprep.subr.mxu0 0.0
        %6415 = vmatpush2.msra.mxu0 %v5850
        %6416 = vmatprep.subr.mxu0 0.0
        %6417 = vmatpush2.msra.mxu0 %v5849
        %6418 = vmatprep.mubr.f32.mxu0 %v5622
        %6419 = vmatmul.mubr.f32.gmra.mxu0 %v5621
        %v6420 = vpop.f32.mrf.mxu0
        %v6421 = vadd.f32 %v6346, %v6420
        %v6422 = vpop.f32.mrf.mxu0
        %6423 = vmatprep.mubr.f32.mxu0 %v5638
        %6424 = vmatmul.mubr.f32.gmra.mxu0 %v5637
        %v6425 = vpop.f32.mrf.mxu0
        %v6426 = vadd.f32 %v6351, %v6425
        %v6427 = vpop.f32.mrf.mxu0
        %6428 = vdwg.mxu0
        %6429 = vmatprep.subr.mxu0 0.0
        %6430 = vmatpush1.msra.mxu0 %v5880
        %6431 = vmatprep.subr.mxu0 0.0
        %6432 = vmatpush1.msra.mxu0 %v5879
        %6433 = vmatprep.subr.mxu0 0.0
        %6434 = vmatpush1.msra.mxu0 %v5878
        %6435 = vmatprep.subr.mxu0 0.0
        %6436 = vmatpush1.msra.mxu0 %v5877
        %6437 = vmatprep.subr.mxu0 0.0
        %6438 = vmatpush1.msra.mxu0 %v5876
        %6439 = vmatprep.subr.mxu0 0.0
        %6440 = vmatpush1.msra.mxu0 %v5875
        %6441 = vmatprep.subr.mxu0 0.0
        %6442 = vmatpush1.msra.mxu0 %v5874
        %6443 = vmatprep.subr.mxu0 0.0
        %6444 = vmatpush1.msra.mxu0 %v5873
        %6445 = vmatprep.subr.mxu0 0.0
        %6446 = vmatpush1.msra.mxu0 %v5872
        %6447 = vmatprep.subr.mxu0 0.0
        %6448 = vmatpush1.msra.mxu0 %v5871
        %6449 = vmatprep.subr.mxu0 0.0
        %6450 = vmatpush1.msra.mxu0 %v5870
        %6451 = vmatprep.subr.mxu0 0.0
        %6452 = vmatpush1.msra.mxu0 %v5869
        %6453 = vmatprep.subr.mxu0 0.0
        %6454 = vmatpush1.msra.mxu0 %v5868
        %6455 = vmatprep.subr.mxu0 0.0
        %6456 = vmatpush1.msra.mxu0 %v5867
        %6457 = vmatprep.subr.mxu0 0.0
        %6458 = vmatpush1.msra.mxu0 %v5866
        %6459 = vmatprep.subr.mxu0 0.0
        %6460 = vmatpush1.msra.mxu0 %v5865
        %6461 = vmatprep.subr.mxu0 0.0
        %6462 = vmatpush2.msra.mxu0 %v5896
        %6463 = vmatprep.subr.mxu0 0.0
        %6464 = vmatpush2.msra.mxu0 %v5895
        %6465 = vmatprep.subr.mxu0 0.0
        %6466 = vmatpush2.msra.mxu0 %v5894
        %6467 = vmatprep.subr.mxu0 0.0
        %6468 = vmatpush2.msra.mxu0 %v5893
        %6469 = vmatprep.subr.mxu0 0.0
        %6470 = vmatpush2.msra.mxu0 %v5892
        %6471 = vmatprep.subr.mxu0 0.0
        %6472 = vmatpush2.msra.mxu0 %v5891
        %6473 = vmatprep.subr.mxu0 0.0
        %6474 = vmatpush2.msra.mxu0 %v5890
        %6475 = vmatprep.subr.mxu0 0.0
        %6476 = vmatpush2.msra.mxu0 %v5889
        %6477 = vmatprep.subr.mxu0 0.0
        %6478 = vmatpush2.msra.mxu0 %v5888
        %6479 = vmatprep.subr.mxu0 0.0
        %6480 = vmatpush2.msra.mxu0 %v5887
        %6481 = vmatprep.subr.mxu0 0.0
        %6482 = vmatpush2.msra.mxu0 %v5886
        %6483 = vmatprep.subr.mxu0 0.0
        %6484 = vmatpush2.msra.mxu0 %v5885
        %6485 = vmatprep.subr.mxu0 0.0
        %6486 = vmatpush2.msra.mxu0 %v5884
        %6487 = vmatprep.subr.mxu0 0.0
        %6488 = vmatpush2.msra.mxu0 %v5883
        %6489 = vmatprep.subr.mxu0 0.0
        %6490 = vmatpush2.msra.mxu0 %v5882
        %6491 = vmatprep.subr.mxu0 0.0
        %6492 = vmatpush2.msra.mxu0 %v5881
        %6493 = vmatprep.mubr.f32.mxu0 %v5624
        %6494 = vmatmul.mubr.f32.gmra.mxu0 %v5623
        %v6495 = vpop.f32.mrf.mxu0
        %v6496 = vadd.f32 %v6421, %v6495
        %v6497 = vpop.f32.mrf.mxu0
        %6498 = vmatprep.mubr.f32.mxu0 %v5640
        %6499 = vmatmul.mubr.f32.gmra.mxu0 %v5639
        %v6500 = vpop.f32.mrf.mxu0
        %v6501 = vadd.f32 %v6426, %v6500
        %v6502 = vpop.f32.mrf.mxu0
        %6503 = vdwg.mxu0
        %v6504 = vadd.f32 %v4837, %v6496
        %v6505 = vadd.f32 %v4838, %v6501
        %v6506 = vld [vmem:[%s1359] sm:$0x1]
        %v6507 = vld [vmem:[%s1362] sm:$0x1]
        %v6508 = vsel %vm1418, %v6504, 0.0
        %6509 = vadd.xlane.f32.xlu0 %v6508
        %v6510 = vpop.xlane.xlu0 %6509
        %v6511 = vsel %vm1418, %v6505, 0.0
        %6512 = vadd.xlane.f32.xlu0 %v6511
        %v6513 = vpop.xlane.xlu0 %6512
        %v6514 = vmul.f32 %v6510, %v3088
        %v6515 = vmul.f32 %v6513, %v3088
        %v6516 = vsub.f32 %v6504, %v6514
        %v6517 = vsub.f32 %v6505, %v6515
        %v6518 = vmul.f32 %v6516, %v6516
        %v6519 = vmul.f32 %v6517, %v6517
        %v6520 = vsel %vm1418, %v6518, 0.0
        %6521 = vadd.xlane.f32.xlu0 %v6520
        %v6522 = vpop.xlane.xlu0 %6521
        %v6523 = vsel %vm1418, %v6519, 0.0
        %6524 = vadd.xlane.f32.xlu0 %v6523
        %v6525 = vpop.xlane.xlu0 %6524
        %v6526 = vmul.f32 %v6522, %v3088
        %v6527 = vmul.f32 %v6525, %v3088
        %v6528 = vadd.f32 %v6526, 1e-05
        %v6529 = vadd.f32 %v6527, 1e-05
        %v6530 = vrsqrt.pop %v6528
        %v6531 = vrsqrt.pop %v6529
        %v6532 = vmul.f32 %v6516, %v6530
        %v6533 = vmul.f32 %v6517, %v6531
        %v6535 = vlaneseq
        %v6536 = vshrl.u32 %v6535, 7
        %v6537 = vsub.s32 0, %v6536
        %v6538 = vrot.slane %v6506, %v6537
        %v6540 = vmul.f32 %v6532, %v6538
        %v6541 = vmul.f32 %v6533, %v6538
        %v6543 = vlaneseq
        %v6544 = vshrl.u32 %v6543, 7
        %v6545 = vsub.s32 0, %v6544
        %v6546 = vrot.slane %v6507, %v6545
        %v6548 = vadd.f32 %v6540, %v6546
        %v6549 = vadd.f32 %v6541, %v6546
        %6550 = vst.msk [vmem:[#allocation2] sm:$0xff] %vm1418, %v6548
        %6551 = vst.msk [vmem:[#allocation2 + $0x8] sm:$0xff] %vm1418, %v6549
        %p6552 = scmp.eq.s32.totalorder %s77, 1
        // Predicated region
        $region153: #{tpu_custom_call.1} parent=147 // pred_check
          %p6553 = pneg %p6552
        $region154: #{tpu_custom_call.1} parent=147 // pred_check_branch
          %6555 = sbr.rel (%p6553) target = $region156
        $region155: #{tpu_custom_call.1} parent=147 // pred_region
          %v6556 = vld [vmem:[%s57] sm:$0x1]
          %v6557 = vld [vmem:[%s59] sm:$0x1]
          %v6558 = vsel %vm1418, %v6548, 0.0
          %6559 = vadd.xlane.f32.xlu0 %v6558
          %v6560 = vpop.xlane.xlu0 %6559
          %v6561 = vsel %vm1418, %v6549, 0.0
          %6562 = vadd.xlane.f32.xlu0 %v6561
          %v6563 = vpop.xlane.xlu0 %6562
          %v6564 = vmul.f32 %v6560, %v3088
          %v6565 = vmul.f32 %v6563, %v3088
          %v6566 = vsub.f32 %v6548, %v6564
          %v6567 = vsub.f32 %v6549, %v6565
          %v6568 = vmul.f32 %v6566, %v6566
          %v6569 = vmul.f32 %v6567, %v6567
          %v6570 = vsel %vm1418, %v6568, 0.0
          %6571 = vadd.xlane.f32.xlu0 %v6570
          %v6572 = vpop.xlane.xlu0 %6571
          %v6573 = vsel %vm1418, %v6569, 0.0
          %6574 = vadd.xlane.f32.xlu0 %v6573
          %v6575 = vpop.xlane.xlu0 %6574
          %v6576 = vmul.f32 %v6572, %v3088
          %v6577 = vmul.f32 %v6575, %v3088
          %v6578 = vadd.f32 %v6576, 1e-05
          %v6579 = vadd.f32 %v6577, 1e-05
          %v6580 = vrsqrt.pop %v6578
          %v6581 = vrsqrt.pop %v6579
          %v6582 = vmul.f32 %v6566, %v6580
          %v6583 = vmul.f32 %v6567, %v6581
          %v6585 = vlaneseq
          %v6586 = vshrl.u32 %v6585, 7
          %v6587 = vsub.s32 0, %v6586
          %v6588 = vrot.slane %v6556, %v6587
          %v6590 = vmul.f32 %v6582, %v6588
          %v6591 = vmul.f32 %v6583, %v6588
          %v6593 = vlaneseq
          %v6594 = vshrl.u32 %v6593, 7
          %v6595 = vsub.s32 0, %v6594
          %v6596 = vrot.slane %v6557, %v6595
          %v6598 = vadd.f32 %v6590, %v6596
          %v6599 = vadd.f32 %v6591, %v6596
          %v6600 = vld [vmem:[%s61] sm:$0xff]
          %v6601 = vld [vmem:[%s61 + $0x8] sm:$0xff]
          %v6602 = vld [vmem:[%s61 + $0x10] sm:$0xff]
          %v6603 = vld [vmem:[%s61 + $0x18] sm:$0xff]
          %v6604 = vld [vmem:[%s63] sm:$0x1]
          %v6606 = vlaneseq
          %v6607 = vshrl.u32 %v6606, 7
          %v6608 = vsub.s32 0, %v6607
          %v6609 = vrot.slane %v6604, %v6608
          %v6612 = vsel %vm1418, %v6598, 0
          %v6615 = vsel %vm1418, %v6599, 0
          %6617 = vmatprep.subr.mxu0 0.0
          %6618 = vmatpush1.msra.mxu0 0.0
          %6619 = vmatprep.subr.mxu0 0.0
          %6620 = vmatpush1.msra.mxu0 0.0
          %6621 = vmatprep.subr.mxu0 0.0
          %6622 = vmatpush1.msra.mxu0 0.0
          %6623 = vmatprep.subr.mxu0 0.0
          %6624 = vmatpush1.msra.mxu0 0.0
          %6625 = vmatprep.subr.mxu0 0.0
          %6626 = vmatpush1.msra.mxu0 0.0
          %6627 = vmatprep.subr.mxu0 0.0
          %6628 = vmatpush1.msra.mxu0 0.0
          %6629 = vmatprep.subr.mxu0 0.0
          %6630 = vmatpush1.msra.mxu0 0.0
          %6631 = vmatprep.subr.mxu0 0.0
          %6632 = vmatpush1.msra.mxu0 0.0
          %6633 = vmatprep.subr.mxu0 0.0
          %6634 = vmatpush1.msra.mxu0 0.0
          %6635 = vmatprep.subr.mxu0 0.0
          %6636 = vmatpush1.msra.mxu0 0.0
          %6637 = vmatprep.subr.mxu0 0.0
          %6638 = vmatpush1.msra.mxu0 0.0
          %6639 = vmatprep.subr.mxu0 0.0
          %6640 = vmatpush1.msra.mxu0 0.0
          %6641 = vmatprep.subr.mxu0 0.0
          %6642 = vmatpush1.msra.mxu0 %v6603
          %6643 = vmatprep.subr.mxu0 0.0
          %6644 = vmatpush1.msra.mxu0 %v6602
          %6645 = vmatprep.subr.mxu0 0.0
          %6646 = vmatpush1.msra.mxu0 %v6601
          %6647 = vmatprep.subr.mxu0 0.0
          %6648 = vmatpush1.msra.mxu0 %v6600
          %6649 = vmatprep.subr.mxu0 0.0
          %6650 = vmatpush2.msra.mxu0 0.0
          %6651 = vmatprep.subr.mxu0 0.0
          %6652 = vmatpush2.msra.mxu0 0.0
          %6653 = vmatprep.subr.mxu0 0.0
          %6654 = vmatpush2.msra.mxu0 0.0
          %6655 = vmatprep.subr.mxu0 0.0
          %6656 = vmatpush2.msra.mxu0 0.0
          %6657 = vmatprep.subr.mxu0 0.0
          %6658 = vmatpush2.msra.mxu0 0.0
          %6659 = vmatprep.subr.mxu0 0.0
          %6660 = vmatpush2.msra.mxu0 0.0
          %6661 = vmatprep.subr.mxu0 0.0
          %6662 = vmatpush2.msra.mxu0 0.0
          %6663 = vmatprep.subr.mxu0 0.0
          %6664 = vmatpush2.msra.mxu0 0.0
          %6665 = vmatprep.subr.mxu0 0.0
          %6666 = vmatpush2.msra.mxu0 0.0
          %6667 = vmatprep.subr.mxu0 0.0
          %6668 = vmatpush2.msra.mxu0 0.0
          %6669 = vmatprep.subr.mxu0 0.0
          %6670 = vmatpush2.msra.mxu0 0.0
          %6671 = vmatprep.subr.mxu0 0.0
          %6672 = vmatpush2.msra.mxu0 0.0
          %6673 = vmatprep.subr.mxu0 0.0
          %6674 = vmatpush2.msra.mxu0 0.0
          %6675 = vmatprep.subr.mxu0 0.0
          %6676 = vmatpush2.msra.mxu0 0.0
          %6677 = vmatprep.subr.mxu0 0.0
          %6678 = vmatpush2.msra.mxu0 0.0
          %6679 = vmatprep.subr.mxu0 0.0
          %6680 = vmatpush2.msra.mxu0 0.0
          %6681 = vmatprep.mubr.f32.mxu0 0.0
          %6682 = vmatmul.mubr.f32.gmra.mxu0 %v6612
          %v6683 = vpop.f32.mrf.mxu0
          %v6684 = vadd.f32 %v6609, %v6683
          %v6685 = vpop.f32.mrf.mxu0
          %6686 = vmatprep.mubr.f32.mxu0 0.0
          %6687 = vmatmul.mubr.f32.gmra.mxu0 %v6615
          %v6688 = vpop.f32.mrf.mxu0
          %v6689 = vadd.f32 %v6609, %v6688
          %v6690 = vpop.f32.mrf.mxu0
          %6691 = vdwg.mxu0
          %6692 = vst [vmem:[#allocation3] sm:$0xff] %v6684
          %6693 = vst [vmem:[#allocation3 + $0x8] sm:$0xff] %v6689
        $region156: #{tpu_custom_call.1} parent=147 // pred_fallthru
          _
        // Predicated region
        $region157: #{tpu_custom_call.1} parent=147 // pred_check
          %p6694 = pneg %p892
        $region158: #{tpu_custom_call.1} parent=147 // pred_check_branch
          %6696 = sbr.rel (%p6694) target = $region160
        $region159: #{tpu_custom_call.1} parent=147 // pred_region
          %s6698 = ssub.s32 256, 256
          %6699 = vsyncadd [#allocation4], %s6698
          %s6700 = sshll.u32 [#allocation3], 4
          %s6701 = int_to_ptr.vmem [resolvable:$true] %s6700
          %6706 = dma.vmem_to_hbm [thread:$0]  %s6701, 256, %s65, [#allocation4], 128, 128, 8
        $region160: #{tpu_custom_call.1} parent=147 // pred_fallthru
          _
        // Predicated region
        $region161: #{tpu_custom_call.1} parent=147 // pred_check
          %p6707 = pneg %p892
        $region162: #{tpu_custom_call.1} parent=147 // pred_check_branch
          %6709 = sbr.rel (%p6707) target = $region164
        $region163: #{tpu_custom_call.1} parent=147 // pred_region
          %6710 = dma.done [#allocation4], 256
        $region164: #{tpu_custom_call.1} parent=147 // pred_fallthru
          _
      $region148: #{tpu_custom_call.1} parent=5 // pred_fallthru
        _
      %p6711 = scmp.le.s32.totalorder 2, %s72
      // Predicated region
      $region165: #{tpu_custom_call.1} parent=5 // pred_check
        %p6712 = pneg %p6711
      $region166: #{tpu_custom_call.1} parent=5 // pred_check_branch
        %6714 = sbr.rel (%p6712) target = $region168
      $region167: #{tpu_custom_call.1} parent=5 // pred_region
        %s6715 = ssub.s32 %s72, 2
      $region168: #{tpu_custom_call.1} parent=5 // pred_fallthru
        _
    $region6: #{tpu_custom_call.1} parent=1 // loop_footer
      %s76 = sadd.s32 1, %s72
    $region7: #{tpu_custom_call.1} parent=1 // loop_footer_branch
      %71 = sbr.rel target = $region3
    $region8: #{tpu_custom_call.1} parent=1 // loop_exit
      _
    %6716 = vsyncpa [#allocation4], 1
    %s6717 = scalar_lea.sflag [#allocation4], 1
    %6718 = vsyncpa %s6717, 1

</llo_original>
